<compile_context>
chip_gen: v7x
topology: tpu7x:2x2x1
jax: 0.10.0
libtpu: 0.0.40
codegen_flags: <defaults>
</compile_context>

<pallas_src>
import functools

import jax
import jax.numpy as jnp
from jax.experimental import pallas as pl
from jax.experimental.pallas import tpu as pltpu


def _gnn_kernel(adj_ref, x_ref, idx_ref,
                w1_ref, p1_ref, w2_ref, p2_ref, w4_ref, b4_ref,
                out_ref, *,
                n_feat, n_hidden_1, n_hidden_2, num_graphs, n_nodes, tb,
                compute_dtype):
    del n_hidden_2  # only needed for shapes, not used for slicing
    eps = 1e-5
    F, H1 = n_feat, n_hidden_1
    N, TB, G = n_nodes, tb, num_graphs
    cdt = compute_dtype

    adj = adj_ref[...]                      # (TB, N, N)   (possibly bf16)
    x0 = x_ref[...]                         # (TB*N, F)    f32, TB batches stacked
    idx = idx_ref[...]                      # (TB*N, 1)    int32

    w1 = w1_ref[...]                        # (2F, H1)
    p1 = p1_ref[...]                        # (3, H1)  rows: bias, gamma, beta
    w2 = w2_ref[...]                        # (2H1, H2)
    p2 = p2_ref[...]                        # (3, H2)
    w4 = w4_ref[...]                        # (F+H1+H2, 1)
    b4 = b4_ref[...]                        # (1, 1)

    def mm(a, b):
        # Shared-weight matmul over all TB batches at once (MXU, f32 accum).
        return jnp.dot(a.astype(cdt), b.astype(cdt),
                       preferred_element_type=jnp.float32)

    def spmm(x_flat):
        # Per-batch adj @ x (block-diagonal over the TB batches of this step).
        f = x_flat.shape[-1]
        xb = x_flat.reshape(TB, N, f).astype(cdt)
        ax = jnp.einsum("bij,bjf->bif", adj.astype(cdt), xb,
                        preferred_element_type=jnp.float32)
        return ax.reshape(TB * N, f)

    def bn(x_flat, p):
        # Training-mode BatchNorm1d per graph-batch: two-pass biased stats,
        # affine epilogue fused into one FMA (x*scale + shift).
        h = x_flat.shape[-1]
        xb = x_flat.reshape(TB, N, h)
        mu = jnp.mean(xb, axis=1, keepdims=True)               # (TB, 1, H)
        d = xb - mu
        var = jnp.mean(d * d, axis=1, keepdims=True)           # (TB, 1, H)
        scale = p[1:2, :] * jax.lax.rsqrt(var + eps)           # (TB, 1, H)
        shift = p[2:3, :] - mu * scale
        return (xb * scale + shift).reshape(TB * N, h)

    # ---- layer 1: bn1(relu(fc1(cat([x, adj@x], 1)))) via split weights ----
    x1 = mm(x0, w1[:F]) + mm(spmm(x0), w1[F:]) + p1[0:1, :]
    x1 = jnp.maximum(x1, 0.0)
    x1 = bn(x1, p1)
    # dropout: identity (inference)

    # ---- layer 2 ----
    x2 = mm(x1, w2[:H1]) + mm(spmm(x1), w2[H1:]) + p2[0:1, :]
    x2 = jnp.maximum(x2, 0.0)
    x2 = bn(x2, p2)
    # dropout: identity (inference)

    # ---- readout: per-node scalar s = cat([x,x1,x2]) @ w4, pooled per graph --
    s = mm(x0, w4[:F]) + mm(x1, w4[F:F + H1]) + mm(x2, w4[F + H1:])  # (TB*N, 1)
    gid = jax.lax.broadcasted_iota(jnp.int32, (TB * N, G), 1)        # (TB*N, G)
    onehot = (idx == gid).astype(jnp.float32)                        # (TB*N, G)
    pooled = (onehot * s).reshape(TB, N, G).sum(axis=1)              # (TB, G)
    out_ref[...] = jnp.maximum(pooled + b4, 0.0)


def _pick_batches_per_step(n_batches, n_nodes, target_rows=256):
    """Largest divisor TB of B with TB*N <= target_rows, preferring >= 2 grid
    steps (feeds both v7x TensorCores; use target_rows=128 on v5e)."""
    tb = max(1, min(n_batches, target_rows // max(n_nodes, 1)))
    while n_batches % tb:
        tb -= 1
    if tb == n_batches and n_batches > 1:
        tb = max(d for d in range(1, n_batches) if n_batches % d == 0)
    return tb


def gnn_skip_small_forward_batched(adj, x_in, idx, params, num_graphs, *,
                                   batches_per_step=None,
                                   compute_dtype=jnp.float32,
                                   adj_dtype=jnp.bfloat16):
    """Batched forward.  adj: (B,N,N), x_in: (B,N,F) f32, idx: (B,N) int.
    Returns (B, num_graphs) f32.  compute_dtype=float32 reproduces the PyTorch
    module's numerics; bfloat16 runs the matmuls at native MXU rate (f32 acc).
    adj_dtype=bfloat16 is exact for 0/1 adjacencies."""
    B, N, F = x_in.shape
    H1 = params["w1"].shape[1]
    H2 = params["w2"].shape[1]
    G = num_graphs

    tb = batches_per_step or _pick_batches_per_step(B, N)
    assert B % tb == 0, f"batches_per_step={tb} must divide B={B}"

    # Pack per-layer BN vectors (bias, gamma, beta) into one (3, H) array.
    p1 = jnp.concatenate([params["b1"], params["g1"], params["be1"]], axis=0)
    p2 = jnp.concatenate([params["b2"], params["g2"], params["be2"]], axis=0)
    b4 = params["b4"].reshape(1, 1)

    adj_c = adj.astype(adj_dtype)
    x_flat = x_in.reshape(B * N, F)
    idx_flat = idx.astype(jnp.int32).reshape(B * N, 1)

    kernel = functools.partial(
        _gnn_kernel, n_feat=F, n_hidden_1=H1, n_hidden_2=H2,
        num_graphs=G, n_nodes=N, tb=tb, compute_dtype=compute_dtype)

    def run(single_buffer_params):
        if single_buffer_params:
            def cspec(shape):
                return pl.BlockSpec(shape, lambda *_: (0,) * len(shape),
                                    pipeline_mode=pl.Buffered(1))
        else:
            def cspec(shape):
                return pl.BlockSpec(shape, lambda *_: (0,) * len(shape))
        return pl.pallas_call(
            kernel,
            grid=(B // tb,),
            out_shape=jax.ShapeDtypeStruct((B, G), jnp.float32),
            in_specs=[
                pl.BlockSpec((tb, N, N), lambda b: (b, 0, 0)),     # adj
                pl.BlockSpec((tb * N, F), lambda b: (b, 0)),       # x (stacked)
                pl.BlockSpec((tb * N, 1), lambda b: (b, 0)),       # idx
                cspec((2 * F, H1)),                                # w1
                cspec((3, H1)),                                    # b1/g1/be1
                cspec((2 * H1, H2)),                               # w2
                cspec((3, H2)),                                    # b2/g2/be2
                cspec((F + H1 + H2, 1)),                           # w4
                cspec((1, 1)),                                     # b4
            ],
            out_specs=pl.BlockSpec((tb, G), lambda b: (b, 0)),
            compiler_params=pltpu.CompilerParams(
                dimension_semantics=("parallel",)),
        )(adj_c, x_flat, idx_flat, params["w1"], p1, params["w2"], p2,
          params["w4"], b4)

    try:
        return run(True)
    except Exception:  # pipeline_mode=pl.Buffered(1) unsupported -> default specs
        return run(False)


def gnn_skip_small_forward(adj, x_in, idx, params, num_graphs, **kwargs):
    """Single graph-batch forward matching the PyTorch module: returns (G, 1)."""
    out = gnn_skip_small_forward_batched(
        adj[None], x_in[None], idx[None], params, num_graphs, **kwargs)
    return out.reshape(num_graphs, 1)


def make_params(key, n_feat, n_hidden_1, n_hidden_2, n_hidden_3=None):
    """Synthetic parameters matching the module's shapes.  Weights stored
    transposed relative to PyTorch ([in, out]) so the kernel does x @ W + b."""
    ks = jax.random.split(key, 3)

    def lin(k, fan_in, fan_out):
        bound = 1.0 / jnp.sqrt(fan_in)
        kw, kb = jax.random.split(k)
        w = jax.random.uniform(kw, (fan_in, fan_out), jnp.float32, -bound, bound)
        b = jax.random.uniform(kb, (1, fan_out), jnp.float32, -bound, bound)
        return w, b

    w1, b1 = lin(ks[0], 2 * n_feat, n_hidden_1)
    w2, b2 = lin(ks[1], 2 * n_hidden_1, n_hidden_2)
    w4, b4 = lin(ks[2], n_feat + n_hidden_1 + n_hidden_2, 1)
    return {
        "w1": w1, "b1": b1,
        "g1": jnp.ones((1, n_hidden_1), jnp.float32),
        "be1": jnp.zeros((1, n_hidden_1), jnp.float32),
        "w2": w2, "b2": b2,
        "g2": jnp.ones((1, n_hidden_2), jnp.float32),
        "be2": jnp.zeros((1, n_hidden_2), jnp.float32),
        "w4": w4, "b4": b4,
    }


def _reference(adj, x_in, idx, params, num_graphs):
    """Pure-JAX reference mirroring the PyTorch forward (training-mode BN)."""
    eps = 1e-5

    def bn(x, g, be):
        mu = jnp.mean(x, axis=0, keepdims=True)
        var = jnp.mean((x - mu) ** 2, axis=0, keepdims=True)
        return (x - mu) * jax.lax.rsqrt(var + eps) * g + be

    x1 = jax.nn.relu(jnp.concatenate([x_in, adj @ x_in], 1) @ params["w1"] + params["b1"])
    x1 = bn(x1, params["g1"], params["be1"])
    x2 = jax.nn.relu(jnp.concatenate([x1, adj @ x1], 1) @ params["w2"] + params["b2"])
    x2 = bn(x2, params["g2"], params["be2"])
    xn = jnp.concatenate([x_in, x1, x2], 1)
    onehot = jax.nn.one_hot(idx, num_graphs, dtype=jnp.float32)      # (N, G)
    pooled = onehot.T @ xn                                           # scatter_add
    return jax.nn.relu(pooled @ params["w4"] + params["b4"])         # (G, 1)


if __name__ == "__main__":
    # Small shapes consistent with the forward: B graph-batches of N nodes,
    # F input features, hidden 32/32, G graphs per batch.  B=16, N=16 gives
    # TB=8 -> 128-row fused matmul tiles and a 2-step "parallel" grid.
    N, F, H1, H2, G, B = 16, 8, 32, 32, 4, 16

    key = jax.random.PRNGKey(0)
    k_adj, k_x, k_p = jax.random.split(key, 3)

    # Symmetric 0/1 dense adjacency with self-loops, per batch element.
    a = jax.random.uniform(k_adj, (B, N, N), jnp.float32)
    adj = (((a + jnp.swapaxes(a, 1, 2)) * 0.5 > 0.6).astype(jnp.float32)
           + jnp.eye(N, dtype=jnp.float32)[None])
    x_in = jax.random.normal(k_x, (B, N, F), jnp.float32)
    idx = jnp.tile(jnp.repeat(jnp.arange(G, dtype=jnp.int32), N // G)[None], (B, 1))

    params = make_params(k_p, F, H1, H2)

    # Exact-precision path (f32 matmul operands): parity with PyTorch module.
    out_f32 = jax.block_until_ready(
        gnn_skip_small_forward_batched(adj, x_in, idx, params, G,
                                       compute_dtype=jnp.float32))
    assert out_f32.shape == (B, G) and out_f32.dtype == jnp.float32

    # Performance path (bf16 matmul operands, f32 accumulation).
    out_bf16 = jax.block_until_ready(
        gnn_skip_small_forward_batched(adj, x_in, idx, params, G,
                                       compute_dtype=jnp.bfloat16))
    assert out_bf16.shape == (B, G)

    # Single-sample API matching the PyTorch forward signature / (G, 1) output.
    out_0 = jax.block_until_ready(
        gnn_skip_small_forward(adj[0], x_in[0], idx[0], params, G,
                               compute_dtype=jnp.float32))
    assert out_0.shape == (G, 1) and out_0.dtype == jnp.float32

    # Correctness vs. pure-JAX reference.
    for b in range(B):
        ref = _reference(adj[b], x_in[b], idx[b], params, G)[:, 0]
        assert jnp.allclose(out_f32[b], ref, atol=1e-4, rtol=1e-4), b
    assert jnp.allclose(out_0[:, 0],
                        _reference(adj[0], x_in[0], idx[0], params, G)[:, 0],
                        atol=1e-4, rtol=1e-4)
    # bf16 operands: same result within bf16 rounding of the exact-path output.
    assert jnp.allclose(out_bf16, out_f32, atol=1e-1, rtol=1e-1)

    print("KERNEL_OK")
</pallas_src>

<mosaic_0001>
module attributes {stable_mosaic.version = 11 : i64} {
  func.func @_gnn_kernel(%arg0: i32, %arg1: memref<8x16x16xbf16, #tpu.memory_space<vmem>>, %arg2: memref<128x8xf32, #tpu.memory_space<vmem>>, %arg3: memref<128x1xi32, #tpu.memory_space<vmem>>, %arg4: memref<16x32xf32, #tpu.memory_space<vmem>>, %arg5: memref<3x32xf32, #tpu.memory_space<vmem>>, %arg6: memref<64x32xf32, #tpu.memory_space<vmem>>, %arg7: memref<3x32xf32, #tpu.memory_space<vmem>>, %arg8: memref<72x1xf32, #tpu.memory_space<vmem>>, %arg9: memref<1x1xf32, #tpu.memory_space<vmem>>, %arg10: memref<8x4xf32, #tpu.memory_space<vmem>>) attributes {dimension_semantics = [#tpu.dimension_semantics<parallel>], iteration_bounds = array<i64: 2>, scalar_prefetch = 0 : i64, scratch_operands = 0 : i64, tpu.core_type = #tpu.core_type<tc>, window_params = [{transform_indices = @transform_0, window_bounds = array<i64: 8, 16, 16>}, {transform_indices = @transform_1, window_bounds = array<i64: 128, 8>}, {transform_indices = @transform_2, window_bounds = array<i64: 128, 1>}, {pipeline_mode = #tpu.pipeline_mode<synchronous>, transform_indices = @transform_3, window_bounds = array<i64: 16, 32>}, {pipeline_mode = #tpu.pipeline_mode<synchronous>, transform_indices = @transform_4, window_bounds = array<i64: 3, 32>}, {pipeline_mode = #tpu.pipeline_mode<synchronous>, transform_indices = @transform_5, window_bounds = array<i64: 64, 32>}, {pipeline_mode = #tpu.pipeline_mode<synchronous>, transform_indices = @transform_6, window_bounds = array<i64: 3, 32>}, {pipeline_mode = #tpu.pipeline_mode<synchronous>, transform_indices = @transform_7, window_bounds = array<i64: 72, 1>}, {pipeline_mode = #tpu.pipeline_mode<synchronous>, transform_indices = @transform_8, window_bounds = array<i64: 1, 1>}, {transform_indices = @transform_9, window_bounds = array<i64: 8, 4>}]} {
    %c0 = arith.constant 0 : index
    %c0_0 = arith.constant 0 : index
    %c0_1 = arith.constant 0 : index
    %0 = vector.load %arg1[%c0, %c0_0, %c0_1] : memref<8x16x16xbf16, #tpu.memory_space<vmem>>, vector<8x16x16xbf16>
    %c0_2 = arith.constant 0 : index
    %c0_3 = arith.constant 0 : index
    %1 = vector.load %arg2[%c0_2, %c0_3] : memref<128x8xf32, #tpu.memory_space<vmem>>, vector<128x8xf32>
    %c0_4 = arith.constant 0 : index
    %c0_5 = arith.constant 0 : index
    %2 = vector.load %arg3[%c0_4, %c0_5] : memref<128x1xi32, #tpu.memory_space<vmem>>, vector<128x1xi32>
    %c0_6 = arith.constant 0 : index
    %c0_7 = arith.constant 0 : index
    %3 = vector.load %arg4[%c0_6, %c0_7] : memref<16x32xf32, #tpu.memory_space<vmem>>, vector<16x32xf32>
    %c0_8 = arith.constant 0 : index
    %c0_9 = arith.constant 0 : index
    %4 = vector.load %arg5[%c0_8, %c0_9] : memref<3x32xf32, #tpu.memory_space<vmem>>, vector<3x32xf32>
    %c0_10 = arith.constant 0 : index
    %c0_11 = arith.constant 0 : index
    %5 = vector.load %arg6[%c0_10, %c0_11] : memref<64x32xf32, #tpu.memory_space<vmem>>, vector<64x32xf32>
    %c0_12 = arith.constant 0 : index
    %c0_13 = arith.constant 0 : index
    %6 = vector.load %arg7[%c0_12, %c0_13] : memref<3x32xf32, #tpu.memory_space<vmem>>, vector<3x32xf32>
    %c0_14 = arith.constant 0 : index
    %c0_15 = arith.constant 0 : index
    %7 = vector.load %arg8[%c0_14, %c0_15] : memref<72x1xf32, #tpu.memory_space<vmem>>, vector<72x1xf32>
    %c0_16 = arith.constant 0 : index
    %c0_17 = arith.constant 0 : index
    %8 = vector.load %arg9[%c0_16, %c0_17] : memref<1x1xf32, #tpu.memory_space<vmem>>, vector<1x1xf32>
    %9 = vector.extract_strided_slice %3 {offsets = [0, 0], sizes = [8, 32], strides = [1, 1]} : vector<16x32xf32> to vector<8x32xf32>
    %cst = arith.constant dense<0.000000e+00> : vector<128x32xf32>
    %10 = tpu.matmul %1, %9, %cst {dimension_numbers = #tpu.dot_dimension_numbers<[1], [0], [0], [1], [0, 0, 1, 1], [], []>} : vector<128x8xf32>, vector<8x32xf32>, vector<128x32xf32> -> vector<128x32xf32>
    %11 = vector.shape_cast %1 : vector<128x8xf32> to vector<8x16x8xf32>
    %12 = arith.extf %0 : vector<8x16x16xbf16> to vector<8x16x16xf32>
    "tpu.trace_start"() <{level = 10 : i32, message = "bij,bjf->bif"}> : () -> ()
    %cst_18 = arith.constant dense<0.000000e+00> : vector<8x16x8xf32>
    %13 = tpu.matmul %12, %11, %cst_18 {dimension_numbers = #tpu.dot_dimension_numbers<[2], [1], [1], [2], [0, 0, 0, 1, 1, 2], [0], [0]>} : vector<8x16x16xf32>, vector<8x16x8xf32>, vector<8x16x8xf32> -> vector<8x16x8xf32>
    "tpu.trace_stop"() : () -> ()
    %14 = vector.shape_cast %13 : vector<8x16x8xf32> to vector<128x8xf32>
    %15 = vector.extract_strided_slice %3 {offsets = [8, 0], sizes = [8, 32], strides = [1, 1]} : vector<16x32xf32> to vector<8x32xf32>
    %cst_19 = arith.constant dense<0.000000e+00> : vector<128x32xf32>
    %16 = tpu.matmul %14, %15, %cst_19 {dimension_numbers = #tpu.dot_dimension_numbers<[1], [0], [0], [1], [0, 0, 1, 1], [], []>} : vector<128x8xf32>, vector<8x32xf32>, vector<128x32xf32> -> vector<128x32xf32>
    %17 = arith.addf %10, %16 : vector<128x32xf32>
    %18 = vector.extract_strided_slice %4 {offsets = [0, 0], sizes = [1, 32], strides = [1, 1]} : vector<3x32xf32> to vector<1x32xf32>
    %19 = vector.broadcast %18 : vector<1x32xf32> to vector<128x32xf32>
    %20 = arith.addf %17, %19 : vector<128x32xf32>
    %cst_20 = arith.constant 0.000000e+00 : f32
    %21 = vector.broadcast %cst_20 : f32 to vector<128x32xf32>
    %22 = arith.maximumf %20, %21 : vector<128x32xf32>
    %23 = vector.shape_cast %22 : vector<128x32xf32> to vector<8x16x32xf32>
    %cst_21 = arith.constant dense<0.000000e+00> : vector<8x32xf32>
    %24 = vector.multi_reduction <add>, %23, %cst_21 [1] : vector<8x16x32xf32> to vector<8x32xf32>
    %25 = vector.shape_cast %24 : vector<8x32xf32> to vector<8x1x32xf32>
    %cst_22 = arith.constant 1.600000e+01 : f32
    %26 = vector.broadcast %cst_22 : f32 to vector<8x1x32xf32>
    %27 = arith.divf %25, %26 : vector<8x1x32xf32>
    %28 = vector.broadcast %27 : vector<8x1x32xf32> to vector<8x16x32xf32>
    %29 = arith.subf %23, %28 : vector<8x16x32xf32>
    %30 = arith.mulf %29, %29 : vector<8x16x32xf32>
    %cst_23 = arith.constant dense<0.000000e+00> : vector<8x32xf32>
    %31 = vector.multi_reduction <add>, %30, %cst_23 [1] : vector<8x16x32xf32> to vector<8x32xf32>
    %32 = vector.shape_cast %31 : vector<8x32xf32> to vector<8x1x32xf32>
    %cst_24 = arith.constant 1.600000e+01 : f32
    %33 = vector.broadcast %cst_24 : f32 to vector<8x1x32xf32>
    %34 = arith.divf %32, %33 : vector<8x1x32xf32>
    %35 = vector.extract_strided_slice %4 {offsets = [1, 0], sizes = [1, 32], strides = [1, 1]} : vector<3x32xf32> to vector<1x32xf32>
    %cst_25 = arith.constant 9.99999974E-6 : f32
    %36 = vector.broadcast %cst_25 : f32 to vector<8x1x32xf32>
    %37 = arith.addf %34, %36 : vector<8x1x32xf32>
    %38 = math.rsqrt %37 : vector<8x1x32xf32>
    %39 = vector.shape_cast %35 : vector<1x32xf32> to vector<1x1x32xf32>
    %40 = vector.broadcast %39 : vector<1x1x32xf32> to vector<8x1x32xf32>
    %41 = arith.mulf %40, %38 : vector<8x1x32xf32>
    %42 = vector.extract_strided_slice %4 {offsets = [2, 0], sizes = [1, 32], strides = [1, 1]} : vector<3x32xf32> to vector<1x32xf32>
    %43 = arith.mulf %27, %41 : vector<8x1x32xf32>
    %44 = vector.shape_cast %42 : vector<1x32xf32> to vector<1x1x32xf32>
    %45 = vector.broadcast %44 : vector<1x1x32xf32> to vector<8x1x32xf32>
    %46 = arith.subf %45, %43 : vector<8x1x32xf32>
    %47 = vector.broadcast %41 : vector<8x1x32xf32> to vector<8x16x32xf32>
    %48 = arith.mulf %23, %47 : vector<8x16x32xf32>
    %49 = vector.broadcast %46 : vector<8x1x32xf32> to vector<8x16x32xf32>
    %50 = arith.addf %48, %49 : vector<8x16x32xf32>
    %51 = vector.shape_cast %50 : vector<8x16x32xf32> to vector<128x32xf32>
    %52 = vector.extract_strided_slice %5 {offsets = [0, 0], sizes = [32, 32], strides = [1, 1]} : vector<64x32xf32> to vector<32x32xf32>
    %cst_26 = arith.constant dense<0.000000e+00> : vector<128x32xf32>
    %53 = tpu.matmul %51, %52, %cst_26 {dimension_numbers = #tpu.dot_dimension_numbers<[1], [0], [0], [1], [0, 0, 1, 1], [], []>} : vector<128x32xf32>, vector<32x32xf32>, vector<128x32xf32> -> vector<128x32xf32>
    %54 = vector.shape_cast %51 : vector<128x32xf32> to vector<8x16x32xf32>
    %55 = arith.extf %0 : vector<8x16x16xbf16> to vector<8x16x16xf32>
    "tpu.trace_start"() <{level = 10 : i32, message = "bij,bjf->bif"}> : () -> ()
    %cst_27 = arith.constant dense<0.000000e+00> : vector<8x16x32xf32>
    %56 = tpu.matmul %55, %54, %cst_27 {dimension_numbers = #tpu.dot_dimension_numbers<[2], [1], [1], [2], [0, 0, 0, 1, 1, 2], [0], [0]>} : vector<8x16x16xf32>, vector<8x16x32xf32>, vector<8x16x32xf32> -> vector<8x16x32xf32>
    "tpu.trace_stop"() : () -> ()
    %57 = vector.shape_cast %56 : vector<8x16x32xf32> to vector<128x32xf32>
    %58 = vector.extract_strided_slice %5 {offsets = [32, 0], sizes = [32, 32], strides = [1, 1]} : vector<64x32xf32> to vector<32x32xf32>
    %cst_28 = arith.constant dense<0.000000e+00> : vector<128x32xf32>
    %59 = tpu.matmul %57, %58, %cst_28 {dimension_numbers = #tpu.dot_dimension_numbers<[1], [0], [0], [1], [0, 0, 1, 1], [], []>} : vector<128x32xf32>, vector<32x32xf32>, vector<128x32xf32> -> vector<128x32xf32>
    %60 = arith.addf %53, %59 : vector<128x32xf32>
    %61 = vector.extract_strided_slice %6 {offsets = [0, 0], sizes = [1, 32], strides = [1, 1]} : vector<3x32xf32> to vector<1x32xf32>
    %62 = vector.broadcast %61 : vector<1x32xf32> to vector<128x32xf32>
    %63 = arith.addf %60, %62 : vector<128x32xf32>
    %cst_29 = arith.constant 0.000000e+00 : f32
    %64 = vector.broadcast %cst_29 : f32 to vector<128x32xf32>
    %65 = arith.maximumf %63, %64 : vector<128x32xf32>
    %66 = vector.shape_cast %65 : vector<128x32xf32> to vector<8x16x32xf32>
    %cst_30 = arith.constant dense<0.000000e+00> : vector<8x32xf32>
    %67 = vector.multi_reduction <add>, %66, %cst_30 [1] : vector<8x16x32xf32> to vector<8x32xf32>
    %68 = vector.shape_cast %67 : vector<8x32xf32> to vector<8x1x32xf32>
    %cst_31 = arith.constant 1.600000e+01 : f32
    %69 = vector.broadcast %cst_31 : f32 to vector<8x1x32xf32>
    %70 = arith.divf %68, %69 : vector<8x1x32xf32>
    %71 = vector.broadcast %70 : vector<8x1x32xf32> to vector<8x16x32xf32>
    %72 = arith.subf %66, %71 : vector<8x16x32xf32>
    %73 = arith.mulf %72, %72 : vector<8x16x32xf32>
    %cst_32 = arith.constant dense<0.000000e+00> : vector<8x32xf32>
    %74 = vector.multi_reduction <add>, %73, %cst_32 [1] : vector<8x16x32xf32> to vector<8x32xf32>
    %75 = vector.shape_cast %74 : vector<8x32xf32> to vector<8x1x32xf32>
    %cst_33 = arith.constant 1.600000e+01 : f32
    %76 = vector.broadcast %cst_33 : f32 to vector<8x1x32xf32>
    %77 = arith.divf %75, %76 : vector<8x1x32xf32>
    %78 = vector.extract_strided_slice %6 {offsets = [1, 0], sizes = [1, 32], strides = [1, 1]} : vector<3x32xf32> to vector<1x32xf32>
    %cst_34 = arith.constant 9.99999974E-6 : f32
    %79 = vector.broadcast %cst_34 : f32 to vector<8x1x32xf32>
    %80 = arith.addf %77, %79 : vector<8x1x32xf32>
    %81 = math.rsqrt %80 : vector<8x1x32xf32>
    %82 = vector.shape_cast %78 : vector<1x32xf32> to vector<1x1x32xf32>
    %83 = vector.broadcast %82 : vector<1x1x32xf32> to vector<8x1x32xf32>
    %84 = arith.mulf %83, %81 : vector<8x1x32xf32>
    %85 = vector.extract_strided_slice %6 {offsets = [2, 0], sizes = [1, 32], strides = [1, 1]} : vector<3x32xf32> to vector<1x32xf32>
    %86 = arith.mulf %70, %84 : vector<8x1x32xf32>
    %87 = vector.shape_cast %85 : vector<1x32xf32> to vector<1x1x32xf32>
    %88 = vector.broadcast %87 : vector<1x1x32xf32> to vector<8x1x32xf32>
    %89 = arith.subf %88, %86 : vector<8x1x32xf32>
    %90 = vector.broadcast %84 : vector<8x1x32xf32> to vector<8x16x32xf32>
    %91 = arith.mulf %66, %90 : vector<8x16x32xf32>
    %92 = vector.broadcast %89 : vector<8x1x32xf32> to vector<8x16x32xf32>
    %93 = arith.addf %91, %92 : vector<8x16x32xf32>
    %94 = vector.shape_cast %93 : vector<8x16x32xf32> to vector<128x32xf32>
    %95 = vector.extract_strided_slice %7 {offsets = [0, 0], sizes = [8, 1], strides = [1, 1]} : vector<72x1xf32> to vector<8x1xf32>
    %cst_35 = arith.constant dense<0.000000e+00> : vector<128x1xf32>
    %96 = tpu.matmul %1, %95, %cst_35 {dimension_numbers = #tpu.dot_dimension_numbers<[1], [0], [0], [1], [0, 0, 1, 1], [], []>} : vector<128x8xf32>, vector<8x1xf32>, vector<128x1xf32> -> vector<128x1xf32>
    %97 = vector.extract_strided_slice %7 {offsets = [8, 0], sizes = [32, 1], strides = [1, 1]} : vector<72x1xf32> to vector<32x1xf32>
    %cst_36 = arith.constant dense<0.000000e+00> : vector<128x1xf32>
    %98 = tpu.matmul %51, %97, %cst_36 {dimension_numbers = #tpu.dot_dimension_numbers<[1], [0], [0], [1], [0, 0, 1, 1], [], []>} : vector<128x32xf32>, vector<32x1xf32>, vector<128x1xf32> -> vector<128x1xf32>
    %99 = arith.addf %96, %98 : vector<128x1xf32>
    %100 = vector.extract_strided_slice %7 {offsets = [40, 0], sizes = [32, 1], strides = [1, 1]} : vector<72x1xf32> to vector<32x1xf32>
    %cst_37 = arith.constant dense<0.000000e+00> : vector<128x1xf32>
    %101 = tpu.matmul %94, %100, %cst_37 {dimension_numbers = #tpu.dot_dimension_numbers<[1], [0], [0], [1], [0, 0, 1, 1], [], []>} : vector<128x32xf32>, vector<32x1xf32>, vector<128x1xf32> -> vector<128x1xf32>
    %102 = arith.addf %99, %101 : vector<128x1xf32>
    %103 = tpu.iota {dimensions = array<i32: 1>} : vector<128x4xi32>
    %104 = vector.broadcast %2 : vector<128x1xi32> to vector<128x4xi32>
    %105 = arith.cmpi eq, %104, %103 : vector<128x4xi32>
    %106 = arith.extui %105 : vector<128x4xi1> to vector<128x4xi32>
    %107 = arith.sitofp %106 : vector<128x4xi32> to vector<128x4xf32>
    %108 = vector.broadcast %102 : vector<128x1xf32> to vector<128x4xf32>
    %109 = arith.mulf %107, %108 : vector<128x4xf32>
    %110 = vector.shape_cast %109 : vector<128x4xf32> to vector<8x16x4xf32>
    %cst_38 = arith.constant dense<0.000000e+00> : vector<8x4xf32>
    %111 = vector.multi_reduction <add>, %110, %cst_38 [1] : vector<8x16x4xf32> to vector<8x4xf32>
    %112 = vector.broadcast %8 : vector<1x1xf32> to vector<8x4xf32>
    %113 = arith.addf %111, %112 : vector<8x4xf32>
    %cst_39 = arith.constant 0.000000e+00 : f32
    %114 = vector.broadcast %cst_39 : f32 to vector<8x4xf32>
    %115 = arith.maximumf %113, %114 : vector<8x4xf32>
    %c0_40 = arith.constant 0 : index
    %c0_41 = arith.constant 0 : index
    %116 = vector.load %arg10[%c0_40, %c0_41] : memref<8x4xf32, #tpu.memory_space<vmem>>, vector<8x4xf32>
    tpu.vector_store %arg10[%c0_40, %c0_41], %115 {strides = array<i32>} : memref<8x4xf32, #tpu.memory_space<vmem>>, vector<8x4xf32>,
    return
  }
  func.func @transform_0(%arg0: i32) -> (i32, i32, i32) {
    %c0_i32 = arith.constant 0 : i32
    %c0_i32_0 = arith.constant 0 : i32
    %c0_i32_1 = arith.constant 0 : i32
    return %arg0, %c0_i32, %c0_i32_0 : i32, i32, i32
  }
  func.func @transform_1(%arg0: i32) -> (i32, i32) {
    %c0_i32 = arith.constant 0 : i32
    %c0_i32_0 = arith.constant 0 : i32
    return %arg0, %c0_i32 : i32, i32
  }
  func.func @transform_2(%arg0: i32) -> (i32, i32) {
    %c0_i32 = arith.constant 0 : i32
    %c0_i32_0 = arith.constant 0 : i32
    return %arg0, %c0_i32 : i32, i32
  }
  func.func @transform_3(%arg0: i32) -> (i32, i32) {
    %c0_i32 = arith.constant 0 : i32
    %c0_i32_0 = arith.constant 0 : i32
    %c0_i32_1 = arith.constant 0 : i32
    return %c0_i32, %c0_i32_0 : i32, i32
  }
  func.func @transform_4(%arg0: i32) -> (i32, i32) {
    %c0_i32 = arith.constant 0 : i32
    %c0_i32_0 = arith.constant 0 : i32
    %c0_i32_1 = arith.constant 0 : i32
    return %c0_i32, %c0_i32_0 : i32, i32
  }
  func.func @transform_5(%arg0: i32) -> (i32, i32) {
    %c0_i32 = arith.constant 0 : i32
    %c0_i32_0 = arith.constant 0 : i32
    %c0_i32_1 = arith.constant 0 : i32
    return %c0_i32, %c0_i32_0 : i32, i32
  }
  func.func @transform_6(%arg0: i32) -> (i32, i32) {
    %c0_i32 = arith.constant 0 : i32
    %c0_i32_0 = arith.constant 0 : i32
    %c0_i32_1 = arith.constant 0 : i32
    return %c0_i32, %c0_i32_0 : i32, i32
  }
  func.func @transform_7(%arg0: i32) -> (i32, i32) {
    %c0_i32 = arith.constant 0 : i32
    %c0_i32_0 = arith.constant 0 : i32
    %c0_i32_1 = arith.constant 0 : i32
    return %c0_i32, %c0_i32_0 : i32, i32
  }
  func.func @transform_8(%arg0: i32) -> (i32, i32) {
    %c0_i32 = arith.constant 0 : i32
    %c0_i32_0 = arith.constant 0 : i32
    %c0_i32_1 = arith.constant 0 : i32
    return %c0_i32, %c0_i32_0 : i32, i32
  }
  func.func @transform_9(%arg0: i32) -> (i32, i32) {
    %c0_i32 = arith.constant 0 : i32
    %c0_i32_0 = arith.constant 0 : i32
    return %arg0, %c0_i32 : i32, i32
  }
}

module attributes {stable_mosaic.version = 11 : i64} {
  func.func @_gnn_kernel(%arg0: i32, %arg1: memref<8x16x16xbf16, #tpu.memory_space<vmem>>, %arg2: memref<128x8xf32, #tpu.memory_space<vmem>>, %arg3: memref<128x1xi32, #tpu.memory_space<vmem>>, %arg4: memref<16x32xf32, #tpu.memory_space<vmem>>, %arg5: memref<3x32xf32, #tpu.memory_space<vmem>>, %arg6: memref<64x32xf32, #tpu.memory_space<vmem>>, %arg7: memref<3x32xf32, #tpu.memory_space<vmem>>, %arg8: memref<72x1xf32, #tpu.memory_space<vmem>>, %arg9: memref<1x1xf32, #tpu.memory_space<vmem>>, %arg10: memref<8x4xf32, #tpu.memory_space<vmem>>) attributes {dimension_semantics = [#tpu.dimension_semantics<parallel>], iteration_bounds = array<i64: 2>, scalar_prefetch = 0 : i64, scratch_operands = 0 : i64, tpu.core_type = #tpu.core_type<tc>, window_params = [{transform_indices = @transform_0, window_bounds = array<i64: 8, 16, 16>}, {transform_indices = @transform_1, window_bounds = array<i64: 128, 8>}, {transform_indices = @transform_2, window_bounds = array<i64: 128, 1>}, {pipeline_mode = #tpu.pipeline_mode<synchronous>, transform_indices = @transform_3, window_bounds = array<i64: 16, 32>}, {pipeline_mode = #tpu.pipeline_mode<synchronous>, transform_indices = @transform_4, window_bounds = array<i64: 3, 32>}, {pipeline_mode = #tpu.pipeline_mode<synchronous>, transform_indices = @transform_5, window_bounds = array<i64: 64, 32>}, {pipeline_mode = #tpu.pipeline_mode<synchronous>, transform_indices = @transform_6, window_bounds = array<i64: 3, 32>}, {pipeline_mode = #tpu.pipeline_mode<synchronous>, transform_indices = @transform_7, window_bounds = array<i64: 72, 1>}, {pipeline_mode = #tpu.pipeline_mode<synchronous>, transform_indices = @transform_8, window_bounds = array<i64: 1, 1>}, {transform_indices = @transform_9, window_bounds = array<i64: 8, 4>}]} {
    %c0 = arith.constant 0 : index
    %c0_0 = arith.constant 0 : index
    %c0_1 = arith.constant 0 : index
    %0 = vector.load %arg1[%c0, %c0_0, %c0_1] : memref<8x16x16xbf16, #tpu.memory_space<vmem>>, vector<8x16x16xbf16>
    %c0_2 = arith.constant 0 : index
    %c0_3 = arith.constant 0 : index
    %1 = vector.load %arg2[%c0_2, %c0_3] : memref<128x8xf32, #tpu.memory_space<vmem>>, vector<128x8xf32>
    %c0_4 = arith.constant 0 : index
    %c0_5 = arith.constant 0 : index
    %2 = vector.load %arg3[%c0_4, %c0_5] : memref<128x1xi32, #tpu.memory_space<vmem>>, vector<128x1xi32>
    %c0_6 = arith.constant 0 : index
    %c0_7 = arith.constant 0 : index
    %3 = vector.load %arg4[%c0_6, %c0_7] : memref<16x32xf32, #tpu.memory_space<vmem>>, vector<16x32xf32>
    %c0_8 = arith.constant 0 : index
    %c0_9 = arith.constant 0 : index
    %4 = vector.load %arg5[%c0_8, %c0_9] : memref<3x32xf32, #tpu.memory_space<vmem>>, vector<3x32xf32>
    %c0_10 = arith.constant 0 : index
    %c0_11 = arith.constant 0 : index
    %5 = vector.load %arg6[%c0_10, %c0_11] : memref<64x32xf32, #tpu.memory_space<vmem>>, vector<64x32xf32>
    %c0_12 = arith.constant 0 : index
    %c0_13 = arith.constant 0 : index
    %6 = vector.load %arg7[%c0_12, %c0_13] : memref<3x32xf32, #tpu.memory_space<vmem>>, vector<3x32xf32>
    %c0_14 = arith.constant 0 : index
    %c0_15 = arith.constant 0 : index
    %7 = vector.load %arg8[%c0_14, %c0_15] : memref<72x1xf32, #tpu.memory_space<vmem>>, vector<72x1xf32>
    %c0_16 = arith.constant 0 : index
    %c0_17 = arith.constant 0 : index
    %8 = vector.load %arg9[%c0_16, %c0_17] : memref<1x1xf32, #tpu.memory_space<vmem>>, vector<1x1xf32>
    %9 = vector.extract_strided_slice %3 {offsets = [0, 0], sizes = [8, 32], strides = [1, 1]} : vector<16x32xf32> to vector<8x32xf32>
    %cst = arith.constant dense<0.000000e+00> : vector<128x32xf32>
    %10 = tpu.matmul %1, %9, %cst {dimension_numbers = #tpu.dot_dimension_numbers<[1], [0], [0], [1], [0, 0, 1, 1], [], []>} : vector<128x8xf32>, vector<8x32xf32>, vector<128x32xf32> -> vector<128x32xf32>
    %11 = vector.shape_cast %1 : vector<128x8xf32> to vector<8x16x8xf32>
    %12 = arith.extf %0 : vector<8x16x16xbf16> to vector<8x16x16xf32>
    "tpu.trace_start"() <{level = 10 : i32, message = "bij,bjf->bif"}> : () -> ()
    %cst_18 = arith.constant dense<0.000000e+00> : vector<8x16x8xf32>
    %13 = tpu.matmul %12, %11, %cst_18 {dimension_numbers = #tpu.dot_dimension_numbers<[2], [1], [1], [2], [0, 0, 0, 1, 1, 2], [0], [0]>} : vector<8x16x16xf32>, vector<8x16x8xf32>, vector<8x16x8xf32> -> vector<8x16x8xf32>
    "tpu.trace_stop"() : () -> ()
    %14 = vector.shape_cast %13 : vector<8x16x8xf32> to vector<128x8xf32>
    %15 = vector.extract_strided_slice %3 {offsets = [8, 0], sizes = [8, 32], strides = [1, 1]} : vector<16x32xf32> to vector<8x32xf32>
    %cst_19 = arith.constant dense<0.000000e+00> : vector<128x32xf32>
    %16 = tpu.matmul %14, %15, %cst_19 {dimension_numbers = #tpu.dot_dimension_numbers<[1], [0], [0], [1], [0, 0, 1, 1], [], []>} : vector<128x8xf32>, vector<8x32xf32>, vector<128x32xf32> -> vector<128x32xf32>
    %17 = arith.addf %10, %16 : vector<128x32xf32>
    %18 = vector.extract_strided_slice %4 {offsets = [0, 0], sizes = [1, 32], strides = [1, 1]} : vector<3x32xf32> to vector<1x32xf32>
    %19 = vector.broadcast %18 : vector<1x32xf32> to vector<128x32xf32>
    %20 = arith.addf %17, %19 : vector<128x32xf32>
    %cst_20 = arith.constant 0.000000e+00 : f32
    %21 = vector.broadcast %cst_20 : f32 to vector<128x32xf32>
    %22 = arith.maximumf %20, %21 : vector<128x32xf32>
    %23 = vector.shape_cast %22 : vector<128x32xf32> to vector<8x16x32xf32>
    %cst_21 = arith.constant dense<0.000000e+00> : vector<8x32xf32>
    %24 = vector.multi_reduction <add>, %23, %cst_21 [1] : vector<8x16x32xf32> to vector<8x32xf32>
    %25 = vector.shape_cast %24 : vector<8x32xf32> to vector<8x1x32xf32>
    %cst_22 = arith.constant 1.600000e+01 : f32
    %26 = vector.broadcast %cst_22 : f32 to vector<8x1x32xf32>
    %27 = arith.divf %25, %26 : vector<8x1x32xf32>
    %28 = vector.broadcast %27 : vector<8x1x32xf32> to vector<8x16x32xf32>
    %29 = arith.subf %23, %28 : vector<8x16x32xf32>
    %30 = arith.mulf %29, %29 : vector<8x16x32xf32>
    %cst_23 = arith.constant dense<0.000000e+00> : vector<8x32xf32>
    %31 = vector.multi_reduction <add>, %30, %cst_23 [1] : vector<8x16x32xf32> to vector<8x32xf32>
    %32 = vector.shape_cast %31 : vector<8x32xf32> to vector<8x1x32xf32>
    %cst_24 = arith.constant 1.600000e+01 : f32
    %33 = vector.broadcast %cst_24 : f32 to vector<8x1x32xf32>
    %34 = arith.divf %32, %33 : vector<8x1x32xf32>
    %35 = vector.extract_strided_slice %4 {offsets = [1, 0], sizes = [1, 32], strides = [1, 1]} : vector<3x32xf32> to vector<1x32xf32>
    %cst_25 = arith.constant 9.99999974E-6 : f32
    %36 = vector.broadcast %cst_25 : f32 to vector<8x1x32xf32>
    %37 = arith.addf %34, %36 : vector<8x1x32xf32>
    %38 = math.rsqrt %37 : vector<8x1x32xf32>
    %39 = vector.shape_cast %35 : vector<1x32xf32> to vector<1x1x32xf32>
    %40 = vector.broadcast %39 : vector<1x1x32xf32> to vector<8x1x32xf32>
    %41 = arith.mulf %40, %38 : vector<8x1x32xf32>
    %42 = vector.extract_strided_slice %4 {offsets = [2, 0], sizes = [1, 32], strides = [1, 1]} : vector<3x32xf32> to vector<1x32xf32>
    %43 = arith.mulf %27, %41 : vector<8x1x32xf32>
    %44 = vector.shape_cast %42 : vector<1x32xf32> to vector<1x1x32xf32>
    %45 = vector.broadcast %44 : vector<1x1x32xf32> to vector<8x1x32xf32>
    %46 = arith.subf %45, %43 : vector<8x1x32xf32>
    %47 = vector.broadcast %41 : vector<8x1x32xf32> to vector<8x16x32xf32>
    %48 = arith.mulf %23, %47 : vector<8x16x32xf32>
    %49 = vector.broadcast %46 : vector<8x1x32xf32> to vector<8x16x32xf32>
    %50 = arith.addf %48, %49 : vector<8x16x32xf32>
    %51 = vector.shape_cast %50 : vector<8x16x32xf32> to vector<128x32xf32>
    %52 = vector.extract_strided_slice %5 {offsets = [0, 0], sizes = [32, 32], strides = [1, 1]} : vector<64x32xf32> to vector<32x32xf32>
    %cst_26 = arith.constant dense<0.000000e+00> : vector<128x32xf32>
    %53 = tpu.matmul %51, %52, %cst_26 {dimension_numbers = #tpu.dot_dimension_numbers<[1], [0], [0], [1], [0, 0, 1, 1], [], []>} : vector<128x32xf32>, vector<32x32xf32>, vector<128x32xf32> -> vector<128x32xf32>
    %54 = vector.shape_cast %51 : vector<128x32xf32> to vector<8x16x32xf32>
    %55 = arith.extf %0 : vector<8x16x16xbf16> to vector<8x16x16xf32>
    "tpu.trace_start"() <{level = 10 : i32, message = "bij,bjf->bif"}> : () -> ()
    %cst_27 = arith.constant dense<0.000000e+00> : vector<8x16x32xf32>
    %56 = tpu.matmul %55, %54, %cst_27 {dimension_numbers = #tpu.dot_dimension_numbers<[2], [1], [1], [2], [0, 0, 0, 1, 1, 2], [0], [0]>} : vector<8x16x16xf32>, vector<8x16x32xf32>, vector<8x16x32xf32> -> vector<8x16x32xf32>
    "tpu.trace_stop"() : () -> ()
    %57 = vector.shape_cast %56 : vector<8x16x32xf32> to vector<128x32xf32>
    %58 = vector.extract_strided_slice %5 {offsets = [32, 0], sizes = [32, 32], strides = [1, 1]} : vector<64x32xf32> to vector<32x32xf32>
    %cst_28 = arith.constant dense<0.000000e+00> : vector<128x32xf32>
    %59 = tpu.matmul %57, %58, %cst_28 {dimension_numbers = #tpu.dot_dimension_numbers<[1], [0], [0], [1], [0, 0, 1, 1], [], []>} : vector<128x32xf32>, vector<32x32xf32>, vector<128x32xf32> -> vector<128x32xf32>
    %60 = arith.addf %53, %59 : vector<128x32xf32>
    %61 = vector.extract_strided_slice %6 {offsets = [0, 0], sizes = [1, 32], strides = [1, 1]} : vector<3x32xf32> to vector<1x32xf32>
    %62 = vector.broadcast %61 : vector<1x32xf32> to vector<128x32xf32>
    %63 = arith.addf %60, %62 : vector<128x32xf32>
    %cst_29 = arith.constant 0.000000e+00 : f32
    %64 = vector.broadcast %cst_29 : f32 to vector<128x32xf32>
    %65 = arith.maximumf %63, %64 : vector<128x32xf32>
    %66 = vector.shape_cast %65 : vector<128x32xf32> to vector<8x16x32xf32>
    %cst_30 = arith.constant dense<0.000000e+00> : vector<8x32xf32>
    %67 = vector.multi_reduction <add>, %66, %cst_30 [1] : vector<8x16x32xf32> to vector<8x32xf32>
    %68 = vector.shape_cast %67 : vector<8x32xf32> to vector<8x1x32xf32>
    %cst_31 = arith.constant 1.600000e+01 : f32
    %69 = vector.broadcast %cst_31 : f32 to vector<8x1x32xf32>
    %70 = arith.divf %68, %69 : vector<8x1x32xf32>
    %71 = vector.broadcast %70 : vector<8x1x32xf32> to vector<8x16x32xf32>
    %72 = arith.subf %66, %71 : vector<8x16x32xf32>
    %73 = arith.mulf %72, %72 : vector<8x16x32xf32>
    %cst_32 = arith.constant dense<0.000000e+00> : vector<8x32xf32>
    %74 = vector.multi_reduction <add>, %73, %cst_32 [1] : vector<8x16x32xf32> to vector<8x32xf32>
    %75 = vector.shape_cast %74 : vector<8x32xf32> to vector<8x1x32xf32>
    %cst_33 = arith.constant 1.600000e+01 : f32
    %76 = vector.broadcast %cst_33 : f32 to vector<8x1x32xf32>
    %77 = arith.divf %75, %76 : vector<8x1x32xf32>
    %78 = vector.extract_strided_slice %6 {offsets = [1, 0], sizes = [1, 32], strides = [1, 1]} : vector<3x32xf32> to vector<1x32xf32>
    %cst_34 = arith.constant 9.99999974E-6 : f32
    %79 = vector.broadcast %cst_34 : f32 to vector<8x1x32xf32>
    %80 = arith.addf %77, %79 : vector<8x1x32xf32>
    %81 = math.rsqrt %80 : vector<8x1x32xf32>
    %82 = vector.shape_cast %78 : vector<1x32xf32> to vector<1x1x32xf32>
    %83 = vector.broadcast %82 : vector<1x1x32xf32> to vector<8x1x32xf32>
    %84 = arith.mulf %83, %81 : vector<8x1x32xf32>
    %85 = vector.extract_strided_slice %6 {offsets = [2, 0], sizes = [1, 32], strides = [1, 1]} : vector<3x32xf32> to vector<1x32xf32>
    %86 = arith.mulf %70, %84 : vector<8x1x32xf32>
    %87 = vector.shape_cast %85 : vector<1x32xf32> to vector<1x1x32xf32>
    %88 = vector.broadcast %87 : vector<1x1x32xf32> to vector<8x1x32xf32>
    %89 = arith.subf %88, %86 : vector<8x1x32xf32>
    %90 = vector.broadcast %84 : vector<8x1x32xf32> to vector<8x16x32xf32>
    %91 = arith.mulf %66, %90 : vector<8x16x32xf32>
    %92 = vector.broadcast %89 : vector<8x1x32xf32> to vector<8x16x32xf32>
    %93 = arith.addf %91, %92 : vector<8x16x32xf32>
    %94 = vector.shape_cast %93 : vector<8x16x32xf32> to vector<128x32xf32>
    %95 = vector.extract_strided_slice %7 {offsets = [0, 0], sizes = [8, 1], strides = [1, 1]} : vector<72x1xf32> to vector<8x1xf32>
    %cst_35 = arith.constant dense<0.000000e+00> : vector<128x1xf32>
    %96 = tpu.matmul %1, %95, %cst_35 {dimension_numbers = #tpu.dot_dimension_numbers<[1], [0], [0], [1], [0, 0, 1, 1], [], []>} : vector<128x8xf32>, vector<8x1xf32>, vector<128x1xf32> -> vector<128x1xf32>
    %97 = vector.extract_strided_slice %7 {offsets = [8, 0], sizes = [32, 1], strides = [1, 1]} : vector<72x1xf32> to vector<32x1xf32>
    %cst_36 = arith.constant dense<0.000000e+00> : vector<128x1xf32>
    %98 = tpu.matmul %51, %97, %cst_36 {dimension_numbers = #tpu.dot_dimension_numbers<[1], [0], [0], [1], [0, 0, 1, 1], [], []>} : vector<128x32xf32>, vector<32x1xf32>, vector<128x1xf32> -> vector<128x1xf32>
    %99 = arith.addf %96, %98 : vector<128x1xf32>
    %100 = vector.extract_strided_slice %7 {offsets = [40, 0], sizes = [32, 1], strides = [1, 1]} : vector<72x1xf32> to vector<32x1xf32>
    %cst_37 = arith.constant dense<0.000000e+00> : vector<128x1xf32>
    %101 = tpu.matmul %94, %100, %cst_37 {dimension_numbers = #tpu.dot_dimension_numbers<[1], [0], [0], [1], [0, 0, 1, 1], [], []>} : vector<128x32xf32>, vector<32x1xf32>, vector<128x1xf32> -> vector<128x1xf32>
    %102 = arith.addf %99, %101 : vector<128x1xf32>
    %103 = tpu.iota {dimensions = array<i32: 1>} : vector<128x4xi32>
    %104 = vector.broadcast %2 : vector<128x1xi32> to vector<128x4xi32>
    %105 = arith.cmpi eq, %104, %103 : vector<128x4xi32>
    %106 = arith.extui %105 : vector<128x4xi1> to vector<128x4xi32>
    %107 = arith.sitofp %106 : vector<128x4xi32> to vector<128x4xf32>
    %108 = vector.broadcast %102 : vector<128x1xf32> to vector<128x4xf32>
    %109 = arith.mulf %107, %108 : vector<128x4xf32>
    %110 = vector.shape_cast %109 : vector<128x4xf32> to vector<8x16x4xf32>
    %cst_38 = arith.constant dense<0.000000e+00> : vector<8x4xf32>
    %111 = vector.multi_reduction <add>, %110, %cst_38 [1] : vector<8x16x4xf32> to vector<8x4xf32>
    %112 = vector.broadcast %8 : vector<1x1xf32> to vector<8x4xf32>
    %113 = arith.addf %111, %112 : vector<8x4xf32>
    %cst_39 = arith.constant 0.000000e+00 : f32
    %114 = vector.broadcast %cst_39 : f32 to vector<8x4xf32>
    %115 = arith.maximumf %113, %114 : vector<8x4xf32>
    %c0_40 = arith.constant 0 : index
    %c0_41 = arith.constant 0 : index
    %116 = vector.load %arg10[%c0_40, %c0_41] : memref<8x4xf32, #tpu.memory_space<vmem>>, vector<8x4xf32>
    tpu.vector_store %arg10[%c0_40, %c0_41], %115 {strides = array<i32>} : memref<8x4xf32, #tpu.memory_space<vmem>>, vector<8x4xf32>,
    return
  }
  func.func @transform_0(%arg0: i32) -> (i32, i32, i32) {
    %c0_i32 = arith.constant 0 : i32
    %c0_i32_0 = arith.constant 0 : i32
    %c0_i32_1 = arith.constant 0 : i32
    return %arg0, %c0_i32, %c0_i32_0 : i32, i32, i32
  }
  func.func @transform_1(%arg0: i32) -> (i32, i32) {
    %c0_i32 = arith.constant 0 : i32
    %c0_i32_0 = arith.constant 0 : i32
    return %arg0, %c0_i32 : i32, i32
  }
  func.func @transform_2(%arg0: i32) -> (i32, i32) {
    %c0_i32 = arith.constant 0 : i32
    %c0_i32_0 = arith.constant 0 : i32
    return %arg0, %c0_i32 : i32, i32
  }
  func.func @transform_3(%arg0: i32) -> (i32, i32) {
    %c0_i32 = arith.constant 0 : i32
    %c0_i32_0 = arith.constant 0 : i32
    %c0_i32_1 = arith.constant 0 : i32
    return %c0_i32, %c0_i32_0 : i32, i32
  }
  func.func @transform_4(%arg0: i32) -> (i32, i32) {
    %c0_i32 = arith.constant 0 : i32
    %c0_i32_0 = arith.constant 0 : i32
    %c0_i32_1 = arith.constant 0 : i32
    return %c0_i32, %c0_i32_0 : i32, i32
  }
  func.func @transform_5(%arg0: i32) -> (i32, i32) {
    %c0_i32 = arith.constant 0 : i32
    %c0_i32_0 = arith.constant 0 : i32
    %c0_i32_1 = arith.constant 0 : i32
    return %c0_i32, %c0_i32_0 : i32, i32
  }
  func.func @transform_6(%arg0: i32) -> (i32, i32) {
    %c0_i32 = arith.constant 0 : i32
    %c0_i32_0 = arith.constant 0 : i32
    %c0_i32_1 = arith.constant 0 : i32
    return %c0_i32, %c0_i32_0 : i32, i32
  }
  func.func @transform_7(%arg0: i32) -> (i32, i32) {
    %c0_i32 = arith.constant 0 : i32
    %c0_i32_0 = arith.constant 0 : i32
    %c0_i32_1 = arith.constant 0 : i32
    return %c0_i32, %c0_i32_0 : i32, i32
  }
  func.func @transform_8(%arg0: i32) -> (i32, i32) {
    %c0_i32 = arith.constant 0 : i32
    %c0_i32_0 = arith.constant 0 : i32
    %c0_i32_1 = arith.constant 0 : i32
    return %c0_i32, %c0_i32_0 : i32, i32
  }
  func.func @transform_9(%arg0: i32) -> (i32, i32) {
    %c0_i32 = arith.constant 0 : i32
    %c0_i32_0 = arith.constant 0 : i32
    return %arg0, %c0_i32 : i32, i32
  }
}

</mosaic_0001>

<llo_original>
// kernel: tpu_custom_call.1
$region0: #{tpu_custom_call.1}
  #allocation0 [shape = 'u32[]', space=smem, size = 0x4, offset = 0x4, fixed_abs, tag = 'smem constant byte address 0x4 - core index']
  #allocation1 [shape = 'u32[144,128]{1,0:T(1,128)}', space=vmem, size = 0x12000, scoped, tag = 'internal scratch']
  #allocation2 [shape = 'f32[1,1]{1,0:T(1,128)S(1)}', space=vmem, size = 0x200, scoped, tag = 'scoped memory for tpu_custom_call.1']
  %s0 = inlined_call_operand.vmem [shape: bf16[16,16,16], index: 0, kind: input, shape index: {}]
  %s1 = inlined_call_operand.vmem [shape: f32[256,8], index: 1, kind: input, shape index: {}]
  %s2 = inlined_call_operand.vmem [shape: s32[256,1], index: 2, kind: input, shape index: {}]
  %s3 = inlined_call_operand.vmem [shape: f32[16,32], index: 3, kind: input, shape index: {}]
  %s4 = inlined_call_operand.vmem [shape: f32[3,32], index: 4, kind: input, shape index: {}]
  %s5 = inlined_call_operand.vmem [shape: f32[64,32], index: 5, kind: input, shape index: {}]
  %s6 = inlined_call_operand.vmem [shape: f32[3,32], index: 6, kind: input, shape index: {}]
  %s7 = inlined_call_operand.vmem [shape: f32[72,1], index: 7, kind: input, shape index: {}]
  %s8 = inlined_call_operand.<no memory space> [shape: f32[1,1], index: 8, kind: input, shape index: {}]
  %s9 = inlined_call_operand.vmem [shape: f32[16,4], index: 9, kind: output, shape index: {}]
  %s10 = sld [smem:[#allocation0]]
  $region69: #{tpu_custom_call.1} parent=0
    _
  %s12 = ssub.s32 1, %s10
  %s13 = scalar_select 0, %s12, %s10
  %v14 = vstv %s8
  %15 = vst [vmem:[#allocation2] sm:$0x1] %v14
  loop: start=0, step=1, limit=4
  $region2: #{tpu_custom_call.1} parent=0 // loop_pre_header
    _
  $region3: #{tpu_custom_call.1} parent=0 // loop_header
    %s17 = sphi 0, %s21
    %p18 = scmp.ge.s32.totalorder %s17, 4
    %s27 = sphi 0, %s29
    %s30 = sphi 0, %s27
    %s31 = sphi 0, %s30
    %s47 = sphi 0, %s31
    %s53 = sphi 0, %s55
    %s56 = sphi 0, %s53
    %s57 = sphi 0, %s56
    %s73 = sphi 0, %s57
    %s79 = sphi 0, %s81
    %s82 = sphi 0, %s79
    %s83 = sphi 0, %s82
    %s99 = sphi 0, %s83
    %s103 = sphi 0, %s103
    %s105 = sphi 0, %s103
    %s106 = sphi 0, %s105
    %s120 = sphi 0, %s106
    %s124 = sphi 0, %s124
    %s126 = sphi 0, %s124
    %s127 = sphi 0, %s126
    %s141 = sphi 0, %s127
    %s145 = sphi 0, %s145
    %s147 = sphi 0, %s145
    %s148 = sphi 0, %s147
    %s162 = sphi 0, %s148
    %s166 = sphi 0, %s166
    %s168 = sphi 0, %s166
    %s169 = sphi 0, %s168
    %s183 = sphi 0, %s169
    %s187 = sphi 0, %s187
    %s189 = sphi 0, %s187
    %s190 = sphi 0, %s189
    %s204 = sphi 0, %s190
    %s208 = sphi 0, %s208
    %s210 = sphi 0, %s208
    %s211 = sphi 0, %s210
    %s225 = sphi 0, %s211
    %s231 = sphi 0, %s233
    %s234 = sphi 0, %s231
    %s235 = sphi 0, %s234
    %s251 = sphi 0, %s235
  $region4: #{tpu_custom_call.1} parent=0 // loop_header_branch
    %20 = sbr.rel (%p18) target = $region8
  $region5: #{tpu_custom_call.1} parent=0 // loop_body
    %s22 = ssub.s32 %s17, 1
    %s23 = ssub.s32 %s17, 2
    %s24 = sadd.s32 %s17, 1
    %s25 = ssub.s32 %s17, %s24
    %p26 = scmp.eq.s32.totalorder %s25, 0
    %s28 = sadd.s32 %s27, 1
    %s29 = scalar_select %p26, %s27, %s28
    %p32 = pneg %p26
    %p33 = scmp.eq.s32.totalorder %s17, 1
    %p34 = por %p32, %p33
    %p35 = scmp.ne.s32.totalorder %s27, %s30
    %p36 = scmp.eq.s32.totalorder %s17, 0
    %p37 = por %p35, %p36
    %p38 = scmp.ne.s32.totalorder %s27, %s30
    %p39 = scmp.eq.s32.totalorder %s22, 1
    %p40 = por %p38, %p39
    %p41 = scmp.ne.s32.totalorder %s30, %s31
    %p42 = scmp.eq.s32.totalorder %s22, 0
    %p43 = por %p41, %p42
    %p44 = scmp.ne.s32.totalorder %s30, %s31
    %p45 = scmp.eq.s32.totalorder %s23, 1
    %p46 = por %p44, %p45
    %p48 = scmp.ne.s32.totalorder %s31, %s47
    %p49 = scmp.eq.s32.totalorder %s23, 0
    %p50 = por %p48, %p49
    %s51 = ssub.s32 %s17, %s24
    %p52 = scmp.eq.s32.totalorder %s51, 0
    %s54 = sadd.s32 %s53, 1
    %s55 = scalar_select %p52, %s53, %s54
    %p58 = pneg %p52
    %p59 = scmp.eq.s32.totalorder %s17, 1
    %p60 = por %p58, %p59
    %p61 = scmp.ne.s32.totalorder %s53, %s56
    %p62 = scmp.eq.s32.totalorder %s17, 0
    %p63 = por %p61, %p62
    %p64 = scmp.ne.s32.totalorder %s53, %s56
    %p65 = scmp.eq.s32.totalorder %s22, 1
    %p66 = por %p64, %p65
    %p67 = scmp.ne.s32.totalorder %s56, %s57
    %p68 = scmp.eq.s32.totalorder %s22, 0
    %p69 = por %p67, %p68
    %p70 = scmp.ne.s32.totalorder %s56, %s57
    %p71 = scmp.eq.s32.totalorder %s23, 1
    %p72 = por %p70, %p71
    %p74 = scmp.ne.s32.totalorder %s57, %s73
    %p75 = scmp.eq.s32.totalorder %s23, 0
    %p76 = por %p74, %p75
    %s77 = ssub.s32 %s17, %s24
    %p78 = scmp.eq.s32.totalorder %s77, 0
    %s80 = sadd.s32 %s79, 1
    %s81 = scalar_select %p78, %s79, %s80
    %p84 = pneg %p78
    %p85 = scmp.eq.s32.totalorder %s17, 1
    %p86 = por %p84, %p85
    %p87 = scmp.ne.s32.totalorder %s79, %s82
    %p88 = scmp.eq.s32.totalorder %s17, 0
    %p89 = por %p87, %p88
    %p90 = scmp.ne.s32.totalorder %s79, %s82
    %p91 = scmp.eq.s32.totalorder %s22, 1
    %p92 = por %p90, %p91
    %p93 = scmp.ne.s32.totalorder %s82, %s83
    %p94 = scmp.eq.s32.totalorder %s22, 0
    %p95 = por %p93, %p94
    %p96 = scmp.ne.s32.totalorder %s82, %s83
    %p97 = scmp.eq.s32.totalorder %s23, 1
    %p98 = por %p96, %p97
    %p100 = scmp.ne.s32.totalorder %s83, %s99
    %p101 = scmp.eq.s32.totalorder %s23, 0
    %p102 = por %p100, %p101
    %s104 = sadd.s32 %s103, 1
    %p107 = scmp.eq.s32.totalorder %s17, 1
    %p108 = scmp.ne.s32.totalorder %s103, %s105
    %p109 = scmp.eq.s32.totalorder %s17, 0
    %p110 = por %p108, %p109
    %p111 = scmp.ne.s32.totalorder %s103, %s105
    %p112 = scmp.eq.s32.totalorder %s22, 1
    %p113 = por %p111, %p112
    %p114 = scmp.ne.s32.totalorder %s105, %s106
    %p115 = scmp.eq.s32.totalorder %s22, 0
    %p116 = por %p114, %p115
    %p117 = scmp.ne.s32.totalorder %s105, %s106
    %p118 = scmp.eq.s32.totalorder %s23, 1
    %p119 = por %p117, %p118
    %p121 = scmp.ne.s32.totalorder %s106, %s120
    %p122 = scmp.eq.s32.totalorder %s23, 0
    %p123 = por %p121, %p122
    %s125 = sadd.s32 %s124, 1
    %p128 = scmp.eq.s32.totalorder %s17, 1
    %p129 = scmp.ne.s32.totalorder %s124, %s126
    %p130 = scmp.eq.s32.totalorder %s17, 0
    %p131 = por %p129, %p130
    %p132 = scmp.ne.s32.totalorder %s124, %s126
    %p133 = scmp.eq.s32.totalorder %s22, 1
    %p134 = por %p132, %p133
    %p135 = scmp.ne.s32.totalorder %s126, %s127
    %p136 = scmp.eq.s32.totalorder %s22, 0
    %p137 = por %p135, %p136
    %p138 = scmp.ne.s32.totalorder %s126, %s127
    %p139 = scmp.eq.s32.totalorder %s23, 1
    %p140 = por %p138, %p139
    %p142 = scmp.ne.s32.totalorder %s127, %s141
    %p143 = scmp.eq.s32.totalorder %s23, 0
    %p144 = por %p142, %p143
    %s146 = sadd.s32 %s145, 1
    %p149 = scmp.eq.s32.totalorder %s17, 1
    %p150 = scmp.ne.s32.totalorder %s145, %s147
    %p151 = scmp.eq.s32.totalorder %s17, 0
    %p152 = por %p150, %p151
    %p153 = scmp.ne.s32.totalorder %s145, %s147
    %p154 = scmp.eq.s32.totalorder %s22, 1
    %p155 = por %p153, %p154
    %p156 = scmp.ne.s32.totalorder %s147, %s148
    %p157 = scmp.eq.s32.totalorder %s22, 0
    %p158 = por %p156, %p157
    %p159 = scmp.ne.s32.totalorder %s147, %s148
    %p160 = scmp.eq.s32.totalorder %s23, 1
    %p161 = por %p159, %p160
    %p163 = scmp.ne.s32.totalorder %s148, %s162
    %p164 = scmp.eq.s32.totalorder %s23, 0
    %p165 = por %p163, %p164
    %s167 = sadd.s32 %s166, 1
    %p170 = scmp.eq.s32.totalorder %s17, 1
    %p171 = scmp.ne.s32.totalorder %s166, %s168
    %p172 = scmp.eq.s32.totalorder %s17, 0
    %p173 = por %p171, %p172
    %p174 = scmp.ne.s32.totalorder %s166, %s168
    %p175 = scmp.eq.s32.totalorder %s22, 1
    %p176 = por %p174, %p175
    %p177 = scmp.ne.s32.totalorder %s168, %s169
    %p178 = scmp.eq.s32.totalorder %s22, 0
    %p179 = por %p177, %p178
    %p180 = scmp.ne.s32.totalorder %s168, %s169
    %p181 = scmp.eq.s32.totalorder %s23, 1
    %p182 = por %p180, %p181
    %p184 = scmp.ne.s32.totalorder %s169, %s183
    %p185 = scmp.eq.s32.totalorder %s23, 0
    %p186 = por %p184, %p185
    %s188 = sadd.s32 %s187, 1
    %p191 = scmp.eq.s32.totalorder %s17, 1
    %p192 = scmp.ne.s32.totalorder %s187, %s189
    %p193 = scmp.eq.s32.totalorder %s17, 0
    %p194 = por %p192, %p193
    %p195 = scmp.ne.s32.totalorder %s187, %s189
    %p196 = scmp.eq.s32.totalorder %s22, 1
    %p197 = por %p195, %p196
    %p198 = scmp.ne.s32.totalorder %s189, %s190
    %p199 = scmp.eq.s32.totalorder %s22, 0
    %p200 = por %p198, %p199
    %p201 = scmp.ne.s32.totalorder %s189, %s190
    %p202 = scmp.eq.s32.totalorder %s23, 1
    %p203 = por %p201, %p202
    %p205 = scmp.ne.s32.totalorder %s190, %s204
    %p206 = scmp.eq.s32.totalorder %s23, 0
    %p207 = por %p205, %p206
    %s209 = sadd.s32 %s208, 1
    %p212 = scmp.eq.s32.totalorder %s17, 1
    %p213 = scmp.ne.s32.totalorder %s208, %s210
    %p214 = scmp.eq.s32.totalorder %s17, 0
    %p215 = por %p213, %p214
    %p216 = scmp.ne.s32.totalorder %s208, %s210
    %p217 = scmp.eq.s32.totalorder %s22, 1
    %p218 = por %p216, %p217
    %p219 = scmp.ne.s32.totalorder %s210, %s211
    %p220 = scmp.eq.s32.totalorder %s22, 0
    %p221 = por %p219, %p220
    %p222 = scmp.ne.s32.totalorder %s210, %s211
    %p223 = scmp.eq.s32.totalorder %s23, 1
    %p224 = por %p222, %p223
    %p226 = scmp.ne.s32.totalorder %s211, %s225
    %p227 = scmp.eq.s32.totalorder %s23, 0
    %p228 = por %p226, %p227
    %s229 = ssub.s32 %s17, %s24
    %p230 = scmp.eq.s32.totalorder %s229, 0
    %s232 = sadd.s32 %s231, 1
    %s233 = scalar_select %p230, %s231, %s232
    %p236 = pneg %p230
    %p237 = scmp.eq.s32.totalorder %s17, 1
    %p238 = por %p236, %p237
    %p239 = scmp.ne.s32.totalorder %s231, %s234
    %p240 = scmp.eq.s32.totalorder %s17, 0
    %p241 = por %p239, %p240
    %p242 = scmp.ne.s32.totalorder %s231, %s234
    %p243 = scmp.eq.s32.totalorder %s22, 1
    %p244 = por %p242, %p243
    %p245 = scmp.ne.s32.totalorder %s234, %s235
    %p246 = scmp.eq.s32.totalorder %s22, 0
    %p247 = por %p245, %p246
    %p248 = scmp.ne.s32.totalorder %s234, %s235
    %p249 = scmp.eq.s32.totalorder %s23, 1
    %p250 = por %p248, %p249
    %p252 = scmp.ne.s32.totalorder %s235, %s251
    %p253 = scmp.eq.s32.totalorder %s23, 0
    %p254 = por %p252, %p253
    %p255 = scmp.le.s32.totalorder 1, %s17
    %p256 = scmp.lt.s32.totalorder %s17, 3
    %p257 = pnand %p255, %p256
    %p258 = pneg %p257
    // Predicated region
    $region9: #{tpu_custom_call.1} parent=5 // pred_check
      _
    $region10: #{tpu_custom_call.1} parent=5 // pred_check_branch
      %260 = sbr.rel (%p257) target = $region12
    $region11: #{tpu_custom_call.1} parent=5 // pred_region
      %s261 = ssub.s32 %s17, 1
      // Predicated region
      $region13: #{tpu_custom_call.1} parent=11 // pred_check
        %p262 = pneg %p116
      $region14: #{tpu_custom_call.1} parent=11 // pred_check_branch
        %264 = sbr.rel (%p262) target = $region16
      $region15: #{tpu_custom_call.1} parent=11 // pred_region
        _
      $region16: #{tpu_custom_call.1} parent=11 // pred_fallthru
        _
      // Predicated region
      $region17: #{tpu_custom_call.1} parent=11 // pred_check
        %p265 = pneg %p137
      $region18: #{tpu_custom_call.1} parent=11 // pred_check_branch
        %267 = sbr.rel (%p265) target = $region20
      $region19: #{tpu_custom_call.1} parent=11 // pred_region
        _
      $region20: #{tpu_custom_call.1} parent=11 // pred_fallthru
        _
      // Predicated region
      $region21: #{tpu_custom_call.1} parent=11 // pred_check
        %p268 = pneg %p158
      $region22: #{tpu_custom_call.1} parent=11 // pred_check_branch
        %270 = sbr.rel (%p268) target = $region24
      $region23: #{tpu_custom_call.1} parent=11 // pred_region
        _
      $region24: #{tpu_custom_call.1} parent=11 // pred_fallthru
        _
      // Predicated region
      $region25: #{tpu_custom_call.1} parent=11 // pred_check
        %p271 = pneg %p179
      $region26: #{tpu_custom_call.1} parent=11 // pred_check_branch
        %273 = sbr.rel (%p271) target = $region28
      $region27: #{tpu_custom_call.1} parent=11 // pred_region
        _
      $region28: #{tpu_custom_call.1} parent=11 // pred_fallthru
        _
      // Predicated region
      $region29: #{tpu_custom_call.1} parent=11 // pred_check
        %p274 = pneg %p200
      $region30: #{tpu_custom_call.1} parent=11 // pred_check_branch
        %276 = sbr.rel (%p274) target = $region32
      $region31: #{tpu_custom_call.1} parent=11 // pred_region
        _
      $region32: #{tpu_custom_call.1} parent=11 // pred_fallthru
        _
      // Predicated region
      $region33: #{tpu_custom_call.1} parent=11 // pred_check
        %p277 = pneg %p221
      $region34: #{tpu_custom_call.1} parent=11 // pred_check_branch
        %279 = sbr.rel (%p277) target = $region36
      $region35: #{tpu_custom_call.1} parent=11 // pred_region
        _
      $region36: #{tpu_custom_call.1} parent=11 // pred_fallthru
        _
    $region12: #{tpu_custom_call.1} parent=5 // pred_fallthru
      _
    %p280 = scmp.lt.s32.totalorder %s17, 2
    // Predicated region
    $region37: #{tpu_custom_call.1} parent=5 // pred_check
      %p281 = pneg %p280
    $region38: #{tpu_custom_call.1} parent=5 // pred_check_branch
      %283 = sbr.rel (%p281) target = $region40
    $region39: #{tpu_custom_call.1} parent=5 // pred_region
      // Predicated region
      $region41: #{tpu_custom_call.1} parent=39 // pred_check
        %p284 = pneg %p37
      $region42: #{tpu_custom_call.1} parent=39 // pred_check_branch
        %286 = sbr.rel (%p284) target = $region44
      $region43: #{tpu_custom_call.1} parent=39 // pred_region
        %s287 = smul.u32 8, %s17
        %p288 = scmp.lt.s32.totalorder %s287, 15
        %s289 = scalar_select %p288, %s287, 15
        %s290 = smul.addr %s289, 2
        %s291 = smul.addr %s290, 4
        %s292 = scalar_lea.vmem %s0, %s291
        %s293 = smul.u32 8, %s17
      $region44: #{tpu_custom_call.1} parent=39 // pred_fallthru
        _
      // Predicated region
      $region45: #{tpu_custom_call.1} parent=39 // pred_check
        %p294 = pneg %p63
      $region46: #{tpu_custom_call.1} parent=39 // pred_check_branch
        %296 = sbr.rel (%p294) target = $region48
      $region47: #{tpu_custom_call.1} parent=39 // pred_region
        %s297 = smul.u32 16, %s17
        %p298 = scmp.lt.s32.totalorder %s297, 31
        %s299 = scalar_select %p298, %s297, 31
        %s300 = smul.addr %s299, 8
        %s301 = scalar_lea.vmem %s1, %s300
        %s302 = smul.u32 16, %s17
      $region48: #{tpu_custom_call.1} parent=39 // pred_fallthru
        _
      // Predicated region
      $region49: #{tpu_custom_call.1} parent=39 // pred_check
        %p303 = pneg %p89
      $region50: #{tpu_custom_call.1} parent=39 // pred_check_branch
        %305 = sbr.rel (%p303) target = $region52
      $region51: #{tpu_custom_call.1} parent=39 // pred_region
        %s306 = smul.u32 16, %s17
        %p307 = scmp.lt.s32.totalorder %s306, 31
        %s308 = scalar_select %p307, %s306, 31
        %s309 = smul.addr %s308, 8
        %s310 = scalar_lea.vmem %s2, %s309
        %s311 = smul.u32 16, %s17
      $region52: #{tpu_custom_call.1} parent=39 // pred_fallthru
        _
    $region40: #{tpu_custom_call.1} parent=5 // pred_fallthru
      _
    %p312 = scmp.le.s32.totalorder 1, %s17
    %p313 = scmp.lt.s32.totalorder %s17, 3
    %p314 = pnand %p312, %p313
    %p315 = pneg %p314
    // Predicated region
    $region53: #{tpu_custom_call.1} parent=5 // pred_check
      _
    $region54: #{tpu_custom_call.1} parent=5 // pred_check_branch
      %317 = sbr.rel (%p314) target = $region56
    $region55: #{tpu_custom_call.1} parent=5 // pred_region
      %s318 = ssub.s32 %s17, 1
      %s319 = smul.u32 8, %s22
      %p320 = scmp.lt.s32.totalorder %s319, 15
      %s321 = scalar_select %p320, %s319, 15
      %s322 = smul.addr %s321, 2
      %s323 = smul.addr %s322, 4
      %s324 = scalar_lea.vmem %s0, %s323
      %p325 = pneg %p43
      %p326 = pneg %p40
      %s327 = smul.u32 16, %s22
      %p328 = scmp.lt.s32.totalorder %s327, 31
      %s329 = scalar_select %p328, %s327, 31
      %s330 = smul.addr %s329, 8
      %s331 = scalar_lea.vmem %s1, %s330
      %p332 = pneg %p69
      %p333 = pneg %p66
      %s334 = smul.u32 16, %s22
      %p335 = scmp.lt.s32.totalorder %s334, 31
      %s336 = scalar_select %p335, %s334, 31
      %s337 = smul.addr %s336, 8
      %s338 = scalar_lea.vmem %s2, %s337
      %p339 = pneg %p95
      %p340 = pneg %p92
      %p341 = pneg %p116
      %p342 = pneg %p113
      %p343 = pneg %p137
      %p344 = pneg %p134
      %p345 = pneg %p158
      %p346 = pneg %p155
      %p347 = pneg %p179
      %p348 = pneg %p176
      %p349 = pneg %p200
      %p350 = pneg %p197
      %p351 = pneg %p221
      %p352 = pneg %p218
      %p353 = pneg %p247
      %p354 = pneg %p244
      %p355 = scmp.lt.s32.totalorder %s22, 1
      %s356 = scalar_select %p355, %s22, 1
      %s357 = smul.addr %s356, 8
      %s358 = scalar_lea.vmem %s9, %s357
      %s359 = smul.u32 8, %s22
      %p360 = scmp.lt.s32.totalorder %s359, 15
      %s361 = scalar_select %p360, %s359, 15
      %s362 = smul.addr %s361, 2
      %s363 = smul.addr %s362, 4
      %s364 = scalar_lea.vmem %s0, %s363
      %s365 = smul.u32 8, %s22
      %s366 = smul.u32 16, %s22
      %p367 = scmp.lt.s32.totalorder %s366, 31
      %s368 = scalar_select %p367, %s366, 31
      %s369 = smul.addr %s368, 8
      %s370 = scalar_lea.vmem %s1, %s369
      %s371 = smul.u32 16, %s22
      %s372 = smul.u32 16, %s22
      %p373 = scmp.lt.s32.totalorder %s372, 31
      %s374 = scalar_select %p373, %s372, 31
      %s375 = smul.addr %s374, 8
      %s376 = scalar_lea.vmem %s2, %s375
      %s377 = smul.u32 16, %s22
      %p378 = scmp.lt.s32.totalorder %s22, 1
      %s379 = scalar_select %p378, %s22, 1
      %s380 = smul.addr %s379, 8
      %s381 = scalar_lea.vmem %s9, %s380
      %v382 = vld [vmem:[%s364] sm:$0xf]
      %v383 = vld [vmem:[%s364 + $0x4] sm:$0xf]
      %v384 = vld [vmem:[%s364 + $0x8] sm:$0xf]
      %v385 = vld [vmem:[%s364 + $0xc] sm:$0xf]
      %v386 = vld [vmem:[%s364 + $0x10] sm:$0xf]
      %v387 = vld [vmem:[%s364 + $0x14] sm:$0xf]
      %v388 = vld [vmem:[%s364 + $0x18] sm:$0xf]
      %v389 = vld [vmem:[%s364 + $0x1c] sm:$0xf]
      %v390 = vld [vmem:[%s364 + $0x20] sm:$0xf]
      %v391 = vld [vmem:[%s364 + $0x24] sm:$0xf]
      %v392 = vld [vmem:[%s364 + $0x28] sm:$0xf]
      %v393 = vld [vmem:[%s364 + $0x2c] sm:$0xf]
      %v394 = vld [vmem:[%s364 + $0x30] sm:$0xf]
      %v395 = vld [vmem:[%s364 + $0x34] sm:$0xf]
      %v396 = vld [vmem:[%s364 + $0x38] sm:$0xf]
      %v397 = vld [vmem:[%s364 + $0x3c] sm:$0xf]
      %v398 = vld [vmem:[%s370] sm:$0xff]
      %v399 = vld [vmem:[%s370 + $0x8] sm:$0xff]
      %v400 = vld [vmem:[%s370 + $0x10] sm:$0xff]
      %v401 = vld [vmem:[%s370 + $0x18] sm:$0xff]
      %v402 = vld [vmem:[%s370 + $0x20] sm:$0xff]
      %v403 = vld [vmem:[%s370 + $0x28] sm:$0xff]
      %v404 = vld [vmem:[%s370 + $0x30] sm:$0xff]
      %v405 = vld [vmem:[%s370 + $0x38] sm:$0xff]
      %v406 = vld [vmem:[%s370 + $0x40] sm:$0xff]
      %v407 = vld [vmem:[%s370 + $0x48] sm:$0xff]
      %v408 = vld [vmem:[%s370 + $0x50] sm:$0xff]
      %v409 = vld [vmem:[%s370 + $0x58] sm:$0xff]
      %v410 = vld [vmem:[%s370 + $0x60] sm:$0xff]
      %v411 = vld [vmem:[%s370 + $0x68] sm:$0xff]
      %v412 = vld [vmem:[%s370 + $0x70] sm:$0xff]
      %v413 = vld [vmem:[%s370 + $0x78] sm:$0xff]
      %v414 = vld [vmem:[%s376] sm:$0xff]
      %v415 = vld [vmem:[%s376 + $0x8] sm:$0xff]
      %v416 = vld [vmem:[%s376 + $0x10] sm:$0xff]
      %v417 = vld [vmem:[%s376 + $0x18] sm:$0xff]
      %v418 = vld [vmem:[%s376 + $0x20] sm:$0xff]
      %v419 = vld [vmem:[%s376 + $0x28] sm:$0xff]
      %v420 = vld [vmem:[%s376 + $0x30] sm:$0xff]
      %v421 = vld [vmem:[%s376 + $0x38] sm:$0xff]
      %v422 = vld [vmem:[%s376 + $0x40] sm:$0xff]
      %v423 = vld [vmem:[%s376 + $0x48] sm:$0xff]
      %v424 = vld [vmem:[%s376 + $0x50] sm:$0xff]
      %v425 = vld [vmem:[%s376 + $0x58] sm:$0xff]
      %v426 = vld [vmem:[%s376 + $0x60] sm:$0xff]
      %v427 = vld [vmem:[%s376 + $0x68] sm:$0xff]
      %v428 = vld [vmem:[%s376 + $0x70] sm:$0xff]
      %v429 = vld [vmem:[%s376 + $0x78] sm:$0xff]
      %v430 = vld [vmem:[%s3] sm:$0xff]
      %v431 = vld [vmem:[%s3 + $0x8] sm:$0xff]
      %v432 = vld [vmem:[%s4] sm:$0x7]
      %v433 = vld [vmem:[%s5] sm:$0xff]
      %v434 = vld [vmem:[%s5 + $0x8] sm:$0xff]
      %v435 = vld [vmem:[%s5 + $0x10] sm:$0xff]
      %v436 = vld [vmem:[%s5 + $0x18] sm:$0xff]
      %v437 = vld [vmem:[%s5 + $0x20] sm:$0xff]
      %v438 = vld [vmem:[%s5 + $0x28] sm:$0xff]
      %v439 = vld [vmem:[%s5 + $0x30] sm:$0xff]
      %v440 = vld [vmem:[%s5 + $0x38] sm:$0xff]
      %v441 = vld [vmem:[%s6] sm:$0x7]
      %v442 = vld [vmem:[%s7] sm:$0xff]
      %v443 = vld [vmem:[%s7 + $0x8] sm:$0xff]
      %v444 = vld [vmem:[%s7 + $0x10] sm:$0xff]
      %v445 = vld [vmem:[%s7 + $0x18] sm:$0xff]
      %v446 = vld [vmem:[%s7 + $0x20] sm:$0xff]
      %v447 = vld [vmem:[%s7 + $0x28] sm:$0xff]
      %v448 = vld [vmem:[%s7 + $0x30] sm:$0xff]
      %v449 = vld [vmem:[%s7 + $0x38] sm:$0xff]
      %v450 = vld [vmem:[%s7 + $0x40] sm:$0xff]
      %v451 = vld [vmem:[#allocation2] sm:$0x1]
      %v452 = vunpack.c.l.bf16 %v382
      %v453 = vunpack.c.l.bf16 %v383
      %v454 = vunpack.c.l.bf16 %v384
      %v455 = vunpack.c.l.bf16 %v385
      %v456 = vunpack.c.l.bf16 %v386
      %v457 = vunpack.c.l.bf16 %v387
      %v458 = vunpack.c.l.bf16 %v388
      %v459 = vunpack.c.l.bf16 %v389
      %v460 = vunpack.c.l.bf16 %v390
      %v461 = vunpack.c.l.bf16 %v391
      %v462 = vunpack.c.l.bf16 %v392
      %v463 = vunpack.c.l.bf16 %v393
      %v464 = vunpack.c.l.bf16 %v394
      %v465 = vunpack.c.l.bf16 %v395
      %v466 = vunpack.c.l.bf16 %v396
      %v467 = vunpack.c.l.bf16 %v397
      %vm468 = vcmask 130048
      %v470 = vsel %vm468, %v452, 0
      %v473 = vsel %vm468, %v453, 0
      %475 = vmatprep.subr.mxu0 0.0
      %476 = vmatpush1.msra.mxu0 %v398
      %477 = vmatprep.subr.mxu0 0.0
      %478 = vmatpush1.msra.mxu0 %v399
      %479 = vmatprep.subr.mxu0 0.0
      %480 = vmatpush1.msra.mxu0 0.0
      %481 = vmatprep.subr.mxu0 0.0
      %482 = vmatpush1.msra.mxu0 0.0
      %483 = vmatprep.subr.mxu0 0.0
      %484 = vmatpush1.msra.mxu0 0.0
      %485 = vmatprep.subr.mxu0 0.0
      %486 = vmatpush1.msra.mxu0 0.0
      %487 = vmatprep.subr.mxu0 0.0
      %488 = vmatpush1.msra.mxu0 0.0
      %489 = vmatprep.subr.mxu0 0.0
      %490 = vmatpush1.msra.mxu0 0.0
      %491 = vmatprep.subr.mxu0 0.0
      %492 = vmatpush1.msra.mxu0 0.0
      %493 = vmatprep.subr.mxu0 0.0
      %494 = vmatpush1.msra.mxu0 0.0
      %495 = vmatprep.subr.mxu0 0.0
      %496 = vmatpush1.msra.mxu0 0.0
      %497 = vmatprep.subr.mxu0 0.0
      %498 = vmatpush1.msra.mxu0 0.0
      %499 = vmatprep.subr.mxu0 0.0
      %500 = vmatpush1.msra.mxu0 0.0
      %501 = vmatprep.subr.mxu0 0.0
      %502 = vmatpush1.msra.mxu0 0.0
      %503 = vmatprep.subr.mxu0 0.0
      %504 = vmatpush1.msra.mxu0 0.0
      %505 = vmatprep.subr.mxu0 0.0
      %506 = vmatpush1.msra.mxu0 0.0
      %507 = vmatprep.subr.mxu0 0.0
      %508 = vmatpush1.msra.mxu0 0.0
      %509 = vmatprep.subr.mxu0 0.0
      %510 = vmatpush1.msra.mxu0 0.0
      %511 = vmatprep.subr.mxu0 0.0
      %512 = vmatpush1.msra.mxu0 0.0
      %513 = vmatprep.subr.mxu0 0.0
      %514 = vmatpush1.msra.mxu0 0.0
      %515 = vmatprep.subr.mxu0 0.0
      %516 = vmatpush1.msra.mxu0 0.0
      %517 = vmatprep.subr.mxu0 0.0
      %518 = vmatpush1.msra.mxu0 0.0
      %519 = vmatprep.subr.mxu0 0.0
      %520 = vmatpush1.msra.mxu0 0.0
      %521 = vmatprep.subr.mxu0 0.0
      %522 = vmatpush1.msra.mxu0 0.0
      %523 = vmatprep.subr.mxu0 0.0
      %524 = vmatpush1.msra.mxu0 0.0
      %525 = vmatprep.subr.mxu0 0.0
      %526 = vmatpush1.msra.mxu0 0.0
      %527 = vmatprep.subr.mxu0 0.0
      %528 = vmatpush1.msra.mxu0 0.0
      %529 = vmatprep.subr.mxu0 0.0
      %530 = vmatpush1.msra.mxu0 0.0
      %531 = vmatprep.subr.mxu0 0.0
      %532 = vmatpush1.msra.mxu0 0.0
      %533 = vmatprep.subr.mxu0 0.0
      %534 = vmatpush1.msra.mxu0 0.0
      %535 = vmatprep.subr.mxu0 0.0
      %536 = vmatpush1.msra.mxu0 0.0
      %537 = vmatprep.subr.mxu0 0.0
      %538 = vmatpush1.msra.mxu0 0.0
      %539 = vmatprep.mubr.f32.mxu0 0.0
      %540 = vmatmul.mubr.f32.gmra.mrb[0].mxu0 %v470
      %v541 = vpop.f32.mrb[0].mxu0
      %v542 = vadd.f32 0.0, %v541
      %v543 = vpop.f32.mrb[0].mxu0
      %544 = vmatprep.mubr.f32.mxu0 0.0
      %545 = vmatmul.mubr.f32.gmra.mrb[0].mxu0 %v473
      %v546 = vpop.f32.mrb[0].mxu0
      %v547 = vadd.f32 0.0, %v546
      %v548 = vpop.f32.mrb[0].mxu0
      %549 = vdwg.mxu0
      %v551 = vsel %vm468, %v454, 0
      %v554 = vsel %vm468, %v455, 0
      %556 = vmatprep.subr.mxu0 0.0
      %557 = vmatpush1.msra.mxu0 %v400
      %558 = vmatprep.subr.mxu0 0.0
      %559 = vmatpush1.msra.mxu0 %v401
      %560 = vmatprep.subr.mxu0 0.0
      %561 = vmatpush1.msra.mxu0 0.0
      %562 = vmatprep.subr.mxu0 0.0
      %563 = vmatpush1.msra.mxu0 0.0
      %564 = vmatprep.subr.mxu0 0.0
      %565 = vmatpush1.msra.mxu0 0.0
      %566 = vmatprep.subr.mxu0 0.0
      %567 = vmatpush1.msra.mxu0 0.0
      %568 = vmatprep.subr.mxu0 0.0
      %569 = vmatpush1.msra.mxu0 0.0
      %570 = vmatprep.subr.mxu0 0.0
      %571 = vmatpush1.msra.mxu0 0.0
      %572 = vmatprep.subr.mxu0 0.0
      %573 = vmatpush1.msra.mxu0 0.0
      %574 = vmatprep.subr.mxu0 0.0
      %575 = vmatpush1.msra.mxu0 0.0
      %576 = vmatprep.subr.mxu0 0.0
      %577 = vmatpush1.msra.mxu0 0.0
      %578 = vmatprep.subr.mxu0 0.0
      %579 = vmatpush1.msra.mxu0 0.0
      %580 = vmatprep.subr.mxu0 0.0
      %581 = vmatpush1.msra.mxu0 0.0
      %582 = vmatprep.subr.mxu0 0.0
      %583 = vmatpush1.msra.mxu0 0.0
      %584 = vmatprep.subr.mxu0 0.0
      %585 = vmatpush1.msra.mxu0 0.0
      %586 = vmatprep.subr.mxu0 0.0
      %587 = vmatpush1.msra.mxu0 0.0
      %588 = vmatprep.subr.mxu0 0.0
      %589 = vmatpush1.msra.mxu0 0.0
      %590 = vmatprep.subr.mxu0 0.0
      %591 = vmatpush1.msra.mxu0 0.0
      %592 = vmatprep.subr.mxu0 0.0
      %593 = vmatpush1.msra.mxu0 0.0
      %594 = vmatprep.subr.mxu0 0.0
      %595 = vmatpush1.msra.mxu0 0.0
      %596 = vmatprep.subr.mxu0 0.0
      %597 = vmatpush1.msra.mxu0 0.0
      %598 = vmatprep.subr.mxu0 0.0
      %599 = vmatpush1.msra.mxu0 0.0
      %600 = vmatprep.subr.mxu0 0.0
      %601 = vmatpush1.msra.mxu0 0.0
      %602 = vmatprep.subr.mxu0 0.0
      %603 = vmatpush1.msra.mxu0 0.0
      %604 = vmatprep.subr.mxu0 0.0
      %605 = vmatpush1.msra.mxu0 0.0
      %606 = vmatprep.subr.mxu0 0.0
      %607 = vmatpush1.msra.mxu0 0.0
      %608 = vmatprep.subr.mxu0 0.0
      %609 = vmatpush1.msra.mxu0 0.0
      %610 = vmatprep.subr.mxu0 0.0
      %611 = vmatpush1.msra.mxu0 0.0
      %612 = vmatprep.subr.mxu0 0.0
      %613 = vmatpush1.msra.mxu0 0.0
      %614 = vmatprep.subr.mxu0 0.0
      %615 = vmatpush1.msra.mxu0 0.0
      %616 = vmatprep.subr.mxu0 0.0
      %617 = vmatpush1.msra.mxu0 0.0
      %618 = vmatprep.subr.mxu0 0.0
      %619 = vmatpush1.msra.mxu0 0.0
      %620 = vmatprep.mubr.f32.mxu0 0.0
      %621 = vmatmul.mubr.f32.gmra.mrb[0].mxu0 %v551
      %v622 = vpop.f32.mrb[0].mxu0
      %v623 = vadd.f32 0.0, %v622
      %v624 = vpop.f32.mrb[0].mxu0
      %625 = vmatprep.mubr.f32.mxu0 0.0
      %626 = vmatmul.mubr.f32.gmra.mrb[0].mxu0 %v554
      %v627 = vpop.f32.mrb[0].mxu0
      %v628 = vadd.f32 0.0, %v627
      %v629 = vpop.f32.mrb[0].mxu0
      %630 = vdwg.mxu0
      %v632 = vsel %vm468, %v456, 0
      %v635 = vsel %vm468, %v457, 0
      %637 = vmatprep.subr.mxu0 0.0
      %638 = vmatpush1.msra.mxu0 %v402
      %639 = vmatprep.subr.mxu0 0.0
      %640 = vmatpush1.msra.mxu0 %v403
      %641 = vmatprep.subr.mxu0 0.0
      %642 = vmatpush1.msra.mxu0 0.0
      %643 = vmatprep.subr.mxu0 0.0
      %644 = vmatpush1.msra.mxu0 0.0
      %645 = vmatprep.subr.mxu0 0.0
      %646 = vmatpush1.msra.mxu0 0.0
      %647 = vmatprep.subr.mxu0 0.0
      %648 = vmatpush1.msra.mxu0 0.0
      %649 = vmatprep.subr.mxu0 0.0
      %650 = vmatpush1.msra.mxu0 0.0
      %651 = vmatprep.subr.mxu0 0.0
      %652 = vmatpush1.msra.mxu0 0.0
      %653 = vmatprep.subr.mxu0 0.0
      %654 = vmatpush1.msra.mxu0 0.0
      %655 = vmatprep.subr.mxu0 0.0
      %656 = vmatpush1.msra.mxu0 0.0
      %657 = vmatprep.subr.mxu0 0.0
      %658 = vmatpush1.msra.mxu0 0.0
      %659 = vmatprep.subr.mxu0 0.0
      %660 = vmatpush1.msra.mxu0 0.0
      %661 = vmatprep.subr.mxu0 0.0
      %662 = vmatpush1.msra.mxu0 0.0
      %663 = vmatprep.subr.mxu0 0.0
      %664 = vmatpush1.msra.mxu0 0.0
      %665 = vmatprep.subr.mxu0 0.0
      %666 = vmatpush1.msra.mxu0 0.0
      %667 = vmatprep.subr.mxu0 0.0
      %668 = vmatpush1.msra.mxu0 0.0
      %669 = vmatprep.subr.mxu0 0.0
      %670 = vmatpush1.msra.mxu0 0.0
      %671 = vmatprep.subr.mxu0 0.0
      %672 = vmatpush1.msra.mxu0 0.0
      %673 = vmatprep.subr.mxu0 0.0
      %674 = vmatpush1.msra.mxu0 0.0
      %675 = vmatprep.subr.mxu0 0.0
      %676 = vmatpush1.msra.mxu0 0.0
      %677 = vmatprep.subr.mxu0 0.0
      %678 = vmatpush1.msra.mxu0 0.0
      %679 = vmatprep.subr.mxu0 0.0
      %680 = vmatpush1.msra.mxu0 0.0
      %681 = vmatprep.subr.mxu0 0.0
      %682 = vmatpush1.msra.mxu0 0.0
      %683 = vmatprep.subr.mxu0 0.0
      %684 = vmatpush1.msra.mxu0 0.0
      %685 = vmatprep.subr.mxu0 0.0
      %686 = vmatpush1.msra.mxu0 0.0
      %687 = vmatprep.subr.mxu0 0.0
      %688 = vmatpush1.msra.mxu0 0.0
      %689 = vmatprep.subr.mxu0 0.0
      %690 = vmatpush1.msra.mxu0 0.0
      %691 = vmatprep.subr.mxu0 0.0
      %692 = vmatpush1.msra.mxu0 0.0
      %693 = vmatprep.subr.mxu0 0.0
      %694 = vmatpush1.msra.mxu0 0.0
      %695 = vmatprep.subr.mxu0 0.0
      %696 = vmatpush1.msra.mxu0 0.0
      %697 = vmatprep.subr.mxu0 0.0
      %698 = vmatpush1.msra.mxu0 0.0
      %699 = vmatprep.subr.mxu0 0.0
      %700 = vmatpush1.msra.mxu0 0.0
      %701 = vmatprep.mubr.f32.mxu0 0.0
      %702 = vmatmul.mubr.f32.gmra.mrb[0].mxu0 %v632
      %v703 = vpop.f32.mrb[0].mxu0
      %v704 = vadd.f32 0.0, %v703
      %v705 = vpop.f32.mrb[0].mxu0
      %706 = vmatprep.mubr.f32.mxu0 0.0
      %707 = vmatmul.mubr.f32.gmra.mrb[0].mxu0 %v635
      %v708 = vpop.f32.mrb[0].mxu0
      %v709 = vadd.f32 0.0, %v708
      %v710 = vpop.f32.mrb[0].mxu0
      %711 = vdwg.mxu0
      %v713 = vsel %vm468, %v458, 0
      %v716 = vsel %vm468, %v459, 0
      %718 = vmatprep.subr.mxu0 0.0
      %719 = vmatpush1.msra.mxu0 %v404
      %720 = vmatprep.subr.mxu0 0.0
      %721 = vmatpush1.msra.mxu0 %v405
      %722 = vmatprep.subr.mxu0 0.0
      %723 = vmatpush1.msra.mxu0 0.0
      %724 = vmatprep.subr.mxu0 0.0
      %725 = vmatpush1.msra.mxu0 0.0
      %726 = vmatprep.subr.mxu0 0.0
      %727 = vmatpush1.msra.mxu0 0.0
      %728 = vmatprep.subr.mxu0 0.0
      %729 = vmatpush1.msra.mxu0 0.0
      %730 = vmatprep.subr.mxu0 0.0
      %731 = vmatpush1.msra.mxu0 0.0
      %732 = vmatprep.subr.mxu0 0.0
      %733 = vmatpush1.msra.mxu0 0.0
      %734 = vmatprep.subr.mxu0 0.0
      %735 = vmatpush1.msra.mxu0 0.0
      %736 = vmatprep.subr.mxu0 0.0
      %737 = vmatpush1.msra.mxu0 0.0
      %738 = vmatprep.subr.mxu0 0.0
      %739 = vmatpush1.msra.mxu0 0.0
      %740 = vmatprep.subr.mxu0 0.0
      %741 = vmatpush1.msra.mxu0 0.0
      %742 = vmatprep.subr.mxu0 0.0
      %743 = vmatpush1.msra.mxu0 0.0
      %744 = vmatprep.subr.mxu0 0.0
      %745 = vmatpush1.msra.mxu0 0.0
      %746 = vmatprep.subr.mxu0 0.0
      %747 = vmatpush1.msra.mxu0 0.0
      %748 = vmatprep.subr.mxu0 0.0
      %749 = vmatpush1.msra.mxu0 0.0
      %750 = vmatprep.subr.mxu0 0.0
      %751 = vmatpush1.msra.mxu0 0.0
      %752 = vmatprep.subr.mxu0 0.0
      %753 = vmatpush1.msra.mxu0 0.0
      %754 = vmatprep.subr.mxu0 0.0
      %755 = vmatpush1.msra.mxu0 0.0
      %756 = vmatprep.subr.mxu0 0.0
      %757 = vmatpush1.msra.mxu0 0.0
      %758 = vmatprep.subr.mxu0 0.0
      %759 = vmatpush1.msra.mxu0 0.0
      %760 = vmatprep.subr.mxu0 0.0
      %761 = vmatpush1.msra.mxu0 0.0
      %762 = vmatprep.subr.mxu0 0.0
      %763 = vmatpush1.msra.mxu0 0.0
      %764 = vmatprep.subr.mxu0 0.0
      %765 = vmatpush1.msra.mxu0 0.0
      %766 = vmatprep.subr.mxu0 0.0
      %767 = vmatpush1.msra.mxu0 0.0
      %768 = vmatprep.subr.mxu0 0.0
      %769 = vmatpush1.msra.mxu0 0.0
      %770 = vmatprep.subr.mxu0 0.0
      %771 = vmatpush1.msra.mxu0 0.0
      %772 = vmatprep.subr.mxu0 0.0
      %773 = vmatpush1.msra.mxu0 0.0
      %774 = vmatprep.subr.mxu0 0.0
      %775 = vmatpush1.msra.mxu0 0.0
      %776 = vmatprep.subr.mxu0 0.0
      %777 = vmatpush1.msra.mxu0 0.0
      %778 = vmatprep.subr.mxu0 0.0
      %779 = vmatpush1.msra.mxu0 0.0
      %780 = vmatprep.subr.mxu0 0.0
      %781 = vmatpush1.msra.mxu0 0.0
      %782 = vmatprep.mubr.f32.mxu0 0.0
      %783 = vmatmul.mubr.f32.gmra.mrb[0].mxu0 %v713
      %v784 = vpop.f32.mrb[0].mxu0
      %v785 = vadd.f32 0.0, %v784
      %v786 = vpop.f32.mrb[0].mxu0
      %787 = vmatprep.mubr.f32.mxu0 0.0
      %788 = vmatmul.mubr.f32.gmra.mrb[0].mxu0 %v716
      %v789 = vpop.f32.mrb[0].mxu0
      %v790 = vadd.f32 0.0, %v789
      %v791 = vpop.f32.mrb[0].mxu0
      %792 = vdwg.mxu0
      %v794 = vsel %vm468, %v460, 0
      %v797 = vsel %vm468, %v461, 0
      %799 = vmatprep.subr.mxu0 0.0
      %800 = vmatpush1.msra.mxu0 %v406
      %801 = vmatprep.subr.mxu0 0.0
      %802 = vmatpush1.msra.mxu0 %v407
      %803 = vmatprep.subr.mxu0 0.0
      %804 = vmatpush1.msra.mxu0 0.0
      %805 = vmatprep.subr.mxu0 0.0
      %806 = vmatpush1.msra.mxu0 0.0
      %807 = vmatprep.subr.mxu0 0.0
      %808 = vmatpush1.msra.mxu0 0.0
      %809 = vmatprep.subr.mxu0 0.0
      %810 = vmatpush1.msra.mxu0 0.0
      %811 = vmatprep.subr.mxu0 0.0
      %812 = vmatpush1.msra.mxu0 0.0
      %813 = vmatprep.subr.mxu0 0.0
      %814 = vmatpush1.msra.mxu0 0.0
      %815 = vmatprep.subr.mxu0 0.0
      %816 = vmatpush1.msra.mxu0 0.0
      %817 = vmatprep.subr.mxu0 0.0
      %818 = vmatpush1.msra.mxu0 0.0
      %819 = vmatprep.subr.mxu0 0.0
      %820 = vmatpush1.msra.mxu0 0.0
      %821 = vmatprep.subr.mxu0 0.0
      %822 = vmatpush1.msra.mxu0 0.0
      %823 = vmatprep.subr.mxu0 0.0
      %824 = vmatpush1.msra.mxu0 0.0
      %825 = vmatprep.subr.mxu0 0.0
      %826 = vmatpush1.msra.mxu0 0.0
      %827 = vmatprep.subr.mxu0 0.0
      %828 = vmatpush1.msra.mxu0 0.0
      %829 = vmatprep.subr.mxu0 0.0
      %830 = vmatpush1.msra.mxu0 0.0
      %831 = vmatprep.subr.mxu0 0.0
      %832 = vmatpush1.msra.mxu0 0.0
      %833 = vmatprep.subr.mxu0 0.0
      %834 = vmatpush1.msra.mxu0 0.0
      %835 = vmatprep.subr.mxu0 0.0
      %836 = vmatpush1.msra.mxu0 0.0
      %837 = vmatprep.subr.mxu0 0.0
      %838 = vmatpush1.msra.mxu0 0.0
      %839 = vmatprep.subr.mxu0 0.0
      %840 = vmatpush1.msra.mxu0 0.0
      %841 = vmatprep.subr.mxu0 0.0
      %842 = vmatpush1.msra.mxu0 0.0
      %843 = vmatprep.subr.mxu0 0.0
      %844 = vmatpush1.msra.mxu0 0.0
      %845 = vmatprep.subr.mxu0 0.0
      %846 = vmatpush1.msra.mxu0 0.0
      %847 = vmatprep.subr.mxu0 0.0
      %848 = vmatpush1.msra.mxu0 0.0
      %849 = vmatprep.subr.mxu0 0.0
      %850 = vmatpush1.msra.mxu0 0.0
      %851 = vmatprep.subr.mxu0 0.0
      %852 = vmatpush1.msra.mxu0 0.0
      %853 = vmatprep.subr.mxu0 0.0
      %854 = vmatpush1.msra.mxu0 0.0
      %855 = vmatprep.subr.mxu0 0.0
      %856 = vmatpush1.msra.mxu0 0.0
      %857 = vmatprep.subr.mxu0 0.0
      %858 = vmatpush1.msra.mxu0 0.0
      %859 = vmatprep.subr.mxu0 0.0
      %860 = vmatpush1.msra.mxu0 0.0
      %861 = vmatprep.subr.mxu0 0.0
      %862 = vmatpush1.msra.mxu0 0.0
      %863 = vmatprep.mubr.f32.mxu0 0.0
      %864 = vmatmul.mubr.f32.gmra.mrb[0].mxu0 %v794
      %v865 = vpop.f32.mrb[0].mxu0
      %v866 = vadd.f32 0.0, %v865
      %v867 = vpop.f32.mrb[0].mxu0
      %868 = vmatprep.mubr.f32.mxu0 0.0
      %869 = vmatmul.mubr.f32.gmra.mrb[0].mxu0 %v797
      %v870 = vpop.f32.mrb[0].mxu0
      %v871 = vadd.f32 0.0, %v870
      %v872 = vpop.f32.mrb[0].mxu0
      %873 = vdwg.mxu0
      %v875 = vsel %vm468, %v462, 0
      %v878 = vsel %vm468, %v463, 0
      %880 = vmatprep.subr.mxu0 0.0
      %881 = vmatpush1.msra.mxu0 %v408
      %882 = vmatprep.subr.mxu0 0.0
      %883 = vmatpush1.msra.mxu0 %v409
      %884 = vmatprep.subr.mxu0 0.0
      %885 = vmatpush1.msra.mxu0 0.0
      %886 = vmatprep.subr.mxu0 0.0
      %887 = vmatpush1.msra.mxu0 0.0
      %888 = vmatprep.subr.mxu0 0.0
      %889 = vmatpush1.msra.mxu0 0.0
      %890 = vmatprep.subr.mxu0 0.0
      %891 = vmatpush1.msra.mxu0 0.0
      %892 = vmatprep.subr.mxu0 0.0
      %893 = vmatpush1.msra.mxu0 0.0
      %894 = vmatprep.subr.mxu0 0.0
      %895 = vmatpush1.msra.mxu0 0.0
      %896 = vmatprep.subr.mxu0 0.0
      %897 = vmatpush1.msra.mxu0 0.0
      %898 = vmatprep.subr.mxu0 0.0
      %899 = vmatpush1.msra.mxu0 0.0
      %900 = vmatprep.subr.mxu0 0.0
      %901 = vmatpush1.msra.mxu0 0.0
      %902 = vmatprep.subr.mxu0 0.0
      %903 = vmatpush1.msra.mxu0 0.0
      %904 = vmatprep.subr.mxu0 0.0
      %905 = vmatpush1.msra.mxu0 0.0
      %906 = vmatprep.subr.mxu0 0.0
      %907 = vmatpush1.msra.mxu0 0.0
      %908 = vmatprep.subr.mxu0 0.0
      %909 = vmatpush1.msra.mxu0 0.0
      %910 = vmatprep.subr.mxu0 0.0
      %911 = vmatpush1.msra.mxu0 0.0
      %912 = vmatprep.subr.mxu0 0.0
      %913 = vmatpush1.msra.mxu0 0.0
      %914 = vmatprep.subr.mxu0 0.0
      %915 = vmatpush1.msra.mxu0 0.0
      %916 = vmatprep.subr.mxu0 0.0
      %917 = vmatpush1.msra.mxu0 0.0
      %918 = vmatprep.subr.mxu0 0.0
      %919 = vmatpush1.msra.mxu0 0.0
      %920 = vmatprep.subr.mxu0 0.0
      %921 = vmatpush1.msra.mxu0 0.0
      %922 = vmatprep.subr.mxu0 0.0
      %923 = vmatpush1.msra.mxu0 0.0
      %924 = vmatprep.subr.mxu0 0.0
      %925 = vmatpush1.msra.mxu0 0.0
      %926 = vmatprep.subr.mxu0 0.0
      %927 = vmatpush1.msra.mxu0 0.0
      %928 = vmatprep.subr.mxu0 0.0
      %929 = vmatpush1.msra.mxu0 0.0
      %930 = vmatprep.subr.mxu0 0.0
      %931 = vmatpush1.msra.mxu0 0.0
      %932 = vmatprep.subr.mxu0 0.0
      %933 = vmatpush1.msra.mxu0 0.0
      %934 = vmatprep.subr.mxu0 0.0
      %935 = vmatpush1.msra.mxu0 0.0
      %936 = vmatprep.subr.mxu0 0.0
      %937 = vmatpush1.msra.mxu0 0.0
      %938 = vmatprep.subr.mxu0 0.0
      %939 = vmatpush1.msra.mxu0 0.0
      %940 = vmatprep.subr.mxu0 0.0
      %941 = vmatpush1.msra.mxu0 0.0
      %942 = vmatprep.subr.mxu0 0.0
      %943 = vmatpush1.msra.mxu0 0.0
      %944 = vmatprep.mubr.f32.mxu0 0.0
      %945 = vmatmul.mubr.f32.gmra.mrb[0].mxu0 %v875
      %v946 = vpop.f32.mrb[0].mxu0
      %v947 = vadd.f32 0.0, %v946
      %v948 = vpop.f32.mrb[0].mxu0
      %949 = vmatprep.mubr.f32.mxu0 0.0
      %950 = vmatmul.mubr.f32.gmra.mrb[0].mxu0 %v878
      %v951 = vpop.f32.mrb[0].mxu0
      %v952 = vadd.f32 0.0, %v951
      %v953 = vpop.f32.mrb[0].mxu0
      %954 = vdwg.mxu0
      %v956 = vsel %vm468, %v464, 0
      %v959 = vsel %vm468, %v465, 0
      %961 = vmatprep.subr.mxu0 0.0
      %962 = vmatpush1.msra.mxu0 %v410
      %963 = vmatprep.subr.mxu0 0.0
      %964 = vmatpush1.msra.mxu0 %v411
      %965 = vmatprep.subr.mxu0 0.0
      %966 = vmatpush1.msra.mxu0 0.0
      %967 = vmatprep.subr.mxu0 0.0
      %968 = vmatpush1.msra.mxu0 0.0
      %969 = vmatprep.subr.mxu0 0.0
      %970 = vmatpush1.msra.mxu0 0.0
      %971 = vmatprep.subr.mxu0 0.0
      %972 = vmatpush1.msra.mxu0 0.0
      %973 = vmatprep.subr.mxu0 0.0
      %974 = vmatpush1.msra.mxu0 0.0
      %975 = vmatprep.subr.mxu0 0.0
      %976 = vmatpush1.msra.mxu0 0.0
      %977 = vmatprep.subr.mxu0 0.0
      %978 = vmatpush1.msra.mxu0 0.0
      %979 = vmatprep.subr.mxu0 0.0
      %980 = vmatpush1.msra.mxu0 0.0
      %981 = vmatprep.subr.mxu0 0.0
      %982 = vmatpush1.msra.mxu0 0.0
      %983 = vmatprep.subr.mxu0 0.0
      %984 = vmatpush1.msra.mxu0 0.0
      %985 = vmatprep.subr.mxu0 0.0
      %986 = vmatpush1.msra.mxu0 0.0
      %987 = vmatprep.subr.mxu0 0.0
      %988 = vmatpush1.msra.mxu0 0.0
      %989 = vmatprep.subr.mxu0 0.0
      %990 = vmatpush1.msra.mxu0 0.0
      %991 = vmatprep.subr.mxu0 0.0
      %992 = vmatpush1.msra.mxu0 0.0
      %993 = vmatprep.subr.mxu0 0.0
      %994 = vmatpush1.msra.mxu0 0.0
      %995 = vmatprep.subr.mxu0 0.0
      %996 = vmatpush1.msra.mxu0 0.0
      %997 = vmatprep.subr.mxu0 0.0
      %998 = vmatpush1.msra.mxu0 0.0
      %999 = vmatprep.subr.mxu0 0.0
      %1000 = vmatpush1.msra.mxu0 0.0
      %1001 = vmatprep.subr.mxu0 0.0
      %1002 = vmatpush1.msra.mxu0 0.0
      %1003 = vmatprep.subr.mxu0 0.0
      %1004 = vmatpush1.msra.mxu0 0.0
      %1005 = vmatprep.subr.mxu0 0.0
      %1006 = vmatpush1.msra.mxu0 0.0
      %1007 = vmatprep.subr.mxu0 0.0
      %1008 = vmatpush1.msra.mxu0 0.0
      %1009 = vmatprep.subr.mxu0 0.0
      %1010 = vmatpush1.msra.mxu0 0.0
      %1011 = vmatprep.subr.mxu0 0.0
      %1012 = vmatpush1.msra.mxu0 0.0
      %1013 = vmatprep.subr.mxu0 0.0
      %1014 = vmatpush1.msra.mxu0 0.0
      %1015 = vmatprep.subr.mxu0 0.0
      %1016 = vmatpush1.msra.mxu0 0.0
      %1017 = vmatprep.subr.mxu0 0.0
      %1018 = vmatpush1.msra.mxu0 0.0
      %1019 = vmatprep.subr.mxu0 0.0
      %1020 = vmatpush1.msra.mxu0 0.0
      %1021 = vmatprep.subr.mxu0 0.0
      %1022 = vmatpush1.msra.mxu0 0.0
      %1023 = vmatprep.subr.mxu0 0.0
      %1024 = vmatpush1.msra.mxu0 0.0
      %1025 = vmatprep.mubr.f32.mxu0 0.0
      %1026 = vmatmul.mubr.f32.gmra.mrb[0].mxu0 %v956
      %v1027 = vpop.f32.mrb[0].mxu0
      %v1028 = vadd.f32 0.0, %v1027
      %v1029 = vpop.f32.mrb[0].mxu0
      %1030 = vmatprep.mubr.f32.mxu0 0.0
      %1031 = vmatmul.mubr.f32.gmra.mrb[0].mxu0 %v959
      %v1032 = vpop.f32.mrb[0].mxu0
      %v1033 = vadd.f32 0.0, %v1032
      %v1034 = vpop.f32.mrb[0].mxu0
      %1035 = vdwg.mxu0
      %v1037 = vsel %vm468, %v466, 0
      %v1040 = vsel %vm468, %v467, 0
      %1042 = vmatprep.subr.mxu0 0.0
      %1043 = vmatpush1.msra.mxu0 %v412
      %1044 = vmatprep.subr.mxu0 0.0
      %1045 = vmatpush1.msra.mxu0 %v413
      %1046 = vmatprep.subr.mxu0 0.0
      %1047 = vmatpush1.msra.mxu0 0.0
      %1048 = vmatprep.subr.mxu0 0.0
      %1049 = vmatpush1.msra.mxu0 0.0
      %1050 = vmatprep.subr.mxu0 0.0
      %1051 = vmatpush1.msra.mxu0 0.0
      %1052 = vmatprep.subr.mxu0 0.0
      %1053 = vmatpush1.msra.mxu0 0.0
      %1054 = vmatprep.subr.mxu0 0.0
      %1055 = vmatpush1.msra.mxu0 0.0
      %1056 = vmatprep.subr.mxu0 0.0
      %1057 = vmatpush1.msra.mxu0 0.0
      %1058 = vmatprep.subr.mxu0 0.0
      %1059 = vmatpush1.msra.mxu0 0.0
      %1060 = vmatprep.subr.mxu0 0.0
      %1061 = vmatpush1.msra.mxu0 0.0
      %1062 = vmatprep.subr.mxu0 0.0
      %1063 = vmatpush1.msra.mxu0 0.0
      %1064 = vmatprep.subr.mxu0 0.0
      %1065 = vmatpush1.msra.mxu0 0.0
      %1066 = vmatprep.subr.mxu0 0.0
      %1067 = vmatpush1.msra.mxu0 0.0
      %1068 = vmatprep.subr.mxu0 0.0
      %1069 = vmatpush1.msra.mxu0 0.0
      %1070 = vmatprep.subr.mxu0 0.0
      %1071 = vmatpush1.msra.mxu0 0.0
      %1072 = vmatprep.subr.mxu0 0.0
      %1073 = vmatpush1.msra.mxu0 0.0
      %1074 = vmatprep.subr.mxu0 0.0
      %1075 = vmatpush1.msra.mxu0 0.0
      %1076 = vmatprep.subr.mxu0 0.0
      %1077 = vmatpush1.msra.mxu0 0.0
      %1078 = vmatprep.subr.mxu0 0.0
      %1079 = vmatpush1.msra.mxu0 0.0
      %1080 = vmatprep.subr.mxu0 0.0
      %1081 = vmatpush1.msra.mxu0 0.0
      %1082 = vmatprep.subr.mxu0 0.0
      %1083 = vmatpush1.msra.mxu0 0.0
      %1084 = vmatprep.subr.mxu0 0.0
      %1085 = vmatpush1.msra.mxu0 0.0
      %1086 = vmatprep.subr.mxu0 0.0
      %1087 = vmatpush1.msra.mxu0 0.0
      %1088 = vmatprep.subr.mxu0 0.0
      %1089 = vmatpush1.msra.mxu0 0.0
      %1090 = vmatprep.subr.mxu0 0.0
      %1091 = vmatpush1.msra.mxu0 0.0
      %1092 = vmatprep.subr.mxu0 0.0
      %1093 = vmatpush1.msra.mxu0 0.0
      %1094 = vmatprep.subr.mxu0 0.0
      %1095 = vmatpush1.msra.mxu0 0.0
      %1096 = vmatprep.subr.mxu0 0.0
      %1097 = vmatpush1.msra.mxu0 0.0
      %1098 = vmatprep.subr.mxu0 0.0
      %1099 = vmatpush1.msra.mxu0 0.0
      %1100 = vmatprep.subr.mxu0 0.0
      %1101 = vmatpush1.msra.mxu0 0.0
      %1102 = vmatprep.subr.mxu0 0.0
      %1103 = vmatpush1.msra.mxu0 0.0
      %1104 = vmatprep.subr.mxu0 0.0
      %1105 = vmatpush1.msra.mxu0 0.0
      %1106 = vmatprep.mubr.f32.mxu0 0.0
      %1107 = vmatmul.mubr.f32.gmra.mrb[0].mxu0 %v1037
      %v1108 = vpop.f32.mrb[0].mxu0
      %v1109 = vadd.f32 0.0, %v1108
      %v1110 = vpop.f32.mrb[0].mxu0
      %1111 = vmatprep.mubr.f32.mxu0 0.0
      %1112 = vmatmul.mubr.f32.gmra.mrb[0].mxu0 %v1040
      %v1113 = vpop.f32.mrb[0].mxu0
      %v1114 = vadd.f32 0.0, %v1113
      %v1115 = vpop.f32.mrb[0].mxu0
      %1116 = vdwg.mxu0
      %vm1117 = vcmask 64512
      %v1119 = vsel %vm1117, %v542, 0
      %v1122 = vsel %vm1117, %v547, 0
      %v1125 = vsel %vm1117, %v623, 0
      %v1128 = vsel %vm1117, %v628, 0
      %v1131 = vsel %vm1117, %v704, 0
      %v1134 = vsel %vm1117, %v709, 0
      %v1137 = vsel %vm1117, %v785, 0
      %v1140 = vsel %vm1117, %v790, 0
      %v1143 = vsel %vm1117, %v866, 0
      %v1146 = vsel %vm1117, %v871, 0
      %v1149 = vsel %vm1117, %v947, 0
      %v1152 = vsel %vm1117, %v952, 0
      %v1155 = vsel %vm1117, %v1028, 0
      %v1158 = vsel %vm1117, %v1033, 0
      %v1161 = vsel %vm1117, %v1109, 0
      %v1164 = vsel %vm1117, %v1114, 0
      %1166 = vmatprep.subr.mxu0 0.0
      %1167 = vmatpush1.msra.mxu0 %v431
      %1168 = vmatprep.subr.mxu0 0.0
      %1169 = vmatpush1.msra.mxu0 0.0
      %1170 = vmatprep.subr.mxu0 0.0
      %1171 = vmatpush1.msra.mxu0 0.0
      %1172 = vmatprep.subr.mxu0 0.0
      %1173 = vmatpush1.msra.mxu0 0.0
      %1174 = vmatprep.subr.mxu0 0.0
      %1175 = vmatpush1.msra.mxu0 0.0
      %1176 = vmatprep.subr.mxu0 0.0
      %1177 = vmatpush1.msra.mxu0 0.0
      %1178 = vmatprep.subr.mxu0 0.0
      %1179 = vmatpush1.msra.mxu0 0.0
      %1180 = vmatprep.subr.mxu0 0.0
      %1181 = vmatpush1.msra.mxu0 0.0
      %1182 = vmatprep.subr.mxu0 0.0
      %1183 = vmatpush1.msra.mxu0 0.0
      %1184 = vmatprep.subr.mxu0 0.0
      %1185 = vmatpush1.msra.mxu0 0.0
      %1186 = vmatprep.subr.mxu0 0.0
      %1187 = vmatpush1.msra.mxu0 0.0
      %1188 = vmatprep.subr.mxu0 0.0
      %1189 = vmatpush1.msra.mxu0 0.0
      %1190 = vmatprep.subr.mxu0 0.0
      %1191 = vmatpush1.msra.mxu0 0.0
      %1192 = vmatprep.subr.mxu0 0.0
      %1193 = vmatpush1.msra.mxu0 0.0
      %1194 = vmatprep.subr.mxu0 0.0
      %1195 = vmatpush1.msra.mxu0 0.0
      %1196 = vmatprep.subr.mxu0 0.0
      %1197 = vmatpush1.msra.mxu0 0.0
      %1198 = vmatprep.subr.mxu0 0.0
      %1199 = vmatpush1.msra.mxu0 0.0
      %1200 = vmatprep.subr.mxu0 0.0
      %1201 = vmatpush1.msra.mxu0 0.0
      %1202 = vmatprep.subr.mxu0 0.0
      %1203 = vmatpush1.msra.mxu0 0.0
      %1204 = vmatprep.subr.mxu0 0.0
      %1205 = vmatpush1.msra.mxu0 0.0
      %1206 = vmatprep.subr.mxu0 0.0
      %1207 = vmatpush1.msra.mxu0 0.0
      %1208 = vmatprep.subr.mxu0 0.0
      %1209 = vmatpush1.msra.mxu0 0.0
      %1210 = vmatprep.subr.mxu0 0.0
      %1211 = vmatpush1.msra.mxu0 0.0
      %1212 = vmatprep.subr.mxu0 0.0
      %1213 = vmatpush1.msra.mxu0 0.0
      %1214 = vmatprep.subr.mxu0 0.0
      %1215 = vmatpush1.msra.mxu0 0.0
      %1216 = vmatprep.subr.mxu0 0.0
      %1217 = vmatpush1.msra.mxu0 0.0
      %1218 = vmatprep.subr.mxu0 0.0
      %1219 = vmatpush1.msra.mxu0 0.0
      %1220 = vmatprep.subr.mxu0 0.0
      %1221 = vmatpush1.msra.mxu0 0.0
      %1222 = vmatprep.subr.mxu0 0.0
      %1223 = vmatpush1.msra.mxu0 0.0
      %1224 = vmatprep.subr.mxu0 0.0
      %1225 = vmatpush1.msra.mxu0 0.0
      %1226 = vmatprep.subr.mxu0 0.0
      %1227 = vmatpush1.msra.mxu0 0.0
      %1228 = vmatprep.subr.mxu0 0.0
      %1229 = vmatpush1.msra.mxu0 0.0
      %1230 = vmatprep.mubr.f32.mxu0 0.0
      %1231 = vmatmul.mubr.f32.gmra.mrb[0].mxu0 %v1119
      %v1232 = vpop.f32.mrb[0].mxu0
      %v1233 = vadd.f32 0.0, %v1232
      %v1234 = vpop.f32.mrb[0].mxu0
      %1235 = vmatprep.mubr.f32.mxu0 0.0
      %1236 = vmatmul.mubr.f32.gmra.mrb[0].mxu0 %v1122
      %v1237 = vpop.f32.mrb[0].mxu0
      %v1238 = vadd.f32 0.0, %v1237
      %v1239 = vpop.f32.mrb[0].mxu0
      %1240 = vmatprep.mubr.f32.mxu0 0.0
      %1241 = vmatmul.mubr.f32.gmra.mrb[0].mxu0 %v1125
      %v1242 = vpop.f32.mrb[0].mxu0
      %v1243 = vadd.f32 0.0, %v1242
      %v1244 = vpop.f32.mrb[0].mxu0
      %1245 = vmatprep.mubr.f32.mxu0 0.0
      %1246 = vmatmul.mubr.f32.gmra.mrb[0].mxu0 %v1128
      %v1247 = vpop.f32.mrb[0].mxu0
      %v1248 = vadd.f32 0.0, %v1247
      %v1249 = vpop.f32.mrb[0].mxu0
      %1250 = vmatprep.mubr.f32.mxu0 0.0
      %1251 = vmatmul.mubr.f32.gmra.mrb[0].mxu0 %v1131
      %v1252 = vpop.f32.mrb[0].mxu0
      %v1253 = vadd.f32 0.0, %v1252
      %v1254 = vpop.f32.mrb[0].mxu0
      %1255 = vmatprep.mubr.f32.mxu0 0.0
      %1256 = vmatmul.mubr.f32.gmra.mrb[0].mxu0 %v1134
      %v1257 = vpop.f32.mrb[0].mxu0
      %v1258 = vadd.f32 0.0, %v1257
      %v1259 = vpop.f32.mrb[0].mxu0
      %1260 = vmatprep.mubr.f32.mxu0 0.0
      %1261 = vmatmul.mubr.f32.gmra.mrb[0].mxu0 %v1137
      %v1262 = vpop.f32.mrb[0].mxu0
      %v1263 = vadd.f32 0.0, %v1262
      %v1264 = vpop.f32.mrb[0].mxu0
      %1265 = vmatprep.mubr.f32.mxu0 0.0
      %1266 = vmatmul.mubr.f32.gmra.mrb[0].mxu0 %v1140
      %v1267 = vpop.f32.mrb[0].mxu0
      %v1268 = vadd.f32 0.0, %v1267
      %v1269 = vpop.f32.mrb[0].mxu0
      %1270 = vmatprep.mubr.f32.mxu0 0.0
      %1271 = vmatmul.mubr.f32.gmra.mrb[0].mxu0 %v1143
      %v1272 = vpop.f32.mrb[0].mxu0
      %v1273 = vadd.f32 0.0, %v1272
      %v1274 = vpop.f32.mrb[0].mxu0
      %1275 = vmatprep.mubr.f32.mxu0 0.0
      %1276 = vmatmul.mubr.f32.gmra.mrb[0].mxu0 %v1146
      %v1277 = vpop.f32.mrb[0].mxu0
      %v1278 = vadd.f32 0.0, %v1277
      %v1279 = vpop.f32.mrb[0].mxu0
      %1280 = vmatprep.mubr.f32.mxu0 0.0
      %1281 = vmatmul.mubr.f32.gmra.mrb[0].mxu0 %v1149
      %v1282 = vpop.f32.mrb[0].mxu0
      %v1283 = vadd.f32 0.0, %v1282
      %v1284 = vpop.f32.mrb[0].mxu0
      %1285 = vmatprep.mubr.f32.mxu0 0.0
      %1286 = vmatmul.mubr.f32.gmra.mrb[0].mxu0 %v1152
      %v1287 = vpop.f32.mrb[0].mxu0
      %v1288 = vadd.f32 0.0, %v1287
      %v1289 = vpop.f32.mrb[0].mxu0
      %1290 = vmatprep.mubr.f32.mxu0 0.0
      %1291 = vmatmul.mubr.f32.gmra.mrb[0].mxu0 %v1155
      %v1292 = vpop.f32.mrb[0].mxu0
      %v1293 = vadd.f32 0.0, %v1292
      %v1294 = vpop.f32.mrb[0].mxu0
      %1295 = vmatprep.mubr.f32.mxu0 0.0
      %1296 = vmatmul.mubr.f32.gmra.mrb[0].mxu0 %v1158
      %v1297 = vpop.f32.mrb[0].mxu0
      %v1298 = vadd.f32 0.0, %v1297
      %v1299 = vpop.f32.mrb[0].mxu0
      %1300 = vmatprep.mubr.f32.mxu0 0.0
      %1301 = vmatmul.mubr.f32.gmra.mrb[0].mxu0 %v1161
      %v1302 = vpop.f32.mrb[0].mxu0
      %v1303 = vadd.f32 0.0, %v1302
      %v1304 = vpop.f32.mrb[0].mxu0
      %1305 = vmatprep.mubr.f32.mxu0 0.0
      %1306 = vmatmul.mubr.f32.gmra.mrb[0].mxu0 %v1164
      %v1307 = vpop.f32.mrb[0].mxu0
      %v1308 = vadd.f32 0.0, %v1307
      %v1309 = vpop.f32.mrb[0].mxu0
      %1310 = vdwg.mxu0
      %v1312 = vsel %vm1117, %v398, 0
      %v1315 = vsel %vm1117, %v399, 0
      %v1318 = vsel %vm1117, %v400, 0
      %v1321 = vsel %vm1117, %v401, 0
      %v1324 = vsel %vm1117, %v402, 0
      %v1327 = vsel %vm1117, %v403, 0
      %v1330 = vsel %vm1117, %v404, 0
      %v1333 = vsel %vm1117, %v405, 0
      %v1336 = vsel %vm1117, %v406, 0
      %v1339 = vsel %vm1117, %v407, 0
      %v1342 = vsel %vm1117, %v408, 0
      %v1345 = vsel %vm1117, %v409, 0
      %v1348 = vsel %vm1117, %v410, 0
      %v1351 = vsel %vm1117, %v411, 0
      %v1354 = vsel %vm1117, %v412, 0
      %v1357 = vsel %vm1117, %v413, 0
      %1359 = vmatprep.subr.mxu0 0.0
      %1360 = vmatpush1.msra.mxu0 %v430
      %1361 = vmatprep.subr.mxu0 0.0
      %1362 = vmatpush1.msra.mxu0 0.0
      %1363 = vmatprep.subr.mxu0 0.0
      %1364 = vmatpush1.msra.mxu0 0.0
      %1365 = vmatprep.subr.mxu0 0.0
      %1366 = vmatpush1.msra.mxu0 0.0
      %1367 = vmatprep.subr.mxu0 0.0
      %1368 = vmatpush1.msra.mxu0 0.0
      %1369 = vmatprep.subr.mxu0 0.0
      %1370 = vmatpush1.msra.mxu0 0.0
      %1371 = vmatprep.subr.mxu0 0.0
      %1372 = vmatpush1.msra.mxu0 0.0
      %1373 = vmatprep.subr.mxu0 0.0
      %1374 = vmatpush1.msra.mxu0 0.0
      %1375 = vmatprep.subr.mxu0 0.0
      %1376 = vmatpush1.msra.mxu0 0.0
      %1377 = vmatprep.subr.mxu0 0.0
      %1378 = vmatpush1.msra.mxu0 0.0
      %1379 = vmatprep.subr.mxu0 0.0
      %1380 = vmatpush1.msra.mxu0 0.0
      %1381 = vmatprep.subr.mxu0 0.0
      %1382 = vmatpush1.msra.mxu0 0.0
      %1383 = vmatprep.subr.mxu0 0.0
      %1384 = vmatpush1.msra.mxu0 0.0
      %1385 = vmatprep.subr.mxu0 0.0
      %1386 = vmatpush1.msra.mxu0 0.0
      %1387 = vmatprep.subr.mxu0 0.0
      %1388 = vmatpush1.msra.mxu0 0.0
      %1389 = vmatprep.subr.mxu0 0.0
      %1390 = vmatpush1.msra.mxu0 0.0
      %1391 = vmatprep.subr.mxu0 0.0
      %1392 = vmatpush1.msra.mxu0 0.0
      %1393 = vmatprep.subr.mxu0 0.0
      %1394 = vmatpush1.msra.mxu0 0.0
      %1395 = vmatprep.subr.mxu0 0.0
      %1396 = vmatpush1.msra.mxu0 0.0
      %1397 = vmatprep.subr.mxu0 0.0
      %1398 = vmatpush1.msra.mxu0 0.0
      %1399 = vmatprep.subr.mxu0 0.0
      %1400 = vmatpush1.msra.mxu0 0.0
      %1401 = vmatprep.subr.mxu0 0.0
      %1402 = vmatpush1.msra.mxu0 0.0
      %1403 = vmatprep.subr.mxu0 0.0
      %1404 = vmatpush1.msra.mxu0 0.0
      %1405 = vmatprep.subr.mxu0 0.0
      %1406 = vmatpush1.msra.mxu0 0.0
      %1407 = vmatprep.subr.mxu0 0.0
      %1408 = vmatpush1.msra.mxu0 0.0
      %1409 = vmatprep.subr.mxu0 0.0
      %1410 = vmatpush1.msra.mxu0 0.0
      %1411 = vmatprep.subr.mxu0 0.0
      %1412 = vmatpush1.msra.mxu0 0.0
      %1413 = vmatprep.subr.mxu0 0.0
      %1414 = vmatpush1.msra.mxu0 0.0
      %1415 = vmatprep.subr.mxu0 0.0
      %1416 = vmatpush1.msra.mxu0 0.0
      %1417 = vmatprep.subr.mxu0 0.0
      %1418 = vmatpush1.msra.mxu0 0.0
      %1419 = vmatprep.subr.mxu0 0.0
      %1420 = vmatpush1.msra.mxu0 0.0
      %1421 = vmatprep.subr.mxu0 0.0
      %1422 = vmatpush1.msra.mxu0 0.0
      %1423 = vmatprep.mubr.f32.mxu0 0.0
      %1424 = vmatmul.mubr.f32.gmra.mrb[0].mxu0 %v1312
      %v1425 = vpop.f32.mrb[0].mxu0
      %v1426 = vadd.f32 %v1233, %v1425
      %v1427 = vpop.f32.mrb[0].mxu0
      %1428 = vmatprep.mubr.f32.mxu0 0.0
      %1429 = vmatmul.mubr.f32.gmra.mrb[0].mxu0 %v1315
      %v1430 = vpop.f32.mrb[0].mxu0
      %v1431 = vadd.f32 %v1238, %v1430
      %v1432 = vpop.f32.mrb[0].mxu0
      %1433 = vmatprep.mubr.f32.mxu0 0.0
      %1434 = vmatmul.mubr.f32.gmra.mrb[0].mxu0 %v1318
      %v1435 = vpop.f32.mrb[0].mxu0
      %v1436 = vadd.f32 %v1243, %v1435
      %v1437 = vpop.f32.mrb[0].mxu0
      %1438 = vmatprep.mubr.f32.mxu0 0.0
      %1439 = vmatmul.mubr.f32.gmra.mrb[0].mxu0 %v1321
      %v1440 = vpop.f32.mrb[0].mxu0
      %v1441 = vadd.f32 %v1248, %v1440
      %v1442 = vpop.f32.mrb[0].mxu0
      %1443 = vmatprep.mubr.f32.mxu0 0.0
      %1444 = vmatmul.mubr.f32.gmra.mrb[0].mxu0 %v1324
      %v1445 = vpop.f32.mrb[0].mxu0
      %v1446 = vadd.f32 %v1253, %v1445
      %v1447 = vpop.f32.mrb[0].mxu0
      %1448 = vmatprep.mubr.f32.mxu0 0.0
      %1449 = vmatmul.mubr.f32.gmra.mrb[0].mxu0 %v1327
      %v1450 = vpop.f32.mrb[0].mxu0
      %v1451 = vadd.f32 %v1258, %v1450
      %v1452 = vpop.f32.mrb[0].mxu0
      %1453 = vmatprep.mubr.f32.mxu0 0.0
      %1454 = vmatmul.mubr.f32.gmra.mrb[0].mxu0 %v1330
      %v1455 = vpop.f32.mrb[0].mxu0
      %v1456 = vadd.f32 %v1263, %v1455
      %v1457 = vpop.f32.mrb[0].mxu0
      %1458 = vmatprep.mubr.f32.mxu0 0.0
      %1459 = vmatmul.mubr.f32.gmra.mrb[0].mxu0 %v1333
      %v1460 = vpop.f32.mrb[0].mxu0
      %v1461 = vadd.f32 %v1268, %v1460
      %v1462 = vpop.f32.mrb[0].mxu0
      %1463 = vmatprep.mubr.f32.mxu0 0.0
      %1464 = vmatmul.mubr.f32.gmra.mrb[0].mxu0 %v1336
      %v1465 = vpop.f32.mrb[0].mxu0
      %v1466 = vadd.f32 %v1273, %v1465
      %v1467 = vpop.f32.mrb[0].mxu0
      %1468 = vmatprep.mubr.f32.mxu0 0.0
      %1469 = vmatmul.mubr.f32.gmra.mrb[0].mxu0 %v1339
      %v1470 = vpop.f32.mrb[0].mxu0
      %v1471 = vadd.f32 %v1278, %v1470
      %v1472 = vpop.f32.mrb[0].mxu0
      %1473 = vmatprep.mubr.f32.mxu0 0.0
      %1474 = vmatmul.mubr.f32.gmra.mrb[0].mxu0 %v1342
      %v1475 = vpop.f32.mrb[0].mxu0
      %v1476 = vadd.f32 %v1283, %v1475
      %v1477 = vpop.f32.mrb[0].mxu0
      %1478 = vmatprep.mubr.f32.mxu0 0.0
      %1479 = vmatmul.mubr.f32.gmra.mrb[0].mxu0 %v1345
      %v1480 = vpop.f32.mrb[0].mxu0
      %v1481 = vadd.f32 %v1288, %v1480
      %v1482 = vpop.f32.mrb[0].mxu0
      %1483 = vmatprep.mubr.f32.mxu0 0.0
      %1484 = vmatmul.mubr.f32.gmra.mrb[0].mxu0 %v1348
      %v1485 = vpop.f32.mrb[0].mxu0
      %v1486 = vadd.f32 %v1293, %v1485
      %v1487 = vpop.f32.mrb[0].mxu0
      %1488 = vmatprep.mubr.f32.mxu0 0.0
      %1489 = vmatmul.mubr.f32.gmra.mrb[0].mxu0 %v1351
      %v1490 = vpop.f32.mrb[0].mxu0
      %v1491 = vadd.f32 %v1298, %v1490
      %v1492 = vpop.f32.mrb[0].mxu0
      %1493 = vmatprep.mubr.f32.mxu0 0.0
      %1494 = vmatmul.mubr.f32.gmra.mrb[0].mxu0 %v1354
      %v1495 = vpop.f32.mrb[0].mxu0
      %v1496 = vadd.f32 %v1303, %v1495
      %v1497 = vpop.f32.mrb[0].mxu0
      %1498 = vmatprep.mubr.f32.mxu0 0.0
      %1499 = vmatmul.mubr.f32.gmra.mrb[0].mxu0 %v1357
      %v1500 = vpop.f32.mrb[0].mxu0
      %v1501 = vadd.f32 %v1308, %v1500
      %v1502 = vpop.f32.mrb[0].mxu0
      %1503 = vdwg.mxu0
      %v1504 = vlaneseq
      %v1505 = vshrl.u32 %v1504, 7
      %v1506 = vsub.s32 0, %v1505
      %v1507 = vrot.slane %v432, %v1506
      %v1508 = vadd.f32 %v1426, %v1507
      %v1509 = vadd.f32 %v1431, %v1507
      %v1510 = vadd.f32 %v1436, %v1507
      %v1511 = vadd.f32 %v1441, %v1507
      %v1512 = vadd.f32 %v1446, %v1507
      %v1513 = vadd.f32 %v1451, %v1507
      %v1514 = vadd.f32 %v1456, %v1507
      %v1515 = vadd.f32 %v1461, %v1507
      %v1516 = vadd.f32 %v1466, %v1507
      %v1517 = vadd.f32 %v1471, %v1507
      %v1518 = vadd.f32 %v1476, %v1507
      %v1519 = vadd.f32 %v1481, %v1507
      %v1520 = vadd.f32 %v1486, %v1507
      %v1521 = vadd.f32 %v1491, %v1507
      %v1522 = vadd.f32 %v1496, %v1507
      %v1523 = vadd.f32 %v1501, %v1507
      %v1524 = vmax.f32 %v1508, 0.0
      %v1525 = vmax.f32 %v1509, 0.0
      %v1526 = vmax.f32 %v1510, 0.0
      %v1527 = vmax.f32 %v1511, 0.0
      %v1528 = vmax.f32 %v1512, 0.0
      %v1529 = vmax.f32 %v1513, 0.0
      %v1530 = vmax.f32 %v1514, 0.0
      %v1531 = vmax.f32 %v1515, 0.0
      %v1532 = vmax.f32 %v1516, 0.0
      %v1533 = vmax.f32 %v1517, 0.0
      %v1534 = vmax.f32 %v1518, 0.0
      %v1535 = vmax.f32 %v1519, 0.0
      %v1536 = vmax.f32 %v1520, 0.0
      %v1537 = vmax.f32 %v1521, 0.0
      %v1538 = vmax.f32 %v1522, 0.0
      %v1539 = vmax.f32 %v1523, 0.0
      %vm1540 = vcmask 261120
      %v1541 = vsel %vm1540, %v1524, 0.0
      %v1542 = vsel %vm1540, %v1525, 0.0
      %v1543 = vadd.f32 %v1541, %v1542
      %v1544 = vrot.slane %v1543, 4
      %v1545 = vadd.f32 %v1543, %v1544
      %v1546 = vrot.slane %v1545, 2
      %v1547 = vadd.f32 %v1545, %v1546
      %v1548 = vrot.slane %v1547, 1
      %v1549 = vadd.f32 %v1547, %v1548
      %v1550 = vsel %vm1540, %v1526, 0.0
      %v1551 = vsel %vm1540, %v1527, 0.0
      %v1552 = vadd.f32 %v1550, %v1551
      %v1553 = vrot.slane %v1552, 4
      %v1554 = vadd.f32 %v1552, %v1553
      %v1555 = vrot.slane %v1554, 2
      %v1556 = vadd.f32 %v1554, %v1555
      %v1557 = vrot.slane %v1556, 1
      %v1558 = vadd.f32 %v1556, %v1557
      %v1559 = vsel %vm1540, %v1528, 0.0
      %v1560 = vsel %vm1540, %v1529, 0.0
      %v1561 = vadd.f32 %v1559, %v1560
      %v1562 = vrot.slane %v1561, 4
      %v1563 = vadd.f32 %v1561, %v1562
      %v1564 = vrot.slane %v1563, 2
      %v1565 = vadd.f32 %v1563, %v1564
      %v1566 = vrot.slane %v1565, 1
      %v1567 = vadd.f32 %v1565, %v1566
      %v1568 = vsel %vm1540, %v1530, 0.0
      %v1569 = vsel %vm1540, %v1531, 0.0
      %v1570 = vadd.f32 %v1568, %v1569
      %v1571 = vrot.slane %v1570, 4
      %v1572 = vadd.f32 %v1570, %v1571
      %v1573 = vrot.slane %v1572, 2
      %v1574 = vadd.f32 %v1572, %v1573
      %v1575 = vrot.slane %v1574, 1
      %v1576 = vadd.f32 %v1574, %v1575
      %v1577 = vsel %vm1540, %v1532, 0.0
      %v1578 = vsel %vm1540, %v1533, 0.0
      %v1579 = vadd.f32 %v1577, %v1578
      %v1580 = vrot.slane %v1579, 4
      %v1581 = vadd.f32 %v1579, %v1580
      %v1582 = vrot.slane %v1581, 2
      %v1583 = vadd.f32 %v1581, %v1582
      %v1584 = vrot.slane %v1583, 1
      %v1585 = vadd.f32 %v1583, %v1584
      %v1586 = vsel %vm1540, %v1534, 0.0
      %v1587 = vsel %vm1540, %v1535, 0.0
      %v1588 = vadd.f32 %v1586, %v1587
      %v1589 = vrot.slane %v1588, 4
      %v1590 = vadd.f32 %v1588, %v1589
      %v1591 = vrot.slane %v1590, 2
      %v1592 = vadd.f32 %v1590, %v1591
      %v1593 = vrot.slane %v1592, 1
      %v1594 = vadd.f32 %v1592, %v1593
      %v1595 = vsel %vm1540, %v1536, 0.0
      %v1596 = vsel %vm1540, %v1537, 0.0
      %v1597 = vadd.f32 %v1595, %v1596
      %v1598 = vrot.slane %v1597, 4
      %v1599 = vadd.f32 %v1597, %v1598
      %v1600 = vrot.slane %v1599, 2
      %v1601 = vadd.f32 %v1599, %v1600
      %v1602 = vrot.slane %v1601, 1
      %v1603 = vadd.f32 %v1601, %v1602
      %v1604 = vsel %vm1540, %v1538, 0.0
      %v1605 = vsel %vm1540, %v1539, 0.0
      %v1606 = vadd.f32 %v1604, %v1605
      %v1607 = vrot.slane %v1606, 4
      %v1608 = vadd.f32 %v1606, %v1607
      %v1609 = vrot.slane %v1608, 2
      %v1610 = vadd.f32 %v1608, %v1609
      %v1611 = vrot.slane %v1610, 1
      %v1612 = vadd.f32 %v1610, %v1611
      %v1613 = vrcp.pop 16.0
      %v1614 = vmul.f32 %v1549, %v1613
      %v1615 = vmul.f32 %v1558, %v1613
      %v1616 = vmul.f32 %v1567, %v1613
      %v1617 = vmul.f32 %v1576, %v1613
      %v1618 = vmul.f32 %v1585, %v1613
      %v1619 = vmul.f32 %v1594, %v1613
      %v1620 = vmul.f32 %v1603, %v1613
      %v1621 = vmul.f32 %v1612, %v1613
      %v1622 = vsub.f32 %v1524, %v1614
      %v1623 = vsub.f32 %v1525, %v1614
      %v1624 = vsub.f32 %v1526, %v1615
      %v1625 = vsub.f32 %v1527, %v1615
      %v1626 = vsub.f32 %v1528, %v1616
      %v1627 = vsub.f32 %v1529, %v1616
      %v1628 = vsub.f32 %v1530, %v1617
      %v1629 = vsub.f32 %v1531, %v1617
      %v1630 = vsub.f32 %v1532, %v1618
      %v1631 = vsub.f32 %v1533, %v1618
      %v1632 = vsub.f32 %v1534, %v1619
      %v1633 = vsub.f32 %v1535, %v1619
      %v1634 = vsub.f32 %v1536, %v1620
      %v1635 = vsub.f32 %v1537, %v1620
      %v1636 = vsub.f32 %v1538, %v1621
      %v1637 = vsub.f32 %v1539, %v1621
      %v1638 = vmul.f32 %v1622, %v1622
      %v1639 = vmul.f32 %v1623, %v1623
      %v1640 = vmul.f32 %v1624, %v1624
      %v1641 = vmul.f32 %v1625, %v1625
      %v1642 = vmul.f32 %v1626, %v1626
      %v1643 = vmul.f32 %v1627, %v1627
      %v1644 = vmul.f32 %v1628, %v1628
      %v1645 = vmul.f32 %v1629, %v1629
      %v1646 = vmul.f32 %v1630, %v1630
      %v1647 = vmul.f32 %v1631, %v1631
      %v1648 = vmul.f32 %v1632, %v1632
      %v1649 = vmul.f32 %v1633, %v1633
      %v1650 = vmul.f32 %v1634, %v1634
      %v1651 = vmul.f32 %v1635, %v1635
      %v1652 = vmul.f32 %v1636, %v1636
      %v1653 = vmul.f32 %v1637, %v1637
      %v1654 = vsel %vm1540, %v1638, 0.0
      %v1655 = vsel %vm1540, %v1639, 0.0
      %v1656 = vadd.f32 %v1654, %v1655
      %v1657 = vrot.slane %v1656, 4
      %v1658 = vadd.f32 %v1656, %v1657
      %v1659 = vrot.slane %v1658, 2
      %v1660 = vadd.f32 %v1658, %v1659
      %v1661 = vrot.slane %v1660, 1
      %v1662 = vadd.f32 %v1660, %v1661
      %v1663 = vsel %vm1540, %v1640, 0.0
      %v1664 = vsel %vm1540, %v1641, 0.0
      %v1665 = vadd.f32 %v1663, %v1664
      %v1666 = vrot.slane %v1665, 4
      %v1667 = vadd.f32 %v1665, %v1666
      %v1668 = vrot.slane %v1667, 2
      %v1669 = vadd.f32 %v1667, %v1668
      %v1670 = vrot.slane %v1669, 1
      %v1671 = vadd.f32 %v1669, %v1670
      %v1672 = vsel %vm1540, %v1642, 0.0
      %v1673 = vsel %vm1540, %v1643, 0.0
      %v1674 = vadd.f32 %v1672, %v1673
      %v1675 = vrot.slane %v1674, 4
      %v1676 = vadd.f32 %v1674, %v1675
      %v1677 = vrot.slane %v1676, 2
      %v1678 = vadd.f32 %v1676, %v1677
      %v1679 = vrot.slane %v1678, 1
      %v1680 = vadd.f32 %v1678, %v1679
      %v1681 = vsel %vm1540, %v1644, 0.0
      %v1682 = vsel %vm1540, %v1645, 0.0
      %v1683 = vadd.f32 %v1681, %v1682
      %v1684 = vrot.slane %v1683, 4
      %v1685 = vadd.f32 %v1683, %v1684
      %v1686 = vrot.slane %v1685, 2
      %v1687 = vadd.f32 %v1685, %v1686
      %v1688 = vrot.slane %v1687, 1
      %v1689 = vadd.f32 %v1687, %v1688
      %v1690 = vsel %vm1540, %v1646, 0.0
      %v1691 = vsel %vm1540, %v1647, 0.0
      %v1692 = vadd.f32 %v1690, %v1691
      %v1693 = vrot.slane %v1692, 4
      %v1694 = vadd.f32 %v1692, %v1693
      %v1695 = vrot.slane %v1694, 2
      %v1696 = vadd.f32 %v1694, %v1695
      %v1697 = vrot.slane %v1696, 1
      %v1698 = vadd.f32 %v1696, %v1697
      %v1699 = vsel %vm1540, %v1648, 0.0
      %v1700 = vsel %vm1540, %v1649, 0.0
      %v1701 = vadd.f32 %v1699, %v1700
      %v1702 = vrot.slane %v1701, 4
      %v1703 = vadd.f32 %v1701, %v1702
      %v1704 = vrot.slane %v1703, 2
      %v1705 = vadd.f32 %v1703, %v1704
      %v1706 = vrot.slane %v1705, 1
      %v1707 = vadd.f32 %v1705, %v1706
      %v1708 = vsel %vm1540, %v1650, 0.0
      %v1709 = vsel %vm1540, %v1651, 0.0
      %v1710 = vadd.f32 %v1708, %v1709
      %v1711 = vrot.slane %v1710, 4
      %v1712 = vadd.f32 %v1710, %v1711
      %v1713 = vrot.slane %v1712, 2
      %v1714 = vadd.f32 %v1712, %v1713
      %v1715 = vrot.slane %v1714, 1
      %v1716 = vadd.f32 %v1714, %v1715
      %v1717 = vsel %vm1540, %v1652, 0.0
      %v1718 = vsel %vm1540, %v1653, 0.0
      %v1719 = vadd.f32 %v1717, %v1718
      %v1720 = vrot.slane %v1719, 4
      %v1721 = vadd.f32 %v1719, %v1720
      %v1722 = vrot.slane %v1721, 2
      %v1723 = vadd.f32 %v1721, %v1722
      %v1724 = vrot.slane %v1723, 1
      %v1725 = vadd.f32 %v1723, %v1724
      %v1726 = vmul.f32 %v1662, %v1613
      %v1727 = vmul.f32 %v1671, %v1613
      %v1728 = vmul.f32 %v1680, %v1613
      %v1729 = vmul.f32 %v1689, %v1613
      %v1730 = vmul.f32 %v1698, %v1613
      %v1731 = vmul.f32 %v1707, %v1613
      %v1732 = vmul.f32 %v1716, %v1613
      %v1733 = vmul.f32 %v1725, %v1613
      %v1734 = vadd.f32 %v1726, 1e-05
      %v1735 = vadd.f32 %v1727, 1e-05
      %v1736 = vadd.f32 %v1728, 1e-05
      %v1737 = vadd.f32 %v1729, 1e-05
      %v1738 = vadd.f32 %v1730, 1e-05
      %v1739 = vadd.f32 %v1731, 1e-05
      %v1740 = vadd.f32 %v1732, 1e-05
      %v1741 = vadd.f32 %v1733, 1e-05
      %v1742 = vrsqrt.pop %v1734
      %v1743 = vrsqrt.pop %v1735
      %v1744 = vrsqrt.pop %v1736
      %v1745 = vrsqrt.pop %v1737
      %v1746 = vrsqrt.pop %v1738
      %v1747 = vrsqrt.pop %v1739
      %v1748 = vrsqrt.pop %v1740
      %v1749 = vrsqrt.pop %v1741
      %v1750 = vmul.f32 %v432, %v1742
      %v1751 = vmul.f32 %v432, %v1743
      %v1752 = vmul.f32 %v432, %v1744
      %v1753 = vmul.f32 %v432, %v1745
      %v1754 = vmul.f32 %v432, %v1746
      %v1755 = vmul.f32 %v432, %v1747
      %v1756 = vmul.f32 %v432, %v1748
      %v1757 = vmul.f32 %v432, %v1749
      %v1758 = vmul.f32 %v1614, %v1750
      %v1759 = vmul.f32 %v1615, %v1751
      %v1760 = vmul.f32 %v1616, %v1752
      %v1761 = vmul.f32 %v1617, %v1753
      %v1762 = vmul.f32 %v1618, %v1754
      %v1763 = vmul.f32 %v1619, %v1755
      %v1764 = vmul.f32 %v1620, %v1756
      %v1765 = vmul.f32 %v1621, %v1757
      %v1774 = vrot.slane %v1758, 7
      %v1775 = vrot.slane %v1759, 7
      %v1776 = vrot.slane %v1760, 7
      %v1777 = vrot.slane %v1761, 7
      %v1778 = vrot.slane %v1762, 7
      %v1779 = vrot.slane %v1763, 7
      %v1780 = vrot.slane %v1764, 7
      %v1781 = vrot.slane %v1765, 7
      %v1790 = vsub.f32 %v432, %v1774
      %v1791 = vsub.f32 %v432, %v1775
      %v1792 = vsub.f32 %v432, %v1776
      %v1793 = vsub.f32 %v432, %v1777
      %v1794 = vsub.f32 %v432, %v1778
      %v1795 = vsub.f32 %v432, %v1779
      %v1796 = vsub.f32 %v432, %v1780
      %v1797 = vsub.f32 %v432, %v1781
      %v1798 = vlaneseq
      %v1799 = vshrl.u32 %v1798, 7
      %v1800 = vsub.s32 1, %v1799
      %v1801 = vrot.slane %v1750, %v1800
      %v1802 = vlaneseq
      %v1803 = vshrl.u32 %v1802, 7
      %v1804 = vsub.s32 1, %v1803
      %v1805 = vrot.slane %v1751, %v1804
      %v1806 = vlaneseq
      %v1807 = vshrl.u32 %v1806, 7
      %v1808 = vsub.s32 1, %v1807
      %v1809 = vrot.slane %v1752, %v1808
      %v1810 = vlaneseq
      %v1811 = vshrl.u32 %v1810, 7
      %v1812 = vsub.s32 1, %v1811
      %v1813 = vrot.slane %v1753, %v1812
      %v1814 = vlaneseq
      %v1815 = vshrl.u32 %v1814, 7
      %v1816 = vsub.s32 1, %v1815
      %v1817 = vrot.slane %v1754, %v1816
      %v1818 = vlaneseq
      %v1819 = vshrl.u32 %v1818, 7
      %v1820 = vsub.s32 1, %v1819
      %v1821 = vrot.slane %v1755, %v1820
      %v1822 = vlaneseq
      %v1823 = vshrl.u32 %v1822, 7
      %v1824 = vsub.s32 1, %v1823
      %v1825 = vrot.slane %v1756, %v1824
      %v1826 = vlaneseq
      %v1827 = vshrl.u32 %v1826, 7
      %v1828 = vsub.s32 1, %v1827
      %v1829 = vrot.slane %v1757, %v1828
      %v1830 = vmul.f32 %v1524, %v1801
      %v1831 = vmul.f32 %v1525, %v1801
      %v1832 = vmul.f32 %v1526, %v1805
      %v1833 = vmul.f32 %v1527, %v1805
      %v1834 = vmul.f32 %v1528, %v1809
      %v1835 = vmul.f32 %v1529, %v1809
      %v1836 = vmul.f32 %v1530, %v1813
      %v1837 = vmul.f32 %v1531, %v1813
      %v1838 = vmul.f32 %v1532, %v1817
      %v1839 = vmul.f32 %v1533, %v1817
      %v1840 = vmul.f32 %v1534, %v1821
      %v1841 = vmul.f32 %v1535, %v1821
      %v1842 = vmul.f32 %v1536, %v1825
      %v1843 = vmul.f32 %v1537, %v1825
      %v1844 = vmul.f32 %v1538, %v1829
      %v1845 = vmul.f32 %v1539, %v1829
      %v1846 = vlaneseq
      %v1847 = vshrl.u32 %v1846, 7
      %v1848 = vsub.s32 2, %v1847
      %v1849 = vrot.slane %v1790, %v1848
      %v1850 = vlaneseq
      %v1851 = vshrl.u32 %v1850, 7
      %v1852 = vsub.s32 2, %v1851
      %v1853 = vrot.slane %v1791, %v1852
      %v1854 = vlaneseq
      %v1855 = vshrl.u32 %v1854, 7
      %v1856 = vsub.s32 2, %v1855
      %v1857 = vrot.slane %v1792, %v1856
      %v1858 = vlaneseq
      %v1859 = vshrl.u32 %v1858, 7
      %v1860 = vsub.s32 2, %v1859
      %v1861 = vrot.slane %v1793, %v1860
      %v1862 = vlaneseq
      %v1863 = vshrl.u32 %v1862, 7
      %v1864 = vsub.s32 2, %v1863
      %v1865 = vrot.slane %v1794, %v1864
      %v1866 = vlaneseq
      %v1867 = vshrl.u32 %v1866, 7
      %v1868 = vsub.s32 2, %v1867
      %v1869 = vrot.slane %v1795, %v1868
      %v1870 = vlaneseq
      %v1871 = vshrl.u32 %v1870, 7
      %v1872 = vsub.s32 2, %v1871
      %v1873 = vrot.slane %v1796, %v1872
      %v1874 = vlaneseq
      %v1875 = vshrl.u32 %v1874, 7
      %v1876 = vsub.s32 2, %v1875
      %v1877 = vrot.slane %v1797, %v1876
      %v1878 = vadd.f32 %v1830, %v1849
      %v1879 = vadd.f32 %v1831, %v1849
      %v1880 = vadd.f32 %v1832, %v1853
      %v1881 = vadd.f32 %v1833, %v1853
      %v1882 = vadd.f32 %v1834, %v1857
      %v1883 = vadd.f32 %v1835, %v1857
      %v1884 = vadd.f32 %v1836, %v1861
      %v1885 = vadd.f32 %v1837, %v1861
      %v1886 = vadd.f32 %v1838, %v1865
      %v1887 = vadd.f32 %v1839, %v1865
      %v1888 = vadd.f32 %v1840, %v1869
      %v1889 = vadd.f32 %v1841, %v1869
      %v1890 = vadd.f32 %v1842, %v1873
      %v1891 = vadd.f32 %v1843, %v1873
      %v1892 = vadd.f32 %v1844, %v1877
      %v1893 = vadd.f32 %v1845, %v1877
      %1894 = vmatprep.subr.mxu0 0.0
      %1895 = vmatpush1.msra.mxu0 %v1878
      %1896 = vmatprep.subr.mxu0 0.0
      %1897 = vmatpush1.msra.mxu0 %v1879
      %1898 = vmatprep.subr.mxu0 0.0
      %1899 = vmatpush1.msra.mxu0 0.0
      %1900 = vmatprep.subr.mxu0 0.0
      %1901 = vmatpush1.msra.mxu0 0.0
      %1902 = vmatprep.subr.mxu0 0.0
      %1903 = vmatpush1.msra.mxu0 0.0
      %1904 = vmatprep.subr.mxu0 0.0
      %1905 = vmatpush1.msra.mxu0 0.0
      %1906 = vmatprep.subr.mxu0 0.0
      %1907 = vmatpush1.msra.mxu0 0.0
      %1908 = vmatprep.subr.mxu0 0.0
      %1909 = vmatpush1.msra.mxu0 0.0
      %1910 = vmatprep.subr.mxu0 0.0
      %1911 = vmatpush1.msra.mxu0 0.0
      %1912 = vmatprep.subr.mxu0 0.0
      %1913 = vmatpush1.msra.mxu0 0.0
      %1914 = vmatprep.subr.mxu0 0.0
      %1915 = vmatpush1.msra.mxu0 0.0
      %1916 = vmatprep.subr.mxu0 0.0
      %1917 = vmatpush1.msra.mxu0 0.0
      %1918 = vmatprep.subr.mxu0 0.0
      %1919 = vmatpush1.msra.mxu0 0.0
      %1920 = vmatprep.subr.mxu0 0.0
      %1921 = vmatpush1.msra.mxu0 0.0
      %1922 = vmatprep.subr.mxu0 0.0
      %1923 = vmatpush1.msra.mxu0 0.0
      %1924 = vmatprep.subr.mxu0 0.0
      %1925 = vmatpush1.msra.mxu0 0.0
      %1926 = vmatprep.subr.mxu0 0.0
      %1927 = vmatpush1.msra.mxu0 0.0
      %1928 = vmatprep.subr.mxu0 0.0
      %1929 = vmatpush1.msra.mxu0 0.0
      %1930 = vmatprep.subr.mxu0 0.0
      %1931 = vmatpush1.msra.mxu0 0.0
      %1932 = vmatprep.subr.mxu0 0.0
      %1933 = vmatpush1.msra.mxu0 0.0
      %1934 = vmatprep.subr.mxu0 0.0
      %1935 = vmatpush1.msra.mxu0 0.0
      %1936 = vmatprep.subr.mxu0 0.0
      %1937 = vmatpush1.msra.mxu0 0.0
      %1938 = vmatprep.subr.mxu0 0.0
      %1939 = vmatpush1.msra.mxu0 0.0
      %1940 = vmatprep.subr.mxu0 0.0
      %1941 = vmatpush1.msra.mxu0 0.0
      %1942 = vmatprep.subr.mxu0 0.0
      %1943 = vmatpush1.msra.mxu0 0.0
      %1944 = vmatprep.subr.mxu0 0.0
      %1945 = vmatpush1.msra.mxu0 0.0
      %1946 = vmatprep.subr.mxu0 0.0
      %1947 = vmatpush1.msra.mxu0 0.0
      %1948 = vmatprep.subr.mxu0 0.0
      %1949 = vmatpush1.msra.mxu0 0.0
      %1950 = vmatprep.subr.mxu0 0.0
      %1951 = vmatpush1.msra.mxu0 0.0
      %1952 = vmatprep.subr.mxu0 0.0
      %1953 = vmatpush1.msra.mxu0 0.0
      %1954 = vmatprep.subr.mxu0 0.0
      %1955 = vmatpush1.msra.mxu0 0.0
      %1956 = vmatprep.subr.mxu0 0.0
      %1957 = vmatpush1.msra.mxu0 0.0
      %1958 = vmatprep.mubr.f32.mxu0 0.0
      %1959 = vmatmul.mubr.f32.gmra.mrb[0].mxu0 %v470
      %v1960 = vpop.f32.mrb[0].mxu0
      %v1961 = vadd.f32 0.0, %v1960
      %v1962 = vpop.f32.mrb[0].mxu0
      %1963 = vmatprep.mubr.f32.mxu0 0.0
      %1964 = vmatmul.mubr.f32.gmra.mrb[0].mxu0 %v473
      %v1965 = vpop.f32.mrb[0].mxu0
      %v1966 = vadd.f32 0.0, %v1965
      %v1967 = vpop.f32.mrb[0].mxu0
      %1968 = vdwg.mxu0
      %1969 = vmatprep.subr.mxu0 0.0
      %1970 = vmatpush1.msra.mxu0 %v1880
      %1971 = vmatprep.subr.mxu0 0.0
      %1972 = vmatpush1.msra.mxu0 %v1881
      %1973 = vmatprep.subr.mxu0 0.0
      %1974 = vmatpush1.msra.mxu0 0.0
      %1975 = vmatprep.subr.mxu0 0.0
      %1976 = vmatpush1.msra.mxu0 0.0
      %1977 = vmatprep.subr.mxu0 0.0
      %1978 = vmatpush1.msra.mxu0 0.0
      %1979 = vmatprep.subr.mxu0 0.0
      %1980 = vmatpush1.msra.mxu0 0.0
      %1981 = vmatprep.subr.mxu0 0.0
      %1982 = vmatpush1.msra.mxu0 0.0
      %1983 = vmatprep.subr.mxu0 0.0
      %1984 = vmatpush1.msra.mxu0 0.0
      %1985 = vmatprep.subr.mxu0 0.0
      %1986 = vmatpush1.msra.mxu0 0.0
      %1987 = vmatprep.subr.mxu0 0.0
      %1988 = vmatpush1.msra.mxu0 0.0
      %1989 = vmatprep.subr.mxu0 0.0
      %1990 = vmatpush1.msra.mxu0 0.0
      %1991 = vmatprep.subr.mxu0 0.0
      %1992 = vmatpush1.msra.mxu0 0.0
      %1993 = vmatprep.subr.mxu0 0.0
      %1994 = vmatpush1.msra.mxu0 0.0
      %1995 = vmatprep.subr.mxu0 0.0
      %1996 = vmatpush1.msra.mxu0 0.0
      %1997 = vmatprep.subr.mxu0 0.0
      %1998 = vmatpush1.msra.mxu0 0.0
      %1999 = vmatprep.subr.mxu0 0.0
      %2000 = vmatpush1.msra.mxu0 0.0
      %2001 = vmatprep.subr.mxu0 0.0
      %2002 = vmatpush1.msra.mxu0 0.0
      %2003 = vmatprep.subr.mxu0 0.0
      %2004 = vmatpush1.msra.mxu0 0.0
      %2005 = vmatprep.subr.mxu0 0.0
      %2006 = vmatpush1.msra.mxu0 0.0
      %2007 = vmatprep.subr.mxu0 0.0
      %2008 = vmatpush1.msra.mxu0 0.0
      %2009 = vmatprep.subr.mxu0 0.0
      %2010 = vmatpush1.msra.mxu0 0.0
      %2011 = vmatprep.subr.mxu0 0.0
      %2012 = vmatpush1.msra.mxu0 0.0
      %2013 = vmatprep.subr.mxu0 0.0
      %2014 = vmatpush1.msra.mxu0 0.0
      %2015 = vmatprep.subr.mxu0 0.0
      %2016 = vmatpush1.msra.mxu0 0.0
      %2017 = vmatprep.subr.mxu0 0.0
      %2018 = vmatpush1.msra.mxu0 0.0
      %2019 = vmatprep.subr.mxu0 0.0
      %2020 = vmatpush1.msra.mxu0 0.0
      %2021 = vmatprep.subr.mxu0 0.0
      %2022 = vmatpush1.msra.mxu0 0.0
      %2023 = vmatprep.subr.mxu0 0.0
      %2024 = vmatpush1.msra.mxu0 0.0
      %2025 = vmatprep.subr.mxu0 0.0
      %2026 = vmatpush1.msra.mxu0 0.0
      %2027 = vmatprep.subr.mxu0 0.0
      %2028 = vmatpush1.msra.mxu0 0.0
      %2029 = vmatprep.subr.mxu0 0.0
      %2030 = vmatpush1.msra.mxu0 0.0
      %2031 = vmatprep.subr.mxu0 0.0
      %2032 = vmatpush1.msra.mxu0 0.0
      %2033 = vmatprep.mubr.f32.mxu0 0.0
      %2034 = vmatmul.mubr.f32.gmra.mrb[0].mxu0 %v551
      %v2035 = vpop.f32.mrb[0].mxu0
      %v2036 = vadd.f32 0.0, %v2035
      %v2037 = vpop.f32.mrb[0].mxu0
      %2038 = vmatprep.mubr.f32.mxu0 0.0
      %2039 = vmatmul.mubr.f32.gmra.mrb[0].mxu0 %v554
      %v2040 = vpop.f32.mrb[0].mxu0
      %v2041 = vadd.f32 0.0, %v2040
      %v2042 = vpop.f32.mrb[0].mxu0
      %2043 = vdwg.mxu0
      %2044 = vmatprep.subr.mxu0 0.0
      %2045 = vmatpush1.msra.mxu0 %v1882
      %2046 = vmatprep.subr.mxu0 0.0
      %2047 = vmatpush1.msra.mxu0 %v1883
      %2048 = vmatprep.subr.mxu0 0.0
      %2049 = vmatpush1.msra.mxu0 0.0
      %2050 = vmatprep.subr.mxu0 0.0
      %2051 = vmatpush1.msra.mxu0 0.0
      %2052 = vmatprep.subr.mxu0 0.0
      %2053 = vmatpush1.msra.mxu0 0.0
      %2054 = vmatprep.subr.mxu0 0.0
      %2055 = vmatpush1.msra.mxu0 0.0
      %2056 = vmatprep.subr.mxu0 0.0
      %2057 = vmatpush1.msra.mxu0 0.0
      %2058 = vmatprep.subr.mxu0 0.0
      %2059 = vmatpush1.msra.mxu0 0.0
      %2060 = vmatprep.subr.mxu0 0.0
      %2061 = vmatpush1.msra.mxu0 0.0
      %2062 = vmatprep.subr.mxu0 0.0
      %2063 = vmatpush1.msra.mxu0 0.0
      %2064 = vmatprep.subr.mxu0 0.0
      %2065 = vmatpush1.msra.mxu0 0.0
      %2066 = vmatprep.subr.mxu0 0.0
      %2067 = vmatpush1.msra.mxu0 0.0
      %2068 = vmatprep.subr.mxu0 0.0
      %2069 = vmatpush1.msra.mxu0 0.0
      %2070 = vmatprep.subr.mxu0 0.0
      %2071 = vmatpush1.msra.mxu0 0.0
      %2072 = vmatprep.subr.mxu0 0.0
      %2073 = vmatpush1.msra.mxu0 0.0
      %2074 = vmatprep.subr.mxu0 0.0
      %2075 = vmatpush1.msra.mxu0 0.0
      %2076 = vmatprep.subr.mxu0 0.0
      %2077 = vmatpush1.msra.mxu0 0.0
      %2078 = vmatprep.subr.mxu0 0.0
      %2079 = vmatpush1.msra.mxu0 0.0
      %2080 = vmatprep.subr.mxu0 0.0
      %2081 = vmatpush1.msra.mxu0 0.0
      %2082 = vmatprep.subr.mxu0 0.0
      %2083 = vmatpush1.msra.mxu0 0.0
      %2084 = vmatprep.subr.mxu0 0.0
      %2085 = vmatpush1.msra.mxu0 0.0
      %2086 = vmatprep.subr.mxu0 0.0
      %2087 = vmatpush1.msra.mxu0 0.0
      %2088 = vmatprep.subr.mxu0 0.0
      %2089 = vmatpush1.msra.mxu0 0.0
      %2090 = vmatprep.subr.mxu0 0.0
      %2091 = vmatpush1.msra.mxu0 0.0
      %2092 = vmatprep.subr.mxu0 0.0
      %2093 = vmatpush1.msra.mxu0 0.0
      %2094 = vmatprep.subr.mxu0 0.0
      %2095 = vmatpush1.msra.mxu0 0.0
      %2096 = vmatprep.subr.mxu0 0.0
      %2097 = vmatpush1.msra.mxu0 0.0
      %2098 = vmatprep.subr.mxu0 0.0
      %2099 = vmatpush1.msra.mxu0 0.0
      %2100 = vmatprep.subr.mxu0 0.0
      %2101 = vmatpush1.msra.mxu0 0.0
      %2102 = vmatprep.subr.mxu0 0.0
      %2103 = vmatpush1.msra.mxu0 0.0
      %2104 = vmatprep.subr.mxu0 0.0
      %2105 = vmatpush1.msra.mxu0 0.0
      %2106 = vmatprep.subr.mxu0 0.0
      %2107 = vmatpush1.msra.mxu0 0.0
      %2108 = vmatprep.mubr.f32.mxu0 0.0
      %2109 = vmatmul.mubr.f32.gmra.mrb[0].mxu0 %v632
      %v2110 = vpop.f32.mrb[0].mxu0
      %v2111 = vadd.f32 0.0, %v2110
      %v2112 = vpop.f32.mrb[0].mxu0
      %2113 = vmatprep.mubr.f32.mxu0 0.0
      %2114 = vmatmul.mubr.f32.gmra.mrb[0].mxu0 %v635
      %v2115 = vpop.f32.mrb[0].mxu0
      %v2116 = vadd.f32 0.0, %v2115
      %v2117 = vpop.f32.mrb[0].mxu0
      %2118 = vdwg.mxu0
      %2119 = vmatprep.subr.mxu0 0.0
      %2120 = vmatpush1.msra.mxu0 %v1884
      %2121 = vmatprep.subr.mxu0 0.0
      %2122 = vmatpush1.msra.mxu0 %v1885
      %2123 = vmatprep.subr.mxu0 0.0
      %2124 = vmatpush1.msra.mxu0 0.0
      %2125 = vmatprep.subr.mxu0 0.0
      %2126 = vmatpush1.msra.mxu0 0.0
      %2127 = vmatprep.subr.mxu0 0.0
      %2128 = vmatpush1.msra.mxu0 0.0
      %2129 = vmatprep.subr.mxu0 0.0
      %2130 = vmatpush1.msra.mxu0 0.0
      %2131 = vmatprep.subr.mxu0 0.0
      %2132 = vmatpush1.msra.mxu0 0.0
      %2133 = vmatprep.subr.mxu0 0.0
      %2134 = vmatpush1.msra.mxu0 0.0
      %2135 = vmatprep.subr.mxu0 0.0
      %2136 = vmatpush1.msra.mxu0 0.0
      %2137 = vmatprep.subr.mxu0 0.0
      %2138 = vmatpush1.msra.mxu0 0.0
      %2139 = vmatprep.subr.mxu0 0.0
      %2140 = vmatpush1.msra.mxu0 0.0
      %2141 = vmatprep.subr.mxu0 0.0
      %2142 = vmatpush1.msra.mxu0 0.0
      %2143 = vmatprep.subr.mxu0 0.0
      %2144 = vmatpush1.msra.mxu0 0.0
      %2145 = vmatprep.subr.mxu0 0.0
      %2146 = vmatpush1.msra.mxu0 0.0
      %2147 = vmatprep.subr.mxu0 0.0
      %2148 = vmatpush1.msra.mxu0 0.0
      %2149 = vmatprep.subr.mxu0 0.0
      %2150 = vmatpush1.msra.mxu0 0.0
      %2151 = vmatprep.subr.mxu0 0.0
      %2152 = vmatpush1.msra.mxu0 0.0
      %2153 = vmatprep.subr.mxu0 0.0
      %2154 = vmatpush1.msra.mxu0 0.0
      %2155 = vmatprep.subr.mxu0 0.0
      %2156 = vmatpush1.msra.mxu0 0.0
      %2157 = vmatprep.subr.mxu0 0.0
      %2158 = vmatpush1.msra.mxu0 0.0
      %2159 = vmatprep.subr.mxu0 0.0
      %2160 = vmatpush1.msra.mxu0 0.0
      %2161 = vmatprep.subr.mxu0 0.0
      %2162 = vmatpush1.msra.mxu0 0.0
      %2163 = vmatprep.subr.mxu0 0.0
      %2164 = vmatpush1.msra.mxu0 0.0
      %2165 = vmatprep.subr.mxu0 0.0
      %2166 = vmatpush1.msra.mxu0 0.0
      %2167 = vmatprep.subr.mxu0 0.0
      %2168 = vmatpush1.msra.mxu0 0.0
      %2169 = vmatprep.subr.mxu0 0.0
      %2170 = vmatpush1.msra.mxu0 0.0
      %2171 = vmatprep.subr.mxu0 0.0
      %2172 = vmatpush1.msra.mxu0 0.0
      %2173 = vmatprep.subr.mxu0 0.0
      %2174 = vmatpush1.msra.mxu0 0.0
      %2175 = vmatprep.subr.mxu0 0.0
      %2176 = vmatpush1.msra.mxu0 0.0
      %2177 = vmatprep.subr.mxu0 0.0
      %2178 = vmatpush1.msra.mxu0 0.0
      %2179 = vmatprep.subr.mxu0 0.0
      %2180 = vmatpush1.msra.mxu0 0.0
      %2181 = vmatprep.subr.mxu0 0.0
      %2182 = vmatpush1.msra.mxu0 0.0
      %2183 = vmatprep.mubr.f32.mxu0 0.0
      %2184 = vmatmul.mubr.f32.gmra.mrb[0].mxu0 %v713
      %v2185 = vpop.f32.mrb[0].mxu0
      %v2186 = vadd.f32 0.0, %v2185
      %v2187 = vpop.f32.mrb[0].mxu0
      %2188 = vmatprep.mubr.f32.mxu0 0.0
      %2189 = vmatmul.mubr.f32.gmra.mrb[0].mxu0 %v716
      %v2190 = vpop.f32.mrb[0].mxu0
      %v2191 = vadd.f32 0.0, %v2190
      %v2192 = vpop.f32.mrb[0].mxu0
      %2193 = vdwg.mxu0
      %2194 = vmatprep.subr.mxu0 0.0
      %2195 = vmatpush1.msra.mxu0 %v1886
      %2196 = vmatprep.subr.mxu0 0.0
      %2197 = vmatpush1.msra.mxu0 %v1887
      %2198 = vmatprep.subr.mxu0 0.0
      %2199 = vmatpush1.msra.mxu0 0.0
      %2200 = vmatprep.subr.mxu0 0.0
      %2201 = vmatpush1.msra.mxu0 0.0
      %2202 = vmatprep.subr.mxu0 0.0
      %2203 = vmatpush1.msra.mxu0 0.0
      %2204 = vmatprep.subr.mxu0 0.0
      %2205 = vmatpush1.msra.mxu0 0.0
      %2206 = vmatprep.subr.mxu0 0.0
      %2207 = vmatpush1.msra.mxu0 0.0
      %2208 = vmatprep.subr.mxu0 0.0
      %2209 = vmatpush1.msra.mxu0 0.0
      %2210 = vmatprep.subr.mxu0 0.0
      %2211 = vmatpush1.msra.mxu0 0.0
      %2212 = vmatprep.subr.mxu0 0.0
      %2213 = vmatpush1.msra.mxu0 0.0
      %2214 = vmatprep.subr.mxu0 0.0
      %2215 = vmatpush1.msra.mxu0 0.0
      %2216 = vmatprep.subr.mxu0 0.0
      %2217 = vmatpush1.msra.mxu0 0.0
      %2218 = vmatprep.subr.mxu0 0.0
      %2219 = vmatpush1.msra.mxu0 0.0
      %2220 = vmatprep.subr.mxu0 0.0
      %2221 = vmatpush1.msra.mxu0 0.0
      %2222 = vmatprep.subr.mxu0 0.0
      %2223 = vmatpush1.msra.mxu0 0.0
      %2224 = vmatprep.subr.mxu0 0.0
      %2225 = vmatpush1.msra.mxu0 0.0
      %2226 = vmatprep.subr.mxu0 0.0
      %2227 = vmatpush1.msra.mxu0 0.0
      %2228 = vmatprep.subr.mxu0 0.0
      %2229 = vmatpush1.msra.mxu0 0.0
      %2230 = vmatprep.subr.mxu0 0.0
      %2231 = vmatpush1.msra.mxu0 0.0
      %2232 = vmatprep.subr.mxu0 0.0
      %2233 = vmatpush1.msra.mxu0 0.0
      %2234 = vmatprep.subr.mxu0 0.0
      %2235 = vmatpush1.msra.mxu0 0.0
      %2236 = vmatprep.subr.mxu0 0.0
      %2237 = vmatpush1.msra.mxu0 0.0
      %2238 = vmatprep.subr.mxu0 0.0
      %2239 = vmatpush1.msra.mxu0 0.0
      %2240 = vmatprep.subr.mxu0 0.0
      %2241 = vmatpush1.msra.mxu0 0.0
      %2242 = vmatprep.subr.mxu0 0.0
      %2243 = vmatpush1.msra.mxu0 0.0
      %2244 = vmatprep.subr.mxu0 0.0
      %2245 = vmatpush1.msra.mxu0 0.0
      %2246 = vmatprep.subr.mxu0 0.0
      %2247 = vmatpush1.msra.mxu0 0.0
      %2248 = vmatprep.subr.mxu0 0.0
      %2249 = vmatpush1.msra.mxu0 0.0
      %2250 = vmatprep.subr.mxu0 0.0
      %2251 = vmatpush1.msra.mxu0 0.0
      %2252 = vmatprep.subr.mxu0 0.0
      %2253 = vmatpush1.msra.mxu0 0.0
      %2254 = vmatprep.subr.mxu0 0.0
      %2255 = vmatpush1.msra.mxu0 0.0
      %2256 = vmatprep.subr.mxu0 0.0
      %2257 = vmatpush1.msra.mxu0 0.0
      %2258 = vmatprep.mubr.f32.mxu0 0.0
      %2259 = vmatmul.mubr.f32.gmra.mrb[0].mxu0 %v794
      %v2260 = vpop.f32.mrb[0].mxu0
      %v2261 = vadd.f32 0.0, %v2260
      %v2262 = vpop.f32.mrb[0].mxu0
      %2263 = vmatprep.mubr.f32.mxu0 0.0
      %2264 = vmatmul.mubr.f32.gmra.mrb[0].mxu0 %v797
      %v2265 = vpop.f32.mrb[0].mxu0
      %v2266 = vadd.f32 0.0, %v2265
      %v2267 = vpop.f32.mrb[0].mxu0
      %2268 = vdwg.mxu0
      %2269 = vmatprep.subr.mxu0 0.0
      %2270 = vmatpush1.msra.mxu0 %v1888
      %2271 = vmatprep.subr.mxu0 0.0
      %2272 = vmatpush1.msra.mxu0 %v1889
      %2273 = vmatprep.subr.mxu0 0.0
      %2274 = vmatpush1.msra.mxu0 0.0
      %2275 = vmatprep.subr.mxu0 0.0
      %2276 = vmatpush1.msra.mxu0 0.0
      %2277 = vmatprep.subr.mxu0 0.0
      %2278 = vmatpush1.msra.mxu0 0.0
      %2279 = vmatprep.subr.mxu0 0.0
      %2280 = vmatpush1.msra.mxu0 0.0
      %2281 = vmatprep.subr.mxu0 0.0
      %2282 = vmatpush1.msra.mxu0 0.0
      %2283 = vmatprep.subr.mxu0 0.0
      %2284 = vmatpush1.msra.mxu0 0.0
      %2285 = vmatprep.subr.mxu0 0.0
      %2286 = vmatpush1.msra.mxu0 0.0
      %2287 = vmatprep.subr.mxu0 0.0
      %2288 = vmatpush1.msra.mxu0 0.0
      %2289 = vmatprep.subr.mxu0 0.0
      %2290 = vmatpush1.msra.mxu0 0.0
      %2291 = vmatprep.subr.mxu0 0.0
      %2292 = vmatpush1.msra.mxu0 0.0
      %2293 = vmatprep.subr.mxu0 0.0
      %2294 = vmatpush1.msra.mxu0 0.0
      %2295 = vmatprep.subr.mxu0 0.0
      %2296 = vmatpush1.msra.mxu0 0.0
      %2297 = vmatprep.subr.mxu0 0.0
      %2298 = vmatpush1.msra.mxu0 0.0
      %2299 = vmatprep.subr.mxu0 0.0
      %2300 = vmatpush1.msra.mxu0 0.0
      %2301 = vmatprep.subr.mxu0 0.0
      %2302 = vmatpush1.msra.mxu0 0.0
      %2303 = vmatprep.subr.mxu0 0.0
      %2304 = vmatpush1.msra.mxu0 0.0
      %2305 = vmatprep.subr.mxu0 0.0
      %2306 = vmatpush1.msra.mxu0 0.0
      %2307 = vmatprep.subr.mxu0 0.0
      %2308 = vmatpush1.msra.mxu0 0.0
      %2309 = vmatprep.subr.mxu0 0.0
      %2310 = vmatpush1.msra.mxu0 0.0
      %2311 = vmatprep.subr.mxu0 0.0
      %2312 = vmatpush1.msra.mxu0 0.0
      %2313 = vmatprep.subr.mxu0 0.0
      %2314 = vmatpush1.msra.mxu0 0.0
      %2315 = vmatprep.subr.mxu0 0.0
      %2316 = vmatpush1.msra.mxu0 0.0
      %2317 = vmatprep.subr.mxu0 0.0
      %2318 = vmatpush1.msra.mxu0 0.0
      %2319 = vmatprep.subr.mxu0 0.0
      %2320 = vmatpush1.msra.mxu0 0.0
      %2321 = vmatprep.subr.mxu0 0.0
      %2322 = vmatpush1.msra.mxu0 0.0
      %2323 = vmatprep.subr.mxu0 0.0
      %2324 = vmatpush1.msra.mxu0 0.0
      %2325 = vmatprep.subr.mxu0 0.0
      %2326 = vmatpush1.msra.mxu0 0.0
      %2327 = vmatprep.subr.mxu0 0.0
      %2328 = vmatpush1.msra.mxu0 0.0
      %2329 = vmatprep.subr.mxu0 0.0
      %2330 = vmatpush1.msra.mxu0 0.0
      %2331 = vmatprep.subr.mxu0 0.0
      %2332 = vmatpush1.msra.mxu0 0.0
      %2333 = vmatprep.mubr.f32.mxu0 0.0
      %2334 = vmatmul.mubr.f32.gmra.mrb[0].mxu0 %v875
      %v2335 = vpop.f32.mrb[0].mxu0
      %v2336 = vadd.f32 0.0, %v2335
      %v2337 = vpop.f32.mrb[0].mxu0
      %2338 = vmatprep.mubr.f32.mxu0 0.0
      %2339 = vmatmul.mubr.f32.gmra.mrb[0].mxu0 %v878
      %v2340 = vpop.f32.mrb[0].mxu0
      %v2341 = vadd.f32 0.0, %v2340
      %v2342 = vpop.f32.mrb[0].mxu0
      %2343 = vdwg.mxu0
      %2344 = vmatprep.subr.mxu0 0.0
      %2345 = vmatpush1.msra.mxu0 %v1890
      %2346 = vmatprep.subr.mxu0 0.0
      %2347 = vmatpush1.msra.mxu0 %v1891
      %2348 = vmatprep.subr.mxu0 0.0
      %2349 = vmatpush1.msra.mxu0 0.0
      %2350 = vmatprep.subr.mxu0 0.0
      %2351 = vmatpush1.msra.mxu0 0.0
      %2352 = vmatprep.subr.mxu0 0.0
      %2353 = vmatpush1.msra.mxu0 0.0
      %2354 = vmatprep.subr.mxu0 0.0
      %2355 = vmatpush1.msra.mxu0 0.0
      %2356 = vmatprep.subr.mxu0 0.0
      %2357 = vmatpush1.msra.mxu0 0.0
      %2358 = vmatprep.subr.mxu0 0.0
      %2359 = vmatpush1.msra.mxu0 0.0
      %2360 = vmatprep.subr.mxu0 0.0
      %2361 = vmatpush1.msra.mxu0 0.0
      %2362 = vmatprep.subr.mxu0 0.0
      %2363 = vmatpush1.msra.mxu0 0.0
      %2364 = vmatprep.subr.mxu0 0.0
      %2365 = vmatpush1.msra.mxu0 0.0
      %2366 = vmatprep.subr.mxu0 0.0
      %2367 = vmatpush1.msra.mxu0 0.0
      %2368 = vmatprep.subr.mxu0 0.0
      %2369 = vmatpush1.msra.mxu0 0.0
      %2370 = vmatprep.subr.mxu0 0.0
      %2371 = vmatpush1.msra.mxu0 0.0
      %2372 = vmatprep.subr.mxu0 0.0
      %2373 = vmatpush1.msra.mxu0 0.0
      %2374 = vmatprep.subr.mxu0 0.0
      %2375 = vmatpush1.msra.mxu0 0.0
      %2376 = vmatprep.subr.mxu0 0.0
      %2377 = vmatpush1.msra.mxu0 0.0
      %2378 = vmatprep.subr.mxu0 0.0
      %2379 = vmatpush1.msra.mxu0 0.0
      %2380 = vmatprep.subr.mxu0 0.0
      %2381 = vmatpush1.msra.mxu0 0.0
      %2382 = vmatprep.subr.mxu0 0.0
      %2383 = vmatpush1.msra.mxu0 0.0
      %2384 = vmatprep.subr.mxu0 0.0
      %2385 = vmatpush1.msra.mxu0 0.0
      %2386 = vmatprep.subr.mxu0 0.0
      %2387 = vmatpush1.msra.mxu0 0.0
      %2388 = vmatprep.subr.mxu0 0.0
      %2389 = vmatpush1.msra.mxu0 0.0
      %2390 = vmatprep.subr.mxu0 0.0
      %2391 = vmatpush1.msra.mxu0 0.0
      %2392 = vmatprep.subr.mxu0 0.0
      %2393 = vmatpush1.msra.mxu0 0.0
      %2394 = vmatprep.subr.mxu0 0.0
      %2395 = vmatpush1.msra.mxu0 0.0
      %2396 = vmatprep.subr.mxu0 0.0
      %2397 = vmatpush1.msra.mxu0 0.0
      %2398 = vmatprep.subr.mxu0 0.0
      %2399 = vmatpush1.msra.mxu0 0.0
      %2400 = vmatprep.subr.mxu0 0.0
      %2401 = vmatpush1.msra.mxu0 0.0
      %2402 = vmatprep.subr.mxu0 0.0
      %2403 = vmatpush1.msra.mxu0 0.0
      %2404 = vmatprep.subr.mxu0 0.0
      %2405 = vmatpush1.msra.mxu0 0.0
      %2406 = vmatprep.subr.mxu0 0.0
      %2407 = vmatpush1.msra.mxu0 0.0
      %2408 = vmatprep.mubr.f32.mxu0 0.0
      %2409 = vmatmul.mubr.f32.gmra.mrb[0].mxu0 %v956
      %v2410 = vpop.f32.mrb[0].mxu0
      %v2411 = vadd.f32 0.0, %v2410
      %v2412 = vpop.f32.mrb[0].mxu0
      %2413 = vmatprep.mubr.f32.mxu0 0.0
      %2414 = vmatmul.mubr.f32.gmra.mrb[0].mxu0 %v959
      %v2415 = vpop.f32.mrb[0].mxu0
      %v2416 = vadd.f32 0.0, %v2415
      %v2417 = vpop.f32.mrb[0].mxu0
      %2418 = vdwg.mxu0
      %2419 = vmatprep.subr.mxu0 0.0
      %2420 = vmatpush1.msra.mxu0 %v1892
      %2421 = vmatprep.subr.mxu0 0.0
      %2422 = vmatpush1.msra.mxu0 %v1893
      %2423 = vmatprep.subr.mxu0 0.0
      %2424 = vmatpush1.msra.mxu0 0.0
      %2425 = vmatprep.subr.mxu0 0.0
      %2426 = vmatpush1.msra.mxu0 0.0
      %2427 = vmatprep.subr.mxu0 0.0
      %2428 = vmatpush1.msra.mxu0 0.0
      %2429 = vmatprep.subr.mxu0 0.0
      %2430 = vmatpush1.msra.mxu0 0.0
      %2431 = vmatprep.subr.mxu0 0.0
      %2432 = vmatpush1.msra.mxu0 0.0
      %2433 = vmatprep.subr.mxu0 0.0
      %2434 = vmatpush1.msra.mxu0 0.0
      %2435 = vmatprep.subr.mxu0 0.0
      %2436 = vmatpush1.msra.mxu0 0.0
      %2437 = vmatprep.subr.mxu0 0.0
      %2438 = vmatpush1.msra.mxu0 0.0
      %2439 = vmatprep.subr.mxu0 0.0
      %2440 = vmatpush1.msra.mxu0 0.0
      %2441 = vmatprep.subr.mxu0 0.0
      %2442 = vmatpush1.msra.mxu0 0.0
      %2443 = vmatprep.subr.mxu0 0.0
      %2444 = vmatpush1.msra.mxu0 0.0
      %2445 = vmatprep.subr.mxu0 0.0
      %2446 = vmatpush1.msra.mxu0 0.0
      %2447 = vmatprep.subr.mxu0 0.0
      %2448 = vmatpush1.msra.mxu0 0.0
      %2449 = vmatprep.subr.mxu0 0.0
      %2450 = vmatpush1.msra.mxu0 0.0
      %2451 = vmatprep.subr.mxu0 0.0
      %2452 = vmatpush1.msra.mxu0 0.0
      %2453 = vmatprep.subr.mxu0 0.0
      %2454 = vmatpush1.msra.mxu0 0.0
      %2455 = vmatprep.subr.mxu0 0.0
      %2456 = vmatpush1.msra.mxu0 0.0
      %2457 = vmatprep.subr.mxu0 0.0
      %2458 = vmatpush1.msra.mxu0 0.0
      %2459 = vmatprep.subr.mxu0 0.0
      %2460 = vmatpush1.msra.mxu0 0.0
      %2461 = vmatprep.subr.mxu0 0.0
      %2462 = vmatpush1.msra.mxu0 0.0
      %2463 = vmatprep.subr.mxu0 0.0
      %2464 = vmatpush1.msra.mxu0 0.0
      %2465 = vmatprep.subr.mxu0 0.0
      %2466 = vmatpush1.msra.mxu0 0.0
      %2467 = vmatprep.subr.mxu0 0.0
      %2468 = vmatpush1.msra.mxu0 0.0
      %2469 = vmatprep.subr.mxu0 0.0
      %2470 = vmatpush1.msra.mxu0 0.0
      %2471 = vmatprep.subr.mxu0 0.0
      %2472 = vmatpush1.msra.mxu0 0.0
      %2473 = vmatprep.subr.mxu0 0.0
      %2474 = vmatpush1.msra.mxu0 0.0
      %2475 = vmatprep.subr.mxu0 0.0
      %2476 = vmatpush1.msra.mxu0 0.0
      %2477 = vmatprep.subr.mxu0 0.0
      %2478 = vmatpush1.msra.mxu0 0.0
      %2479 = vmatprep.subr.mxu0 0.0
      %2480 = vmatpush1.msra.mxu0 0.0
      %2481 = vmatprep.subr.mxu0 0.0
      %2482 = vmatpush1.msra.mxu0 0.0
      %2483 = vmatprep.mubr.f32.mxu0 0.0
      %2484 = vmatmul.mubr.f32.gmra.mrb[0].mxu0 %v1037
      %v2485 = vpop.f32.mrb[0].mxu0
      %v2486 = vadd.f32 0.0, %v2485
      %v2487 = vpop.f32.mrb[0].mxu0
      %2488 = vmatprep.mubr.f32.mxu0 0.0
      %2489 = vmatmul.mubr.f32.gmra.mrb[0].mxu0 %v1040
      %v2490 = vpop.f32.mrb[0].mxu0
      %v2491 = vadd.f32 0.0, %v2490
      %v2492 = vpop.f32.mrb[0].mxu0
      %2493 = vdwg.mxu0
      %v2495 = vsel %vm1540, %v1961, 0
      %v2498 = vsel %vm1540, %v1966, 0
      %v2501 = vsel %vm1540, %v2036, 0
      %v2504 = vsel %vm1540, %v2041, 0
      %v2507 = vsel %vm1540, %v2111, 0
      %v2510 = vsel %vm1540, %v2116, 0
      %v2513 = vsel %vm1540, %v2186, 0
      %v2516 = vsel %vm1540, %v2191, 0
      %v2519 = vsel %vm1540, %v2261, 0
      %v2522 = vsel %vm1540, %v2266, 0
      %v2525 = vsel %vm1540, %v2336, 0
      %v2528 = vsel %vm1540, %v2341, 0
      %v2531 = vsel %vm1540, %v2411, 0
      %v2534 = vsel %vm1540, %v2416, 0
      %v2537 = vsel %vm1540, %v2486, 0
      %v2540 = vsel %vm1540, %v2491, 0
      %2542 = vmatprep.subr.mxu0 0.0
      %2543 = vmatpush1.msra.mxu0 %v437
      %2544 = vmatprep.subr.mxu0 0.0
      %2545 = vmatpush1.msra.mxu0 %v438
      %2546 = vmatprep.subr.mxu0 0.0
      %2547 = vmatpush1.msra.mxu0 %v439
      %2548 = vmatprep.subr.mxu0 0.0
      %2549 = vmatpush1.msra.mxu0 %v440
      %2550 = vmatprep.subr.mxu0 0.0
      %2551 = vmatpush1.msra.mxu0 0.0
      %2552 = vmatprep.subr.mxu0 0.0
      %2553 = vmatpush1.msra.mxu0 0.0
      %2554 = vmatprep.subr.mxu0 0.0
      %2555 = vmatpush1.msra.mxu0 0.0
      %2556 = vmatprep.subr.mxu0 0.0
      %2557 = vmatpush1.msra.mxu0 0.0
      %2558 = vmatprep.subr.mxu0 0.0
      %2559 = vmatpush1.msra.mxu0 0.0
      %2560 = vmatprep.subr.mxu0 0.0
      %2561 = vmatpush1.msra.mxu0 0.0
      %2562 = vmatprep.subr.mxu0 0.0
      %2563 = vmatpush1.msra.mxu0 0.0
      %2564 = vmatprep.subr.mxu0 0.0
      %2565 = vmatpush1.msra.mxu0 0.0
      %2566 = vmatprep.subr.mxu0 0.0
      %2567 = vmatpush1.msra.mxu0 0.0
      %2568 = vmatprep.subr.mxu0 0.0
      %2569 = vmatpush1.msra.mxu0 0.0
      %2570 = vmatprep.subr.mxu0 0.0
      %2571 = vmatpush1.msra.mxu0 0.0
      %2572 = vmatprep.subr.mxu0 0.0
      %2573 = vmatpush1.msra.mxu0 0.0
      %2574 = vmatprep.subr.mxu0 0.0
      %2575 = vmatpush1.msra.mxu0 0.0
      %2576 = vmatprep.subr.mxu0 0.0
      %2577 = vmatpush1.msra.mxu0 0.0
      %2578 = vmatprep.subr.mxu0 0.0
      %2579 = vmatpush1.msra.mxu0 0.0
      %2580 = vmatprep.subr.mxu0 0.0
      %2581 = vmatpush1.msra.mxu0 0.0
      %2582 = vmatprep.subr.mxu0 0.0
      %2583 = vmatpush1.msra.mxu0 0.0
      %2584 = vmatprep.subr.mxu0 0.0
      %2585 = vmatpush1.msra.mxu0 0.0
      %2586 = vmatprep.subr.mxu0 0.0
      %2587 = vmatpush1.msra.mxu0 0.0
      %2588 = vmatprep.subr.mxu0 0.0
      %2589 = vmatpush1.msra.mxu0 0.0
      %2590 = vmatprep.subr.mxu0 0.0
      %2591 = vmatpush1.msra.mxu0 0.0
      %2592 = vmatprep.subr.mxu0 0.0
      %2593 = vmatpush1.msra.mxu0 0.0
      %2594 = vmatprep.subr.mxu0 0.0
      %2595 = vmatpush1.msra.mxu0 0.0
      %2596 = vmatprep.subr.mxu0 0.0
      %2597 = vmatpush1.msra.mxu0 0.0
      %2598 = vmatprep.subr.mxu0 0.0
      %2599 = vmatpush1.msra.mxu0 0.0
      %2600 = vmatprep.subr.mxu0 0.0
      %2601 = vmatpush1.msra.mxu0 0.0
      %2602 = vmatprep.subr.mxu0 0.0
      %2603 = vmatpush1.msra.mxu0 0.0
      %2604 = vmatprep.subr.mxu0 0.0
      %2605 = vmatpush1.msra.mxu0 0.0
      %2606 = vmatprep.mubr.f32.mxu0 0.0
      %2607 = vmatmul.mubr.f32.gmra.mrb[0].mxu0 %v2495
      %v2608 = vpop.f32.mrb[0].mxu0
      %v2609 = vadd.f32 0.0, %v2608
      %v2610 = vpop.f32.mrb[0].mxu0
      %2611 = vmatprep.mubr.f32.mxu0 0.0
      %2612 = vmatmul.mubr.f32.gmra.mrb[0].mxu0 %v2498
      %v2613 = vpop.f32.mrb[0].mxu0
      %v2614 = vadd.f32 0.0, %v2613
      %v2615 = vpop.f32.mrb[0].mxu0
      %2616 = vmatprep.mubr.f32.mxu0 0.0
      %2617 = vmatmul.mubr.f32.gmra.mrb[0].mxu0 %v2501
      %v2618 = vpop.f32.mrb[0].mxu0
      %v2619 = vadd.f32 0.0, %v2618
      %v2620 = vpop.f32.mrb[0].mxu0
      %2621 = vmatprep.mubr.f32.mxu0 0.0
      %2622 = vmatmul.mubr.f32.gmra.mrb[0].mxu0 %v2504
      %v2623 = vpop.f32.mrb[0].mxu0
      %v2624 = vadd.f32 0.0, %v2623
      %v2625 = vpop.f32.mrb[0].mxu0
      %2626 = vmatprep.mubr.f32.mxu0 0.0
      %2627 = vmatmul.mubr.f32.gmra.mrb[0].mxu0 %v2507
      %v2628 = vpop.f32.mrb[0].mxu0
      %v2629 = vadd.f32 0.0, %v2628
      %v2630 = vpop.f32.mrb[0].mxu0
      %2631 = vmatprep.mubr.f32.mxu0 0.0
      %2632 = vmatmul.mubr.f32.gmra.mrb[0].mxu0 %v2510
      %v2633 = vpop.f32.mrb[0].mxu0
      %v2634 = vadd.f32 0.0, %v2633
      %v2635 = vpop.f32.mrb[0].mxu0
      %2636 = vmatprep.mubr.f32.mxu0 0.0
      %2637 = vmatmul.mubr.f32.gmra.mrb[0].mxu0 %v2513
      %v2638 = vpop.f32.mrb[0].mxu0
      %v2639 = vadd.f32 0.0, %v2638
      %v2640 = vpop.f32.mrb[0].mxu0
      %2641 = vmatprep.mubr.f32.mxu0 0.0
      %2642 = vmatmul.mubr.f32.gmra.mrb[0].mxu0 %v2516
      %v2643 = vpop.f32.mrb[0].mxu0
      %v2644 = vadd.f32 0.0, %v2643
      %v2645 = vpop.f32.mrb[0].mxu0
      %2646 = vmatprep.mubr.f32.mxu0 0.0
      %2647 = vmatmul.mubr.f32.gmra.mrb[0].mxu0 %v2519
      %v2648 = vpop.f32.mrb[0].mxu0
      %v2649 = vadd.f32 0.0, %v2648
      %v2650 = vpop.f32.mrb[0].mxu0
      %2651 = vmatprep.mubr.f32.mxu0 0.0
      %2652 = vmatmul.mubr.f32.gmra.mrb[0].mxu0 %v2522
      %v2653 = vpop.f32.mrb[0].mxu0
      %v2654 = vadd.f32 0.0, %v2653
      %v2655 = vpop.f32.mrb[0].mxu0
      %2656 = vmatprep.mubr.f32.mxu0 0.0
      %2657 = vmatmul.mubr.f32.gmra.mrb[0].mxu0 %v2525
      %v2658 = vpop.f32.mrb[0].mxu0
      %v2659 = vadd.f32 0.0, %v2658
      %v2660 = vpop.f32.mrb[0].mxu0
      %2661 = vmatprep.mubr.f32.mxu0 0.0
      %2662 = vmatmul.mubr.f32.gmra.mrb[0].mxu0 %v2528
      %v2663 = vpop.f32.mrb[0].mxu0
      %v2664 = vadd.f32 0.0, %v2663
      %v2665 = vpop.f32.mrb[0].mxu0
      %2666 = vmatprep.mubr.f32.mxu0 0.0
      %2667 = vmatmul.mubr.f32.gmra.mrb[0].mxu0 %v2531
      %v2668 = vpop.f32.mrb[0].mxu0
      %v2669 = vadd.f32 0.0, %v2668
      %v2670 = vpop.f32.mrb[0].mxu0
      %2671 = vmatprep.mubr.f32.mxu0 0.0
      %2672 = vmatmul.mubr.f32.gmra.mrb[0].mxu0 %v2534
      %v2673 = vpop.f32.mrb[0].mxu0
      %v2674 = vadd.f32 0.0, %v2673
      %v2675 = vpop.f32.mrb[0].mxu0
      %2676 = vmatprep.mubr.f32.mxu0 0.0
      %2677 = vmatmul.mubr.f32.gmra.mrb[0].mxu0 %v2537
      %v2678 = vpop.f32.mrb[0].mxu0
      %v2679 = vadd.f32 0.0, %v2678
      %v2680 = vpop.f32.mrb[0].mxu0
      %2681 = vmatprep.mubr.f32.mxu0 0.0
      %2682 = vmatmul.mubr.f32.gmra.mrb[0].mxu0 %v2540
      %v2683 = vpop.f32.mrb[0].mxu0
      %v2684 = vadd.f32 0.0, %v2683
      %v2685 = vpop.f32.mrb[0].mxu0
      %2686 = vdwg.mxu0
      %v2688 = vsel %vm1540, %v1878, 0
      %v2691 = vsel %vm1540, %v1879, 0
      %v2694 = vsel %vm1540, %v1880, 0
      %v2697 = vsel %vm1540, %v1881, 0
      %v2700 = vsel %vm1540, %v1882, 0
      %v2703 = vsel %vm1540, %v1883, 0
      %v2706 = vsel %vm1540, %v1884, 0
      %v2709 = vsel %vm1540, %v1885, 0
      %v2712 = vsel %vm1540, %v1886, 0
      %v2715 = vsel %vm1540, %v1887, 0
      %v2718 = vsel %vm1540, %v1888, 0
      %v2721 = vsel %vm1540, %v1889, 0
      %v2724 = vsel %vm1540, %v1890, 0
      %v2727 = vsel %vm1540, %v1891, 0
      %v2730 = vsel %vm1540, %v1892, 0
      %v2733 = vsel %vm1540, %v1893, 0
      %2735 = vmatprep.subr.mxu0 0.0
      %2736 = vmatpush1.msra.mxu0 %v433
      %2737 = vmatprep.subr.mxu0 0.0
      %2738 = vmatpush1.msra.mxu0 %v434
      %2739 = vmatprep.subr.mxu0 0.0
      %2740 = vmatpush1.msra.mxu0 %v435
      %2741 = vmatprep.subr.mxu0 0.0
      %2742 = vmatpush1.msra.mxu0 %v436
      %2743 = vmatprep.subr.mxu0 0.0
      %2744 = vmatpush1.msra.mxu0 0.0
      %2745 = vmatprep.subr.mxu0 0.0
      %2746 = vmatpush1.msra.mxu0 0.0
      %2747 = vmatprep.subr.mxu0 0.0
      %2748 = vmatpush1.msra.mxu0 0.0
      %2749 = vmatprep.subr.mxu0 0.0
      %2750 = vmatpush1.msra.mxu0 0.0
      %2751 = vmatprep.subr.mxu0 0.0
      %2752 = vmatpush1.msra.mxu0 0.0
      %2753 = vmatprep.subr.mxu0 0.0
      %2754 = vmatpush1.msra.mxu0 0.0
      %2755 = vmatprep.subr.mxu0 0.0
      %2756 = vmatpush1.msra.mxu0 0.0
      %2757 = vmatprep.subr.mxu0 0.0
      %2758 = vmatpush1.msra.mxu0 0.0
      %2759 = vmatprep.subr.mxu0 0.0
      %2760 = vmatpush1.msra.mxu0 0.0
      %2761 = vmatprep.subr.mxu0 0.0
      %2762 = vmatpush1.msra.mxu0 0.0
      %2763 = vmatprep.subr.mxu0 0.0
      %2764 = vmatpush1.msra.mxu0 0.0
      %2765 = vmatprep.subr.mxu0 0.0
      %2766 = vmatpush1.msra.mxu0 0.0
      %2767 = vmatprep.subr.mxu0 0.0
      %2768 = vmatpush1.msra.mxu0 0.0
      %2769 = vmatprep.subr.mxu0 0.0
      %2770 = vmatpush1.msra.mxu0 0.0
      %2771 = vmatprep.subr.mxu0 0.0
      %2772 = vmatpush1.msra.mxu0 0.0
      %2773 = vmatprep.subr.mxu0 0.0
      %2774 = vmatpush1.msra.mxu0 0.0
      %2775 = vmatprep.subr.mxu0 0.0
      %2776 = vmatpush1.msra.mxu0 0.0
      %2777 = vmatprep.subr.mxu0 0.0
      %2778 = vmatpush1.msra.mxu0 0.0
      %2779 = vmatprep.subr.mxu0 0.0
      %2780 = vmatpush1.msra.mxu0 0.0
      %2781 = vmatprep.subr.mxu0 0.0
      %2782 = vmatpush1.msra.mxu0 0.0
      %2783 = vmatprep.subr.mxu0 0.0
      %2784 = vmatpush1.msra.mxu0 0.0
      %2785 = vmatprep.subr.mxu0 0.0
      %2786 = vmatpush1.msra.mxu0 0.0
      %2787 = vmatprep.subr.mxu0 0.0
      %2788 = vmatpush1.msra.mxu0 0.0
      %2789 = vmatprep.subr.mxu0 0.0
      %2790 = vmatpush1.msra.mxu0 0.0
      %2791 = vmatprep.subr.mxu0 0.0
      %2792 = vmatpush1.msra.mxu0 0.0
      %2793 = vmatprep.subr.mxu0 0.0
      %2794 = vmatpush1.msra.mxu0 0.0
      %2795 = vmatprep.subr.mxu0 0.0
      %2796 = vmatpush1.msra.mxu0 0.0
      %2797 = vmatprep.subr.mxu0 0.0
      %2798 = vmatpush1.msra.mxu0 0.0
      %2799 = vmatprep.mubr.f32.mxu0 0.0
      %2800 = vmatmul.mubr.f32.gmra.mrb[0].mxu0 %v2688
      %v2801 = vpop.f32.mrb[0].mxu0
      %v2802 = vadd.f32 %v2609, %v2801
      %v2803 = vpop.f32.mrb[0].mxu0
      %2804 = vmatprep.mubr.f32.mxu0 0.0
      %2805 = vmatmul.mubr.f32.gmra.mrb[0].mxu0 %v2691
      %v2806 = vpop.f32.mrb[0].mxu0
      %v2807 = vadd.f32 %v2614, %v2806
      %v2808 = vpop.f32.mrb[0].mxu0
      %2809 = vmatprep.mubr.f32.mxu0 0.0
      %2810 = vmatmul.mubr.f32.gmra.mrb[0].mxu0 %v2694
      %v2811 = vpop.f32.mrb[0].mxu0
      %v2812 = vadd.f32 %v2619, %v2811
      %v2813 = vpop.f32.mrb[0].mxu0
      %2814 = vmatprep.mubr.f32.mxu0 0.0
      %2815 = vmatmul.mubr.f32.gmra.mrb[0].mxu0 %v2697
      %v2816 = vpop.f32.mrb[0].mxu0
      %v2817 = vadd.f32 %v2624, %v2816
      %v2818 = vpop.f32.mrb[0].mxu0
      %2819 = vmatprep.mubr.f32.mxu0 0.0
      %2820 = vmatmul.mubr.f32.gmra.mrb[0].mxu0 %v2700
      %v2821 = vpop.f32.mrb[0].mxu0
      %v2822 = vadd.f32 %v2629, %v2821
      %v2823 = vpop.f32.mrb[0].mxu0
      %2824 = vmatprep.mubr.f32.mxu0 0.0
      %2825 = vmatmul.mubr.f32.gmra.mrb[0].mxu0 %v2703
      %v2826 = vpop.f32.mrb[0].mxu0
      %v2827 = vadd.f32 %v2634, %v2826
      %v2828 = vpop.f32.mrb[0].mxu0
      %2829 = vmatprep.mubr.f32.mxu0 0.0
      %2830 = vmatmul.mubr.f32.gmra.mrb[0].mxu0 %v2706
      %v2831 = vpop.f32.mrb[0].mxu0
      %v2832 = vadd.f32 %v2639, %v2831
      %v2833 = vpop.f32.mrb[0].mxu0
      %2834 = vmatprep.mubr.f32.mxu0 0.0
      %2835 = vmatmul.mubr.f32.gmra.mrb[0].mxu0 %v2709
      %v2836 = vpop.f32.mrb[0].mxu0
      %v2837 = vadd.f32 %v2644, %v2836
      %v2838 = vpop.f32.mrb[0].mxu0
      %2839 = vmatprep.mubr.f32.mxu0 0.0
      %2840 = vmatmul.mubr.f32.gmra.mrb[0].mxu0 %v2712
      %v2841 = vpop.f32.mrb[0].mxu0
      %v2842 = vadd.f32 %v2649, %v2841
      %v2843 = vpop.f32.mrb[0].mxu0
      %2844 = vmatprep.mubr.f32.mxu0 0.0
      %2845 = vmatmul.mubr.f32.gmra.mrb[0].mxu0 %v2715
      %v2846 = vpop.f32.mrb[0].mxu0
      %v2847 = vadd.f32 %v2654, %v2846
      %v2848 = vpop.f32.mrb[0].mxu0
      %2849 = vmatprep.mubr.f32.mxu0 0.0
      %2850 = vmatmul.mubr.f32.gmra.mrb[0].mxu0 %v2718
      %v2851 = vpop.f32.mrb[0].mxu0
      %v2852 = vadd.f32 %v2659, %v2851
      %v2853 = vpop.f32.mrb[0].mxu0
      %2854 = vmatprep.mubr.f32.mxu0 0.0
      %2855 = vmatmul.mubr.f32.gmra.mrb[0].mxu0 %v2721
      %v2856 = vpop.f32.mrb[0].mxu0
      %v2857 = vadd.f32 %v2664, %v2856
      %v2858 = vpop.f32.mrb[0].mxu0
      %2859 = vmatprep.mubr.f32.mxu0 0.0
      %2860 = vmatmul.mubr.f32.gmra.mrb[0].mxu0 %v2724
      %v2861 = vpop.f32.mrb[0].mxu0
      %v2862 = vadd.f32 %v2669, %v2861
      %v2863 = vpop.f32.mrb[0].mxu0
      %2864 = vmatprep.mubr.f32.mxu0 0.0
      %2865 = vmatmul.mubr.f32.gmra.mrb[0].mxu0 %v2727
      %v2866 = vpop.f32.mrb[0].mxu0
      %v2867 = vadd.f32 %v2674, %v2866
      %v2868 = vpop.f32.mrb[0].mxu0
      %2869 = vmatprep.mubr.f32.mxu0 0.0
      %2870 = vmatmul.mubr.f32.gmra.mrb[0].mxu0 %v2730
      %v2871 = vpop.f32.mrb[0].mxu0
      %v2872 = vadd.f32 %v2679, %v2871
      %v2873 = vpop.f32.mrb[0].mxu0
      %2874 = vmatprep.mubr.f32.mxu0 0.0
      %2875 = vmatmul.mubr.f32.gmra.mrb[0].mxu0 %v2733
      %v2876 = vpop.f32.mrb[0].mxu0
      %v2877 = vadd.f32 %v2684, %v2876
      %v2878 = vpop.f32.mrb[0].mxu0
      %2879 = vdwg.mxu0
      %v2880 = vlaneseq
      %v2881 = vshrl.u32 %v2880, 7
      %v2882 = vsub.s32 0, %v2881
      %v2883 = vrot.slane %v441, %v2882
      %v2884 = vadd.f32 %v2802, %v2883
      %v2885 = vadd.f32 %v2807, %v2883
      %v2886 = vadd.f32 %v2812, %v2883
      %v2887 = vadd.f32 %v2817, %v2883
      %v2888 = vadd.f32 %v2822, %v2883
      %v2889 = vadd.f32 %v2827, %v2883
      %v2890 = vadd.f32 %v2832, %v2883
      %v2891 = vadd.f32 %v2837, %v2883
      %v2892 = vadd.f32 %v2842, %v2883
      %v2893 = vadd.f32 %v2847, %v2883
      %v2894 = vadd.f32 %v2852, %v2883
      %v2895 = vadd.f32 %v2857, %v2883
      %v2896 = vadd.f32 %v2862, %v2883
      %v2897 = vadd.f32 %v2867, %v2883
      %v2898 = vadd.f32 %v2872, %v2883
      %v2899 = vadd.f32 %v2877, %v2883
      %v2900 = vmax.f32 %v2884, 0.0
      %v2901 = vmax.f32 %v2885, 0.0
      %v2902 = vmax.f32 %v2886, 0.0
      %v2903 = vmax.f32 %v2887, 0.0
      %v2904 = vmax.f32 %v2888, 0.0
      %v2905 = vmax.f32 %v2889, 0.0
      %v2906 = vmax.f32 %v2890, 0.0
      %v2907 = vmax.f32 %v2891, 0.0
      %v2908 = vmax.f32 %v2892, 0.0
      %v2909 = vmax.f32 %v2893, 0.0
      %v2910 = vmax.f32 %v2894, 0.0
      %v2911 = vmax.f32 %v2895, 0.0
      %v2912 = vmax.f32 %v2896, 0.0
      %v2913 = vmax.f32 %v2897, 0.0
      %v2914 = vmax.f32 %v2898, 0.0
      %v2915 = vmax.f32 %v2899, 0.0
      %v2916 = vsel %vm1540, %v2900, 0.0
      %v2917 = vsel %vm1540, %v2901, 0.0
      %v2918 = vadd.f32 %v2916, %v2917
      %v2919 = vrot.slane %v2918, 4
      %v2920 = vadd.f32 %v2918, %v2919
      %v2921 = vrot.slane %v2920, 2
      %v2922 = vadd.f32 %v2920, %v2921
      %v2923 = vrot.slane %v2922, 1
      %v2924 = vadd.f32 %v2922, %v2923
      %v2925 = vsel %vm1540, %v2902, 0.0
      %v2926 = vsel %vm1540, %v2903, 0.0
      %v2927 = vadd.f32 %v2925, %v2926
      %v2928 = vrot.slane %v2927, 4
      %v2929 = vadd.f32 %v2927, %v2928
      %v2930 = vrot.slane %v2929, 2
      %v2931 = vadd.f32 %v2929, %v2930
      %v2932 = vrot.slane %v2931, 1
      %v2933 = vadd.f32 %v2931, %v2932
      %v2934 = vsel %vm1540, %v2904, 0.0
      %v2935 = vsel %vm1540, %v2905, 0.0
      %v2936 = vadd.f32 %v2934, %v2935
      %v2937 = vrot.slane %v2936, 4
      %v2938 = vadd.f32 %v2936, %v2937
      %v2939 = vrot.slane %v2938, 2
      %v2940 = vadd.f32 %v2938, %v2939
      %v2941 = vrot.slane %v2940, 1
      %v2942 = vadd.f32 %v2940, %v2941
      %v2943 = vsel %vm1540, %v2906, 0.0
      %v2944 = vsel %vm1540, %v2907, 0.0
      %v2945 = vadd.f32 %v2943, %v2944
      %v2946 = vrot.slane %v2945, 4
      %v2947 = vadd.f32 %v2945, %v2946
      %v2948 = vrot.slane %v2947, 2
      %v2949 = vadd.f32 %v2947, %v2948
      %v2950 = vrot.slane %v2949, 1
      %v2951 = vadd.f32 %v2949, %v2950
      %v2952 = vsel %vm1540, %v2908, 0.0
      %v2953 = vsel %vm1540, %v2909, 0.0
      %v2954 = vadd.f32 %v2952, %v2953
      %v2955 = vrot.slane %v2954, 4
      %v2956 = vadd.f32 %v2954, %v2955
      %v2957 = vrot.slane %v2956, 2
      %v2958 = vadd.f32 %v2956, %v2957
      %v2959 = vrot.slane %v2958, 1
      %v2960 = vadd.f32 %v2958, %v2959
      %v2961 = vsel %vm1540, %v2910, 0.0
      %v2962 = vsel %vm1540, %v2911, 0.0
      %v2963 = vadd.f32 %v2961, %v2962
      %v2964 = vrot.slane %v2963, 4
      %v2965 = vadd.f32 %v2963, %v2964
      %v2966 = vrot.slane %v2965, 2
      %v2967 = vadd.f32 %v2965, %v2966
      %v2968 = vrot.slane %v2967, 1
      %v2969 = vadd.f32 %v2967, %v2968
      %v2970 = vsel %vm1540, %v2912, 0.0
      %v2971 = vsel %vm1540, %v2913, 0.0
      %v2972 = vadd.f32 %v2970, %v2971
      %v2973 = vrot.slane %v2972, 4
      %v2974 = vadd.f32 %v2972, %v2973
      %v2975 = vrot.slane %v2974, 2
      %v2976 = vadd.f32 %v2974, %v2975
      %v2977 = vrot.slane %v2976, 1
      %v2978 = vadd.f32 %v2976, %v2977
      %v2979 = vsel %vm1540, %v2914, 0.0
      %v2980 = vsel %vm1540, %v2915, 0.0
      %v2981 = vadd.f32 %v2979, %v2980
      %v2982 = vrot.slane %v2981, 4
      %v2983 = vadd.f32 %v2981, %v2982
      %v2984 = vrot.slane %v2983, 2
      %v2985 = vadd.f32 %v2983, %v2984
      %v2986 = vrot.slane %v2985, 1
      %v2987 = vadd.f32 %v2985, %v2986
      %v2988 = vmul.f32 %v2924, %v1613
      %v2989 = vmul.f32 %v2933, %v1613
      %v2990 = vmul.f32 %v2942, %v1613
      %v2991 = vmul.f32 %v2951, %v1613
      %v2992 = vmul.f32 %v2960, %v1613
      %v2993 = vmul.f32 %v2969, %v1613
      %v2994 = vmul.f32 %v2978, %v1613
      %v2995 = vmul.f32 %v2987, %v1613
      %v2996 = vsub.f32 %v2900, %v2988
      %v2997 = vsub.f32 %v2901, %v2988
      %v2998 = vsub.f32 %v2902, %v2989
      %v2999 = vsub.f32 %v2903, %v2989
      %v3000 = vsub.f32 %v2904, %v2990
      %v3001 = vsub.f32 %v2905, %v2990
      %v3002 = vsub.f32 %v2906, %v2991
      %v3003 = vsub.f32 %v2907, %v2991
      %v3004 = vsub.f32 %v2908, %v2992
      %v3005 = vsub.f32 %v2909, %v2992
      %v3006 = vsub.f32 %v2910, %v2993
      %v3007 = vsub.f32 %v2911, %v2993
      %v3008 = vsub.f32 %v2912, %v2994
      %v3009 = vsub.f32 %v2913, %v2994
      %v3010 = vsub.f32 %v2914, %v2995
      %v3011 = vsub.f32 %v2915, %v2995
      %v3012 = vmul.f32 %v2996, %v2996
      %v3013 = vmul.f32 %v2997, %v2997
      %v3014 = vmul.f32 %v2998, %v2998
      %v3015 = vmul.f32 %v2999, %v2999
      %v3016 = vmul.f32 %v3000, %v3000
      %v3017 = vmul.f32 %v3001, %v3001
      %v3018 = vmul.f32 %v3002, %v3002
      %v3019 = vmul.f32 %v3003, %v3003
      %v3020 = vmul.f32 %v3004, %v3004
      %v3021 = vmul.f32 %v3005, %v3005
      %v3022 = vmul.f32 %v3006, %v3006
      %v3023 = vmul.f32 %v3007, %v3007
      %v3024 = vmul.f32 %v3008, %v3008
      %v3025 = vmul.f32 %v3009, %v3009
      %v3026 = vmul.f32 %v3010, %v3010
      %v3027 = vmul.f32 %v3011, %v3011
      %v3028 = vsel %vm1540, %v3012, 0.0
      %v3029 = vsel %vm1540, %v3013, 0.0
      %v3030 = vadd.f32 %v3028, %v3029
      %v3031 = vrot.slane %v3030, 4
      %v3032 = vadd.f32 %v3030, %v3031
      %v3033 = vrot.slane %v3032, 2
      %v3034 = vadd.f32 %v3032, %v3033
      %v3035 = vrot.slane %v3034, 1
      %v3036 = vadd.f32 %v3034, %v3035
      %v3037 = vsel %vm1540, %v3014, 0.0
      %v3038 = vsel %vm1540, %v3015, 0.0
      %v3039 = vadd.f32 %v3037, %v3038
      %v3040 = vrot.slane %v3039, 4
      %v3041 = vadd.f32 %v3039, %v3040
      %v3042 = vrot.slane %v3041, 2
      %v3043 = vadd.f32 %v3041, %v3042
      %v3044 = vrot.slane %v3043, 1
      %v3045 = vadd.f32 %v3043, %v3044
      %v3046 = vsel %vm1540, %v3016, 0.0
      %v3047 = vsel %vm1540, %v3017, 0.0
      %v3048 = vadd.f32 %v3046, %v3047
      %v3049 = vrot.slane %v3048, 4
      %v3050 = vadd.f32 %v3048, %v3049
      %v3051 = vrot.slane %v3050, 2
      %v3052 = vadd.f32 %v3050, %v3051
      %v3053 = vrot.slane %v3052, 1
      %v3054 = vadd.f32 %v3052, %v3053
      %v3055 = vsel %vm1540, %v3018, 0.0
      %v3056 = vsel %vm1540, %v3019, 0.0
      %v3057 = vadd.f32 %v3055, %v3056
      %v3058 = vrot.slane %v3057, 4
      %v3059 = vadd.f32 %v3057, %v3058
      %v3060 = vrot.slane %v3059, 2
      %v3061 = vadd.f32 %v3059, %v3060
      %v3062 = vrot.slane %v3061, 1
      %v3063 = vadd.f32 %v3061, %v3062
      %v3064 = vsel %vm1540, %v3020, 0.0
      %v3065 = vsel %vm1540, %v3021, 0.0
      %v3066 = vadd.f32 %v3064, %v3065
      %v3067 = vrot.slane %v3066, 4
      %v3068 = vadd.f32 %v3066, %v3067
      %v3069 = vrot.slane %v3068, 2
      %v3070 = vadd.f32 %v3068, %v3069
      %v3071 = vrot.slane %v3070, 1
      %v3072 = vadd.f32 %v3070, %v3071
      %v3073 = vsel %vm1540, %v3022, 0.0
      %v3074 = vsel %vm1540, %v3023, 0.0
      %v3075 = vadd.f32 %v3073, %v3074
      %v3076 = vrot.slane %v3075, 4
      %v3077 = vadd.f32 %v3075, %v3076
      %v3078 = vrot.slane %v3077, 2
      %v3079 = vadd.f32 %v3077, %v3078
      %v3080 = vrot.slane %v3079, 1
      %v3081 = vadd.f32 %v3079, %v3080
      %v3082 = vsel %vm1540, %v3024, 0.0
      %v3083 = vsel %vm1540, %v3025, 0.0
      %v3084 = vadd.f32 %v3082, %v3083
      %v3085 = vrot.slane %v3084, 4
      %v3086 = vadd.f32 %v3084, %v3085
      %v3087 = vrot.slane %v3086, 2
      %v3088 = vadd.f32 %v3086, %v3087
      %v3089 = vrot.slane %v3088, 1
      %v3090 = vadd.f32 %v3088, %v3089
      %v3091 = vsel %vm1540, %v3026, 0.0
      %v3092 = vsel %vm1540, %v3027, 0.0
      %v3093 = vadd.f32 %v3091, %v3092
      %v3094 = vrot.slane %v3093, 4
      %v3095 = vadd.f32 %v3093, %v3094
      %v3096 = vrot.slane %v3095, 2
      %v3097 = vadd.f32 %v3095, %v3096
      %v3098 = vrot.slane %v3097, 1
      %v3099 = vadd.f32 %v3097, %v3098
      %v3100 = vmul.f32 %v3036, %v1613
      %v3101 = vmul.f32 %v3045, %v1613
      %v3102 = vmul.f32 %v3054, %v1613
      %v3103 = vmul.f32 %v3063, %v1613
      %v3104 = vmul.f32 %v3072, %v1613
      %v3105 = vmul.f32 %v3081, %v1613
      %v3106 = vmul.f32 %v3090, %v1613
      %v3107 = vmul.f32 %v3099, %v1613
      %v3108 = vadd.f32 %v3100, 1e-05
      %v3109 = vadd.f32 %v3101, 1e-05
      %v3110 = vadd.f32 %v3102, 1e-05
      %v3111 = vadd.f32 %v3103, 1e-05
      %v3112 = vadd.f32 %v3104, 1e-05
      %v3113 = vadd.f32 %v3105, 1e-05
      %v3114 = vadd.f32 %v3106, 1e-05
      %v3115 = vadd.f32 %v3107, 1e-05
      %v3116 = vrsqrt.pop %v3108
      %v3117 = vrsqrt.pop %v3109
      %v3118 = vrsqrt.pop %v3110
      %v3119 = vrsqrt.pop %v3111
      %v3120 = vrsqrt.pop %v3112
      %v3121 = vrsqrt.pop %v3113
      %v3122 = vrsqrt.pop %v3114
      %v3123 = vrsqrt.pop %v3115
      %v3124 = vmul.f32 %v441, %v3116
      %v3125 = vmul.f32 %v441, %v3117
      %v3126 = vmul.f32 %v441, %v3118
      %v3127 = vmul.f32 %v441, %v3119
      %v3128 = vmul.f32 %v441, %v3120
      %v3129 = vmul.f32 %v441, %v3121
      %v3130 = vmul.f32 %v441, %v3122
      %v3131 = vmul.f32 %v441, %v3123
      %v3132 = vmul.f32 %v2988, %v3124
      %v3133 = vmul.f32 %v2989, %v3125
      %v3134 = vmul.f32 %v2990, %v3126
      %v3135 = vmul.f32 %v2991, %v3127
      %v3136 = vmul.f32 %v2992, %v3128
      %v3137 = vmul.f32 %v2993, %v3129
      %v3138 = vmul.f32 %v2994, %v3130
      %v3139 = vmul.f32 %v2995, %v3131
      %v3148 = vrot.slane %v3132, 7
      %v3149 = vrot.slane %v3133, 7
      %v3150 = vrot.slane %v3134, 7
      %v3151 = vrot.slane %v3135, 7
      %v3152 = vrot.slane %v3136, 7
      %v3153 = vrot.slane %v3137, 7
      %v3154 = vrot.slane %v3138, 7
      %v3155 = vrot.slane %v3139, 7
      %v3164 = vsub.f32 %v441, %v3148
      %v3165 = vsub.f32 %v441, %v3149
      %v3166 = vsub.f32 %v441, %v3150
      %v3167 = vsub.f32 %v441, %v3151
      %v3168 = vsub.f32 %v441, %v3152
      %v3169 = vsub.f32 %v441, %v3153
      %v3170 = vsub.f32 %v441, %v3154
      %v3171 = vsub.f32 %v441, %v3155
      %v3172 = vlaneseq
      %v3173 = vshrl.u32 %v3172, 7
      %v3174 = vsub.s32 1, %v3173
      %v3175 = vrot.slane %v3124, %v3174
      %v3176 = vlaneseq
      %v3177 = vshrl.u32 %v3176, 7
      %v3178 = vsub.s32 1, %v3177
      %v3179 = vrot.slane %v3125, %v3178
      %v3180 = vlaneseq
      %v3181 = vshrl.u32 %v3180, 7
      %v3182 = vsub.s32 1, %v3181
      %v3183 = vrot.slane %v3126, %v3182
      %v3184 = vlaneseq
      %v3185 = vshrl.u32 %v3184, 7
      %v3186 = vsub.s32 1, %v3185
      %v3187 = vrot.slane %v3127, %v3186
      %v3188 = vlaneseq
      %v3189 = vshrl.u32 %v3188, 7
      %v3190 = vsub.s32 1, %v3189
      %v3191 = vrot.slane %v3128, %v3190
      %v3192 = vlaneseq
      %v3193 = vshrl.u32 %v3192, 7
      %v3194 = vsub.s32 1, %v3193
      %v3195 = vrot.slane %v3129, %v3194
      %v3196 = vlaneseq
      %v3197 = vshrl.u32 %v3196, 7
      %v3198 = vsub.s32 1, %v3197
      %v3199 = vrot.slane %v3130, %v3198
      %v3200 = vlaneseq
      %v3201 = vshrl.u32 %v3200, 7
      %v3202 = vsub.s32 1, %v3201
      %v3203 = vrot.slane %v3131, %v3202
      %v3204 = vmul.f32 %v2900, %v3175
      %v3205 = vmul.f32 %v2901, %v3175
      %v3206 = vmul.f32 %v2902, %v3179
      %v3207 = vmul.f32 %v2903, %v3179
      %v3208 = vmul.f32 %v2904, %v3183
      %v3209 = vmul.f32 %v2905, %v3183
      %v3210 = vmul.f32 %v2906, %v3187
      %v3211 = vmul.f32 %v2907, %v3187
      %v3212 = vmul.f32 %v2908, %v3191
      %v3213 = vmul.f32 %v2909, %v3191
      %v3214 = vmul.f32 %v2910, %v3195
      %v3215 = vmul.f32 %v2911, %v3195
      %v3216 = vmul.f32 %v2912, %v3199
      %v3217 = vmul.f32 %v2913, %v3199
      %v3218 = vmul.f32 %v2914, %v3203
      %v3219 = vmul.f32 %v2915, %v3203
      %v3220 = vlaneseq
      %v3221 = vshrl.u32 %v3220, 7
      %v3222 = vsub.s32 2, %v3221
      %v3223 = vrot.slane %v3164, %v3222
      %v3224 = vlaneseq
      %v3225 = vshrl.u32 %v3224, 7
      %v3226 = vsub.s32 2, %v3225
      %v3227 = vrot.slane %v3165, %v3226
      %v3228 = vlaneseq
      %v3229 = vshrl.u32 %v3228, 7
      %v3230 = vsub.s32 2, %v3229
      %v3231 = vrot.slane %v3166, %v3230
      %v3232 = vlaneseq
      %v3233 = vshrl.u32 %v3232, 7
      %v3234 = vsub.s32 2, %v3233
      %v3235 = vrot.slane %v3167, %v3234
      %v3236 = vlaneseq
      %v3237 = vshrl.u32 %v3236, 7
      %v3238 = vsub.s32 2, %v3237
      %v3239 = vrot.slane %v3168, %v3238
      %v3240 = vlaneseq
      %v3241 = vshrl.u32 %v3240, 7
      %v3242 = vsub.s32 2, %v3241
      %v3243 = vrot.slane %v3169, %v3242
      %v3244 = vlaneseq
      %v3245 = vshrl.u32 %v3244, 7
      %v3246 = vsub.s32 2, %v3245
      %v3247 = vrot.slane %v3170, %v3246
      %v3248 = vlaneseq
      %v3249 = vshrl.u32 %v3248, 7
      %v3250 = vsub.s32 2, %v3249
      %v3251 = vrot.slane %v3171, %v3250
      %v3252 = vadd.f32 %v3204, %v3223
      %v3253 = vadd.f32 %v3205, %v3223
      %v3254 = vadd.f32 %v3206, %v3227
      %v3255 = vadd.f32 %v3207, %v3227
      %v3256 = vadd.f32 %v3208, %v3231
      %v3257 = vadd.f32 %v3209, %v3231
      %v3258 = vadd.f32 %v3210, %v3235
      %v3259 = vadd.f32 %v3211, %v3235
      %v3260 = vadd.f32 %v3212, %v3239
      %v3261 = vadd.f32 %v3213, %v3239
      %v3262 = vadd.f32 %v3214, %v3243
      %v3263 = vadd.f32 %v3215, %v3243
      %v3264 = vadd.f32 %v3216, %v3247
      %v3265 = vadd.f32 %v3217, %v3247
      %v3266 = vadd.f32 %v3218, %v3251
      %v3267 = vadd.f32 %v3219, %v3251
      %3268 = vmatprep.subr.mxu0 0.0
      %3269 = vmatpush1.msra.mxu0 %v443
      %3270 = vmatprep.subr.mxu0 0.0
      %3271 = vmatpush1.msra.mxu0 %v444
      %3272 = vmatprep.subr.mxu0 0.0
      %3273 = vmatpush1.msra.mxu0 %v445
      %3274 = vmatprep.subr.mxu0 0.0
      %3275 = vmatpush1.msra.mxu0 %v446
      %3276 = vmatprep.subr.mxu0 0.0
      %3277 = vmatpush1.msra.mxu0 0.0
      %3278 = vmatprep.subr.mxu0 0.0
      %3279 = vmatpush1.msra.mxu0 0.0
      %3280 = vmatprep.subr.mxu0 0.0
      %3281 = vmatpush1.msra.mxu0 0.0
      %3282 = vmatprep.subr.mxu0 0.0
      %3283 = vmatpush1.msra.mxu0 0.0
      %3284 = vmatprep.subr.mxu0 0.0
      %3285 = vmatpush1.msra.mxu0 0.0
      %3286 = vmatprep.subr.mxu0 0.0
      %3287 = vmatpush1.msra.mxu0 0.0
      %3288 = vmatprep.subr.mxu0 0.0
      %3289 = vmatpush1.msra.mxu0 0.0
      %3290 = vmatprep.subr.mxu0 0.0
      %3291 = vmatpush1.msra.mxu0 0.0
      %3292 = vmatprep.subr.mxu0 0.0
      %3293 = vmatpush1.msra.mxu0 0.0
      %3294 = vmatprep.subr.mxu0 0.0
      %3295 = vmatpush1.msra.mxu0 0.0
      %3296 = vmatprep.subr.mxu0 0.0
      %3297 = vmatpush1.msra.mxu0 0.0
      %3298 = vmatprep.subr.mxu0 0.0
      %3299 = vmatpush1.msra.mxu0 0.0
      %3300 = vmatprep.subr.mxu0 0.0
      %3301 = vmatpush1.msra.mxu0 0.0
      %3302 = vmatprep.subr.mxu0 0.0
      %3303 = vmatpush1.msra.mxu0 0.0
      %3304 = vmatprep.subr.mxu0 0.0
      %3305 = vmatpush1.msra.mxu0 0.0
      %3306 = vmatprep.subr.mxu0 0.0
      %3307 = vmatpush1.msra.mxu0 0.0
      %3308 = vmatprep.subr.mxu0 0.0
      %3309 = vmatpush1.msra.mxu0 0.0
      %3310 = vmatprep.subr.mxu0 0.0
      %3311 = vmatpush1.msra.mxu0 0.0
      %3312 = vmatprep.subr.mxu0 0.0
      %3313 = vmatpush1.msra.mxu0 0.0
      %3314 = vmatprep.subr.mxu0 0.0
      %3315 = vmatpush1.msra.mxu0 0.0
      %3316 = vmatprep.subr.mxu0 0.0
      %3317 = vmatpush1.msra.mxu0 0.0
      %3318 = vmatprep.subr.mxu0 0.0
      %3319 = vmatpush1.msra.mxu0 0.0
      %3320 = vmatprep.subr.mxu0 0.0
      %3321 = vmatpush1.msra.mxu0 0.0
      %3322 = vmatprep.subr.mxu0 0.0
      %3323 = vmatpush1.msra.mxu0 0.0
      %3324 = vmatprep.subr.mxu0 0.0
      %3325 = vmatpush1.msra.mxu0 0.0
      %3326 = vmatprep.subr.mxu0 0.0
      %3327 = vmatpush1.msra.mxu0 0.0
      %3328 = vmatprep.subr.mxu0 0.0
      %3329 = vmatpush1.msra.mxu0 0.0
      %3330 = vmatprep.subr.mxu0 0.0
      %3331 = vmatpush1.msra.mxu0 0.0
      %3332 = vmatprep.mubr.f32.mxu0 0.0
      %3333 = vmatmul.mubr.f32.gmra.mrb[0].mxu0 %v2688
      %v3334 = vpop.f32.mrb[0].mxu0
      %v3335 = vadd.f32 0.0, %v3334
      %v3336 = vpop.f32.mrb[0].mxu0
      %3337 = vmatprep.mubr.f32.mxu0 0.0
      %3338 = vmatmul.mubr.f32.gmra.mrb[0].mxu0 %v2691
      %v3339 = vpop.f32.mrb[0].mxu0
      %v3340 = vadd.f32 0.0, %v3339
      %v3341 = vpop.f32.mrb[0].mxu0
      %3342 = vmatprep.mubr.f32.mxu0 0.0
      %3343 = vmatmul.mubr.f32.gmra.mrb[0].mxu0 %v2694
      %v3344 = vpop.f32.mrb[0].mxu0
      %v3345 = vadd.f32 0.0, %v3344
      %v3346 = vpop.f32.mrb[0].mxu0
      %3347 = vmatprep.mubr.f32.mxu0 0.0
      %3348 = vmatmul.mubr.f32.gmra.mrb[0].mxu0 %v2697
      %v3349 = vpop.f32.mrb[0].mxu0
      %v3350 = vadd.f32 0.0, %v3349
      %v3351 = vpop.f32.mrb[0].mxu0
      %3352 = vmatprep.mubr.f32.mxu0 0.0
      %3353 = vmatmul.mubr.f32.gmra.mrb[0].mxu0 %v2700
      %v3354 = vpop.f32.mrb[0].mxu0
      %v3355 = vadd.f32 0.0, %v3354
      %v3356 = vpop.f32.mrb[0].mxu0
      %3357 = vmatprep.mubr.f32.mxu0 0.0
      %3358 = vmatmul.mubr.f32.gmra.mrb[0].mxu0 %v2703
      %v3359 = vpop.f32.mrb[0].mxu0
      %v3360 = vadd.f32 0.0, %v3359
      %v3361 = vpop.f32.mrb[0].mxu0
      %3362 = vmatprep.mubr.f32.mxu0 0.0
      %3363 = vmatmul.mubr.f32.gmra.mrb[0].mxu0 %v2706
      %v3364 = vpop.f32.mrb[0].mxu0
      %v3365 = vadd.f32 0.0, %v3364
      %v3366 = vpop.f32.mrb[0].mxu0
      %3367 = vmatprep.mubr.f32.mxu0 0.0
      %3368 = vmatmul.mubr.f32.gmra.mrb[0].mxu0 %v2709
      %v3369 = vpop.f32.mrb[0].mxu0
      %v3370 = vadd.f32 0.0, %v3369
      %v3371 = vpop.f32.mrb[0].mxu0
      %3372 = vmatprep.mubr.f32.mxu0 0.0
      %3373 = vmatmul.mubr.f32.gmra.mrb[0].mxu0 %v2712
      %v3374 = vpop.f32.mrb[0].mxu0
      %v3375 = vadd.f32 0.0, %v3374
      %v3376 = vpop.f32.mrb[0].mxu0
      %3377 = vmatprep.mubr.f32.mxu0 0.0
      %3378 = vmatmul.mubr.f32.gmra.mrb[0].mxu0 %v2715
      %v3379 = vpop.f32.mrb[0].mxu0
      %v3380 = vadd.f32 0.0, %v3379
      %v3381 = vpop.f32.mrb[0].mxu0
      %3382 = vmatprep.mubr.f32.mxu0 0.0
      %3383 = vmatmul.mubr.f32.gmra.mrb[0].mxu0 %v2718
      %v3384 = vpop.f32.mrb[0].mxu0
      %v3385 = vadd.f32 0.0, %v3384
      %v3386 = vpop.f32.mrb[0].mxu0
      %3387 = vmatprep.mubr.f32.mxu0 0.0
      %3388 = vmatmul.mubr.f32.gmra.mrb[0].mxu0 %v2721
      %v3389 = vpop.f32.mrb[0].mxu0
      %v3390 = vadd.f32 0.0, %v3389
      %v3391 = vpop.f32.mrb[0].mxu0
      %3392 = vmatprep.mubr.f32.mxu0 0.0
      %3393 = vmatmul.mubr.f32.gmra.mrb[0].mxu0 %v2724
      %v3394 = vpop.f32.mrb[0].mxu0
      %v3395 = vadd.f32 0.0, %v3394
      %v3396 = vpop.f32.mrb[0].mxu0
      %3397 = vmatprep.mubr.f32.mxu0 0.0
      %3398 = vmatmul.mubr.f32.gmra.mrb[0].mxu0 %v2727
      %v3399 = vpop.f32.mrb[0].mxu0
      %v3400 = vadd.f32 0.0, %v3399
      %v3401 = vpop.f32.mrb[0].mxu0
      %3402 = vmatprep.mubr.f32.mxu0 0.0
      %3403 = vmatmul.mubr.f32.gmra.mrb[0].mxu0 %v2730
      %v3404 = vpop.f32.mrb[0].mxu0
      %v3405 = vadd.f32 0.0, %v3404
      %v3406 = vpop.f32.mrb[0].mxu0
      %3407 = vmatprep.mubr.f32.mxu0 0.0
      %3408 = vmatmul.mubr.f32.gmra.mrb[0].mxu0 %v2733
      %v3409 = vpop.f32.mrb[0].mxu0
      %v3410 = vadd.f32 0.0, %v3409
      %v3411 = vpop.f32.mrb[0].mxu0
      %3412 = vdwg.mxu0
      %3413 = vmatprep.subr.mxu0 0.0
      %3414 = vmatpush1.msra.mxu0 %v442
      %3415 = vmatprep.subr.mxu0 0.0
      %3416 = vmatpush1.msra.mxu0 0.0
      %3417 = vmatprep.subr.mxu0 0.0
      %3418 = vmatpush1.msra.mxu0 0.0
      %3419 = vmatprep.subr.mxu0 0.0
      %3420 = vmatpush1.msra.mxu0 0.0
      %3421 = vmatprep.subr.mxu0 0.0
      %3422 = vmatpush1.msra.mxu0 0.0
      %3423 = vmatprep.subr.mxu0 0.0
      %3424 = vmatpush1.msra.mxu0 0.0
      %3425 = vmatprep.subr.mxu0 0.0
      %3426 = vmatpush1.msra.mxu0 0.0
      %3427 = vmatprep.subr.mxu0 0.0
      %3428 = vmatpush1.msra.mxu0 0.0
      %3429 = vmatprep.subr.mxu0 0.0
      %3430 = vmatpush1.msra.mxu0 0.0
      %3431 = vmatprep.subr.mxu0 0.0
      %3432 = vmatpush1.msra.mxu0 0.0
      %3433 = vmatprep.subr.mxu0 0.0
      %3434 = vmatpush1.msra.mxu0 0.0
      %3435 = vmatprep.subr.mxu0 0.0
      %3436 = vmatpush1.msra.mxu0 0.0
      %3437 = vmatprep.subr.mxu0 0.0
      %3438 = vmatpush1.msra.mxu0 0.0
      %3439 = vmatprep.subr.mxu0 0.0
      %3440 = vmatpush1.msra.mxu0 0.0
      %3441 = vmatprep.subr.mxu0 0.0
      %3442 = vmatpush1.msra.mxu0 0.0
      %3443 = vmatprep.subr.mxu0 0.0
      %3444 = vmatpush1.msra.mxu0 0.0
      %3445 = vmatprep.subr.mxu0 0.0
      %3446 = vmatpush1.msra.mxu0 0.0
      %3447 = vmatprep.subr.mxu0 0.0
      %3448 = vmatpush1.msra.mxu0 0.0
      %3449 = vmatprep.subr.mxu0 0.0
      %3450 = vmatpush1.msra.mxu0 0.0
      %3451 = vmatprep.subr.mxu0 0.0
      %3452 = vmatpush1.msra.mxu0 0.0
      %3453 = vmatprep.subr.mxu0 0.0
      %3454 = vmatpush1.msra.mxu0 0.0
      %3455 = vmatprep.subr.mxu0 0.0
      %3456 = vmatpush1.msra.mxu0 0.0
      %3457 = vmatprep.subr.mxu0 0.0
      %3458 = vmatpush1.msra.mxu0 0.0
      %3459 = vmatprep.subr.mxu0 0.0
      %3460 = vmatpush1.msra.mxu0 0.0
      %3461 = vmatprep.subr.mxu0 0.0
      %3462 = vmatpush1.msra.mxu0 0.0
      %3463 = vmatprep.subr.mxu0 0.0
      %3464 = vmatpush1.msra.mxu0 0.0
      %3465 = vmatprep.subr.mxu0 0.0
      %3466 = vmatpush1.msra.mxu0 0.0
      %3467 = vmatprep.subr.mxu0 0.0
      %3468 = vmatpush1.msra.mxu0 0.0
      %3469 = vmatprep.subr.mxu0 0.0
      %3470 = vmatpush1.msra.mxu0 0.0
      %3471 = vmatprep.subr.mxu0 0.0
      %3472 = vmatpush1.msra.mxu0 0.0
      %3473 = vmatprep.subr.mxu0 0.0
      %3474 = vmatpush1.msra.mxu0 0.0
      %3475 = vmatprep.subr.mxu0 0.0
      %3476 = vmatpush1.msra.mxu0 0.0
      %3477 = vmatprep.mubr.f32.mxu0 0.0
      %3478 = vmatmul.mubr.f32.gmra.mrb[0].mxu0 %v1312
      %v3479 = vpop.f32.mrb[0].mxu0
      %v3480 = vadd.f32 %v3335, %v3479
      %v3481 = vpop.f32.mrb[0].mxu0
      %3482 = vmatprep.mubr.f32.mxu0 0.0
      %3483 = vmatmul.mubr.f32.gmra.mrb[0].mxu0 %v1315
      %v3484 = vpop.f32.mrb[0].mxu0
      %v3485 = vadd.f32 %v3340, %v3484
      %v3486 = vpop.f32.mrb[0].mxu0
      %3487 = vmatprep.mubr.f32.mxu0 0.0
      %3488 = vmatmul.mubr.f32.gmra.mrb[0].mxu0 %v1318
      %v3489 = vpop.f32.mrb[0].mxu0
      %v3490 = vadd.f32 %v3345, %v3489
      %v3491 = vpop.f32.mrb[0].mxu0
      %3492 = vmatprep.mubr.f32.mxu0 0.0
      %3493 = vmatmul.mubr.f32.gmra.mrb[0].mxu0 %v1321
      %v3494 = vpop.f32.mrb[0].mxu0
      %v3495 = vadd.f32 %v3350, %v3494
      %v3496 = vpop.f32.mrb[0].mxu0
      %3497 = vmatprep.mubr.f32.mxu0 0.0
      %3498 = vmatmul.mubr.f32.gmra.mrb[0].mxu0 %v1324
      %v3499 = vpop.f32.mrb[0].mxu0
      %v3500 = vadd.f32 %v3355, %v3499
      %v3501 = vpop.f32.mrb[0].mxu0
      %3502 = vmatprep.mubr.f32.mxu0 0.0
      %3503 = vmatmul.mubr.f32.gmra.mrb[0].mxu0 %v1327
      %v3504 = vpop.f32.mrb[0].mxu0
      %v3505 = vadd.f32 %v3360, %v3504
      %v3506 = vpop.f32.mrb[0].mxu0
      %3507 = vmatprep.mubr.f32.mxu0 0.0
      %3508 = vmatmul.mubr.f32.gmra.mrb[0].mxu0 %v1330
      %v3509 = vpop.f32.mrb[0].mxu0
      %v3510 = vadd.f32 %v3365, %v3509
      %v3511 = vpop.f32.mrb[0].mxu0
      %3512 = vmatprep.mubr.f32.mxu0 0.0
      %3513 = vmatmul.mubr.f32.gmra.mrb[0].mxu0 %v1333
      %v3514 = vpop.f32.mrb[0].mxu0
      %v3515 = vadd.f32 %v3370, %v3514
      %v3516 = vpop.f32.mrb[0].mxu0
      %3517 = vmatprep.mubr.f32.mxu0 0.0
      %3518 = vmatmul.mubr.f32.gmra.mrb[0].mxu0 %v1336
      %v3519 = vpop.f32.mrb[0].mxu0
      %v3520 = vadd.f32 %v3375, %v3519
      %v3521 = vpop.f32.mrb[0].mxu0
      %3522 = vmatprep.mubr.f32.mxu0 0.0
      %3523 = vmatmul.mubr.f32.gmra.mrb[0].mxu0 %v1339
      %v3524 = vpop.f32.mrb[0].mxu0
      %v3525 = vadd.f32 %v3380, %v3524
      %v3526 = vpop.f32.mrb[0].mxu0
      %3527 = vmatprep.mubr.f32.mxu0 0.0
      %3528 = vmatmul.mubr.f32.gmra.mrb[0].mxu0 %v1342
      %v3529 = vpop.f32.mrb[0].mxu0
      %v3530 = vadd.f32 %v3385, %v3529
      %v3531 = vpop.f32.mrb[0].mxu0
      %3532 = vmatprep.mubr.f32.mxu0 0.0
      %3533 = vmatmul.mubr.f32.gmra.mrb[0].mxu0 %v1345
      %v3534 = vpop.f32.mrb[0].mxu0
      %v3535 = vadd.f32 %v3390, %v3534
      %v3536 = vpop.f32.mrb[0].mxu0
      %3537 = vmatprep.mubr.f32.mxu0 0.0
      %3538 = vmatmul.mubr.f32.gmra.mrb[0].mxu0 %v1348
      %v3539 = vpop.f32.mrb[0].mxu0
      %v3540 = vadd.f32 %v3395, %v3539
      %v3541 = vpop.f32.mrb[0].mxu0
      %3542 = vmatprep.mubr.f32.mxu0 0.0
      %3543 = vmatmul.mubr.f32.gmra.mrb[0].mxu0 %v1351
      %v3544 = vpop.f32.mrb[0].mxu0
      %v3545 = vadd.f32 %v3400, %v3544
      %v3546 = vpop.f32.mrb[0].mxu0
      %3547 = vmatprep.mubr.f32.mxu0 0.0
      %3548 = vmatmul.mubr.f32.gmra.mrb[0].mxu0 %v1354
      %v3549 = vpop.f32.mrb[0].mxu0
      %v3550 = vadd.f32 %v3405, %v3549
      %v3551 = vpop.f32.mrb[0].mxu0
      %3552 = vmatprep.mubr.f32.mxu0 0.0
      %3553 = vmatmul.mubr.f32.gmra.mrb[0].mxu0 %v1357
      %v3554 = vpop.f32.mrb[0].mxu0
      %v3555 = vadd.f32 %v3410, %v3554
      %v3556 = vpop.f32.mrb[0].mxu0
      %3557 = vdwg.mxu0
      %v3559 = vsel %vm1540, %v3252, 0
      %v3562 = vsel %vm1540, %v3253, 0
      %v3565 = vsel %vm1540, %v3254, 0
      %v3568 = vsel %vm1540, %v3255, 0
      %v3571 = vsel %vm1540, %v3256, 0
      %v3574 = vsel %vm1540, %v3257, 0
      %v3577 = vsel %vm1540, %v3258, 0
      %v3580 = vsel %vm1540, %v3259, 0
      %v3583 = vsel %vm1540, %v3260, 0
      %v3586 = vsel %vm1540, %v3261, 0
      %v3589 = vsel %vm1540, %v3262, 0
      %v3592 = vsel %vm1540, %v3263, 0
      %v3595 = vsel %vm1540, %v3264, 0
      %v3598 = vsel %vm1540, %v3265, 0
      %v3601 = vsel %vm1540, %v3266, 0
      %v3604 = vsel %vm1540, %v3267, 0
      %3606 = vmatprep.subr.mxu0 0.0
      %3607 = vmatpush1.msra.mxu0 %v447
      %3608 = vmatprep.subr.mxu0 0.0
      %3609 = vmatpush1.msra.mxu0 %v448
      %3610 = vmatprep.subr.mxu0 0.0
      %3611 = vmatpush1.msra.mxu0 %v449
      %3612 = vmatprep.subr.mxu0 0.0
      %3613 = vmatpush1.msra.mxu0 %v450
      %3614 = vmatprep.subr.mxu0 0.0
      %3615 = vmatpush1.msra.mxu0 0.0
      %3616 = vmatprep.subr.mxu0 0.0
      %3617 = vmatpush1.msra.mxu0 0.0
      %3618 = vmatprep.subr.mxu0 0.0
      %3619 = vmatpush1.msra.mxu0 0.0
      %3620 = vmatprep.subr.mxu0 0.0
      %3621 = vmatpush1.msra.mxu0 0.0
      %3622 = vmatprep.subr.mxu0 0.0
      %3623 = vmatpush1.msra.mxu0 0.0
      %3624 = vmatprep.subr.mxu0 0.0
      %3625 = vmatpush1.msra.mxu0 0.0
      %3626 = vmatprep.subr.mxu0 0.0
      %3627 = vmatpush1.msra.mxu0 0.0
      %3628 = vmatprep.subr.mxu0 0.0
      %3629 = vmatpush1.msra.mxu0 0.0
      %3630 = vmatprep.subr.mxu0 0.0
      %3631 = vmatpush1.msra.mxu0 0.0
      %3632 = vmatprep.subr.mxu0 0.0
      %3633 = vmatpush1.msra.mxu0 0.0
      %3634 = vmatprep.subr.mxu0 0.0
      %3635 = vmatpush1.msra.mxu0 0.0
      %3636 = vmatprep.subr.mxu0 0.0
      %3637 = vmatpush1.msra.mxu0 0.0
      %3638 = vmatprep.subr.mxu0 0.0
      %3639 = vmatpush1.msra.mxu0 0.0
      %3640 = vmatprep.subr.mxu0 0.0
      %3641 = vmatpush1.msra.mxu0 0.0
      %3642 = vmatprep.subr.mxu0 0.0
      %3643 = vmatpush1.msra.mxu0 0.0
      %3644 = vmatprep.subr.mxu0 0.0
      %3645 = vmatpush1.msra.mxu0 0.0
      %3646 = vmatprep.subr.mxu0 0.0
      %3647 = vmatpush1.msra.mxu0 0.0
      %3648 = vmatprep.subr.mxu0 0.0
      %3649 = vmatpush1.msra.mxu0 0.0
      %3650 = vmatprep.subr.mxu0 0.0
      %3651 = vmatpush1.msra.mxu0 0.0
      %3652 = vmatprep.subr.mxu0 0.0
      %3653 = vmatpush1.msra.mxu0 0.0
      %3654 = vmatprep.subr.mxu0 0.0
      %3655 = vmatpush1.msra.mxu0 0.0
      %3656 = vmatprep.subr.mxu0 0.0
      %3657 = vmatpush1.msra.mxu0 0.0
      %3658 = vmatprep.subr.mxu0 0.0
      %3659 = vmatpush1.msra.mxu0 0.0
      %3660 = vmatprep.subr.mxu0 0.0
      %3661 = vmatpush1.msra.mxu0 0.0
      %3662 = vmatprep.subr.mxu0 0.0
      %3663 = vmatpush1.msra.mxu0 0.0
      %3664 = vmatprep.subr.mxu0 0.0
      %3665 = vmatpush1.msra.mxu0 0.0
      %3666 = vmatprep.subr.mxu0 0.0
      %3667 = vmatpush1.msra.mxu0 0.0
      %3668 = vmatprep.subr.mxu0 0.0
      %3669 = vmatpush1.msra.mxu0 0.0
      %3670 = vmatprep.mubr.f32.mxu0 0.0
      %3671 = vmatmul.mubr.f32.gmra.mrb[0].mxu0 %v3559
      %v3672 = vpop.f32.mrb[0].mxu0
      %v3673 = vadd.f32 0.0, %v3672
      %v3674 = vpop.f32.mrb[0].mxu0
      %3675 = vmatprep.mubr.f32.mxu0 0.0
      %3676 = vmatmul.mubr.f32.gmra.mrb[0].mxu0 %v3562
      %v3677 = vpop.f32.mrb[0].mxu0
      %v3678 = vadd.f32 0.0, %v3677
      %v3679 = vpop.f32.mrb[0].mxu0
      %3680 = vmatprep.mubr.f32.mxu0 0.0
      %3681 = vmatmul.mubr.f32.gmra.mrb[0].mxu0 %v3565
      %v3682 = vpop.f32.mrb[0].mxu0
      %v3683 = vadd.f32 0.0, %v3682
      %v3684 = vpop.f32.mrb[0].mxu0
      %3685 = vmatprep.mubr.f32.mxu0 0.0
      %3686 = vmatmul.mubr.f32.gmra.mrb[0].mxu0 %v3568
      %v3687 = vpop.f32.mrb[0].mxu0
      %v3688 = vadd.f32 0.0, %v3687
      %v3689 = vpop.f32.mrb[0].mxu0
      %3690 = vmatprep.mubr.f32.mxu0 0.0
      %3691 = vmatmul.mubr.f32.gmra.mrb[0].mxu0 %v3571
      %v3692 = vpop.f32.mrb[0].mxu0
      %v3693 = vadd.f32 0.0, %v3692
      %v3694 = vpop.f32.mrb[0].mxu0
      %3695 = vmatprep.mubr.f32.mxu0 0.0
      %3696 = vmatmul.mubr.f32.gmra.mrb[0].mxu0 %v3574
      %v3697 = vpop.f32.mrb[0].mxu0
      %v3698 = vadd.f32 0.0, %v3697
      %v3699 = vpop.f32.mrb[0].mxu0
      %3700 = vmatprep.mubr.f32.mxu0 0.0
      %3701 = vmatmul.mubr.f32.gmra.mrb[0].mxu0 %v3577
      %v3702 = vpop.f32.mrb[0].mxu0
      %v3703 = vadd.f32 0.0, %v3702
      %v3704 = vpop.f32.mrb[0].mxu0
      %3705 = vmatprep.mubr.f32.mxu0 0.0
      %3706 = vmatmul.mubr.f32.gmra.mrb[0].mxu0 %v3580
      %v3707 = vpop.f32.mrb[0].mxu0
      %v3708 = vadd.f32 0.0, %v3707
      %v3709 = vpop.f32.mrb[0].mxu0
      %3710 = vmatprep.mubr.f32.mxu0 0.0
      %3711 = vmatmul.mubr.f32.gmra.mrb[0].mxu0 %v3583
      %v3712 = vpop.f32.mrb[0].mxu0
      %v3713 = vadd.f32 0.0, %v3712
      %v3714 = vpop.f32.mrb[0].mxu0
      %3715 = vmatprep.mubr.f32.mxu0 0.0
      %3716 = vmatmul.mubr.f32.gmra.mrb[0].mxu0 %v3586
      %v3717 = vpop.f32.mrb[0].mxu0
      %v3718 = vadd.f32 0.0, %v3717
      %v3719 = vpop.f32.mrb[0].mxu0
      %3720 = vmatprep.mubr.f32.mxu0 0.0
      %3721 = vmatmul.mubr.f32.gmra.mrb[0].mxu0 %v3589
      %v3722 = vpop.f32.mrb[0].mxu0
      %v3723 = vadd.f32 0.0, %v3722
      %v3724 = vpop.f32.mrb[0].mxu0
      %3725 = vmatprep.mubr.f32.mxu0 0.0
      %3726 = vmatmul.mubr.f32.gmra.mrb[0].mxu0 %v3592
      %v3727 = vpop.f32.mrb[0].mxu0
      %v3728 = vadd.f32 0.0, %v3727
      %v3729 = vpop.f32.mrb[0].mxu0
      %3730 = vmatprep.mubr.f32.mxu0 0.0
      %3731 = vmatmul.mubr.f32.gmra.mrb[0].mxu0 %v3595
      %v3732 = vpop.f32.mrb[0].mxu0
      %v3733 = vadd.f32 0.0, %v3732
      %v3734 = vpop.f32.mrb[0].mxu0
      %3735 = vmatprep.mubr.f32.mxu0 0.0
      %3736 = vmatmul.mubr.f32.gmra.mrb[0].mxu0 %v3598
      %v3737 = vpop.f32.mrb[0].mxu0
      %v3738 = vadd.f32 0.0, %v3737
      %v3739 = vpop.f32.mrb[0].mxu0
      %3740 = vmatprep.mubr.f32.mxu0 0.0
      %3741 = vmatmul.mubr.f32.gmra.mrb[0].mxu0 %v3601
      %v3742 = vpop.f32.mrb[0].mxu0
      %v3743 = vadd.f32 0.0, %v3742
      %v3744 = vpop.f32.mrb[0].mxu0
      %3745 = vmatprep.mubr.f32.mxu0 0.0
      %3746 = vmatmul.mubr.f32.gmra.mrb[0].mxu0 %v3604
      %v3747 = vpop.f32.mrb[0].mxu0
      %v3748 = vadd.f32 0.0, %v3747
      %v3749 = vpop.f32.mrb[0].mxu0
      %3750 = vdwg.mxu0
      %v3751 = vadd.f32 %v3480, %v3673
      %v3752 = vadd.f32 %v3485, %v3678
      %v3753 = vadd.f32 %v3490, %v3683
      %v3754 = vadd.f32 %v3495, %v3688
      %v3755 = vadd.f32 %v3500, %v3693
      %v3756 = vadd.f32 %v3505, %v3698
      %v3757 = vadd.f32 %v3510, %v3703
      %v3758 = vadd.f32 %v3515, %v3708
      %v3759 = vadd.f32 %v3520, %v3713
      %v3760 = vadd.f32 %v3525, %v3718
      %v3761 = vadd.f32 %v3530, %v3723
      %v3762 = vadd.f32 %v3535, %v3728
      %v3763 = vadd.f32 %v3540, %v3733
      %v3764 = vadd.f32 %v3545, %v3738
      %v3765 = vadd.f32 %v3550, %v3743
      %v3766 = vadd.f32 %v3555, %v3748
      %v3767 = vlaneseq
      %v3768 = vand.u32 %v3767, 127
      %3769 = vset.pattern.permute.xlu0 0
      %3770 = vperm.xlu0 %3769, %v414
      %v3771 = vpop.permute.xlu0 %3770
      %3772 = vset.pattern.permute.xlu0 0
      %3773 = vperm.xlu0 %3772, %v415
      %v3774 = vpop.permute.xlu0 %3773
      %3775 = vset.pattern.permute.xlu0 0
      %3776 = vperm.xlu0 %3775, %v416
      %v3777 = vpop.permute.xlu0 %3776
      %3778 = vset.pattern.permute.xlu0 0
      %3779 = vperm.xlu0 %3778, %v417
      %v3780 = vpop.permute.xlu0 %3779
      %3781 = vset.pattern.permute.xlu0 0
      %3782 = vperm.xlu0 %3781, %v418
      %v3783 = vpop.permute.xlu0 %3782
      %3784 = vset.pattern.permute.xlu0 0
      %3785 = vperm.xlu0 %3784, %v419
      %v3786 = vpop.permute.xlu0 %3785
      %3787 = vset.pattern.permute.xlu0 0
      %3788 = vperm.xlu0 %3787, %v420
      %v3789 = vpop.permute.xlu0 %3788
      %3790 = vset.pattern.permute.xlu0 0
      %3791 = vperm.xlu0 %3790, %v421
      %v3792 = vpop.permute.xlu0 %3791
      %3793 = vset.pattern.permute.xlu0 0
      %3794 = vperm.xlu0 %3793, %v422
      %v3795 = vpop.permute.xlu0 %3794
      %3796 = vset.pattern.permute.xlu0 0
      %3797 = vperm.xlu0 %3796, %v423
      %v3798 = vpop.permute.xlu0 %3797
      %3799 = vset.pattern.permute.xlu0 0
      %3800 = vperm.xlu0 %3799, %v424
      %v3801 = vpop.permute.xlu0 %3800
      %3802 = vset.pattern.permute.xlu0 0
      %3803 = vperm.xlu0 %3802, %v425
      %v3804 = vpop.permute.xlu0 %3803
      %3805 = vset.pattern.permute.xlu0 0
      %3806 = vperm.xlu0 %3805, %v426
      %v3807 = vpop.permute.xlu0 %3806
      %3808 = vset.pattern.permute.xlu0 0
      %3809 = vperm.xlu0 %3808, %v427
      %v3810 = vpop.permute.xlu0 %3809
      %3811 = vset.pattern.permute.xlu0 0
      %3812 = vperm.xlu0 %3811, %v428
      %v3813 = vpop.permute.xlu0 %3812
      %3814 = vset.pattern.permute.xlu0 0
      %3815 = vperm.xlu0 %3814, %v429
      %v3816 = vpop.permute.xlu0 %3815
      %vm3817 = vcmp.eq.s32.totalorder %v3771, %v3768
      %vm3818 = vcmp.eq.s32.totalorder %v3774, %v3768
      %vm3819 = vcmp.eq.s32.totalorder %v3777, %v3768
      %vm3820 = vcmp.eq.s32.totalorder %v3780, %v3768
      %vm3821 = vcmp.eq.s32.totalorder %v3783, %v3768
      %vm3822 = vcmp.eq.s32.totalorder %v3786, %v3768
      %vm3823 = vcmp.eq.s32.totalorder %v3789, %v3768
      %vm3824 = vcmp.eq.s32.totalorder %v3792, %v3768
      %vm3825 = vcmp.eq.s32.totalorder %v3795, %v3768
      %vm3826 = vcmp.eq.s32.totalorder %v3798, %v3768
      %vm3827 = vcmp.eq.s32.totalorder %v3801, %v3768
      %vm3828 = vcmp.eq.s32.totalorder %v3804, %v3768
      %vm3829 = vcmp.eq.s32.totalorder %v3807, %v3768
      %vm3830 = vcmp.eq.s32.totalorder %v3810, %v3768
      %vm3831 = vcmp.eq.s32.totalorder %v3813, %v3768
      %vm3832 = vcmp.eq.s32.totalorder %v3816, %v3768
      %v3833 = vsel %vm3817, 1, 0
      %v3834 = vsel %vm3818, 1, 0
      %v3835 = vsel %vm3819, 1, 0
      %v3836 = vsel %vm3820, 1, 0
      %v3837 = vsel %vm3821, 1, 0
      %v3838 = vsel %vm3822, 1, 0
      %v3839 = vsel %vm3823, 1, 0
      %v3840 = vsel %vm3824, 1, 0
      %v3841 = vsel %vm3825, 1, 0
      %v3842 = vsel %vm3826, 1, 0
      %v3843 = vsel %vm3827, 1, 0
      %v3844 = vsel %vm3828, 1, 0
      %v3845 = vsel %vm3829, 1, 0
      %v3846 = vsel %vm3830, 1, 0
      %v3847 = vsel %vm3831, 1, 0
      %v3848 = vsel %vm3832, 1, 0
      %v3849 = vcvt.s32.f32 %v3833
      %v3850 = vcvt.s32.f32 %v3834
      %v3851 = vcvt.s32.f32 %v3835
      %v3852 = vcvt.s32.f32 %v3836
      %v3853 = vcvt.s32.f32 %v3837
      %v3854 = vcvt.s32.f32 %v3838
      %v3855 = vcvt.s32.f32 %v3839
      %v3856 = vcvt.s32.f32 %v3840
      %v3857 = vcvt.s32.f32 %v3841
      %v3858 = vcvt.s32.f32 %v3842
      %v3859 = vcvt.s32.f32 %v3843
      %v3860 = vcvt.s32.f32 %v3844
      %v3861 = vcvt.s32.f32 %v3845
      %v3862 = vcvt.s32.f32 %v3846
      %v3863 = vcvt.s32.f32 %v3847
      %v3864 = vcvt.s32.f32 %v3848
      %3866 = vset.pattern.permute.xlu0 0
      %3867 = vperm.xlu0 %3866, %v3751
      %v3868 = vpop.permute.xlu0 %3867
      %3871 = vset.pattern.permute.xlu0 0
      %3872 = vperm.xlu0 %3871, %v3752
      %v3873 = vpop.permute.xlu0 %3872
      %3876 = vset.pattern.permute.xlu0 0
      %3877 = vperm.xlu0 %3876, %v3753
      %v3878 = vpop.permute.xlu0 %3877
      %3881 = vset.pattern.permute.xlu0 0
      %3882 = vperm.xlu0 %3881, %v3754
      %v3883 = vpop.permute.xlu0 %3882
      %3886 = vset.pattern.permute.xlu0 0
      %3887 = vperm.xlu0 %3886, %v3755
      %v3888 = vpop.permute.xlu0 %3887
      %3891 = vset.pattern.permute.xlu0 0
      %3892 = vperm.xlu0 %3891, %v3756
      %v3893 = vpop.permute.xlu0 %3892
      %3896 = vset.pattern.permute.xlu0 0
      %3897 = vperm.xlu0 %3896, %v3757
      %v3898 = vpop.permute.xlu0 %3897
      %3901 = vset.pattern.permute.xlu0 0
      %3902 = vperm.xlu0 %3901, %v3758
      %v3903 = vpop.permute.xlu0 %3902
      %3906 = vset.pattern.permute.xlu0 0
      %3907 = vperm.xlu0 %3906, %v3759
      %v3908 = vpop.permute.xlu0 %3907
      %3911 = vset.pattern.permute.xlu0 0
      %3912 = vperm.xlu0 %3911, %v3760
      %v3913 = vpop.permute.xlu0 %3912
      %3916 = vset.pattern.permute.xlu0 0
      %3917 = vperm.xlu0 %3916, %v3761
      %v3918 = vpop.permute.xlu0 %3917
      %3921 = vset.pattern.permute.xlu0 0
      %3922 = vperm.xlu0 %3921, %v3762
      %v3923 = vpop.permute.xlu0 %3922
      %3926 = vset.pattern.permute.xlu0 0
      %3927 = vperm.xlu0 %3926, %v3763
      %v3928 = vpop.permute.xlu0 %3927
      %3931 = vset.pattern.permute.xlu0 0
      %3932 = vperm.xlu0 %3931, %v3764
      %v3933 = vpop.permute.xlu0 %3932
      %3936 = vset.pattern.permute.xlu0 0
      %3937 = vperm.xlu0 %3936, %v3765
      %v3938 = vpop.permute.xlu0 %3937
      %3941 = vset.pattern.permute.xlu0 0
      %3942 = vperm.xlu0 %3941, %v3766
      %v3943 = vpop.permute.xlu0 %3942
      %v3945 = vmul.f32 %v3849, %v3868
      %v3946 = vmul.f32 %v3850, %v3873
      %v3947 = vmul.f32 %v3851, %v3878
      %v3948 = vmul.f32 %v3852, %v3883
      %v3949 = vmul.f32 %v3853, %v3888
      %v3950 = vmul.f32 %v3854, %v3893
      %v3951 = vmul.f32 %v3855, %v3898
      %v3952 = vmul.f32 %v3856, %v3903
      %v3953 = vmul.f32 %v3857, %v3908
      %v3954 = vmul.f32 %v3858, %v3913
      %v3955 = vmul.f32 %v3859, %v3918
      %v3956 = vmul.f32 %v3860, %v3923
      %v3957 = vmul.f32 %v3861, %v3928
      %v3958 = vmul.f32 %v3862, %v3933
      %v3959 = vmul.f32 %v3863, %v3938
      %v3960 = vmul.f32 %v3864, %v3943
      %vm3961 = vcmask 31744
      %v3962 = vsel %vm3961, %v3945, 0.0
      %v3963 = vsel %vm3961, %v3946, 0.0
      %v3964 = vadd.f32 %v3962, %v3963
      %v3965 = vrot.slane %v3964, 4
      %v3966 = vadd.f32 %v3964, %v3965
      %v3967 = vrot.slane %v3966, 2
      %v3968 = vadd.f32 %v3966, %v3967
      %v3969 = vrot.slane %v3968, 1
      %v3970 = vadd.f32 %v3968, %v3969
      %v3971 = vsel %vm3961, %v3947, 0.0
      %v3972 = vsel %vm3961, %v3948, 0.0
      %v3973 = vadd.f32 %v3971, %v3972
      %v3974 = vrot.slane %v3973, 4
      %v3975 = vadd.f32 %v3973, %v3974
      %v3976 = vrot.slane %v3975, 2
      %v3977 = vadd.f32 %v3975, %v3976
      %v3978 = vrot.slane %v3977, 1
      %v3979 = vadd.f32 %v3977, %v3978
      %v3980 = vsel %vm3961, %v3949, 0.0
      %v3981 = vsel %vm3961, %v3950, 0.0
      %v3982 = vadd.f32 %v3980, %v3981
      %v3983 = vrot.slane %v3982, 4
      %v3984 = vadd.f32 %v3982, %v3983
      %v3985 = vrot.slane %v3984, 2
      %v3986 = vadd.f32 %v3984, %v3985
      %v3987 = vrot.slane %v3986, 1
      %v3988 = vadd.f32 %v3986, %v3987
      %v3989 = vsel %vm3961, %v3951, 0.0
      %v3990 = vsel %vm3961, %v3952, 0.0
      %v3991 = vadd.f32 %v3989, %v3990
      %v3992 = vrot.slane %v3991, 4
      %v3993 = vadd.f32 %v3991, %v3992
      %v3994 = vrot.slane %v3993, 2
      %v3995 = vadd.f32 %v3993, %v3994
      %v3996 = vrot.slane %v3995, 1
      %v3997 = vadd.f32 %v3995, %v3996
      %v3998 = vsel %vm3961, %v3953, 0.0
      %v3999 = vsel %vm3961, %v3954, 0.0
      %v4000 = vadd.f32 %v3998, %v3999
      %v4001 = vrot.slane %v4000, 4
      %v4002 = vadd.f32 %v4000, %v4001
      %v4003 = vrot.slane %v4002, 2
      %v4004 = vadd.f32 %v4002, %v4003
      %v4005 = vrot.slane %v4004, 1
      %v4006 = vadd.f32 %v4004, %v4005
      %v4007 = vsel %vm3961, %v3955, 0.0
      %v4008 = vsel %vm3961, %v3956, 0.0
      %v4009 = vadd.f32 %v4007, %v4008
      %v4010 = vrot.slane %v4009, 4
      %v4011 = vadd.f32 %v4009, %v4010
      %v4012 = vrot.slane %v4011, 2
      %v4013 = vadd.f32 %v4011, %v4012
      %v4014 = vrot.slane %v4013, 1
      %v4015 = vadd.f32 %v4013, %v4014
      %v4016 = vsel %vm3961, %v3957, 0.0
      %v4017 = vsel %vm3961, %v3958, 0.0
      %v4018 = vadd.f32 %v4016, %v4017
      %v4019 = vrot.slane %v4018, 4
      %v4020 = vadd.f32 %v4018, %v4019
      %v4021 = vrot.slane %v4020, 2
      %v4022 = vadd.f32 %v4020, %v4021
      %v4023 = vrot.slane %v4022, 1
      %v4024 = vadd.f32 %v4022, %v4023
      %v4025 = vsel %vm3961, %v3959, 0.0
      %v4026 = vsel %vm3961, %v3960, 0.0
      %v4027 = vadd.f32 %v4025, %v4026
      %v4028 = vrot.slane %v4027, 4
      %v4029 = vadd.f32 %v4027, %v4028
      %v4030 = vrot.slane %v4029, 2
      %v4031 = vadd.f32 %v4029, %v4030
      %v4032 = vrot.slane %v4031, 1
      %v4033 = vadd.f32 %v4031, %v4032
      %v4035 = vlaneseq
      %v4036 = vshrl.u32 %v4035, 7
      %v4037 = vsub.s32 0, %v4036
      %v4038 = vrot.slane %v451, %v4037
      %4039 = vset.pattern.permute.xlu0 0
      %4040 = vperm.xlu0 %4039, %v4038
      %v4041 = vpop.permute.xlu0 %4040
      %v4043 = vadd.f32 %v3970, %v4041
      %v4044 = vadd.f32 %v3979, %v4041
      %v4045 = vadd.f32 %v3988, %v4041
      %v4046 = vadd.f32 %v3997, %v4041
      %v4047 = vadd.f32 %v4006, %v4041
      %v4048 = vadd.f32 %v4015, %v4041
      %v4049 = vadd.f32 %v4024, %v4041
      %v4050 = vadd.f32 %v4033, %v4041
      %v4051 = vmax.f32 %v4043, 0.0
      %v4052 = vmax.f32 %v4044, 0.0
      %v4053 = vmax.f32 %v4045, 0.0
      %v4054 = vmax.f32 %v4046, 0.0
      %v4055 = vmax.f32 %v4047, 0.0
      %v4056 = vmax.f32 %v4048, 0.0
      %v4057 = vmax.f32 %v4049, 0.0
      %v4058 = vmax.f32 %v4050, 0.0
      %vm4067 = vcmask 1041409
      %v4068 = vsel %vm4067, %v4052, %v4051
      %vm4069 = vcmask 1042434
      %v4070 = vsel %vm4069, %v4053, %v4068
      %vm4071 = vcmask 1043459
      %v4072 = vsel %vm4071, %v4054, %v4070
      %vm4073 = vcmask 1044484
      %v4074 = vsel %vm4073, %v4055, %v4072
      %vm4075 = vcmask 1045509
      %v4076 = vsel %vm4075, %v4056, %v4074
      %vm4077 = vcmask 1046534
      %v4078 = vsel %vm4077, %v4057, %v4076
      %vm4079 = vcmask 1047559
      %v4080 = vsel %vm4079, %v4058, %v4078
      %4082 = vst.msk [vmem:[%s381] sm:$0xff] %vm3961, %v4080
      %p4083 = scmp.lt.s32.totalorder %s22, 1
      %s4084 = scalar_select %p4083, %s22, 1
      %s4085 = smul.addr %s4084, 8
      %s4086 = scalar_lea.vmem %s9, %s4085
      // Predicated region
      $region57: #{tpu_custom_call.1} parent=55 // pred_check
        %p4087 = pneg %p244
      $region58: #{tpu_custom_call.1} parent=55 // pred_check_branch
        %4089 = sbr.rel (%p4087) target = $region60
      $region59: #{tpu_custom_call.1} parent=55 // pred_region
        _
      $region60: #{tpu_custom_call.1} parent=55 // pred_fallthru
        _
    $region56: #{tpu_custom_call.1} parent=5 // pred_fallthru
      _
    %p4090 = scmp.le.s32.totalorder 2, %s17
    // Predicated region
    $region61: #{tpu_custom_call.1} parent=5 // pred_check
      %p4091 = pneg %p4090
    $region62: #{tpu_custom_call.1} parent=5 // pred_check_branch
      %4093 = sbr.rel (%p4091) target = $region64
    $region63: #{tpu_custom_call.1} parent=5 // pred_region
      %s4094 = ssub.s32 %s17, 2
      // Predicated region
      $region65: #{tpu_custom_call.1} parent=63 // pred_check
        %p4095 = pneg %p250
      $region66: #{tpu_custom_call.1} parent=63 // pred_check_branch
        %4097 = sbr.rel (%p4095) target = $region68
      $region67: #{tpu_custom_call.1} parent=63 // pred_region
        %p4098 = scmp.lt.s32.totalorder %s23, 1
        %s4099 = scalar_select %p4098, %s23, 1
        %s4100 = smul.addr %s4099, 8
        %s4101 = scalar_lea.vmem %s9, %s4100
      $region68: #{tpu_custom_call.1} parent=63 // pred_fallthru
        _
    $region64: #{tpu_custom_call.1} parent=5 // pred_fallthru
      _
  $region6: #{tpu_custom_call.1} parent=0 // loop_footer
    %s21 = sadd.s32 1, %s17
  $region7: #{tpu_custom_call.1} parent=0 // loop_footer_branch
    %16 = sbr.rel target = $region3
  $region8: #{tpu_custom_call.1} parent=0 // loop_exit
    _

// kernel: tpu_custom_call.1
$region0: #{tpu_custom_call.1}
  #allocation0 [shape = 'u32[]', space=smem, size = 0x4, offset = 0x4, fixed_abs, tag = 'smem constant byte address 0x4 - core index']
  #allocation1 [shape = 'u32[144,128]{1,0:T(1,128)}', space=vmem, size = 0x12000, scoped, tag = 'internal scratch']
  #allocation2 [shape = 'f32[1,1]{1,0:T(1,128)S(1)}', space=vmem, size = 0x200, scoped, tag = 'scoped memory for tpu_custom_call.1']
  %s0 = inlined_call_operand.vmem [shape: bf16[16,16,16], index: 0, kind: input, shape index: {}]
  %s1 = inlined_call_operand.vmem [shape: f32[256,8], index: 1, kind: input, shape index: {}]
  %s2 = inlined_call_operand.vmem [shape: s32[256,1], index: 2, kind: input, shape index: {}]
  %s3 = inlined_call_operand.vmem [shape: f32[16,32], index: 3, kind: input, shape index: {}]
  %s4 = inlined_call_operand.vmem [shape: f32[3,32], index: 4, kind: input, shape index: {}]
  %s5 = inlined_call_operand.vmem [shape: f32[64,32], index: 5, kind: input, shape index: {}]
  %s6 = inlined_call_operand.vmem [shape: f32[3,32], index: 6, kind: input, shape index: {}]
  %s7 = inlined_call_operand.vmem [shape: f32[72,1], index: 7, kind: input, shape index: {}]
  %s8 = inlined_call_operand.<no memory space> [shape: f32[1,1], index: 8, kind: input, shape index: {}]
  %s9 = inlined_call_operand.vmem [shape: f32[16,4], index: 9, kind: output, shape index: {}]
  %s10 = sld [smem:[#allocation0]]
  $region69: #{tpu_custom_call.1} parent=0
    _
  %s12 = ssub.s32 1, %s10
  %s13 = scalar_select 0, %s12, %s10
  %v14 = vstv %s8
  %15 = vst [vmem:[#allocation2] sm:$0x1] %v14
  loop: start=0, step=1, limit=4
  $region2: #{tpu_custom_call.1} parent=0 // loop_pre_header
    _
  $region3: #{tpu_custom_call.1} parent=0 // loop_header
    %s17 = sphi 0, %s21
    %p18 = scmp.ge.s32.totalorder %s17, 4
    %s27 = sphi 0, %s29
    %s30 = sphi 0, %s27
    %s31 = sphi 0, %s30
    %s47 = sphi 0, %s31
    %s53 = sphi 0, %s55
    %s56 = sphi 0, %s53
    %s57 = sphi 0, %s56
    %s73 = sphi 0, %s57
    %s79 = sphi 0, %s81
    %s82 = sphi 0, %s79
    %s83 = sphi 0, %s82
    %s99 = sphi 0, %s83
    %s103 = sphi 0, %s103
    %s105 = sphi 0, %s103
    %s106 = sphi 0, %s105
    %s120 = sphi 0, %s106
    %s124 = sphi 0, %s124
    %s126 = sphi 0, %s124
    %s127 = sphi 0, %s126
    %s141 = sphi 0, %s127
    %s145 = sphi 0, %s145
    %s147 = sphi 0, %s145
    %s148 = sphi 0, %s147
    %s162 = sphi 0, %s148
    %s166 = sphi 0, %s166
    %s168 = sphi 0, %s166
    %s169 = sphi 0, %s168
    %s183 = sphi 0, %s169
    %s187 = sphi 0, %s187
    %s189 = sphi 0, %s187
    %s190 = sphi 0, %s189
    %s204 = sphi 0, %s190
    %s208 = sphi 0, %s208
    %s210 = sphi 0, %s208
    %s211 = sphi 0, %s210
    %s225 = sphi 0, %s211
    %s231 = sphi 0, %s233
    %s234 = sphi 0, %s231
    %s235 = sphi 0, %s234
    %s251 = sphi 0, %s235
  $region4: #{tpu_custom_call.1} parent=0 // loop_header_branch
    %20 = sbr.rel (%p18) target = $region8
  $region5: #{tpu_custom_call.1} parent=0 // loop_body
    %s22 = ssub.s32 %s17, 1
    %s23 = ssub.s32 %s17, 2
    %s24 = sadd.s32 %s17, 1
    %s25 = ssub.s32 %s17, %s24
    %p26 = scmp.eq.s32.totalorder %s25, 0
    %s28 = sadd.s32 %s27, 1
    %s29 = scalar_select %p26, %s27, %s28
    %p32 = pneg %p26
    %p33 = scmp.eq.s32.totalorder %s17, 1
    %p34 = por %p32, %p33
    %p35 = scmp.ne.s32.totalorder %s27, %s30
    %p36 = scmp.eq.s32.totalorder %s17, 0
    %p37 = por %p35, %p36
    %p38 = scmp.ne.s32.totalorder %s27, %s30
    %p39 = scmp.eq.s32.totalorder %s22, 1
    %p40 = por %p38, %p39
    %p41 = scmp.ne.s32.totalorder %s30, %s31
    %p42 = scmp.eq.s32.totalorder %s22, 0
    %p43 = por %p41, %p42
    %p44 = scmp.ne.s32.totalorder %s30, %s31
    %p45 = scmp.eq.s32.totalorder %s23, 1
    %p46 = por %p44, %p45
    %p48 = scmp.ne.s32.totalorder %s31, %s47
    %p49 = scmp.eq.s32.totalorder %s23, 0
    %p50 = por %p48, %p49
    %s51 = ssub.s32 %s17, %s24
    %p52 = scmp.eq.s32.totalorder %s51, 0
    %s54 = sadd.s32 %s53, 1
    %s55 = scalar_select %p52, %s53, %s54
    %p58 = pneg %p52
    %p59 = scmp.eq.s32.totalorder %s17, 1
    %p60 = por %p58, %p59
    %p61 = scmp.ne.s32.totalorder %s53, %s56
    %p62 = scmp.eq.s32.totalorder %s17, 0
    %p63 = por %p61, %p62
    %p64 = scmp.ne.s32.totalorder %s53, %s56
    %p65 = scmp.eq.s32.totalorder %s22, 1
    %p66 = por %p64, %p65
    %p67 = scmp.ne.s32.totalorder %s56, %s57
    %p68 = scmp.eq.s32.totalorder %s22, 0
    %p69 = por %p67, %p68
    %p70 = scmp.ne.s32.totalorder %s56, %s57
    %p71 = scmp.eq.s32.totalorder %s23, 1
    %p72 = por %p70, %p71
    %p74 = scmp.ne.s32.totalorder %s57, %s73
    %p75 = scmp.eq.s32.totalorder %s23, 0
    %p76 = por %p74, %p75
    %s77 = ssub.s32 %s17, %s24
    %p78 = scmp.eq.s32.totalorder %s77, 0
    %s80 = sadd.s32 %s79, 1
    %s81 = scalar_select %p78, %s79, %s80
    %p84 = pneg %p78
    %p85 = scmp.eq.s32.totalorder %s17, 1
    %p86 = por %p84, %p85
    %p87 = scmp.ne.s32.totalorder %s79, %s82
    %p88 = scmp.eq.s32.totalorder %s17, 0
    %p89 = por %p87, %p88
    %p90 = scmp.ne.s32.totalorder %s79, %s82
    %p91 = scmp.eq.s32.totalorder %s22, 1
    %p92 = por %p90, %p91
    %p93 = scmp.ne.s32.totalorder %s82, %s83
    %p94 = scmp.eq.s32.totalorder %s22, 0
    %p95 = por %p93, %p94
    %p96 = scmp.ne.s32.totalorder %s82, %s83
    %p97 = scmp.eq.s32.totalorder %s23, 1
    %p98 = por %p96, %p97
    %p100 = scmp.ne.s32.totalorder %s83, %s99
    %p101 = scmp.eq.s32.totalorder %s23, 0
    %p102 = por %p100, %p101
    %s104 = sadd.s32 %s103, 1
    %p107 = scmp.eq.s32.totalorder %s17, 1
    %p108 = scmp.ne.s32.totalorder %s103, %s105
    %p109 = scmp.eq.s32.totalorder %s17, 0
    %p110 = por %p108, %p109
    %p111 = scmp.ne.s32.totalorder %s103, %s105
    %p112 = scmp.eq.s32.totalorder %s22, 1
    %p113 = por %p111, %p112
    %p114 = scmp.ne.s32.totalorder %s105, %s106
    %p115 = scmp.eq.s32.totalorder %s22, 0
    %p116 = por %p114, %p115
    %p117 = scmp.ne.s32.totalorder %s105, %s106
    %p118 = scmp.eq.s32.totalorder %s23, 1
    %p119 = por %p117, %p118
    %p121 = scmp.ne.s32.totalorder %s106, %s120
    %p122 = scmp.eq.s32.totalorder %s23, 0
    %p123 = por %p121, %p122
    %s125 = sadd.s32 %s124, 1
    %p128 = scmp.eq.s32.totalorder %s17, 1
    %p129 = scmp.ne.s32.totalorder %s124, %s126
    %p130 = scmp.eq.s32.totalorder %s17, 0
    %p131 = por %p129, %p130
    %p132 = scmp.ne.s32.totalorder %s124, %s126
    %p133 = scmp.eq.s32.totalorder %s22, 1
    %p134 = por %p132, %p133
    %p135 = scmp.ne.s32.totalorder %s126, %s127
    %p136 = scmp.eq.s32.totalorder %s22, 0
    %p137 = por %p135, %p136
    %p138 = scmp.ne.s32.totalorder %s126, %s127
    %p139 = scmp.eq.s32.totalorder %s23, 1
    %p140 = por %p138, %p139
    %p142 = scmp.ne.s32.totalorder %s127, %s141
    %p143 = scmp.eq.s32.totalorder %s23, 0
    %p144 = por %p142, %p143
    %s146 = sadd.s32 %s145, 1
    %p149 = scmp.eq.s32.totalorder %s17, 1
    %p150 = scmp.ne.s32.totalorder %s145, %s147
    %p151 = scmp.eq.s32.totalorder %s17, 0
    %p152 = por %p150, %p151
    %p153 = scmp.ne.s32.totalorder %s145, %s147
    %p154 = scmp.eq.s32.totalorder %s22, 1
    %p155 = por %p153, %p154
    %p156 = scmp.ne.s32.totalorder %s147, %s148
    %p157 = scmp.eq.s32.totalorder %s22, 0
    %p158 = por %p156, %p157
    %p159 = scmp.ne.s32.totalorder %s147, %s148
    %p160 = scmp.eq.s32.totalorder %s23, 1
    %p161 = por %p159, %p160
    %p163 = scmp.ne.s32.totalorder %s148, %s162
    %p164 = scmp.eq.s32.totalorder %s23, 0
    %p165 = por %p163, %p164
    %s167 = sadd.s32 %s166, 1
    %p170 = scmp.eq.s32.totalorder %s17, 1
    %p171 = scmp.ne.s32.totalorder %s166, %s168
    %p172 = scmp.eq.s32.totalorder %s17, 0
    %p173 = por %p171, %p172
    %p174 = scmp.ne.s32.totalorder %s166, %s168
    %p175 = scmp.eq.s32.totalorder %s22, 1
    %p176 = por %p174, %p175
    %p177 = scmp.ne.s32.totalorder %s168, %s169
    %p178 = scmp.eq.s32.totalorder %s22, 0
    %p179 = por %p177, %p178
    %p180 = scmp.ne.s32.totalorder %s168, %s169
    %p181 = scmp.eq.s32.totalorder %s23, 1
    %p182 = por %p180, %p181
    %p184 = scmp.ne.s32.totalorder %s169, %s183
    %p185 = scmp.eq.s32.totalorder %s23, 0
    %p186 = por %p184, %p185
    %s188 = sadd.s32 %s187, 1
    %p191 = scmp.eq.s32.totalorder %s17, 1
    %p192 = scmp.ne.s32.totalorder %s187, %s189
    %p193 = scmp.eq.s32.totalorder %s17, 0
    %p194 = por %p192, %p193
    %p195 = scmp.ne.s32.totalorder %s187, %s189
    %p196 = scmp.eq.s32.totalorder %s22, 1
    %p197 = por %p195, %p196
    %p198 = scmp.ne.s32.totalorder %s189, %s190
    %p199 = scmp.eq.s32.totalorder %s22, 0
    %p200 = por %p198, %p199
    %p201 = scmp.ne.s32.totalorder %s189, %s190
    %p202 = scmp.eq.s32.totalorder %s23, 1
    %p203 = por %p201, %p202
    %p205 = scmp.ne.s32.totalorder %s190, %s204
    %p206 = scmp.eq.s32.totalorder %s23, 0
    %p207 = por %p205, %p206
    %s209 = sadd.s32 %s208, 1
    %p212 = scmp.eq.s32.totalorder %s17, 1
    %p213 = scmp.ne.s32.totalorder %s208, %s210
    %p214 = scmp.eq.s32.totalorder %s17, 0
    %p215 = por %p213, %p214
    %p216 = scmp.ne.s32.totalorder %s208, %s210
    %p217 = scmp.eq.s32.totalorder %s22, 1
    %p218 = por %p216, %p217
    %p219 = scmp.ne.s32.totalorder %s210, %s211
    %p220 = scmp.eq.s32.totalorder %s22, 0
    %p221 = por %p219, %p220
    %p222 = scmp.ne.s32.totalorder %s210, %s211
    %p223 = scmp.eq.s32.totalorder %s23, 1
    %p224 = por %p222, %p223
    %p226 = scmp.ne.s32.totalorder %s211, %s225
    %p227 = scmp.eq.s32.totalorder %s23, 0
    %p228 = por %p226, %p227
    %s229 = ssub.s32 %s17, %s24
    %p230 = scmp.eq.s32.totalorder %s229, 0
    %s232 = sadd.s32 %s231, 1
    %s233 = scalar_select %p230, %s231, %s232
    %p236 = pneg %p230
    %p237 = scmp.eq.s32.totalorder %s17, 1
    %p238 = por %p236, %p237
    %p239 = scmp.ne.s32.totalorder %s231, %s234
    %p240 = scmp.eq.s32.totalorder %s17, 0
    %p241 = por %p239, %p240
    %p242 = scmp.ne.s32.totalorder %s231, %s234
    %p243 = scmp.eq.s32.totalorder %s22, 1
    %p244 = por %p242, %p243
    %p245 = scmp.ne.s32.totalorder %s234, %s235
    %p246 = scmp.eq.s32.totalorder %s22, 0
    %p247 = por %p245, %p246
    %p248 = scmp.ne.s32.totalorder %s234, %s235
    %p249 = scmp.eq.s32.totalorder %s23, 1
    %p250 = por %p248, %p249
    %p252 = scmp.ne.s32.totalorder %s235, %s251
    %p253 = scmp.eq.s32.totalorder %s23, 0
    %p254 = por %p252, %p253
    %p255 = scmp.le.s32.totalorder 1, %s17
    %p256 = scmp.lt.s32.totalorder %s17, 3
    %p257 = pnand %p255, %p256
    %p258 = pneg %p257
    // Predicated region
    $region9: #{tpu_custom_call.1} parent=5 // pred_check
      _
    $region10: #{tpu_custom_call.1} parent=5 // pred_check_branch
      %260 = sbr.rel (%p257) target = $region12
    $region11: #{tpu_custom_call.1} parent=5 // pred_region
      %s261 = ssub.s32 %s17, 1
      // Predicated region
      $region13: #{tpu_custom_call.1} parent=11 // pred_check
        %p262 = pneg %p116
      $region14: #{tpu_custom_call.1} parent=11 // pred_check_branch
        %264 = sbr.rel (%p262) target = $region16
      $region15: #{tpu_custom_call.1} parent=11 // pred_region
        _
      $region16: #{tpu_custom_call.1} parent=11 // pred_fallthru
        _
      // Predicated region
      $region17: #{tpu_custom_call.1} parent=11 // pred_check
        %p265 = pneg %p137
      $region18: #{tpu_custom_call.1} parent=11 // pred_check_branch
        %267 = sbr.rel (%p265) target = $region20
      $region19: #{tpu_custom_call.1} parent=11 // pred_region
        _
      $region20: #{tpu_custom_call.1} parent=11 // pred_fallthru
        _
      // Predicated region
      $region21: #{tpu_custom_call.1} parent=11 // pred_check
        %p268 = pneg %p158
      $region22: #{tpu_custom_call.1} parent=11 // pred_check_branch
        %270 = sbr.rel (%p268) target = $region24
      $region23: #{tpu_custom_call.1} parent=11 // pred_region
        _
      $region24: #{tpu_custom_call.1} parent=11 // pred_fallthru
        _
      // Predicated region
      $region25: #{tpu_custom_call.1} parent=11 // pred_check
        %p271 = pneg %p179
      $region26: #{tpu_custom_call.1} parent=11 // pred_check_branch
        %273 = sbr.rel (%p271) target = $region28
      $region27: #{tpu_custom_call.1} parent=11 // pred_region
        _
      $region28: #{tpu_custom_call.1} parent=11 // pred_fallthru
        _
      // Predicated region
      $region29: #{tpu_custom_call.1} parent=11 // pred_check
        %p274 = pneg %p200
      $region30: #{tpu_custom_call.1} parent=11 // pred_check_branch
        %276 = sbr.rel (%p274) target = $region32
      $region31: #{tpu_custom_call.1} parent=11 // pred_region
        _
      $region32: #{tpu_custom_call.1} parent=11 // pred_fallthru
        _
      // Predicated region
      $region33: #{tpu_custom_call.1} parent=11 // pred_check
        %p277 = pneg %p221
      $region34: #{tpu_custom_call.1} parent=11 // pred_check_branch
        %279 = sbr.rel (%p277) target = $region36
      $region35: #{tpu_custom_call.1} parent=11 // pred_region
        _
      $region36: #{tpu_custom_call.1} parent=11 // pred_fallthru
        _
    $region12: #{tpu_custom_call.1} parent=5 // pred_fallthru
      _
    %p280 = scmp.lt.s32.totalorder %s17, 2
    // Predicated region
    $region37: #{tpu_custom_call.1} parent=5 // pred_check
      %p281 = pneg %p280
    $region38: #{tpu_custom_call.1} parent=5 // pred_check_branch
      %283 = sbr.rel (%p281) target = $region40
    $region39: #{tpu_custom_call.1} parent=5 // pred_region
      // Predicated region
      $region41: #{tpu_custom_call.1} parent=39 // pred_check
        %p284 = pneg %p37
      $region42: #{tpu_custom_call.1} parent=39 // pred_check_branch
        %286 = sbr.rel (%p284) target = $region44
      $region43: #{tpu_custom_call.1} parent=39 // pred_region
        %s287 = smul.u32 8, %s17
        %p288 = scmp.lt.s32.totalorder %s287, 15
        %s289 = scalar_select %p288, %s287, 15
        %s290 = smul.addr %s289, 2
        %s291 = smul.addr %s290, 4
        %s292 = scalar_lea.vmem %s0, %s291
        %s293 = smul.u32 8, %s17
      $region44: #{tpu_custom_call.1} parent=39 // pred_fallthru
        _
      // Predicated region
      $region45: #{tpu_custom_call.1} parent=39 // pred_check
        %p294 = pneg %p63
      $region46: #{tpu_custom_call.1} parent=39 // pred_check_branch
        %296 = sbr.rel (%p294) target = $region48
      $region47: #{tpu_custom_call.1} parent=39 // pred_region
        %s297 = smul.u32 16, %s17
        %p298 = scmp.lt.s32.totalorder %s297, 31
        %s299 = scalar_select %p298, %s297, 31
        %s300 = smul.addr %s299, 8
        %s301 = scalar_lea.vmem %s1, %s300
        %s302 = smul.u32 16, %s17
      $region48: #{tpu_custom_call.1} parent=39 // pred_fallthru
        _
      // Predicated region
      $region49: #{tpu_custom_call.1} parent=39 // pred_check
        %p303 = pneg %p89
      $region50: #{tpu_custom_call.1} parent=39 // pred_check_branch
        %305 = sbr.rel (%p303) target = $region52
      $region51: #{tpu_custom_call.1} parent=39 // pred_region
        %s306 = smul.u32 16, %s17
        %p307 = scmp.lt.s32.totalorder %s306, 31
        %s308 = scalar_select %p307, %s306, 31
        %s309 = smul.addr %s308, 8
        %s310 = scalar_lea.vmem %s2, %s309
        %s311 = smul.u32 16, %s17
      $region52: #{tpu_custom_call.1} parent=39 // pred_fallthru
        _
    $region40: #{tpu_custom_call.1} parent=5 // pred_fallthru
      _
    %p312 = scmp.le.s32.totalorder 1, %s17
    %p313 = scmp.lt.s32.totalorder %s17, 3
    %p314 = pnand %p312, %p313
    %p315 = pneg %p314
    // Predicated region
    $region53: #{tpu_custom_call.1} parent=5 // pred_check
      _
    $region54: #{tpu_custom_call.1} parent=5 // pred_check_branch
      %317 = sbr.rel (%p314) target = $region56
    $region55: #{tpu_custom_call.1} parent=5 // pred_region
      %s318 = ssub.s32 %s17, 1
      %s319 = smul.u32 8, %s22
      %p320 = scmp.lt.s32.totalorder %s319, 15
      %s321 = scalar_select %p320, %s319, 15
      %s322 = smul.addr %s321, 2
      %s323 = smul.addr %s322, 4
      %s324 = scalar_lea.vmem %s0, %s323
      %p325 = pneg %p43
      %p326 = pneg %p40
      %s327 = smul.u32 16, %s22
      %p328 = scmp.lt.s32.totalorder %s327, 31
      %s329 = scalar_select %p328, %s327, 31
      %s330 = smul.addr %s329, 8
      %s331 = scalar_lea.vmem %s1, %s330
      %p332 = pneg %p69
      %p333 = pneg %p66
      %s334 = smul.u32 16, %s22
      %p335 = scmp.lt.s32.totalorder %s334, 31
      %s336 = scalar_select %p335, %s334, 31
      %s337 = smul.addr %s336, 8
      %s338 = scalar_lea.vmem %s2, %s337
      %p339 = pneg %p95
      %p340 = pneg %p92
      %p341 = pneg %p116
      %p342 = pneg %p113
      %p343 = pneg %p137
      %p344 = pneg %p134
      %p345 = pneg %p158
      %p346 = pneg %p155
      %p347 = pneg %p179
      %p348 = pneg %p176
      %p349 = pneg %p200
      %p350 = pneg %p197
      %p351 = pneg %p221
      %p352 = pneg %p218
      %p353 = pneg %p247
      %p354 = pneg %p244
      %p355 = scmp.lt.s32.totalorder %s22, 1
      %s356 = scalar_select %p355, %s22, 1
      %s357 = smul.addr %s356, 8
      %s358 = scalar_lea.vmem %s9, %s357
      %s359 = smul.u32 8, %s22
      %p360 = scmp.lt.s32.totalorder %s359, 15
      %s361 = scalar_select %p360, %s359, 15
      %s362 = smul.addr %s361, 2
      %s363 = smul.addr %s362, 4
      %s364 = scalar_lea.vmem %s0, %s363
      %s365 = smul.u32 8, %s22
      %s366 = smul.u32 16, %s22
      %p367 = scmp.lt.s32.totalorder %s366, 31
      %s368 = scalar_select %p367, %s366, 31
      %s369 = smul.addr %s368, 8
      %s370 = scalar_lea.vmem %s1, %s369
      %s371 = smul.u32 16, %s22
      %s372 = smul.u32 16, %s22
      %p373 = scmp.lt.s32.totalorder %s372, 31
      %s374 = scalar_select %p373, %s372, 31
      %s375 = smul.addr %s374, 8
      %s376 = scalar_lea.vmem %s2, %s375
      %s377 = smul.u32 16, %s22
      %p378 = scmp.lt.s32.totalorder %s22, 1
      %s379 = scalar_select %p378, %s22, 1
      %s380 = smul.addr %s379, 8
      %s381 = scalar_lea.vmem %s9, %s380
      %v382 = vld [vmem:[%s364] sm:$0xf]
      %v383 = vld [vmem:[%s364 + $0x4] sm:$0xf]
      %v384 = vld [vmem:[%s364 + $0x8] sm:$0xf]
      %v385 = vld [vmem:[%s364 + $0xc] sm:$0xf]
      %v386 = vld [vmem:[%s364 + $0x10] sm:$0xf]
      %v387 = vld [vmem:[%s364 + $0x14] sm:$0xf]
      %v388 = vld [vmem:[%s364 + $0x18] sm:$0xf]
      %v389 = vld [vmem:[%s364 + $0x1c] sm:$0xf]
      %v390 = vld [vmem:[%s364 + $0x20] sm:$0xf]
      %v391 = vld [vmem:[%s364 + $0x24] sm:$0xf]
      %v392 = vld [vmem:[%s364 + $0x28] sm:$0xf]
      %v393 = vld [vmem:[%s364 + $0x2c] sm:$0xf]
      %v394 = vld [vmem:[%s364 + $0x30] sm:$0xf]
      %v395 = vld [vmem:[%s364 + $0x34] sm:$0xf]
      %v396 = vld [vmem:[%s364 + $0x38] sm:$0xf]
      %v397 = vld [vmem:[%s364 + $0x3c] sm:$0xf]
      %v398 = vld [vmem:[%s370] sm:$0xff]
      %v399 = vld [vmem:[%s370 + $0x8] sm:$0xff]
      %v400 = vld [vmem:[%s370 + $0x10] sm:$0xff]
      %v401 = vld [vmem:[%s370 + $0x18] sm:$0xff]
      %v402 = vld [vmem:[%s370 + $0x20] sm:$0xff]
      %v403 = vld [vmem:[%s370 + $0x28] sm:$0xff]
      %v404 = vld [vmem:[%s370 + $0x30] sm:$0xff]
      %v405 = vld [vmem:[%s370 + $0x38] sm:$0xff]
      %v406 = vld [vmem:[%s370 + $0x40] sm:$0xff]
      %v407 = vld [vmem:[%s370 + $0x48] sm:$0xff]
      %v408 = vld [vmem:[%s370 + $0x50] sm:$0xff]
      %v409 = vld [vmem:[%s370 + $0x58] sm:$0xff]
      %v410 = vld [vmem:[%s370 + $0x60] sm:$0xff]
      %v411 = vld [vmem:[%s370 + $0x68] sm:$0xff]
      %v412 = vld [vmem:[%s370 + $0x70] sm:$0xff]
      %v413 = vld [vmem:[%s370 + $0x78] sm:$0xff]
      %v414 = vld [vmem:[%s376] sm:$0xff]
      %v415 = vld [vmem:[%s376 + $0x8] sm:$0xff]
      %v416 = vld [vmem:[%s376 + $0x10] sm:$0xff]
      %v417 = vld [vmem:[%s376 + $0x18] sm:$0xff]
      %v418 = vld [vmem:[%s376 + $0x20] sm:$0xff]
      %v419 = vld [vmem:[%s376 + $0x28] sm:$0xff]
      %v420 = vld [vmem:[%s376 + $0x30] sm:$0xff]
      %v421 = vld [vmem:[%s376 + $0x38] sm:$0xff]
      %v422 = vld [vmem:[%s376 + $0x40] sm:$0xff]
      %v423 = vld [vmem:[%s376 + $0x48] sm:$0xff]
      %v424 = vld [vmem:[%s376 + $0x50] sm:$0xff]
      %v425 = vld [vmem:[%s376 + $0x58] sm:$0xff]
      %v426 = vld [vmem:[%s376 + $0x60] sm:$0xff]
      %v427 = vld [vmem:[%s376 + $0x68] sm:$0xff]
      %v428 = vld [vmem:[%s376 + $0x70] sm:$0xff]
      %v429 = vld [vmem:[%s376 + $0x78] sm:$0xff]
      %v430 = vld [vmem:[%s3] sm:$0xff]
      %v431 = vld [vmem:[%s3 + $0x8] sm:$0xff]
      %v432 = vld [vmem:[%s4] sm:$0x7]
      %v433 = vld [vmem:[%s5] sm:$0xff]
      %v434 = vld [vmem:[%s5 + $0x8] sm:$0xff]
      %v435 = vld [vmem:[%s5 + $0x10] sm:$0xff]
      %v436 = vld [vmem:[%s5 + $0x18] sm:$0xff]
      %v437 = vld [vmem:[%s5 + $0x20] sm:$0xff]
      %v438 = vld [vmem:[%s5 + $0x28] sm:$0xff]
      %v439 = vld [vmem:[%s5 + $0x30] sm:$0xff]
      %v440 = vld [vmem:[%s5 + $0x38] sm:$0xff]
      %v441 = vld [vmem:[%s6] sm:$0x7]
      %v442 = vld [vmem:[%s7] sm:$0xff]
      %v443 = vld [vmem:[%s7 + $0x8] sm:$0xff]
      %v444 = vld [vmem:[%s7 + $0x10] sm:$0xff]
      %v445 = vld [vmem:[%s7 + $0x18] sm:$0xff]
      %v446 = vld [vmem:[%s7 + $0x20] sm:$0xff]
      %v447 = vld [vmem:[%s7 + $0x28] sm:$0xff]
      %v448 = vld [vmem:[%s7 + $0x30] sm:$0xff]
      %v449 = vld [vmem:[%s7 + $0x38] sm:$0xff]
      %v450 = vld [vmem:[%s7 + $0x40] sm:$0xff]
      %v451 = vld [vmem:[#allocation2] sm:$0x1]
      %v452 = vunpack.c.l.bf16 %v382
      %v453 = vunpack.c.l.bf16 %v383
      %v454 = vunpack.c.l.bf16 %v384
      %v455 = vunpack.c.l.bf16 %v385
      %v456 = vunpack.c.l.bf16 %v386
      %v457 = vunpack.c.l.bf16 %v387
      %v458 = vunpack.c.l.bf16 %v388
      %v459 = vunpack.c.l.bf16 %v389
      %v460 = vunpack.c.l.bf16 %v390
      %v461 = vunpack.c.l.bf16 %v391
      %v462 = vunpack.c.l.bf16 %v392
      %v463 = vunpack.c.l.bf16 %v393
      %v464 = vunpack.c.l.bf16 %v394
      %v465 = vunpack.c.l.bf16 %v395
      %v466 = vunpack.c.l.bf16 %v396
      %v467 = vunpack.c.l.bf16 %v397
      %vm468 = vcmask 130048
      %v470 = vsel %vm468, %v452, 0
      %v473 = vsel %vm468, %v453, 0
      %475 = vmatprep.subr.mxu0 0.0
      %476 = vmatpush1.msra.mxu0 %v398
      %477 = vmatprep.subr.mxu0 0.0
      %478 = vmatpush1.msra.mxu0 %v399
      %479 = vmatprep.subr.mxu0 0.0
      %480 = vmatpush1.msra.mxu0 0.0
      %481 = vmatprep.subr.mxu0 0.0
      %482 = vmatpush1.msra.mxu0 0.0
      %483 = vmatprep.subr.mxu0 0.0
      %484 = vmatpush1.msra.mxu0 0.0
      %485 = vmatprep.subr.mxu0 0.0
      %486 = vmatpush1.msra.mxu0 0.0
      %487 = vmatprep.subr.mxu0 0.0
      %488 = vmatpush1.msra.mxu0 0.0
      %489 = vmatprep.subr.mxu0 0.0
      %490 = vmatpush1.msra.mxu0 0.0
      %491 = vmatprep.subr.mxu0 0.0
      %492 = vmatpush1.msra.mxu0 0.0
      %493 = vmatprep.subr.mxu0 0.0
      %494 = vmatpush1.msra.mxu0 0.0
      %495 = vmatprep.subr.mxu0 0.0
      %496 = vmatpush1.msra.mxu0 0.0
      %497 = vmatprep.subr.mxu0 0.0
      %498 = vmatpush1.msra.mxu0 0.0
      %499 = vmatprep.subr.mxu0 0.0
      %500 = vmatpush1.msra.mxu0 0.0
      %501 = vmatprep.subr.mxu0 0.0
      %502 = vmatpush1.msra.mxu0 0.0
      %503 = vmatprep.subr.mxu0 0.0
      %504 = vmatpush1.msra.mxu0 0.0
      %505 = vmatprep.subr.mxu0 0.0
      %506 = vmatpush1.msra.mxu0 0.0
      %507 = vmatprep.subr.mxu0 0.0
      %508 = vmatpush1.msra.mxu0 0.0
      %509 = vmatprep.subr.mxu0 0.0
      %510 = vmatpush1.msra.mxu0 0.0
      %511 = vmatprep.subr.mxu0 0.0
      %512 = vmatpush1.msra.mxu0 0.0
      %513 = vmatprep.subr.mxu0 0.0
      %514 = vmatpush1.msra.mxu0 0.0
      %515 = vmatprep.subr.mxu0 0.0
      %516 = vmatpush1.msra.mxu0 0.0
      %517 = vmatprep.subr.mxu0 0.0
      %518 = vmatpush1.msra.mxu0 0.0
      %519 = vmatprep.subr.mxu0 0.0
      %520 = vmatpush1.msra.mxu0 0.0
      %521 = vmatprep.subr.mxu0 0.0
      %522 = vmatpush1.msra.mxu0 0.0
      %523 = vmatprep.subr.mxu0 0.0
      %524 = vmatpush1.msra.mxu0 0.0
      %525 = vmatprep.subr.mxu0 0.0
      %526 = vmatpush1.msra.mxu0 0.0
      %527 = vmatprep.subr.mxu0 0.0
      %528 = vmatpush1.msra.mxu0 0.0
      %529 = vmatprep.subr.mxu0 0.0
      %530 = vmatpush1.msra.mxu0 0.0
      %531 = vmatprep.subr.mxu0 0.0
      %532 = vmatpush1.msra.mxu0 0.0
      %533 = vmatprep.subr.mxu0 0.0
      %534 = vmatpush1.msra.mxu0 0.0
      %535 = vmatprep.subr.mxu0 0.0
      %536 = vmatpush1.msra.mxu0 0.0
      %537 = vmatprep.subr.mxu0 0.0
      %538 = vmatpush1.msra.mxu0 0.0
      %539 = vmatprep.mubr.f32.mxu0 0.0
      %540 = vmatmul.mubr.f32.gmra.mrb[0].mxu0 %v470
      %v541 = vpop.f32.mrb[0].mxu0
      %v542 = vadd.f32 0.0, %v541
      %v543 = vpop.f32.mrb[0].mxu0
      %544 = vmatprep.mubr.f32.mxu0 0.0
      %545 = vmatmul.mubr.f32.gmra.mrb[0].mxu0 %v473
      %v546 = vpop.f32.mrb[0].mxu0
      %v547 = vadd.f32 0.0, %v546
      %v548 = vpop.f32.mrb[0].mxu0
      %549 = vdwg.mxu0
      %v551 = vsel %vm468, %v454, 0
      %v554 = vsel %vm468, %v455, 0
      %556 = vmatprep.subr.mxu0 0.0
      %557 = vmatpush1.msra.mxu0 %v400
      %558 = vmatprep.subr.mxu0 0.0
      %559 = vmatpush1.msra.mxu0 %v401
      %560 = vmatprep.subr.mxu0 0.0
      %561 = vmatpush1.msra.mxu0 0.0
      %562 = vmatprep.subr.mxu0 0.0
      %563 = vmatpush1.msra.mxu0 0.0
      %564 = vmatprep.subr.mxu0 0.0
      %565 = vmatpush1.msra.mxu0 0.0
      %566 = vmatprep.subr.mxu0 0.0
      %567 = vmatpush1.msra.mxu0 0.0
      %568 = vmatprep.subr.mxu0 0.0
      %569 = vmatpush1.msra.mxu0 0.0
      %570 = vmatprep.subr.mxu0 0.0
      %571 = vmatpush1.msra.mxu0 0.0
      %572 = vmatprep.subr.mxu0 0.0
      %573 = vmatpush1.msra.mxu0 0.0
      %574 = vmatprep.subr.mxu0 0.0
      %575 = vmatpush1.msra.mxu0 0.0
      %576 = vmatprep.subr.mxu0 0.0
      %577 = vmatpush1.msra.mxu0 0.0
      %578 = vmatprep.subr.mxu0 0.0
      %579 = vmatpush1.msra.mxu0 0.0
      %580 = vmatprep.subr.mxu0 0.0
      %581 = vmatpush1.msra.mxu0 0.0
      %582 = vmatprep.subr.mxu0 0.0
      %583 = vmatpush1.msra.mxu0 0.0
      %584 = vmatprep.subr.mxu0 0.0
      %585 = vmatpush1.msra.mxu0 0.0
      %586 = vmatprep.subr.mxu0 0.0
      %587 = vmatpush1.msra.mxu0 0.0
      %588 = vmatprep.subr.mxu0 0.0
      %589 = vmatpush1.msra.mxu0 0.0
      %590 = vmatprep.subr.mxu0 0.0
      %591 = vmatpush1.msra.mxu0 0.0
      %592 = vmatprep.subr.mxu0 0.0
      %593 = vmatpush1.msra.mxu0 0.0
      %594 = vmatprep.subr.mxu0 0.0
      %595 = vmatpush1.msra.mxu0 0.0
      %596 = vmatprep.subr.mxu0 0.0
      %597 = vmatpush1.msra.mxu0 0.0
      %598 = vmatprep.subr.mxu0 0.0
      %599 = vmatpush1.msra.mxu0 0.0
      %600 = vmatprep.subr.mxu0 0.0
      %601 = vmatpush1.msra.mxu0 0.0
      %602 = vmatprep.subr.mxu0 0.0
      %603 = vmatpush1.msra.mxu0 0.0
      %604 = vmatprep.subr.mxu0 0.0
      %605 = vmatpush1.msra.mxu0 0.0
      %606 = vmatprep.subr.mxu0 0.0
      %607 = vmatpush1.msra.mxu0 0.0
      %608 = vmatprep.subr.mxu0 0.0
      %609 = vmatpush1.msra.mxu0 0.0
      %610 = vmatprep.subr.mxu0 0.0
      %611 = vmatpush1.msra.mxu0 0.0
      %612 = vmatprep.subr.mxu0 0.0
      %613 = vmatpush1.msra.mxu0 0.0
      %614 = vmatprep.subr.mxu0 0.0
      %615 = vmatpush1.msra.mxu0 0.0
      %616 = vmatprep.subr.mxu0 0.0
      %617 = vmatpush1.msra.mxu0 0.0
      %618 = vmatprep.subr.mxu0 0.0
      %619 = vmatpush1.msra.mxu0 0.0
      %620 = vmatprep.mubr.f32.mxu0 0.0
      %621 = vmatmul.mubr.f32.gmra.mrb[0].mxu0 %v551
      %v622 = vpop.f32.mrb[0].mxu0
      %v623 = vadd.f32 0.0, %v622
      %v624 = vpop.f32.mrb[0].mxu0
      %625 = vmatprep.mubr.f32.mxu0 0.0
      %626 = vmatmul.mubr.f32.gmra.mrb[0].mxu0 %v554
      %v627 = vpop.f32.mrb[0].mxu0
      %v628 = vadd.f32 0.0, %v627
      %v629 = vpop.f32.mrb[0].mxu0
      %630 = vdwg.mxu0
      %v632 = vsel %vm468, %v456, 0
      %v635 = vsel %vm468, %v457, 0
      %637 = vmatprep.subr.mxu0 0.0
      %638 = vmatpush1.msra.mxu0 %v402
      %639 = vmatprep.subr.mxu0 0.0
      %640 = vmatpush1.msra.mxu0 %v403
      %641 = vmatprep.subr.mxu0 0.0
      %642 = vmatpush1.msra.mxu0 0.0
      %643 = vmatprep.subr.mxu0 0.0
      %644 = vmatpush1.msra.mxu0 0.0
      %645 = vmatprep.subr.mxu0 0.0
      %646 = vmatpush1.msra.mxu0 0.0
      %647 = vmatprep.subr.mxu0 0.0
      %648 = vmatpush1.msra.mxu0 0.0
      %649 = vmatprep.subr.mxu0 0.0
      %650 = vmatpush1.msra.mxu0 0.0
      %651 = vmatprep.subr.mxu0 0.0
      %652 = vmatpush1.msra.mxu0 0.0
      %653 = vmatprep.subr.mxu0 0.0
      %654 = vmatpush1.msra.mxu0 0.0
      %655 = vmatprep.subr.mxu0 0.0
      %656 = vmatpush1.msra.mxu0 0.0
      %657 = vmatprep.subr.mxu0 0.0
      %658 = vmatpush1.msra.mxu0 0.0
      %659 = vmatprep.subr.mxu0 0.0
      %660 = vmatpush1.msra.mxu0 0.0
      %661 = vmatprep.subr.mxu0 0.0
      %662 = vmatpush1.msra.mxu0 0.0
      %663 = vmatprep.subr.mxu0 0.0
      %664 = vmatpush1.msra.mxu0 0.0
      %665 = vmatprep.subr.mxu0 0.0
      %666 = vmatpush1.msra.mxu0 0.0
      %667 = vmatprep.subr.mxu0 0.0
      %668 = vmatpush1.msra.mxu0 0.0
      %669 = vmatprep.subr.mxu0 0.0
      %670 = vmatpush1.msra.mxu0 0.0
      %671 = vmatprep.subr.mxu0 0.0
      %672 = vmatpush1.msra.mxu0 0.0
      %673 = vmatprep.subr.mxu0 0.0
      %674 = vmatpush1.msra.mxu0 0.0
      %675 = vmatprep.subr.mxu0 0.0
      %676 = vmatpush1.msra.mxu0 0.0
      %677 = vmatprep.subr.mxu0 0.0
      %678 = vmatpush1.msra.mxu0 0.0
      %679 = vmatprep.subr.mxu0 0.0
      %680 = vmatpush1.msra.mxu0 0.0
      %681 = vmatprep.subr.mxu0 0.0
      %682 = vmatpush1.msra.mxu0 0.0
      %683 = vmatprep.subr.mxu0 0.0
      %684 = vmatpush1.msra.mxu0 0.0
      %685 = vmatprep.subr.mxu0 0.0
      %686 = vmatpush1.msra.mxu0 0.0
      %687 = vmatprep.subr.mxu0 0.0
      %688 = vmatpush1.msra.mxu0 0.0
      %689 = vmatprep.subr.mxu0 0.0
      %690 = vmatpush1.msra.mxu0 0.0
      %691 = vmatprep.subr.mxu0 0.0
      %692 = vmatpush1.msra.mxu0 0.0
      %693 = vmatprep.subr.mxu0 0.0
      %694 = vmatpush1.msra.mxu0 0.0
      %695 = vmatprep.subr.mxu0 0.0
      %696 = vmatpush1.msra.mxu0 0.0
      %697 = vmatprep.subr.mxu0 0.0
      %698 = vmatpush1.msra.mxu0 0.0
      %699 = vmatprep.subr.mxu0 0.0
      %700 = vmatpush1.msra.mxu0 0.0
      %701 = vmatprep.mubr.f32.mxu0 0.0
      %702 = vmatmul.mubr.f32.gmra.mrb[0].mxu0 %v632
      %v703 = vpop.f32.mrb[0].mxu0
      %v704 = vadd.f32 0.0, %v703
      %v705 = vpop.f32.mrb[0].mxu0
      %706 = vmatprep.mubr.f32.mxu0 0.0
      %707 = vmatmul.mubr.f32.gmra.mrb[0].mxu0 %v635
      %v708 = vpop.f32.mrb[0].mxu0
      %v709 = vadd.f32 0.0, %v708
      %v710 = vpop.f32.mrb[0].mxu0
      %711 = vdwg.mxu0
      %v713 = vsel %vm468, %v458, 0
      %v716 = vsel %vm468, %v459, 0
      %718 = vmatprep.subr.mxu0 0.0
      %719 = vmatpush1.msra.mxu0 %v404
      %720 = vmatprep.subr.mxu0 0.0
      %721 = vmatpush1.msra.mxu0 %v405
      %722 = vmatprep.subr.mxu0 0.0
      %723 = vmatpush1.msra.mxu0 0.0
      %724 = vmatprep.subr.mxu0 0.0
      %725 = vmatpush1.msra.mxu0 0.0
      %726 = vmatprep.subr.mxu0 0.0
      %727 = vmatpush1.msra.mxu0 0.0
      %728 = vmatprep.subr.mxu0 0.0
      %729 = vmatpush1.msra.mxu0 0.0
      %730 = vmatprep.subr.mxu0 0.0
      %731 = vmatpush1.msra.mxu0 0.0
      %732 = vmatprep.subr.mxu0 0.0
      %733 = vmatpush1.msra.mxu0 0.0
      %734 = vmatprep.subr.mxu0 0.0
      %735 = vmatpush1.msra.mxu0 0.0
      %736 = vmatprep.subr.mxu0 0.0
      %737 = vmatpush1.msra.mxu0 0.0
      %738 = vmatprep.subr.mxu0 0.0
      %739 = vmatpush1.msra.mxu0 0.0
      %740 = vmatprep.subr.mxu0 0.0
      %741 = vmatpush1.msra.mxu0 0.0
      %742 = vmatprep.subr.mxu0 0.0
      %743 = vmatpush1.msra.mxu0 0.0
      %744 = vmatprep.subr.mxu0 0.0
      %745 = vmatpush1.msra.mxu0 0.0
      %746 = vmatprep.subr.mxu0 0.0
      %747 = vmatpush1.msra.mxu0 0.0
      %748 = vmatprep.subr.mxu0 0.0
      %749 = vmatpush1.msra.mxu0 0.0
      %750 = vmatprep.subr.mxu0 0.0
      %751 = vmatpush1.msra.mxu0 0.0
      %752 = vmatprep.subr.mxu0 0.0
      %753 = vmatpush1.msra.mxu0 0.0
      %754 = vmatprep.subr.mxu0 0.0
      %755 = vmatpush1.msra.mxu0 0.0
      %756 = vmatprep.subr.mxu0 0.0
      %757 = vmatpush1.msra.mxu0 0.0
      %758 = vmatprep.subr.mxu0 0.0
      %759 = vmatpush1.msra.mxu0 0.0
      %760 = vmatprep.subr.mxu0 0.0
      %761 = vmatpush1.msra.mxu0 0.0
      %762 = vmatprep.subr.mxu0 0.0
      %763 = vmatpush1.msra.mxu0 0.0
      %764 = vmatprep.subr.mxu0 0.0
      %765 = vmatpush1.msra.mxu0 0.0
      %766 = vmatprep.subr.mxu0 0.0
      %767 = vmatpush1.msra.mxu0 0.0
      %768 = vmatprep.subr.mxu0 0.0
      %769 = vmatpush1.msra.mxu0 0.0
      %770 = vmatprep.subr.mxu0 0.0
      %771 = vmatpush1.msra.mxu0 0.0
      %772 = vmatprep.subr.mxu0 0.0
      %773 = vmatpush1.msra.mxu0 0.0
      %774 = vmatprep.subr.mxu0 0.0
      %775 = vmatpush1.msra.mxu0 0.0
      %776 = vmatprep.subr.mxu0 0.0
      %777 = vmatpush1.msra.mxu0 0.0
      %778 = vmatprep.subr.mxu0 0.0
      %779 = vmatpush1.msra.mxu0 0.0
      %780 = vmatprep.subr.mxu0 0.0
      %781 = vmatpush1.msra.mxu0 0.0
      %782 = vmatprep.mubr.f32.mxu0 0.0
      %783 = vmatmul.mubr.f32.gmra.mrb[0].mxu0 %v713
      %v784 = vpop.f32.mrb[0].mxu0
      %v785 = vadd.f32 0.0, %v784
      %v786 = vpop.f32.mrb[0].mxu0
      %787 = vmatprep.mubr.f32.mxu0 0.0
      %788 = vmatmul.mubr.f32.gmra.mrb[0].mxu0 %v716
      %v789 = vpop.f32.mrb[0].mxu0
      %v790 = vadd.f32 0.0, %v789
      %v791 = vpop.f32.mrb[0].mxu0
      %792 = vdwg.mxu0
      %v794 = vsel %vm468, %v460, 0
      %v797 = vsel %vm468, %v461, 0
      %799 = vmatprep.subr.mxu0 0.0
      %800 = vmatpush1.msra.mxu0 %v406
      %801 = vmatprep.subr.mxu0 0.0
      %802 = vmatpush1.msra.mxu0 %v407
      %803 = vmatprep.subr.mxu0 0.0
      %804 = vmatpush1.msra.mxu0 0.0
      %805 = vmatprep.subr.mxu0 0.0
      %806 = vmatpush1.msra.mxu0 0.0
      %807 = vmatprep.subr.mxu0 0.0
      %808 = vmatpush1.msra.mxu0 0.0
      %809 = vmatprep.subr.mxu0 0.0
      %810 = vmatpush1.msra.mxu0 0.0
      %811 = vmatprep.subr.mxu0 0.0
      %812 = vmatpush1.msra.mxu0 0.0
      %813 = vmatprep.subr.mxu0 0.0
      %814 = vmatpush1.msra.mxu0 0.0
      %815 = vmatprep.subr.mxu0 0.0
      %816 = vmatpush1.msra.mxu0 0.0
      %817 = vmatprep.subr.mxu0 0.0
      %818 = vmatpush1.msra.mxu0 0.0
      %819 = vmatprep.subr.mxu0 0.0
      %820 = vmatpush1.msra.mxu0 0.0
      %821 = vmatprep.subr.mxu0 0.0
      %822 = vmatpush1.msra.mxu0 0.0
      %823 = vmatprep.subr.mxu0 0.0
      %824 = vmatpush1.msra.mxu0 0.0
      %825 = vmatprep.subr.mxu0 0.0
      %826 = vmatpush1.msra.mxu0 0.0
      %827 = vmatprep.subr.mxu0 0.0
      %828 = vmatpush1.msra.mxu0 0.0
      %829 = vmatprep.subr.mxu0 0.0
      %830 = vmatpush1.msra.mxu0 0.0
      %831 = vmatprep.subr.mxu0 0.0
      %832 = vmatpush1.msra.mxu0 0.0
      %833 = vmatprep.subr.mxu0 0.0
      %834 = vmatpush1.msra.mxu0 0.0
      %835 = vmatprep.subr.mxu0 0.0
      %836 = vmatpush1.msra.mxu0 0.0
      %837 = vmatprep.subr.mxu0 0.0
      %838 = vmatpush1.msra.mxu0 0.0
      %839 = vmatprep.subr.mxu0 0.0
      %840 = vmatpush1.msra.mxu0 0.0
      %841 = vmatprep.subr.mxu0 0.0
      %842 = vmatpush1.msra.mxu0 0.0
      %843 = vmatprep.subr.mxu0 0.0
      %844 = vmatpush1.msra.mxu0 0.0
      %845 = vmatprep.subr.mxu0 0.0
      %846 = vmatpush1.msra.mxu0 0.0
      %847 = vmatprep.subr.mxu0 0.0
      %848 = vmatpush1.msra.mxu0 0.0
      %849 = vmatprep.subr.mxu0 0.0
      %850 = vmatpush1.msra.mxu0 0.0
      %851 = vmatprep.subr.mxu0 0.0
      %852 = vmatpush1.msra.mxu0 0.0
      %853 = vmatprep.subr.mxu0 0.0
      %854 = vmatpush1.msra.mxu0 0.0
      %855 = vmatprep.subr.mxu0 0.0
      %856 = vmatpush1.msra.mxu0 0.0
      %857 = vmatprep.subr.mxu0 0.0
      %858 = vmatpush1.msra.mxu0 0.0
      %859 = vmatprep.subr.mxu0 0.0
      %860 = vmatpush1.msra.mxu0 0.0
      %861 = vmatprep.subr.mxu0 0.0
      %862 = vmatpush1.msra.mxu0 0.0
      %863 = vmatprep.mubr.f32.mxu0 0.0
      %864 = vmatmul.mubr.f32.gmra.mrb[0].mxu0 %v794
      %v865 = vpop.f32.mrb[0].mxu0
      %v866 = vadd.f32 0.0, %v865
      %v867 = vpop.f32.mrb[0].mxu0
      %868 = vmatprep.mubr.f32.mxu0 0.0
      %869 = vmatmul.mubr.f32.gmra.mrb[0].mxu0 %v797
      %v870 = vpop.f32.mrb[0].mxu0
      %v871 = vadd.f32 0.0, %v870
      %v872 = vpop.f32.mrb[0].mxu0
      %873 = vdwg.mxu0
      %v875 = vsel %vm468, %v462, 0
      %v878 = vsel %vm468, %v463, 0
      %880 = vmatprep.subr.mxu0 0.0
      %881 = vmatpush1.msra.mxu0 %v408
      %882 = vmatprep.subr.mxu0 0.0
      %883 = vmatpush1.msra.mxu0 %v409
      %884 = vmatprep.subr.mxu0 0.0
      %885 = vmatpush1.msra.mxu0 0.0
      %886 = vmatprep.subr.mxu0 0.0
      %887 = vmatpush1.msra.mxu0 0.0
      %888 = vmatprep.subr.mxu0 0.0
      %889 = vmatpush1.msra.mxu0 0.0
      %890 = vmatprep.subr.mxu0 0.0
      %891 = vmatpush1.msra.mxu0 0.0
      %892 = vmatprep.subr.mxu0 0.0
      %893 = vmatpush1.msra.mxu0 0.0
      %894 = vmatprep.subr.mxu0 0.0
      %895 = vmatpush1.msra.mxu0 0.0
      %896 = vmatprep.subr.mxu0 0.0
      %897 = vmatpush1.msra.mxu0 0.0
      %898 = vmatprep.subr.mxu0 0.0
      %899 = vmatpush1.msra.mxu0 0.0
      %900 = vmatprep.subr.mxu0 0.0
      %901 = vmatpush1.msra.mxu0 0.0
      %902 = vmatprep.subr.mxu0 0.0
      %903 = vmatpush1.msra.mxu0 0.0
      %904 = vmatprep.subr.mxu0 0.0
      %905 = vmatpush1.msra.mxu0 0.0
      %906 = vmatprep.subr.mxu0 0.0
      %907 = vmatpush1.msra.mxu0 0.0
      %908 = vmatprep.subr.mxu0 0.0
      %909 = vmatpush1.msra.mxu0 0.0
      %910 = vmatprep.subr.mxu0 0.0
      %911 = vmatpush1.msra.mxu0 0.0
      %912 = vmatprep.subr.mxu0 0.0
      %913 = vmatpush1.msra.mxu0 0.0
      %914 = vmatprep.subr.mxu0 0.0
      %915 = vmatpush1.msra.mxu0 0.0
      %916 = vmatprep.subr.mxu0 0.0
      %917 = vmatpush1.msra.mxu0 0.0
      %918 = vmatprep.subr.mxu0 0.0
      %919 = vmatpush1.msra.mxu0 0.0
      %920 = vmatprep.subr.mxu0 0.0
      %921 = vmatpush1.msra.mxu0 0.0
      %922 = vmatprep.subr.mxu0 0.0
      %923 = vmatpush1.msra.mxu0 0.0
      %924 = vmatprep.subr.mxu0 0.0
      %925 = vmatpush1.msra.mxu0 0.0
      %926 = vmatprep.subr.mxu0 0.0
      %927 = vmatpush1.msra.mxu0 0.0
      %928 = vmatprep.subr.mxu0 0.0
      %929 = vmatpush1.msra.mxu0 0.0
      %930 = vmatprep.subr.mxu0 0.0
      %931 = vmatpush1.msra.mxu0 0.0
      %932 = vmatprep.subr.mxu0 0.0
      %933 = vmatpush1.msra.mxu0 0.0
      %934 = vmatprep.subr.mxu0 0.0
      %935 = vmatpush1.msra.mxu0 0.0
      %936 = vmatprep.subr.mxu0 0.0
      %937 = vmatpush1.msra.mxu0 0.0
      %938 = vmatprep.subr.mxu0 0.0
      %939 = vmatpush1.msra.mxu0 0.0
      %940 = vmatprep.subr.mxu0 0.0
      %941 = vmatpush1.msra.mxu0 0.0
      %942 = vmatprep.subr.mxu0 0.0
      %943 = vmatpush1.msra.mxu0 0.0
      %944 = vmatprep.mubr.f32.mxu0 0.0
      %945 = vmatmul.mubr.f32.gmra.mrb[0].mxu0 %v875
      %v946 = vpop.f32.mrb[0].mxu0
      %v947 = vadd.f32 0.0, %v946
      %v948 = vpop.f32.mrb[0].mxu0
      %949 = vmatprep.mubr.f32.mxu0 0.0
      %950 = vmatmul.mubr.f32.gmra.mrb[0].mxu0 %v878
      %v951 = vpop.f32.mrb[0].mxu0
      %v952 = vadd.f32 0.0, %v951
      %v953 = vpop.f32.mrb[0].mxu0
      %954 = vdwg.mxu0
      %v956 = vsel %vm468, %v464, 0
      %v959 = vsel %vm468, %v465, 0
      %961 = vmatprep.subr.mxu0 0.0
      %962 = vmatpush1.msra.mxu0 %v410
      %963 = vmatprep.subr.mxu0 0.0
      %964 = vmatpush1.msra.mxu0 %v411
      %965 = vmatprep.subr.mxu0 0.0
      %966 = vmatpush1.msra.mxu0 0.0
      %967 = vmatprep.subr.mxu0 0.0
      %968 = vmatpush1.msra.mxu0 0.0
      %969 = vmatprep.subr.mxu0 0.0
      %970 = vmatpush1.msra.mxu0 0.0
      %971 = vmatprep.subr.mxu0 0.0
      %972 = vmatpush1.msra.mxu0 0.0
      %973 = vmatprep.subr.mxu0 0.0
      %974 = vmatpush1.msra.mxu0 0.0
      %975 = vmatprep.subr.mxu0 0.0
      %976 = vmatpush1.msra.mxu0 0.0
      %977 = vmatprep.subr.mxu0 0.0
      %978 = vmatpush1.msra.mxu0 0.0
      %979 = vmatprep.subr.mxu0 0.0
      %980 = vmatpush1.msra.mxu0 0.0
      %981 = vmatprep.subr.mxu0 0.0
      %982 = vmatpush1.msra.mxu0 0.0
      %983 = vmatprep.subr.mxu0 0.0
      %984 = vmatpush1.msra.mxu0 0.0
      %985 = vmatprep.subr.mxu0 0.0
      %986 = vmatpush1.msra.mxu0 0.0
      %987 = vmatprep.subr.mxu0 0.0
      %988 = vmatpush1.msra.mxu0 0.0
      %989 = vmatprep.subr.mxu0 0.0
      %990 = vmatpush1.msra.mxu0 0.0
      %991 = vmatprep.subr.mxu0 0.0
      %992 = vmatpush1.msra.mxu0 0.0
      %993 = vmatprep.subr.mxu0 0.0
      %994 = vmatpush1.msra.mxu0 0.0
      %995 = vmatprep.subr.mxu0 0.0
      %996 = vmatpush1.msra.mxu0 0.0
      %997 = vmatprep.subr.mxu0 0.0
      %998 = vmatpush1.msra.mxu0 0.0
      %999 = vmatprep.subr.mxu0 0.0
      %1000 = vmatpush1.msra.mxu0 0.0
      %1001 = vmatprep.subr.mxu0 0.0
      %1002 = vmatpush1.msra.mxu0 0.0
      %1003 = vmatprep.subr.mxu0 0.0
      %1004 = vmatpush1.msra.mxu0 0.0
      %1005 = vmatprep.subr.mxu0 0.0
      %1006 = vmatpush1.msra.mxu0 0.0
      %1007 = vmatprep.subr.mxu0 0.0
      %1008 = vmatpush1.msra.mxu0 0.0
      %1009 = vmatprep.subr.mxu0 0.0
      %1010 = vmatpush1.msra.mxu0 0.0
      %1011 = vmatprep.subr.mxu0 0.0
      %1012 = vmatpush1.msra.mxu0 0.0
      %1013 = vmatprep.subr.mxu0 0.0
      %1014 = vmatpush1.msra.mxu0 0.0
      %1015 = vmatprep.subr.mxu0 0.0
      %1016 = vmatpush1.msra.mxu0 0.0
      %1017 = vmatprep.subr.mxu0 0.0
      %1018 = vmatpush1.msra.mxu0 0.0
      %1019 = vmatprep.subr.mxu0 0.0
      %1020 = vmatpush1.msra.mxu0 0.0
      %1021 = vmatprep.subr.mxu0 0.0
      %1022 = vmatpush1.msra.mxu0 0.0
      %1023 = vmatprep.subr.mxu0 0.0
      %1024 = vmatpush1.msra.mxu0 0.0
      %1025 = vmatprep.mubr.f32.mxu0 0.0
      %1026 = vmatmul.mubr.f32.gmra.mrb[0].mxu0 %v956
      %v1027 = vpop.f32.mrb[0].mxu0
      %v1028 = vadd.f32 0.0, %v1027
      %v1029 = vpop.f32.mrb[0].mxu0
      %1030 = vmatprep.mubr.f32.mxu0 0.0
      %1031 = vmatmul.mubr.f32.gmra.mrb[0].mxu0 %v959
      %v1032 = vpop.f32.mrb[0].mxu0
      %v1033 = vadd.f32 0.0, %v1032
      %v1034 = vpop.f32.mrb[0].mxu0
      %1035 = vdwg.mxu0
      %v1037 = vsel %vm468, %v466, 0
      %v1040 = vsel %vm468, %v467, 0
      %1042 = vmatprep.subr.mxu0 0.0
      %1043 = vmatpush1.msra.mxu0 %v412
      %1044 = vmatprep.subr.mxu0 0.0
      %1045 = vmatpush1.msra.mxu0 %v413
      %1046 = vmatprep.subr.mxu0 0.0
      %1047 = vmatpush1.msra.mxu0 0.0
      %1048 = vmatprep.subr.mxu0 0.0
      %1049 = vmatpush1.msra.mxu0 0.0
      %1050 = vmatprep.subr.mxu0 0.0
      %1051 = vmatpush1.msra.mxu0 0.0
      %1052 = vmatprep.subr.mxu0 0.0
      %1053 = vmatpush1.msra.mxu0 0.0
      %1054 = vmatprep.subr.mxu0 0.0
      %1055 = vmatpush1.msra.mxu0 0.0
      %1056 = vmatprep.subr.mxu0 0.0
      %1057 = vmatpush1.msra.mxu0 0.0
      %1058 = vmatprep.subr.mxu0 0.0
      %1059 = vmatpush1.msra.mxu0 0.0
      %1060 = vmatprep.subr.mxu0 0.0
      %1061 = vmatpush1.msra.mxu0 0.0
      %1062 = vmatprep.subr.mxu0 0.0
      %1063 = vmatpush1.msra.mxu0 0.0
      %1064 = vmatprep.subr.mxu0 0.0
      %1065 = vmatpush1.msra.mxu0 0.0
      %1066 = vmatprep.subr.mxu0 0.0
      %1067 = vmatpush1.msra.mxu0 0.0
      %1068 = vmatprep.subr.mxu0 0.0
      %1069 = vmatpush1.msra.mxu0 0.0
      %1070 = vmatprep.subr.mxu0 0.0
      %1071 = vmatpush1.msra.mxu0 0.0
      %1072 = vmatprep.subr.mxu0 0.0
      %1073 = vmatpush1.msra.mxu0 0.0
      %1074 = vmatprep.subr.mxu0 0.0
      %1075 = vmatpush1.msra.mxu0 0.0
      %1076 = vmatprep.subr.mxu0 0.0
      %1077 = vmatpush1.msra.mxu0 0.0
      %1078 = vmatprep.subr.mxu0 0.0
      %1079 = vmatpush1.msra.mxu0 0.0
      %1080 = vmatprep.subr.mxu0 0.0
      %1081 = vmatpush1.msra.mxu0 0.0
      %1082 = vmatprep.subr.mxu0 0.0
      %1083 = vmatpush1.msra.mxu0 0.0
      %1084 = vmatprep.subr.mxu0 0.0
      %1085 = vmatpush1.msra.mxu0 0.0
      %1086 = vmatprep.subr.mxu0 0.0
      %1087 = vmatpush1.msra.mxu0 0.0
      %1088 = vmatprep.subr.mxu0 0.0
      %1089 = vmatpush1.msra.mxu0 0.0
      %1090 = vmatprep.subr.mxu0 0.0
      %1091 = vmatpush1.msra.mxu0 0.0
      %1092 = vmatprep.subr.mxu0 0.0
      %1093 = vmatpush1.msra.mxu0 0.0
      %1094 = vmatprep.subr.mxu0 0.0
      %1095 = vmatpush1.msra.mxu0 0.0
      %1096 = vmatprep.subr.mxu0 0.0
      %1097 = vmatpush1.msra.mxu0 0.0
      %1098 = vmatprep.subr.mxu0 0.0
      %1099 = vmatpush1.msra.mxu0 0.0
      %1100 = vmatprep.subr.mxu0 0.0
      %1101 = vmatpush1.msra.mxu0 0.0
      %1102 = vmatprep.subr.mxu0 0.0
      %1103 = vmatpush1.msra.mxu0 0.0
      %1104 = vmatprep.subr.mxu0 0.0
      %1105 = vmatpush1.msra.mxu0 0.0
      %1106 = vmatprep.mubr.f32.mxu0 0.0
      %1107 = vmatmul.mubr.f32.gmra.mrb[0].mxu0 %v1037
      %v1108 = vpop.f32.mrb[0].mxu0
      %v1109 = vadd.f32 0.0, %v1108
      %v1110 = vpop.f32.mrb[0].mxu0
      %1111 = vmatprep.mubr.f32.mxu0 0.0
      %1112 = vmatmul.mubr.f32.gmra.mrb[0].mxu0 %v1040
      %v1113 = vpop.f32.mrb[0].mxu0
      %v1114 = vadd.f32 0.0, %v1113
      %v1115 = vpop.f32.mrb[0].mxu0
      %1116 = vdwg.mxu0
      %vm1117 = vcmask 64512
      %v1119 = vsel %vm1117, %v542, 0
      %v1122 = vsel %vm1117, %v547, 0
      %v1125 = vsel %vm1117, %v623, 0
      %v1128 = vsel %vm1117, %v628, 0
      %v1131 = vsel %vm1117, %v704, 0
      %v1134 = vsel %vm1117, %v709, 0
      %v1137 = vsel %vm1117, %v785, 0
      %v1140 = vsel %vm1117, %v790, 0
      %v1143 = vsel %vm1117, %v866, 0
      %v1146 = vsel %vm1117, %v871, 0
      %v1149 = vsel %vm1117, %v947, 0
      %v1152 = vsel %vm1117, %v952, 0
      %v1155 = vsel %vm1117, %v1028, 0
      %v1158 = vsel %vm1117, %v1033, 0
      %v1161 = vsel %vm1117, %v1109, 0
      %v1164 = vsel %vm1117, %v1114, 0
      %1166 = vmatprep.subr.mxu0 0.0
      %1167 = vmatpush1.msra.mxu0 %v431
      %1168 = vmatprep.subr.mxu0 0.0
      %1169 = vmatpush1.msra.mxu0 0.0
      %1170 = vmatprep.subr.mxu0 0.0
      %1171 = vmatpush1.msra.mxu0 0.0
      %1172 = vmatprep.subr.mxu0 0.0
      %1173 = vmatpush1.msra.mxu0 0.0
      %1174 = vmatprep.subr.mxu0 0.0
      %1175 = vmatpush1.msra.mxu0 0.0
      %1176 = vmatprep.subr.mxu0 0.0
      %1177 = vmatpush1.msra.mxu0 0.0
      %1178 = vmatprep.subr.mxu0 0.0
      %1179 = vmatpush1.msra.mxu0 0.0
      %1180 = vmatprep.subr.mxu0 0.0
      %1181 = vmatpush1.msra.mxu0 0.0
      %1182 = vmatprep.subr.mxu0 0.0
      %1183 = vmatpush1.msra.mxu0 0.0
      %1184 = vmatprep.subr.mxu0 0.0
      %1185 = vmatpush1.msra.mxu0 0.0
      %1186 = vmatprep.subr.mxu0 0.0
      %1187 = vmatpush1.msra.mxu0 0.0
      %1188 = vmatprep.subr.mxu0 0.0
      %1189 = vmatpush1.msra.mxu0 0.0
      %1190 = vmatprep.subr.mxu0 0.0
      %1191 = vmatpush1.msra.mxu0 0.0
      %1192 = vmatprep.subr.mxu0 0.0
      %1193 = vmatpush1.msra.mxu0 0.0
      %1194 = vmatprep.subr.mxu0 0.0
      %1195 = vmatpush1.msra.mxu0 0.0
      %1196 = vmatprep.subr.mxu0 0.0
      %1197 = vmatpush1.msra.mxu0 0.0
      %1198 = vmatprep.subr.mxu0 0.0
      %1199 = vmatpush1.msra.mxu0 0.0
      %1200 = vmatprep.subr.mxu0 0.0
      %1201 = vmatpush1.msra.mxu0 0.0
      %1202 = vmatprep.subr.mxu0 0.0
      %1203 = vmatpush1.msra.mxu0 0.0
      %1204 = vmatprep.subr.mxu0 0.0
      %1205 = vmatpush1.msra.mxu0 0.0
      %1206 = vmatprep.subr.mxu0 0.0
      %1207 = vmatpush1.msra.mxu0 0.0
      %1208 = vmatprep.subr.mxu0 0.0
      %1209 = vmatpush1.msra.mxu0 0.0
      %1210 = vmatprep.subr.mxu0 0.0
      %1211 = vmatpush1.msra.mxu0 0.0
      %1212 = vmatprep.subr.mxu0 0.0
      %1213 = vmatpush1.msra.mxu0 0.0
      %1214 = vmatprep.subr.mxu0 0.0
      %1215 = vmatpush1.msra.mxu0 0.0
      %1216 = vmatprep.subr.mxu0 0.0
      %1217 = vmatpush1.msra.mxu0 0.0
      %1218 = vmatprep.subr.mxu0 0.0
      %1219 = vmatpush1.msra.mxu0 0.0
      %1220 = vmatprep.subr.mxu0 0.0
      %1221 = vmatpush1.msra.mxu0 0.0
      %1222 = vmatprep.subr.mxu0 0.0
      %1223 = vmatpush1.msra.mxu0 0.0
      %1224 = vmatprep.subr.mxu0 0.0
      %1225 = vmatpush1.msra.mxu0 0.0
      %1226 = vmatprep.subr.mxu0 0.0
      %1227 = vmatpush1.msra.mxu0 0.0
      %1228 = vmatprep.subr.mxu0 0.0
      %1229 = vmatpush1.msra.mxu0 0.0
      %1230 = vmatprep.mubr.f32.mxu0 0.0
      %1231 = vmatmul.mubr.f32.gmra.mrb[0].mxu0 %v1119
      %v1232 = vpop.f32.mrb[0].mxu0
      %v1233 = vadd.f32 0.0, %v1232
      %v1234 = vpop.f32.mrb[0].mxu0
      %1235 = vmatprep.mubr.f32.mxu0 0.0
      %1236 = vmatmul.mubr.f32.gmra.mrb[0].mxu0 %v1122
      %v1237 = vpop.f32.mrb[0].mxu0
      %v1238 = vadd.f32 0.0, %v1237
      %v1239 = vpop.f32.mrb[0].mxu0
      %1240 = vmatprep.mubr.f32.mxu0 0.0
      %1241 = vmatmul.mubr.f32.gmra.mrb[0].mxu0 %v1125
      %v1242 = vpop.f32.mrb[0].mxu0
      %v1243 = vadd.f32 0.0, %v1242
      %v1244 = vpop.f32.mrb[0].mxu0
      %1245 = vmatprep.mubr.f32.mxu0 0.0
      %1246 = vmatmul.mubr.f32.gmra.mrb[0].mxu0 %v1128
      %v1247 = vpop.f32.mrb[0].mxu0
      %v1248 = vadd.f32 0.0, %v1247
      %v1249 = vpop.f32.mrb[0].mxu0
      %1250 = vmatprep.mubr.f32.mxu0 0.0
      %1251 = vmatmul.mubr.f32.gmra.mrb[0].mxu0 %v1131
      %v1252 = vpop.f32.mrb[0].mxu0
      %v1253 = vadd.f32 0.0, %v1252
      %v1254 = vpop.f32.mrb[0].mxu0
      %1255 = vmatprep.mubr.f32.mxu0 0.0
      %1256 = vmatmul.mubr.f32.gmra.mrb[0].mxu0 %v1134
      %v1257 = vpop.f32.mrb[0].mxu0
      %v1258 = vadd.f32 0.0, %v1257
      %v1259 = vpop.f32.mrb[0].mxu0
      %1260 = vmatprep.mubr.f32.mxu0 0.0
      %1261 = vmatmul.mubr.f32.gmra.mrb[0].mxu0 %v1137
      %v1262 = vpop.f32.mrb[0].mxu0
      %v1263 = vadd.f32 0.0, %v1262
      %v1264 = vpop.f32.mrb[0].mxu0
      %1265 = vmatprep.mubr.f32.mxu0 0.0
      %1266 = vmatmul.mubr.f32.gmra.mrb[0].mxu0 %v1140
      %v1267 = vpop.f32.mrb[0].mxu0
      %v1268 = vadd.f32 0.0, %v1267
      %v1269 = vpop.f32.mrb[0].mxu0
      %1270 = vmatprep.mubr.f32.mxu0 0.0
      %1271 = vmatmul.mubr.f32.gmra.mrb[0].mxu0 %v1143
      %v1272 = vpop.f32.mrb[0].mxu0
      %v1273 = vadd.f32 0.0, %v1272
      %v1274 = vpop.f32.mrb[0].mxu0
      %1275 = vmatprep.mubr.f32.mxu0 0.0
      %1276 = vmatmul.mubr.f32.gmra.mrb[0].mxu0 %v1146
      %v1277 = vpop.f32.mrb[0].mxu0
      %v1278 = vadd.f32 0.0, %v1277
      %v1279 = vpop.f32.mrb[0].mxu0
      %1280 = vmatprep.mubr.f32.mxu0 0.0
      %1281 = vmatmul.mubr.f32.gmra.mrb[0].mxu0 %v1149
      %v1282 = vpop.f32.mrb[0].mxu0
      %v1283 = vadd.f32 0.0, %v1282
      %v1284 = vpop.f32.mrb[0].mxu0
      %1285 = vmatprep.mubr.f32.mxu0 0.0
      %1286 = vmatmul.mubr.f32.gmra.mrb[0].mxu0 %v1152
      %v1287 = vpop.f32.mrb[0].mxu0
      %v1288 = vadd.f32 0.0, %v1287
      %v1289 = vpop.f32.mrb[0].mxu0
      %1290 = vmatprep.mubr.f32.mxu0 0.0
      %1291 = vmatmul.mubr.f32.gmra.mrb[0].mxu0 %v1155
      %v1292 = vpop.f32.mrb[0].mxu0
      %v1293 = vadd.f32 0.0, %v1292
      %v1294 = vpop.f32.mrb[0].mxu0
      %1295 = vmatprep.mubr.f32.mxu0 0.0
      %1296 = vmatmul.mubr.f32.gmra.mrb[0].mxu0 %v1158
      %v1297 = vpop.f32.mrb[0].mxu0
      %v1298 = vadd.f32 0.0, %v1297
      %v1299 = vpop.f32.mrb[0].mxu0
      %1300 = vmatprep.mubr.f32.mxu0 0.0
      %1301 = vmatmul.mubr.f32.gmra.mrb[0].mxu0 %v1161
      %v1302 = vpop.f32.mrb[0].mxu0
      %v1303 = vadd.f32 0.0, %v1302
      %v1304 = vpop.f32.mrb[0].mxu0
      %1305 = vmatprep.mubr.f32.mxu0 0.0
      %1306 = vmatmul.mubr.f32.gmra.mrb[0].mxu0 %v1164
      %v1307 = vpop.f32.mrb[0].mxu0
      %v1308 = vadd.f32 0.0, %v1307
      %v1309 = vpop.f32.mrb[0].mxu0
      %1310 = vdwg.mxu0
      %v1312 = vsel %vm1117, %v398, 0
      %v1315 = vsel %vm1117, %v399, 0
      %v1318 = vsel %vm1117, %v400, 0
      %v1321 = vsel %vm1117, %v401, 0
      %v1324 = vsel %vm1117, %v402, 0
      %v1327 = vsel %vm1117, %v403, 0
      %v1330 = vsel %vm1117, %v404, 0
      %v1333 = vsel %vm1117, %v405, 0
      %v1336 = vsel %vm1117, %v406, 0
      %v1339 = vsel %vm1117, %v407, 0
      %v1342 = vsel %vm1117, %v408, 0
      %v1345 = vsel %vm1117, %v409, 0
      %v1348 = vsel %vm1117, %v410, 0
      %v1351 = vsel %vm1117, %v411, 0
      %v1354 = vsel %vm1117, %v412, 0
      %v1357 = vsel %vm1117, %v413, 0
      %1359 = vmatprep.subr.mxu0 0.0
      %1360 = vmatpush1.msra.mxu0 %v430
      %1361 = vmatprep.subr.mxu0 0.0
      %1362 = vmatpush1.msra.mxu0 0.0
      %1363 = vmatprep.subr.mxu0 0.0
      %1364 = vmatpush1.msra.mxu0 0.0
      %1365 = vmatprep.subr.mxu0 0.0
      %1366 = vmatpush1.msra.mxu0 0.0
      %1367 = vmatprep.subr.mxu0 0.0
      %1368 = vmatpush1.msra.mxu0 0.0
      %1369 = vmatprep.subr.mxu0 0.0
      %1370 = vmatpush1.msra.mxu0 0.0
      %1371 = vmatprep.subr.mxu0 0.0
      %1372 = vmatpush1.msra.mxu0 0.0
      %1373 = vmatprep.subr.mxu0 0.0
      %1374 = vmatpush1.msra.mxu0 0.0
      %1375 = vmatprep.subr.mxu0 0.0
      %1376 = vmatpush1.msra.mxu0 0.0
      %1377 = vmatprep.subr.mxu0 0.0
      %1378 = vmatpush1.msra.mxu0 0.0
      %1379 = vmatprep.subr.mxu0 0.0
      %1380 = vmatpush1.msra.mxu0 0.0
      %1381 = vmatprep.subr.mxu0 0.0
      %1382 = vmatpush1.msra.mxu0 0.0
      %1383 = vmatprep.subr.mxu0 0.0
      %1384 = vmatpush1.msra.mxu0 0.0
      %1385 = vmatprep.subr.mxu0 0.0
      %1386 = vmatpush1.msra.mxu0 0.0
      %1387 = vmatprep.subr.mxu0 0.0
      %1388 = vmatpush1.msra.mxu0 0.0
      %1389 = vmatprep.subr.mxu0 0.0
      %1390 = vmatpush1.msra.mxu0 0.0
      %1391 = vmatprep.subr.mxu0 0.0
      %1392 = vmatpush1.msra.mxu0 0.0
      %1393 = vmatprep.subr.mxu0 0.0
      %1394 = vmatpush1.msra.mxu0 0.0
      %1395 = vmatprep.subr.mxu0 0.0
      %1396 = vmatpush1.msra.mxu0 0.0
      %1397 = vmatprep.subr.mxu0 0.0
      %1398 = vmatpush1.msra.mxu0 0.0
      %1399 = vmatprep.subr.mxu0 0.0
      %1400 = vmatpush1.msra.mxu0 0.0
      %1401 = vmatprep.subr.mxu0 0.0
      %1402 = vmatpush1.msra.mxu0 0.0
      %1403 = vmatprep.subr.mxu0 0.0
      %1404 = vmatpush1.msra.mxu0 0.0
      %1405 = vmatprep.subr.mxu0 0.0
      %1406 = vmatpush1.msra.mxu0 0.0
      %1407 = vmatprep.subr.mxu0 0.0
      %1408 = vmatpush1.msra.mxu0 0.0
      %1409 = vmatprep.subr.mxu0 0.0
      %1410 = vmatpush1.msra.mxu0 0.0
      %1411 = vmatprep.subr.mxu0 0.0
      %1412 = vmatpush1.msra.mxu0 0.0
      %1413 = vmatprep.subr.mxu0 0.0
      %1414 = vmatpush1.msra.mxu0 0.0
      %1415 = vmatprep.subr.mxu0 0.0
      %1416 = vmatpush1.msra.mxu0 0.0
      %1417 = vmatprep.subr.mxu0 0.0
      %1418 = vmatpush1.msra.mxu0 0.0
      %1419 = vmatprep.subr.mxu0 0.0
      %1420 = vmatpush1.msra.mxu0 0.0
      %1421 = vmatprep.subr.mxu0 0.0
      %1422 = vmatpush1.msra.mxu0 0.0
      %1423 = vmatprep.mubr.f32.mxu0 0.0
      %1424 = vmatmul.mubr.f32.gmra.mrb[0].mxu0 %v1312
      %v1425 = vpop.f32.mrb[0].mxu0
      %v1426 = vadd.f32 %v1233, %v1425
      %v1427 = vpop.f32.mrb[0].mxu0
      %1428 = vmatprep.mubr.f32.mxu0 0.0
      %1429 = vmatmul.mubr.f32.gmra.mrb[0].mxu0 %v1315
      %v1430 = vpop.f32.mrb[0].mxu0
      %v1431 = vadd.f32 %v1238, %v1430
      %v1432 = vpop.f32.mrb[0].mxu0
      %1433 = vmatprep.mubr.f32.mxu0 0.0
      %1434 = vmatmul.mubr.f32.gmra.mrb[0].mxu0 %v1318
      %v1435 = vpop.f32.mrb[0].mxu0
      %v1436 = vadd.f32 %v1243, %v1435
      %v1437 = vpop.f32.mrb[0].mxu0
      %1438 = vmatprep.mubr.f32.mxu0 0.0
      %1439 = vmatmul.mubr.f32.gmra.mrb[0].mxu0 %v1321
      %v1440 = vpop.f32.mrb[0].mxu0
      %v1441 = vadd.f32 %v1248, %v1440
      %v1442 = vpop.f32.mrb[0].mxu0
      %1443 = vmatprep.mubr.f32.mxu0 0.0
      %1444 = vmatmul.mubr.f32.gmra.mrb[0].mxu0 %v1324
      %v1445 = vpop.f32.mrb[0].mxu0
      %v1446 = vadd.f32 %v1253, %v1445
      %v1447 = vpop.f32.mrb[0].mxu0
      %1448 = vmatprep.mubr.f32.mxu0 0.0
      %1449 = vmatmul.mubr.f32.gmra.mrb[0].mxu0 %v1327
      %v1450 = vpop.f32.mrb[0].mxu0
      %v1451 = vadd.f32 %v1258, %v1450
      %v1452 = vpop.f32.mrb[0].mxu0
      %1453 = vmatprep.mubr.f32.mxu0 0.0
      %1454 = vmatmul.mubr.f32.gmra.mrb[0].mxu0 %v1330
      %v1455 = vpop.f32.mrb[0].mxu0
      %v1456 = vadd.f32 %v1263, %v1455
      %v1457 = vpop.f32.mrb[0].mxu0
      %1458 = vmatprep.mubr.f32.mxu0 0.0
      %1459 = vmatmul.mubr.f32.gmra.mrb[0].mxu0 %v1333
      %v1460 = vpop.f32.mrb[0].mxu0
      %v1461 = vadd.f32 %v1268, %v1460
      %v1462 = vpop.f32.mrb[0].mxu0
      %1463 = vmatprep.mubr.f32.mxu0 0.0
      %1464 = vmatmul.mubr.f32.gmra.mrb[0].mxu0 %v1336
      %v1465 = vpop.f32.mrb[0].mxu0
      %v1466 = vadd.f32 %v1273, %v1465
      %v1467 = vpop.f32.mrb[0].mxu0
      %1468 = vmatprep.mubr.f32.mxu0 0.0
      %1469 = vmatmul.mubr.f32.gmra.mrb[0].mxu0 %v1339
      %v1470 = vpop.f32.mrb[0].mxu0
      %v1471 = vadd.f32 %v1278, %v1470
      %v1472 = vpop.f32.mrb[0].mxu0
      %1473 = vmatprep.mubr.f32.mxu0 0.0
      %1474 = vmatmul.mubr.f32.gmra.mrb[0].mxu0 %v1342
      %v1475 = vpop.f32.mrb[0].mxu0
      %v1476 = vadd.f32 %v1283, %v1475
      %v1477 = vpop.f32.mrb[0].mxu0
      %1478 = vmatprep.mubr.f32.mxu0 0.0
      %1479 = vmatmul.mubr.f32.gmra.mrb[0].mxu0 %v1345
      %v1480 = vpop.f32.mrb[0].mxu0
      %v1481 = vadd.f32 %v1288, %v1480
      %v1482 = vpop.f32.mrb[0].mxu0
      %1483 = vmatprep.mubr.f32.mxu0 0.0
      %1484 = vmatmul.mubr.f32.gmra.mrb[0].mxu0 %v1348
      %v1485 = vpop.f32.mrb[0].mxu0
      %v1486 = vadd.f32 %v1293, %v1485
      %v1487 = vpop.f32.mrb[0].mxu0
      %1488 = vmatprep.mubr.f32.mxu0 0.0
      %1489 = vmatmul.mubr.f32.gmra.mrb[0].mxu0 %v1351
      %v1490 = vpop.f32.mrb[0].mxu0
      %v1491 = vadd.f32 %v1298, %v1490
      %v1492 = vpop.f32.mrb[0].mxu0
      %1493 = vmatprep.mubr.f32.mxu0 0.0
      %1494 = vmatmul.mubr.f32.gmra.mrb[0].mxu0 %v1354
      %v1495 = vpop.f32.mrb[0].mxu0
      %v1496 = vadd.f32 %v1303, %v1495
      %v1497 = vpop.f32.mrb[0].mxu0
      %1498 = vmatprep.mubr.f32.mxu0 0.0
      %1499 = vmatmul.mubr.f32.gmra.mrb[0].mxu0 %v1357
      %v1500 = vpop.f32.mrb[0].mxu0
      %v1501 = vadd.f32 %v1308, %v1500
      %v1502 = vpop.f32.mrb[0].mxu0
      %1503 = vdwg.mxu0
      %v1504 = vlaneseq
      %v1505 = vshrl.u32 %v1504, 7
      %v1506 = vsub.s32 0, %v1505
      %v1507 = vrot.slane %v432, %v1506
      %v1508 = vadd.f32 %v1426, %v1507
      %v1509 = vadd.f32 %v1431, %v1507
      %v1510 = vadd.f32 %v1436, %v1507
      %v1511 = vadd.f32 %v1441, %v1507
      %v1512 = vadd.f32 %v1446, %v1507
      %v1513 = vadd.f32 %v1451, %v1507
      %v1514 = vadd.f32 %v1456, %v1507
      %v1515 = vadd.f32 %v1461, %v1507
      %v1516 = vadd.f32 %v1466, %v1507
      %v1517 = vadd.f32 %v1471, %v1507
      %v1518 = vadd.f32 %v1476, %v1507
      %v1519 = vadd.f32 %v1481, %v1507
      %v1520 = vadd.f32 %v1486, %v1507
      %v1521 = vadd.f32 %v1491, %v1507
      %v1522 = vadd.f32 %v1496, %v1507
      %v1523 = vadd.f32 %v1501, %v1507
      %v1524 = vmax.f32 %v1508, 0.0
      %v1525 = vmax.f32 %v1509, 0.0
      %v1526 = vmax.f32 %v1510, 0.0
      %v1527 = vmax.f32 %v1511, 0.0
      %v1528 = vmax.f32 %v1512, 0.0
      %v1529 = vmax.f32 %v1513, 0.0
      %v1530 = vmax.f32 %v1514, 0.0
      %v1531 = vmax.f32 %v1515, 0.0
      %v1532 = vmax.f32 %v1516, 0.0
      %v1533 = vmax.f32 %v1517, 0.0
      %v1534 = vmax.f32 %v1518, 0.0
      %v1535 = vmax.f32 %v1519, 0.0
      %v1536 = vmax.f32 %v1520, 0.0
      %v1537 = vmax.f32 %v1521, 0.0
      %v1538 = vmax.f32 %v1522, 0.0
      %v1539 = vmax.f32 %v1523, 0.0
      %vm1540 = vcmask 261120
      %v1541 = vsel %vm1540, %v1524, 0.0
      %v1542 = vsel %vm1540, %v1525, 0.0
      %v1543 = vadd.f32 %v1541, %v1542
      %v1544 = vrot.slane %v1543, 4
      %v1545 = vadd.f32 %v1543, %v1544
      %v1546 = vrot.slane %v1545, 2
      %v1547 = vadd.f32 %v1545, %v1546
      %v1548 = vrot.slane %v1547, 1
      %v1549 = vadd.f32 %v1547, %v1548
      %v1550 = vsel %vm1540, %v1526, 0.0
      %v1551 = vsel %vm1540, %v1527, 0.0
      %v1552 = vadd.f32 %v1550, %v1551
      %v1553 = vrot.slane %v1552, 4
      %v1554 = vadd.f32 %v1552, %v1553
      %v1555 = vrot.slane %v1554, 2
      %v1556 = vadd.f32 %v1554, %v1555
      %v1557 = vrot.slane %v1556, 1
      %v1558 = vadd.f32 %v1556, %v1557
      %v1559 = vsel %vm1540, %v1528, 0.0
      %v1560 = vsel %vm1540, %v1529, 0.0
      %v1561 = vadd.f32 %v1559, %v1560
      %v1562 = vrot.slane %v1561, 4
      %v1563 = vadd.f32 %v1561, %v1562
      %v1564 = vrot.slane %v1563, 2
      %v1565 = vadd.f32 %v1563, %v1564
      %v1566 = vrot.slane %v1565, 1
      %v1567 = vadd.f32 %v1565, %v1566
      %v1568 = vsel %vm1540, %v1530, 0.0
      %v1569 = vsel %vm1540, %v1531, 0.0
      %v1570 = vadd.f32 %v1568, %v1569
      %v1571 = vrot.slane %v1570, 4
      %v1572 = vadd.f32 %v1570, %v1571
      %v1573 = vrot.slane %v1572, 2
      %v1574 = vadd.f32 %v1572, %v1573
      %v1575 = vrot.slane %v1574, 1
      %v1576 = vadd.f32 %v1574, %v1575
      %v1577 = vsel %vm1540, %v1532, 0.0
      %v1578 = vsel %vm1540, %v1533, 0.0
      %v1579 = vadd.f32 %v1577, %v1578
      %v1580 = vrot.slane %v1579, 4
      %v1581 = vadd.f32 %v1579, %v1580
      %v1582 = vrot.slane %v1581, 2
      %v1583 = vadd.f32 %v1581, %v1582
      %v1584 = vrot.slane %v1583, 1
      %v1585 = vadd.f32 %v1583, %v1584
      %v1586 = vsel %vm1540, %v1534, 0.0
      %v1587 = vsel %vm1540, %v1535, 0.0
      %v1588 = vadd.f32 %v1586, %v1587
      %v1589 = vrot.slane %v1588, 4
      %v1590 = vadd.f32 %v1588, %v1589
      %v1591 = vrot.slane %v1590, 2
      %v1592 = vadd.f32 %v1590, %v1591
      %v1593 = vrot.slane %v1592, 1
      %v1594 = vadd.f32 %v1592, %v1593
      %v1595 = vsel %vm1540, %v1536, 0.0
      %v1596 = vsel %vm1540, %v1537, 0.0
      %v1597 = vadd.f32 %v1595, %v1596
      %v1598 = vrot.slane %v1597, 4
      %v1599 = vadd.f32 %v1597, %v1598
      %v1600 = vrot.slane %v1599, 2
      %v1601 = vadd.f32 %v1599, %v1600
      %v1602 = vrot.slane %v1601, 1
      %v1603 = vadd.f32 %v1601, %v1602
      %v1604 = vsel %vm1540, %v1538, 0.0
      %v1605 = vsel %vm1540, %v1539, 0.0
      %v1606 = vadd.f32 %v1604, %v1605
      %v1607 = vrot.slane %v1606, 4
      %v1608 = vadd.f32 %v1606, %v1607
      %v1609 = vrot.slane %v1608, 2
      %v1610 = vadd.f32 %v1608, %v1609
      %v1611 = vrot.slane %v1610, 1
      %v1612 = vadd.f32 %v1610, %v1611
      %v1613 = vrcp.pop 16.0
      %v1614 = vmul.f32 %v1549, %v1613
      %v1615 = vmul.f32 %v1558, %v1613
      %v1616 = vmul.f32 %v1567, %v1613
      %v1617 = vmul.f32 %v1576, %v1613
      %v1618 = vmul.f32 %v1585, %v1613
      %v1619 = vmul.f32 %v1594, %v1613
      %v1620 = vmul.f32 %v1603, %v1613
      %v1621 = vmul.f32 %v1612, %v1613
      %v1622 = vsub.f32 %v1524, %v1614
      %v1623 = vsub.f32 %v1525, %v1614
      %v1624 = vsub.f32 %v1526, %v1615
      %v1625 = vsub.f32 %v1527, %v1615
      %v1626 = vsub.f32 %v1528, %v1616
      %v1627 = vsub.f32 %v1529, %v1616
      %v1628 = vsub.f32 %v1530, %v1617
      %v1629 = vsub.f32 %v1531, %v1617
      %v1630 = vsub.f32 %v1532, %v1618
      %v1631 = vsub.f32 %v1533, %v1618
      %v1632 = vsub.f32 %v1534, %v1619
      %v1633 = vsub.f32 %v1535, %v1619
      %v1634 = vsub.f32 %v1536, %v1620
      %v1635 = vsub.f32 %v1537, %v1620
      %v1636 = vsub.f32 %v1538, %v1621
      %v1637 = vsub.f32 %v1539, %v1621
      %v1638 = vmul.f32 %v1622, %v1622
      %v1639 = vmul.f32 %v1623, %v1623
      %v1640 = vmul.f32 %v1624, %v1624
      %v1641 = vmul.f32 %v1625, %v1625
      %v1642 = vmul.f32 %v1626, %v1626
      %v1643 = vmul.f32 %v1627, %v1627
      %v1644 = vmul.f32 %v1628, %v1628
      %v1645 = vmul.f32 %v1629, %v1629
      %v1646 = vmul.f32 %v1630, %v1630
      %v1647 = vmul.f32 %v1631, %v1631
      %v1648 = vmul.f32 %v1632, %v1632
      %v1649 = vmul.f32 %v1633, %v1633
      %v1650 = vmul.f32 %v1634, %v1634
      %v1651 = vmul.f32 %v1635, %v1635
      %v1652 = vmul.f32 %v1636, %v1636
      %v1653 = vmul.f32 %v1637, %v1637
      %v1654 = vsel %vm1540, %v1638, 0.0
      %v1655 = vsel %vm1540, %v1639, 0.0
      %v1656 = vadd.f32 %v1654, %v1655
      %v1657 = vrot.slane %v1656, 4
      %v1658 = vadd.f32 %v1656, %v1657
      %v1659 = vrot.slane %v1658, 2
      %v1660 = vadd.f32 %v1658, %v1659
      %v1661 = vrot.slane %v1660, 1
      %v1662 = vadd.f32 %v1660, %v1661
      %v1663 = vsel %vm1540, %v1640, 0.0
      %v1664 = vsel %vm1540, %v1641, 0.0
      %v1665 = vadd.f32 %v1663, %v1664
      %v1666 = vrot.slane %v1665, 4
      %v1667 = vadd.f32 %v1665, %v1666
      %v1668 = vrot.slane %v1667, 2
      %v1669 = vadd.f32 %v1667, %v1668
      %v1670 = vrot.slane %v1669, 1
      %v1671 = vadd.f32 %v1669, %v1670
      %v1672 = vsel %vm1540, %v1642, 0.0
      %v1673 = vsel %vm1540, %v1643, 0.0
      %v1674 = vadd.f32 %v1672, %v1673
      %v1675 = vrot.slane %v1674, 4
      %v1676 = vadd.f32 %v1674, %v1675
      %v1677 = vrot.slane %v1676, 2
      %v1678 = vadd.f32 %v1676, %v1677
      %v1679 = vrot.slane %v1678, 1
      %v1680 = vadd.f32 %v1678, %v1679
      %v1681 = vsel %vm1540, %v1644, 0.0
      %v1682 = vsel %vm1540, %v1645, 0.0
      %v1683 = vadd.f32 %v1681, %v1682
      %v1684 = vrot.slane %v1683, 4
      %v1685 = vadd.f32 %v1683, %v1684
      %v1686 = vrot.slane %v1685, 2
      %v1687 = vadd.f32 %v1685, %v1686
      %v1688 = vrot.slane %v1687, 1
      %v1689 = vadd.f32 %v1687, %v1688
      %v1690 = vsel %vm1540, %v1646, 0.0
      %v1691 = vsel %vm1540, %v1647, 0.0
      %v1692 = vadd.f32 %v1690, %v1691
      %v1693 = vrot.slane %v1692, 4
      %v1694 = vadd.f32 %v1692, %v1693
      %v1695 = vrot.slane %v1694, 2
      %v1696 = vadd.f32 %v1694, %v1695
      %v1697 = vrot.slane %v1696, 1
      %v1698 = vadd.f32 %v1696, %v1697
      %v1699 = vsel %vm1540, %v1648, 0.0
      %v1700 = vsel %vm1540, %v1649, 0.0
      %v1701 = vadd.f32 %v1699, %v1700
      %v1702 = vrot.slane %v1701, 4
      %v1703 = vadd.f32 %v1701, %v1702
      %v1704 = vrot.slane %v1703, 2
      %v1705 = vadd.f32 %v1703, %v1704
      %v1706 = vrot.slane %v1705, 1
      %v1707 = vadd.f32 %v1705, %v1706
      %v1708 = vsel %vm1540, %v1650, 0.0
      %v1709 = vsel %vm1540, %v1651, 0.0
      %v1710 = vadd.f32 %v1708, %v1709
      %v1711 = vrot.slane %v1710, 4
      %v1712 = vadd.f32 %v1710, %v1711
      %v1713 = vrot.slane %v1712, 2
      %v1714 = vadd.f32 %v1712, %v1713
      %v1715 = vrot.slane %v1714, 1
      %v1716 = vadd.f32 %v1714, %v1715
      %v1717 = vsel %vm1540, %v1652, 0.0
      %v1718 = vsel %vm1540, %v1653, 0.0
      %v1719 = vadd.f32 %v1717, %v1718
      %v1720 = vrot.slane %v1719, 4
      %v1721 = vadd.f32 %v1719, %v1720
      %v1722 = vrot.slane %v1721, 2
      %v1723 = vadd.f32 %v1721, %v1722
      %v1724 = vrot.slane %v1723, 1
      %v1725 = vadd.f32 %v1723, %v1724
      %v1726 = vmul.f32 %v1662, %v1613
      %v1727 = vmul.f32 %v1671, %v1613
      %v1728 = vmul.f32 %v1680, %v1613
      %v1729 = vmul.f32 %v1689, %v1613
      %v1730 = vmul.f32 %v1698, %v1613
      %v1731 = vmul.f32 %v1707, %v1613
      %v1732 = vmul.f32 %v1716, %v1613
      %v1733 = vmul.f32 %v1725, %v1613
      %v1734 = vadd.f32 %v1726, 1e-05
      %v1735 = vadd.f32 %v1727, 1e-05
      %v1736 = vadd.f32 %v1728, 1e-05
      %v1737 = vadd.f32 %v1729, 1e-05
      %v1738 = vadd.f32 %v1730, 1e-05
      %v1739 = vadd.f32 %v1731, 1e-05
      %v1740 = vadd.f32 %v1732, 1e-05
      %v1741 = vadd.f32 %v1733, 1e-05
      %v1742 = vrsqrt.pop %v1734
      %v1743 = vrsqrt.pop %v1735
      %v1744 = vrsqrt.pop %v1736
      %v1745 = vrsqrt.pop %v1737
      %v1746 = vrsqrt.pop %v1738
      %v1747 = vrsqrt.pop %v1739
      %v1748 = vrsqrt.pop %v1740
      %v1749 = vrsqrt.pop %v1741
      %v1750 = vmul.f32 %v432, %v1742
      %v1751 = vmul.f32 %v432, %v1743
      %v1752 = vmul.f32 %v432, %v1744
      %v1753 = vmul.f32 %v432, %v1745
      %v1754 = vmul.f32 %v432, %v1746
      %v1755 = vmul.f32 %v432, %v1747
      %v1756 = vmul.f32 %v432, %v1748
      %v1757 = vmul.f32 %v432, %v1749
      %v1758 = vmul.f32 %v1614, %v1750
      %v1759 = vmul.f32 %v1615, %v1751
      %v1760 = vmul.f32 %v1616, %v1752
      %v1761 = vmul.f32 %v1617, %v1753
      %v1762 = vmul.f32 %v1618, %v1754
      %v1763 = vmul.f32 %v1619, %v1755
      %v1764 = vmul.f32 %v1620, %v1756
      %v1765 = vmul.f32 %v1621, %v1757
      %v1774 = vrot.slane %v1758, 7
      %v1775 = vrot.slane %v1759, 7
      %v1776 = vrot.slane %v1760, 7
      %v1777 = vrot.slane %v1761, 7
      %v1778 = vrot.slane %v1762, 7
      %v1779 = vrot.slane %v1763, 7
      %v1780 = vrot.slane %v1764, 7
      %v1781 = vrot.slane %v1765, 7
      %v1790 = vsub.f32 %v432, %v1774
      %v1791 = vsub.f32 %v432, %v1775
      %v1792 = vsub.f32 %v432, %v1776
      %v1793 = vsub.f32 %v432, %v1777
      %v1794 = vsub.f32 %v432, %v1778
      %v1795 = vsub.f32 %v432, %v1779
      %v1796 = vsub.f32 %v432, %v1780
      %v1797 = vsub.f32 %v432, %v1781
      %v1798 = vlaneseq
      %v1799 = vshrl.u32 %v1798, 7
      %v1800 = vsub.s32 1, %v1799
      %v1801 = vrot.slane %v1750, %v1800
      %v1802 = vlaneseq
      %v1803 = vshrl.u32 %v1802, 7
      %v1804 = vsub.s32 1, %v1803
      %v1805 = vrot.slane %v1751, %v1804
      %v1806 = vlaneseq
      %v1807 = vshrl.u32 %v1806, 7
      %v1808 = vsub.s32 1, %v1807
      %v1809 = vrot.slane %v1752, %v1808
      %v1810 = vlaneseq
      %v1811 = vshrl.u32 %v1810, 7
      %v1812 = vsub.s32 1, %v1811
      %v1813 = vrot.slane %v1753, %v1812
      %v1814 = vlaneseq
      %v1815 = vshrl.u32 %v1814, 7
      %v1816 = vsub.s32 1, %v1815
      %v1817 = vrot.slane %v1754, %v1816
      %v1818 = vlaneseq
      %v1819 = vshrl.u32 %v1818, 7
      %v1820 = vsub.s32 1, %v1819
      %v1821 = vrot.slane %v1755, %v1820
      %v1822 = vlaneseq
      %v1823 = vshrl.u32 %v1822, 7
      %v1824 = vsub.s32 1, %v1823
      %v1825 = vrot.slane %v1756, %v1824
      %v1826 = vlaneseq
      %v1827 = vshrl.u32 %v1826, 7
      %v1828 = vsub.s32 1, %v1827
      %v1829 = vrot.slane %v1757, %v1828
      %v1830 = vmul.f32 %v1524, %v1801
      %v1831 = vmul.f32 %v1525, %v1801
      %v1832 = vmul.f32 %v1526, %v1805
      %v1833 = vmul.f32 %v1527, %v1805
      %v1834 = vmul.f32 %v1528, %v1809
      %v1835 = vmul.f32 %v1529, %v1809
      %v1836 = vmul.f32 %v1530, %v1813
      %v1837 = vmul.f32 %v1531, %v1813
      %v1838 = vmul.f32 %v1532, %v1817
      %v1839 = vmul.f32 %v1533, %v1817
      %v1840 = vmul.f32 %v1534, %v1821
      %v1841 = vmul.f32 %v1535, %v1821
      %v1842 = vmul.f32 %v1536, %v1825
      %v1843 = vmul.f32 %v1537, %v1825
      %v1844 = vmul.f32 %v1538, %v1829
      %v1845 = vmul.f32 %v1539, %v1829
      %v1846 = vlaneseq
      %v1847 = vshrl.u32 %v1846, 7
      %v1848 = vsub.s32 2, %v1847
      %v1849 = vrot.slane %v1790, %v1848
      %v1850 = vlaneseq
      %v1851 = vshrl.u32 %v1850, 7
      %v1852 = vsub.s32 2, %v1851
      %v1853 = vrot.slane %v1791, %v1852
      %v1854 = vlaneseq
      %v1855 = vshrl.u32 %v1854, 7
      %v1856 = vsub.s32 2, %v1855
      %v1857 = vrot.slane %v1792, %v1856
      %v1858 = vlaneseq
      %v1859 = vshrl.u32 %v1858, 7
      %v1860 = vsub.s32 2, %v1859
      %v1861 = vrot.slane %v1793, %v1860
      %v1862 = vlaneseq
      %v1863 = vshrl.u32 %v1862, 7
      %v1864 = vsub.s32 2, %v1863
      %v1865 = vrot.slane %v1794, %v1864
      %v1866 = vlaneseq
      %v1867 = vshrl.u32 %v1866, 7
      %v1868 = vsub.s32 2, %v1867
      %v1869 = vrot.slane %v1795, %v1868
      %v1870 = vlaneseq
      %v1871 = vshrl.u32 %v1870, 7
      %v1872 = vsub.s32 2, %v1871
      %v1873 = vrot.slane %v1796, %v1872
      %v1874 = vlaneseq
      %v1875 = vshrl.u32 %v1874, 7
      %v1876 = vsub.s32 2, %v1875
      %v1877 = vrot.slane %v1797, %v1876
      %v1878 = vadd.f32 %v1830, %v1849
      %v1879 = vadd.f32 %v1831, %v1849
      %v1880 = vadd.f32 %v1832, %v1853
      %v1881 = vadd.f32 %v1833, %v1853
      %v1882 = vadd.f32 %v1834, %v1857
      %v1883 = vadd.f32 %v1835, %v1857
      %v1884 = vadd.f32 %v1836, %v1861
      %v1885 = vadd.f32 %v1837, %v1861
      %v1886 = vadd.f32 %v1838, %v1865
      %v1887 = vadd.f32 %v1839, %v1865
      %v1888 = vadd.f32 %v1840, %v1869
      %v1889 = vadd.f32 %v1841, %v1869
      %v1890 = vadd.f32 %v1842, %v1873
      %v1891 = vadd.f32 %v1843, %v1873
      %v1892 = vadd.f32 %v1844, %v1877
      %v1893 = vadd.f32 %v1845, %v1877
      %1894 = vmatprep.subr.mxu0 0.0
      %1895 = vmatpush1.msra.mxu0 %v1878
      %1896 = vmatprep.subr.mxu0 0.0
      %1897 = vmatpush1.msra.mxu0 %v1879
      %1898 = vmatprep.subr.mxu0 0.0
      %1899 = vmatpush1.msra.mxu0 0.0
      %1900 = vmatprep.subr.mxu0 0.0
      %1901 = vmatpush1.msra.mxu0 0.0
      %1902 = vmatprep.subr.mxu0 0.0
      %1903 = vmatpush1.msra.mxu0 0.0
      %1904 = vmatprep.subr.mxu0 0.0
      %1905 = vmatpush1.msra.mxu0 0.0
      %1906 = vmatprep.subr.mxu0 0.0
      %1907 = vmatpush1.msra.mxu0 0.0
      %1908 = vmatprep.subr.mxu0 0.0
      %1909 = vmatpush1.msra.mxu0 0.0
      %1910 = vmatprep.subr.mxu0 0.0
      %1911 = vmatpush1.msra.mxu0 0.0
      %1912 = vmatprep.subr.mxu0 0.0
      %1913 = vmatpush1.msra.mxu0 0.0
      %1914 = vmatprep.subr.mxu0 0.0
      %1915 = vmatpush1.msra.mxu0 0.0
      %1916 = vmatprep.subr.mxu0 0.0
      %1917 = vmatpush1.msra.mxu0 0.0
      %1918 = vmatprep.subr.mxu0 0.0
      %1919 = vmatpush1.msra.mxu0 0.0
      %1920 = vmatprep.subr.mxu0 0.0
      %1921 = vmatpush1.msra.mxu0 0.0
      %1922 = vmatprep.subr.mxu0 0.0
      %1923 = vmatpush1.msra.mxu0 0.0
      %1924 = vmatprep.subr.mxu0 0.0
      %1925 = vmatpush1.msra.mxu0 0.0
      %1926 = vmatprep.subr.mxu0 0.0
      %1927 = vmatpush1.msra.mxu0 0.0
      %1928 = vmatprep.subr.mxu0 0.0
      %1929 = vmatpush1.msra.mxu0 0.0
      %1930 = vmatprep.subr.mxu0 0.0
      %1931 = vmatpush1.msra.mxu0 0.0
      %1932 = vmatprep.subr.mxu0 0.0
      %1933 = vmatpush1.msra.mxu0 0.0
      %1934 = vmatprep.subr.mxu0 0.0
      %1935 = vmatpush1.msra.mxu0 0.0
      %1936 = vmatprep.subr.mxu0 0.0
      %1937 = vmatpush1.msra.mxu0 0.0
      %1938 = vmatprep.subr.mxu0 0.0
      %1939 = vmatpush1.msra.mxu0 0.0
      %1940 = vmatprep.subr.mxu0 0.0
      %1941 = vmatpush1.msra.mxu0 0.0
      %1942 = vmatprep.subr.mxu0 0.0
      %1943 = vmatpush1.msra.mxu0 0.0
      %1944 = vmatprep.subr.mxu0 0.0
      %1945 = vmatpush1.msra.mxu0 0.0
      %1946 = vmatprep.subr.mxu0 0.0
      %1947 = vmatpush1.msra.mxu0 0.0
      %1948 = vmatprep.subr.mxu0 0.0
      %1949 = vmatpush1.msra.mxu0 0.0
      %1950 = vmatprep.subr.mxu0 0.0
      %1951 = vmatpush1.msra.mxu0 0.0
      %1952 = vmatprep.subr.mxu0 0.0
      %1953 = vmatpush1.msra.mxu0 0.0
      %1954 = vmatprep.subr.mxu0 0.0
      %1955 = vmatpush1.msra.mxu0 0.0
      %1956 = vmatprep.subr.mxu0 0.0
      %1957 = vmatpush1.msra.mxu0 0.0
      %1958 = vmatprep.mubr.f32.mxu0 0.0
      %1959 = vmatmul.mubr.f32.gmra.mrb[0].mxu0 %v470
      %v1960 = vpop.f32.mrb[0].mxu0
      %v1961 = vadd.f32 0.0, %v1960
      %v1962 = vpop.f32.mrb[0].mxu0
      %1963 = vmatprep.mubr.f32.mxu0 0.0
      %1964 = vmatmul.mubr.f32.gmra.mrb[0].mxu0 %v473
      %v1965 = vpop.f32.mrb[0].mxu0
      %v1966 = vadd.f32 0.0, %v1965
      %v1967 = vpop.f32.mrb[0].mxu0
      %1968 = vdwg.mxu0
      %1969 = vmatprep.subr.mxu0 0.0
      %1970 = vmatpush1.msra.mxu0 %v1880
      %1971 = vmatprep.subr.mxu0 0.0
      %1972 = vmatpush1.msra.mxu0 %v1881
      %1973 = vmatprep.subr.mxu0 0.0
      %1974 = vmatpush1.msra.mxu0 0.0
      %1975 = vmatprep.subr.mxu0 0.0
      %1976 = vmatpush1.msra.mxu0 0.0
      %1977 = vmatprep.subr.mxu0 0.0
      %1978 = vmatpush1.msra.mxu0 0.0
      %1979 = vmatprep.subr.mxu0 0.0
      %1980 = vmatpush1.msra.mxu0 0.0
      %1981 = vmatprep.subr.mxu0 0.0
      %1982 = vmatpush1.msra.mxu0 0.0
      %1983 = vmatprep.subr.mxu0 0.0
      %1984 = vmatpush1.msra.mxu0 0.0
      %1985 = vmatprep.subr.mxu0 0.0
      %1986 = vmatpush1.msra.mxu0 0.0
      %1987 = vmatprep.subr.mxu0 0.0
      %1988 = vmatpush1.msra.mxu0 0.0
      %1989 = vmatprep.subr.mxu0 0.0
      %1990 = vmatpush1.msra.mxu0 0.0
      %1991 = vmatprep.subr.mxu0 0.0
      %1992 = vmatpush1.msra.mxu0 0.0
      %1993 = vmatprep.subr.mxu0 0.0
      %1994 = vmatpush1.msra.mxu0 0.0
      %1995 = vmatprep.subr.mxu0 0.0
      %1996 = vmatpush1.msra.mxu0 0.0
      %1997 = vmatprep.subr.mxu0 0.0
      %1998 = vmatpush1.msra.mxu0 0.0
      %1999 = vmatprep.subr.mxu0 0.0
      %2000 = vmatpush1.msra.mxu0 0.0
      %2001 = vmatprep.subr.mxu0 0.0
      %2002 = vmatpush1.msra.mxu0 0.0
      %2003 = vmatprep.subr.mxu0 0.0
      %2004 = vmatpush1.msra.mxu0 0.0
      %2005 = vmatprep.subr.mxu0 0.0
      %2006 = vmatpush1.msra.mxu0 0.0
      %2007 = vmatprep.subr.mxu0 0.0
      %2008 = vmatpush1.msra.mxu0 0.0
      %2009 = vmatprep.subr.mxu0 0.0
      %2010 = vmatpush1.msra.mxu0 0.0
      %2011 = vmatprep.subr.mxu0 0.0
      %2012 = vmatpush1.msra.mxu0 0.0
      %2013 = vmatprep.subr.mxu0 0.0
      %2014 = vmatpush1.msra.mxu0 0.0
      %2015 = vmatprep.subr.mxu0 0.0
      %2016 = vmatpush1.msra.mxu0 0.0
      %2017 = vmatprep.subr.mxu0 0.0
      %2018 = vmatpush1.msra.mxu0 0.0
      %2019 = vmatprep.subr.mxu0 0.0
      %2020 = vmatpush1.msra.mxu0 0.0
      %2021 = vmatprep.subr.mxu0 0.0
      %2022 = vmatpush1.msra.mxu0 0.0
      %2023 = vmatprep.subr.mxu0 0.0
      %2024 = vmatpush1.msra.mxu0 0.0
      %2025 = vmatprep.subr.mxu0 0.0
      %2026 = vmatpush1.msra.mxu0 0.0
      %2027 = vmatprep.subr.mxu0 0.0
      %2028 = vmatpush1.msra.mxu0 0.0
      %2029 = vmatprep.subr.mxu0 0.0
      %2030 = vmatpush1.msra.mxu0 0.0
      %2031 = vmatprep.subr.mxu0 0.0
      %2032 = vmatpush1.msra.mxu0 0.0
      %2033 = vmatprep.mubr.f32.mxu0 0.0
      %2034 = vmatmul.mubr.f32.gmra.mrb[0].mxu0 %v551
      %v2035 = vpop.f32.mrb[0].mxu0
      %v2036 = vadd.f32 0.0, %v2035
      %v2037 = vpop.f32.mrb[0].mxu0
      %2038 = vmatprep.mubr.f32.mxu0 0.0
      %2039 = vmatmul.mubr.f32.gmra.mrb[0].mxu0 %v554
      %v2040 = vpop.f32.mrb[0].mxu0
      %v2041 = vadd.f32 0.0, %v2040
      %v2042 = vpop.f32.mrb[0].mxu0
      %2043 = vdwg.mxu0
      %2044 = vmatprep.subr.mxu0 0.0
      %2045 = vmatpush1.msra.mxu0 %v1882
      %2046 = vmatprep.subr.mxu0 0.0
      %2047 = vmatpush1.msra.mxu0 %v1883
      %2048 = vmatprep.subr.mxu0 0.0
      %2049 = vmatpush1.msra.mxu0 0.0
      %2050 = vmatprep.subr.mxu0 0.0
      %2051 = vmatpush1.msra.mxu0 0.0
      %2052 = vmatprep.subr.mxu0 0.0
      %2053 = vmatpush1.msra.mxu0 0.0
      %2054 = vmatprep.subr.mxu0 0.0
      %2055 = vmatpush1.msra.mxu0 0.0
      %2056 = vmatprep.subr.mxu0 0.0
      %2057 = vmatpush1.msra.mxu0 0.0
      %2058 = vmatprep.subr.mxu0 0.0
      %2059 = vmatpush1.msra.mxu0 0.0
      %2060 = vmatprep.subr.mxu0 0.0
      %2061 = vmatpush1.msra.mxu0 0.0
      %2062 = vmatprep.subr.mxu0 0.0
      %2063 = vmatpush1.msra.mxu0 0.0
      %2064 = vmatprep.subr.mxu0 0.0
      %2065 = vmatpush1.msra.mxu0 0.0
      %2066 = vmatprep.subr.mxu0 0.0
      %2067 = vmatpush1.msra.mxu0 0.0
      %2068 = vmatprep.subr.mxu0 0.0
      %2069 = vmatpush1.msra.mxu0 0.0
      %2070 = vmatprep.subr.mxu0 0.0
      %2071 = vmatpush1.msra.mxu0 0.0
      %2072 = vmatprep.subr.mxu0 0.0
      %2073 = vmatpush1.msra.mxu0 0.0
      %2074 = vmatprep.subr.mxu0 0.0
      %2075 = vmatpush1.msra.mxu0 0.0
      %2076 = vmatprep.subr.mxu0 0.0
      %2077 = vmatpush1.msra.mxu0 0.0
      %2078 = vmatprep.subr.mxu0 0.0
      %2079 = vmatpush1.msra.mxu0 0.0
      %2080 = vmatprep.subr.mxu0 0.0
      %2081 = vmatpush1.msra.mxu0 0.0
      %2082 = vmatprep.subr.mxu0 0.0
      %2083 = vmatpush1.msra.mxu0 0.0
      %2084 = vmatprep.subr.mxu0 0.0
      %2085 = vmatpush1.msra.mxu0 0.0
      %2086 = vmatprep.subr.mxu0 0.0
      %2087 = vmatpush1.msra.mxu0 0.0
      %2088 = vmatprep.subr.mxu0 0.0
      %2089 = vmatpush1.msra.mxu0 0.0
      %2090 = vmatprep.subr.mxu0 0.0
      %2091 = vmatpush1.msra.mxu0 0.0
      %2092 = vmatprep.subr.mxu0 0.0
      %2093 = vmatpush1.msra.mxu0 0.0
      %2094 = vmatprep.subr.mxu0 0.0
      %2095 = vmatpush1.msra.mxu0 0.0
      %2096 = vmatprep.subr.mxu0 0.0
      %2097 = vmatpush1.msra.mxu0 0.0
      %2098 = vmatprep.subr.mxu0 0.0
      %2099 = vmatpush1.msra.mxu0 0.0
      %2100 = vmatprep.subr.mxu0 0.0
      %2101 = vmatpush1.msra.mxu0 0.0
      %2102 = vmatprep.subr.mxu0 0.0
      %2103 = vmatpush1.msra.mxu0 0.0
      %2104 = vmatprep.subr.mxu0 0.0
      %2105 = vmatpush1.msra.mxu0 0.0
      %2106 = vmatprep.subr.mxu0 0.0
      %2107 = vmatpush1.msra.mxu0 0.0
      %2108 = vmatprep.mubr.f32.mxu0 0.0
      %2109 = vmatmul.mubr.f32.gmra.mrb[0].mxu0 %v632
      %v2110 = vpop.f32.mrb[0].mxu0
      %v2111 = vadd.f32 0.0, %v2110
      %v2112 = vpop.f32.mrb[0].mxu0
      %2113 = vmatprep.mubr.f32.mxu0 0.0
      %2114 = vmatmul.mubr.f32.gmra.mrb[0].mxu0 %v635
      %v2115 = vpop.f32.mrb[0].mxu0
      %v2116 = vadd.f32 0.0, %v2115
      %v2117 = vpop.f32.mrb[0].mxu0
      %2118 = vdwg.mxu0
      %2119 = vmatprep.subr.mxu0 0.0
      %2120 = vmatpush1.msra.mxu0 %v1884
      %2121 = vmatprep.subr.mxu0 0.0
      %2122 = vmatpush1.msra.mxu0 %v1885
      %2123 = vmatprep.subr.mxu0 0.0
      %2124 = vmatpush1.msra.mxu0 0.0
      %2125 = vmatprep.subr.mxu0 0.0
      %2126 = vmatpush1.msra.mxu0 0.0
      %2127 = vmatprep.subr.mxu0 0.0
      %2128 = vmatpush1.msra.mxu0 0.0
      %2129 = vmatprep.subr.mxu0 0.0
      %2130 = vmatpush1.msra.mxu0 0.0
      %2131 = vmatprep.subr.mxu0 0.0
      %2132 = vmatpush1.msra.mxu0 0.0
      %2133 = vmatprep.subr.mxu0 0.0
      %2134 = vmatpush1.msra.mxu0 0.0
      %2135 = vmatprep.subr.mxu0 0.0
      %2136 = vmatpush1.msra.mxu0 0.0
      %2137 = vmatprep.subr.mxu0 0.0
      %2138 = vmatpush1.msra.mxu0 0.0
      %2139 = vmatprep.subr.mxu0 0.0
      %2140 = vmatpush1.msra.mxu0 0.0
      %2141 = vmatprep.subr.mxu0 0.0
      %2142 = vmatpush1.msra.mxu0 0.0
      %2143 = vmatprep.subr.mxu0 0.0
      %2144 = vmatpush1.msra.mxu0 0.0
      %2145 = vmatprep.subr.mxu0 0.0
      %2146 = vmatpush1.msra.mxu0 0.0
      %2147 = vmatprep.subr.mxu0 0.0
      %2148 = vmatpush1.msra.mxu0 0.0
      %2149 = vmatprep.subr.mxu0 0.0
      %2150 = vmatpush1.msra.mxu0 0.0
      %2151 = vmatprep.subr.mxu0 0.0
      %2152 = vmatpush1.msra.mxu0 0.0
      %2153 = vmatprep.subr.mxu0 0.0
      %2154 = vmatpush1.msra.mxu0 0.0
      %2155 = vmatprep.subr.mxu0 0.0
      %2156 = vmatpush1.msra.mxu0 0.0
      %2157 = vmatprep.subr.mxu0 0.0
      %2158 = vmatpush1.msra.mxu0 0.0
      %2159 = vmatprep.subr.mxu0 0.0
      %2160 = vmatpush1.msra.mxu0 0.0
      %2161 = vmatprep.subr.mxu0 0.0
      %2162 = vmatpush1.msra.mxu0 0.0
      %2163 = vmatprep.subr.mxu0 0.0
      %2164 = vmatpush1.msra.mxu0 0.0
      %2165 = vmatprep.subr.mxu0 0.0
      %2166 = vmatpush1.msra.mxu0 0.0
      %2167 = vmatprep.subr.mxu0 0.0
      %2168 = vmatpush1.msra.mxu0 0.0
      %2169 = vmatprep.subr.mxu0 0.0
      %2170 = vmatpush1.msra.mxu0 0.0
      %2171 = vmatprep.subr.mxu0 0.0
      %2172 = vmatpush1.msra.mxu0 0.0
      %2173 = vmatprep.subr.mxu0 0.0
      %2174 = vmatpush1.msra.mxu0 0.0
      %2175 = vmatprep.subr.mxu0 0.0
      %2176 = vmatpush1.msra.mxu0 0.0
      %2177 = vmatprep.subr.mxu0 0.0
      %2178 = vmatpush1.msra.mxu0 0.0
      %2179 = vmatprep.subr.mxu0 0.0
      %2180 = vmatpush1.msra.mxu0 0.0
      %2181 = vmatprep.subr.mxu0 0.0
      %2182 = vmatpush1.msra.mxu0 0.0
      %2183 = vmatprep.mubr.f32.mxu0 0.0
      %2184 = vmatmul.mubr.f32.gmra.mrb[0].mxu0 %v713
      %v2185 = vpop.f32.mrb[0].mxu0
      %v2186 = vadd.f32 0.0, %v2185
      %v2187 = vpop.f32.mrb[0].mxu0
      %2188 = vmatprep.mubr.f32.mxu0 0.0
      %2189 = vmatmul.mubr.f32.gmra.mrb[0].mxu0 %v716
      %v2190 = vpop.f32.mrb[0].mxu0
      %v2191 = vadd.f32 0.0, %v2190
      %v2192 = vpop.f32.mrb[0].mxu0
      %2193 = vdwg.mxu0
      %2194 = vmatprep.subr.mxu0 0.0
      %2195 = vmatpush1.msra.mxu0 %v1886
      %2196 = vmatprep.subr.mxu0 0.0
      %2197 = vmatpush1.msra.mxu0 %v1887
      %2198 = vmatprep.subr.mxu0 0.0
      %2199 = vmatpush1.msra.mxu0 0.0
      %2200 = vmatprep.subr.mxu0 0.0
      %2201 = vmatpush1.msra.mxu0 0.0
      %2202 = vmatprep.subr.mxu0 0.0
      %2203 = vmatpush1.msra.mxu0 0.0
      %2204 = vmatprep.subr.mxu0 0.0
      %2205 = vmatpush1.msra.mxu0 0.0
      %2206 = vmatprep.subr.mxu0 0.0
      %2207 = vmatpush1.msra.mxu0 0.0
      %2208 = vmatprep.subr.mxu0 0.0
      %2209 = vmatpush1.msra.mxu0 0.0
      %2210 = vmatprep.subr.mxu0 0.0
      %2211 = vmatpush1.msra.mxu0 0.0
      %2212 = vmatprep.subr.mxu0 0.0
      %2213 = vmatpush1.msra.mxu0 0.0
      %2214 = vmatprep.subr.mxu0 0.0
      %2215 = vmatpush1.msra.mxu0 0.0
      %2216 = vmatprep.subr.mxu0 0.0
      %2217 = vmatpush1.msra.mxu0 0.0
      %2218 = vmatprep.subr.mxu0 0.0
      %2219 = vmatpush1.msra.mxu0 0.0
      %2220 = vmatprep.subr.mxu0 0.0
      %2221 = vmatpush1.msra.mxu0 0.0
      %2222 = vmatprep.subr.mxu0 0.0
      %2223 = vmatpush1.msra.mxu0 0.0
      %2224 = vmatprep.subr.mxu0 0.0
      %2225 = vmatpush1.msra.mxu0 0.0
      %2226 = vmatprep.subr.mxu0 0.0
      %2227 = vmatpush1.msra.mxu0 0.0
      %2228 = vmatprep.subr.mxu0 0.0
      %2229 = vmatpush1.msra.mxu0 0.0
      %2230 = vmatprep.subr.mxu0 0.0
      %2231 = vmatpush1.msra.mxu0 0.0
      %2232 = vmatprep.subr.mxu0 0.0
      %2233 = vmatpush1.msra.mxu0 0.0
      %2234 = vmatprep.subr.mxu0 0.0
      %2235 = vmatpush1.msra.mxu0 0.0
      %2236 = vmatprep.subr.mxu0 0.0
      %2237 = vmatpush1.msra.mxu0 0.0
      %2238 = vmatprep.subr.mxu0 0.0
      %2239 = vmatpush1.msra.mxu0 0.0
      %2240 = vmatprep.subr.mxu0 0.0
      %2241 = vmatpush1.msra.mxu0 0.0
      %2242 = vmatprep.subr.mxu0 0.0
      %2243 = vmatpush1.msra.mxu0 0.0
      %2244 = vmatprep.subr.mxu0 0.0
      %2245 = vmatpush1.msra.mxu0 0.0
      %2246 = vmatprep.subr.mxu0 0.0
      %2247 = vmatpush1.msra.mxu0 0.0
      %2248 = vmatprep.subr.mxu0 0.0
      %2249 = vmatpush1.msra.mxu0 0.0
      %2250 = vmatprep.subr.mxu0 0.0
      %2251 = vmatpush1.msra.mxu0 0.0
      %2252 = vmatprep.subr.mxu0 0.0
      %2253 = vmatpush1.msra.mxu0 0.0
      %2254 = vmatprep.subr.mxu0 0.0
      %2255 = vmatpush1.msra.mxu0 0.0
      %2256 = vmatprep.subr.mxu0 0.0
      %2257 = vmatpush1.msra.mxu0 0.0
      %2258 = vmatprep.mubr.f32.mxu0 0.0
      %2259 = vmatmul.mubr.f32.gmra.mrb[0].mxu0 %v794
      %v2260 = vpop.f32.mrb[0].mxu0
      %v2261 = vadd.f32 0.0, %v2260
      %v2262 = vpop.f32.mrb[0].mxu0
      %2263 = vmatprep.mubr.f32.mxu0 0.0
      %2264 = vmatmul.mubr.f32.gmra.mrb[0].mxu0 %v797
      %v2265 = vpop.f32.mrb[0].mxu0
      %v2266 = vadd.f32 0.0, %v2265
      %v2267 = vpop.f32.mrb[0].mxu0
      %2268 = vdwg.mxu0
      %2269 = vmatprep.subr.mxu0 0.0
      %2270 = vmatpush1.msra.mxu0 %v1888
      %2271 = vmatprep.subr.mxu0 0.0
      %2272 = vmatpush1.msra.mxu0 %v1889
      %2273 = vmatprep.subr.mxu0 0.0
      %2274 = vmatpush1.msra.mxu0 0.0
      %2275 = vmatprep.subr.mxu0 0.0
      %2276 = vmatpush1.msra.mxu0 0.0
      %2277 = vmatprep.subr.mxu0 0.0
      %2278 = vmatpush1.msra.mxu0 0.0
      %2279 = vmatprep.subr.mxu0 0.0
      %2280 = vmatpush1.msra.mxu0 0.0
      %2281 = vmatprep.subr.mxu0 0.0
      %2282 = vmatpush1.msra.mxu0 0.0
      %2283 = vmatprep.subr.mxu0 0.0
      %2284 = vmatpush1.msra.mxu0 0.0
      %2285 = vmatprep.subr.mxu0 0.0
      %2286 = vmatpush1.msra.mxu0 0.0
      %2287 = vmatprep.subr.mxu0 0.0
      %2288 = vmatpush1.msra.mxu0 0.0
      %2289 = vmatprep.subr.mxu0 0.0
      %2290 = vmatpush1.msra.mxu0 0.0
      %2291 = vmatprep.subr.mxu0 0.0
      %2292 = vmatpush1.msra.mxu0 0.0
      %2293 = vmatprep.subr.mxu0 0.0
      %2294 = vmatpush1.msra.mxu0 0.0
      %2295 = vmatprep.subr.mxu0 0.0
      %2296 = vmatpush1.msra.mxu0 0.0
      %2297 = vmatprep.subr.mxu0 0.0
      %2298 = vmatpush1.msra.mxu0 0.0
      %2299 = vmatprep.subr.mxu0 0.0
      %2300 = vmatpush1.msra.mxu0 0.0
      %2301 = vmatprep.subr.mxu0 0.0
      %2302 = vmatpush1.msra.mxu0 0.0
      %2303 = vmatprep.subr.mxu0 0.0
      %2304 = vmatpush1.msra.mxu0 0.0
      %2305 = vmatprep.subr.mxu0 0.0
      %2306 = vmatpush1.msra.mxu0 0.0
      %2307 = vmatprep.subr.mxu0 0.0
      %2308 = vmatpush1.msra.mxu0 0.0
      %2309 = vmatprep.subr.mxu0 0.0
      %2310 = vmatpush1.msra.mxu0 0.0
      %2311 = vmatprep.subr.mxu0 0.0
      %2312 = vmatpush1.msra.mxu0 0.0
      %2313 = vmatprep.subr.mxu0 0.0
      %2314 = vmatpush1.msra.mxu0 0.0
      %2315 = vmatprep.subr.mxu0 0.0
      %2316 = vmatpush1.msra.mxu0 0.0
      %2317 = vmatprep.subr.mxu0 0.0
      %2318 = vmatpush1.msra.mxu0 0.0
      %2319 = vmatprep.subr.mxu0 0.0
      %2320 = vmatpush1.msra.mxu0 0.0
      %2321 = vmatprep.subr.mxu0 0.0
      %2322 = vmatpush1.msra.mxu0 0.0
      %2323 = vmatprep.subr.mxu0 0.0
      %2324 = vmatpush1.msra.mxu0 0.0
      %2325 = vmatprep.subr.mxu0 0.0
      %2326 = vmatpush1.msra.mxu0 0.0
      %2327 = vmatprep.subr.mxu0 0.0
      %2328 = vmatpush1.msra.mxu0 0.0
      %2329 = vmatprep.subr.mxu0 0.0
      %2330 = vmatpush1.msra.mxu0 0.0
      %2331 = vmatprep.subr.mxu0 0.0
      %2332 = vmatpush1.msra.mxu0 0.0
      %2333 = vmatprep.mubr.f32.mxu0 0.0
      %2334 = vmatmul.mubr.f32.gmra.mrb[0].mxu0 %v875
      %v2335 = vpop.f32.mrb[0].mxu0
      %v2336 = vadd.f32 0.0, %v2335
      %v2337 = vpop.f32.mrb[0].mxu0
      %2338 = vmatprep.mubr.f32.mxu0 0.0
      %2339 = vmatmul.mubr.f32.gmra.mrb[0].mxu0 %v878
      %v2340 = vpop.f32.mrb[0].mxu0
      %v2341 = vadd.f32 0.0, %v2340
      %v2342 = vpop.f32.mrb[0].mxu0
      %2343 = vdwg.mxu0
      %2344 = vmatprep.subr.mxu0 0.0
      %2345 = vmatpush1.msra.mxu0 %v1890
      %2346 = vmatprep.subr.mxu0 0.0
      %2347 = vmatpush1.msra.mxu0 %v1891
      %2348 = vmatprep.subr.mxu0 0.0
      %2349 = vmatpush1.msra.mxu0 0.0
      %2350 = vmatprep.subr.mxu0 0.0
      %2351 = vmatpush1.msra.mxu0 0.0
      %2352 = vmatprep.subr.mxu0 0.0
      %2353 = vmatpush1.msra.mxu0 0.0
      %2354 = vmatprep.subr.mxu0 0.0
      %2355 = vmatpush1.msra.mxu0 0.0
      %2356 = vmatprep.subr.mxu0 0.0
      %2357 = vmatpush1.msra.mxu0 0.0
      %2358 = vmatprep.subr.mxu0 0.0
      %2359 = vmatpush1.msra.mxu0 0.0
      %2360 = vmatprep.subr.mxu0 0.0
      %2361 = vmatpush1.msra.mxu0 0.0
      %2362 = vmatprep.subr.mxu0 0.0
      %2363 = vmatpush1.msra.mxu0 0.0
      %2364 = vmatprep.subr.mxu0 0.0
      %2365 = vmatpush1.msra.mxu0 0.0
      %2366 = vmatprep.subr.mxu0 0.0
      %2367 = vmatpush1.msra.mxu0 0.0
      %2368 = vmatprep.subr.mxu0 0.0
      %2369 = vmatpush1.msra.mxu0 0.0
      %2370 = vmatprep.subr.mxu0 0.0
      %2371 = vmatpush1.msra.mxu0 0.0
      %2372 = vmatprep.subr.mxu0 0.0
      %2373 = vmatpush1.msra.mxu0 0.0
      %2374 = vmatprep.subr.mxu0 0.0
      %2375 = vmatpush1.msra.mxu0 0.0
      %2376 = vmatprep.subr.mxu0 0.0
      %2377 = vmatpush1.msra.mxu0 0.0
      %2378 = vmatprep.subr.mxu0 0.0
      %2379 = vmatpush1.msra.mxu0 0.0
      %2380 = vmatprep.subr.mxu0 0.0
      %2381 = vmatpush1.msra.mxu0 0.0
      %2382 = vmatprep.subr.mxu0 0.0
      %2383 = vmatpush1.msra.mxu0 0.0
      %2384 = vmatprep.subr.mxu0 0.0
      %2385 = vmatpush1.msra.mxu0 0.0
      %2386 = vmatprep.subr.mxu0 0.0
      %2387 = vmatpush1.msra.mxu0 0.0
      %2388 = vmatprep.subr.mxu0 0.0
      %2389 = vmatpush1.msra.mxu0 0.0
      %2390 = vmatprep.subr.mxu0 0.0
      %2391 = vmatpush1.msra.mxu0 0.0
      %2392 = vmatprep.subr.mxu0 0.0
      %2393 = vmatpush1.msra.mxu0 0.0
      %2394 = vmatprep.subr.mxu0 0.0
      %2395 = vmatpush1.msra.mxu0 0.0
      %2396 = vmatprep.subr.mxu0 0.0
      %2397 = vmatpush1.msra.mxu0 0.0
      %2398 = vmatprep.subr.mxu0 0.0
      %2399 = vmatpush1.msra.mxu0 0.0
      %2400 = vmatprep.subr.mxu0 0.0
      %2401 = vmatpush1.msra.mxu0 0.0
      %2402 = vmatprep.subr.mxu0 0.0
      %2403 = vmatpush1.msra.mxu0 0.0
      %2404 = vmatprep.subr.mxu0 0.0
      %2405 = vmatpush1.msra.mxu0 0.0
      %2406 = vmatprep.subr.mxu0 0.0
      %2407 = vmatpush1.msra.mxu0 0.0
      %2408 = vmatprep.mubr.f32.mxu0 0.0
      %2409 = vmatmul.mubr.f32.gmra.mrb[0].mxu0 %v956
      %v2410 = vpop.f32.mrb[0].mxu0
      %v2411 = vadd.f32 0.0, %v2410
      %v2412 = vpop.f32.mrb[0].mxu0
      %2413 = vmatprep.mubr.f32.mxu0 0.0
      %2414 = vmatmul.mubr.f32.gmra.mrb[0].mxu0 %v959
      %v2415 = vpop.f32.mrb[0].mxu0
      %v2416 = vadd.f32 0.0, %v2415
      %v2417 = vpop.f32.mrb[0].mxu0
      %2418 = vdwg.mxu0
      %2419 = vmatprep.subr.mxu0 0.0
      %2420 = vmatpush1.msra.mxu0 %v1892
      %2421 = vmatprep.subr.mxu0 0.0
      %2422 = vmatpush1.msra.mxu0 %v1893
      %2423 = vmatprep.subr.mxu0 0.0
      %2424 = vmatpush1.msra.mxu0 0.0
      %2425 = vmatprep.subr.mxu0 0.0
      %2426 = vmatpush1.msra.mxu0 0.0
      %2427 = vmatprep.subr.mxu0 0.0
      %2428 = vmatpush1.msra.mxu0 0.0
      %2429 = vmatprep.subr.mxu0 0.0
      %2430 = vmatpush1.msra.mxu0 0.0
      %2431 = vmatprep.subr.mxu0 0.0
      %2432 = vmatpush1.msra.mxu0 0.0
      %2433 = vmatprep.subr.mxu0 0.0
      %2434 = vmatpush1.msra.mxu0 0.0
      %2435 = vmatprep.subr.mxu0 0.0
      %2436 = vmatpush1.msra.mxu0 0.0
      %2437 = vmatprep.subr.mxu0 0.0
      %2438 = vmatpush1.msra.mxu0 0.0
      %2439 = vmatprep.subr.mxu0 0.0
      %2440 = vmatpush1.msra.mxu0 0.0
      %2441 = vmatprep.subr.mxu0 0.0
      %2442 = vmatpush1.msra.mxu0 0.0
      %2443 = vmatprep.subr.mxu0 0.0
      %2444 = vmatpush1.msra.mxu0 0.0
      %2445 = vmatprep.subr.mxu0 0.0
      %2446 = vmatpush1.msra.mxu0 0.0
      %2447 = vmatprep.subr.mxu0 0.0
      %2448 = vmatpush1.msra.mxu0 0.0
      %2449 = vmatprep.subr.mxu0 0.0
      %2450 = vmatpush1.msra.mxu0 0.0
      %2451 = vmatprep.subr.mxu0 0.0
      %2452 = vmatpush1.msra.mxu0 0.0
      %2453 = vmatprep.subr.mxu0 0.0
      %2454 = vmatpush1.msra.mxu0 0.0
      %2455 = vmatprep.subr.mxu0 0.0
      %2456 = vmatpush1.msra.mxu0 0.0
      %2457 = vmatprep.subr.mxu0 0.0
      %2458 = vmatpush1.msra.mxu0 0.0
      %2459 = vmatprep.subr.mxu0 0.0
      %2460 = vmatpush1.msra.mxu0 0.0
      %2461 = vmatprep.subr.mxu0 0.0
      %2462 = vmatpush1.msra.mxu0 0.0
      %2463 = vmatprep.subr.mxu0 0.0
      %2464 = vmatpush1.msra.mxu0 0.0
      %2465 = vmatprep.subr.mxu0 0.0
      %2466 = vmatpush1.msra.mxu0 0.0
      %2467 = vmatprep.subr.mxu0 0.0
      %2468 = vmatpush1.msra.mxu0 0.0
      %2469 = vmatprep.subr.mxu0 0.0
      %2470 = vmatpush1.msra.mxu0 0.0
      %2471 = vmatprep.subr.mxu0 0.0
      %2472 = vmatpush1.msra.mxu0 0.0
      %2473 = vmatprep.subr.mxu0 0.0
      %2474 = vmatpush1.msra.mxu0 0.0
      %2475 = vmatprep.subr.mxu0 0.0
      %2476 = vmatpush1.msra.mxu0 0.0
      %2477 = vmatprep.subr.mxu0 0.0
      %2478 = vmatpush1.msra.mxu0 0.0
      %2479 = vmatprep.subr.mxu0 0.0
      %2480 = vmatpush1.msra.mxu0 0.0
      %2481 = vmatprep.subr.mxu0 0.0
      %2482 = vmatpush1.msra.mxu0 0.0
      %2483 = vmatprep.mubr.f32.mxu0 0.0
      %2484 = vmatmul.mubr.f32.gmra.mrb[0].mxu0 %v1037
      %v2485 = vpop.f32.mrb[0].mxu0
      %v2486 = vadd.f32 0.0, %v2485
      %v2487 = vpop.f32.mrb[0].mxu0
      %2488 = vmatprep.mubr.f32.mxu0 0.0
      %2489 = vmatmul.mubr.f32.gmra.mrb[0].mxu0 %v1040
      %v2490 = vpop.f32.mrb[0].mxu0
      %v2491 = vadd.f32 0.0, %v2490
      %v2492 = vpop.f32.mrb[0].mxu0
      %2493 = vdwg.mxu0
      %v2495 = vsel %vm1540, %v1961, 0
      %v2498 = vsel %vm1540, %v1966, 0
      %v2501 = vsel %vm1540, %v2036, 0
      %v2504 = vsel %vm1540, %v2041, 0
      %v2507 = vsel %vm1540, %v2111, 0
      %v2510 = vsel %vm1540, %v2116, 0
      %v2513 = vsel %vm1540, %v2186, 0
      %v2516 = vsel %vm1540, %v2191, 0
      %v2519 = vsel %vm1540, %v2261, 0
      %v2522 = vsel %vm1540, %v2266, 0
      %v2525 = vsel %vm1540, %v2336, 0
      %v2528 = vsel %vm1540, %v2341, 0
      %v2531 = vsel %vm1540, %v2411, 0
      %v2534 = vsel %vm1540, %v2416, 0
      %v2537 = vsel %vm1540, %v2486, 0
      %v2540 = vsel %vm1540, %v2491, 0
      %2542 = vmatprep.subr.mxu0 0.0
      %2543 = vmatpush1.msra.mxu0 %v437
      %2544 = vmatprep.subr.mxu0 0.0
      %2545 = vmatpush1.msra.mxu0 %v438
      %2546 = vmatprep.subr.mxu0 0.0
      %2547 = vmatpush1.msra.mxu0 %v439
      %2548 = vmatprep.subr.mxu0 0.0
      %2549 = vmatpush1.msra.mxu0 %v440
      %2550 = vmatprep.subr.mxu0 0.0
      %2551 = vmatpush1.msra.mxu0 0.0
      %2552 = vmatprep.subr.mxu0 0.0
      %2553 = vmatpush1.msra.mxu0 0.0
      %2554 = vmatprep.subr.mxu0 0.0
      %2555 = vmatpush1.msra.mxu0 0.0
      %2556 = vmatprep.subr.mxu0 0.0
      %2557 = vmatpush1.msra.mxu0 0.0
      %2558 = vmatprep.subr.mxu0 0.0
      %2559 = vmatpush1.msra.mxu0 0.0
      %2560 = vmatprep.subr.mxu0 0.0
      %2561 = vmatpush1.msra.mxu0 0.0
      %2562 = vmatprep.subr.mxu0 0.0
      %2563 = vmatpush1.msra.mxu0 0.0
      %2564 = vmatprep.subr.mxu0 0.0
      %2565 = vmatpush1.msra.mxu0 0.0
      %2566 = vmatprep.subr.mxu0 0.0
      %2567 = vmatpush1.msra.mxu0 0.0
      %2568 = vmatprep.subr.mxu0 0.0
      %2569 = vmatpush1.msra.mxu0 0.0
      %2570 = vmatprep.subr.mxu0 0.0
      %2571 = vmatpush1.msra.mxu0 0.0
      %2572 = vmatprep.subr.mxu0 0.0
      %2573 = vmatpush1.msra.mxu0 0.0
      %2574 = vmatprep.subr.mxu0 0.0
      %2575 = vmatpush1.msra.mxu0 0.0
      %2576 = vmatprep.subr.mxu0 0.0
      %2577 = vmatpush1.msra.mxu0 0.0
      %2578 = vmatprep.subr.mxu0 0.0
      %2579 = vmatpush1.msra.mxu0 0.0
      %2580 = vmatprep.subr.mxu0 0.0
      %2581 = vmatpush1.msra.mxu0 0.0
      %2582 = vmatprep.subr.mxu0 0.0
      %2583 = vmatpush1.msra.mxu0 0.0
      %2584 = vmatprep.subr.mxu0 0.0
      %2585 = vmatpush1.msra.mxu0 0.0
      %2586 = vmatprep.subr.mxu0 0.0
      %2587 = vmatpush1.msra.mxu0 0.0
      %2588 = vmatprep.subr.mxu0 0.0
      %2589 = vmatpush1.msra.mxu0 0.0
      %2590 = vmatprep.subr.mxu0 0.0
      %2591 = vmatpush1.msra.mxu0 0.0
      %2592 = vmatprep.subr.mxu0 0.0
      %2593 = vmatpush1.msra.mxu0 0.0
      %2594 = vmatprep.subr.mxu0 0.0
      %2595 = vmatpush1.msra.mxu0 0.0
      %2596 = vmatprep.subr.mxu0 0.0
      %2597 = vmatpush1.msra.mxu0 0.0
      %2598 = vmatprep.subr.mxu0 0.0
      %2599 = vmatpush1.msra.mxu0 0.0
      %2600 = vmatprep.subr.mxu0 0.0
      %2601 = vmatpush1.msra.mxu0 0.0
      %2602 = vmatprep.subr.mxu0 0.0
      %2603 = vmatpush1.msra.mxu0 0.0
      %2604 = vmatprep.subr.mxu0 0.0
      %2605 = vmatpush1.msra.mxu0 0.0
      %2606 = vmatprep.mubr.f32.mxu0 0.0
      %2607 = vmatmul.mubr.f32.gmra.mrb[0].mxu0 %v2495
      %v2608 = vpop.f32.mrb[0].mxu0
      %v2609 = vadd.f32 0.0, %v2608
      %v2610 = vpop.f32.mrb[0].mxu0
      %2611 = vmatprep.mubr.f32.mxu0 0.0
      %2612 = vmatmul.mubr.f32.gmra.mrb[0].mxu0 %v2498
      %v2613 = vpop.f32.mrb[0].mxu0
      %v2614 = vadd.f32 0.0, %v2613
      %v2615 = vpop.f32.mrb[0].mxu0
      %2616 = vmatprep.mubr.f32.mxu0 0.0
      %2617 = vmatmul.mubr.f32.gmra.mrb[0].mxu0 %v2501
      %v2618 = vpop.f32.mrb[0].mxu0
      %v2619 = vadd.f32 0.0, %v2618
      %v2620 = vpop.f32.mrb[0].mxu0
      %2621 = vmatprep.mubr.f32.mxu0 0.0
      %2622 = vmatmul.mubr.f32.gmra.mrb[0].mxu0 %v2504
      %v2623 = vpop.f32.mrb[0].mxu0
      %v2624 = vadd.f32 0.0, %v2623
      %v2625 = vpop.f32.mrb[0].mxu0
      %2626 = vmatprep.mubr.f32.mxu0 0.0
      %2627 = vmatmul.mubr.f32.gmra.mrb[0].mxu0 %v2507
      %v2628 = vpop.f32.mrb[0].mxu0
      %v2629 = vadd.f32 0.0, %v2628
      %v2630 = vpop.f32.mrb[0].mxu0
      %2631 = vmatprep.mubr.f32.mxu0 0.0
      %2632 = vmatmul.mubr.f32.gmra.mrb[0].mxu0 %v2510
      %v2633 = vpop.f32.mrb[0].mxu0
      %v2634 = vadd.f32 0.0, %v2633
      %v2635 = vpop.f32.mrb[0].mxu0
      %2636 = vmatprep.mubr.f32.mxu0 0.0
      %2637 = vmatmul.mubr.f32.gmra.mrb[0].mxu0 %v2513
      %v2638 = vpop.f32.mrb[0].mxu0
      %v2639 = vadd.f32 0.0, %v2638
      %v2640 = vpop.f32.mrb[0].mxu0
      %2641 = vmatprep.mubr.f32.mxu0 0.0
      %2642 = vmatmul.mubr.f32.gmra.mrb[0].mxu0 %v2516
      %v2643 = vpop.f32.mrb[0].mxu0
      %v2644 = vadd.f32 0.0, %v2643
      %v2645 = vpop.f32.mrb[0].mxu0
      %2646 = vmatprep.mubr.f32.mxu0 0.0
      %2647 = vmatmul.mubr.f32.gmra.mrb[0].mxu0 %v2519
      %v2648 = vpop.f32.mrb[0].mxu0
      %v2649 = vadd.f32 0.0, %v2648
      %v2650 = vpop.f32.mrb[0].mxu0
      %2651 = vmatprep.mubr.f32.mxu0 0.0
      %2652 = vmatmul.mubr.f32.gmra.mrb[0].mxu0 %v2522
      %v2653 = vpop.f32.mrb[0].mxu0
      %v2654 = vadd.f32 0.0, %v2653
      %v2655 = vpop.f32.mrb[0].mxu0
      %2656 = vmatprep.mubr.f32.mxu0 0.0
      %2657 = vmatmul.mubr.f32.gmra.mrb[0].mxu0 %v2525
      %v2658 = vpop.f32.mrb[0].mxu0
      %v2659 = vadd.f32 0.0, %v2658
      %v2660 = vpop.f32.mrb[0].mxu0
      %2661 = vmatprep.mubr.f32.mxu0 0.0
      %2662 = vmatmul.mubr.f32.gmra.mrb[0].mxu0 %v2528
      %v2663 = vpop.f32.mrb[0].mxu0
      %v2664 = vadd.f32 0.0, %v2663
      %v2665 = vpop.f32.mrb[0].mxu0
      %2666 = vmatprep.mubr.f32.mxu0 0.0
      %2667 = vmatmul.mubr.f32.gmra.mrb[0].mxu0 %v2531
      %v2668 = vpop.f32.mrb[0].mxu0
      %v2669 = vadd.f32 0.0, %v2668
      %v2670 = vpop.f32.mrb[0].mxu0
      %2671 = vmatprep.mubr.f32.mxu0 0.0
      %2672 = vmatmul.mubr.f32.gmra.mrb[0].mxu0 %v2534
      %v2673 = vpop.f32.mrb[0].mxu0
      %v2674 = vadd.f32 0.0, %v2673
      %v2675 = vpop.f32.mrb[0].mxu0
      %2676 = vmatprep.mubr.f32.mxu0 0.0
      %2677 = vmatmul.mubr.f32.gmra.mrb[0].mxu0 %v2537
      %v2678 = vpop.f32.mrb[0].mxu0
      %v2679 = vadd.f32 0.0, %v2678
      %v2680 = vpop.f32.mrb[0].mxu0
      %2681 = vmatprep.mubr.f32.mxu0 0.0
      %2682 = vmatmul.mubr.f32.gmra.mrb[0].mxu0 %v2540
      %v2683 = vpop.f32.mrb[0].mxu0
      %v2684 = vadd.f32 0.0, %v2683
      %v2685 = vpop.f32.mrb[0].mxu0
      %2686 = vdwg.mxu0
      %v2688 = vsel %vm1540, %v1878, 0
      %v2691 = vsel %vm1540, %v1879, 0
      %v2694 = vsel %vm1540, %v1880, 0
      %v2697 = vsel %vm1540, %v1881, 0
      %v2700 = vsel %vm1540, %v1882, 0
      %v2703 = vsel %vm1540, %v1883, 0
      %v2706 = vsel %vm1540, %v1884, 0
      %v2709 = vsel %vm1540, %v1885, 0
      %v2712 = vsel %vm1540, %v1886, 0
      %v2715 = vsel %vm1540, %v1887, 0
      %v2718 = vsel %vm1540, %v1888, 0
      %v2721 = vsel %vm1540, %v1889, 0
      %v2724 = vsel %vm1540, %v1890, 0
      %v2727 = vsel %vm1540, %v1891, 0
      %v2730 = vsel %vm1540, %v1892, 0
      %v2733 = vsel %vm1540, %v1893, 0
      %2735 = vmatprep.subr.mxu0 0.0
      %2736 = vmatpush1.msra.mxu0 %v433
      %2737 = vmatprep.subr.mxu0 0.0
      %2738 = vmatpush1.msra.mxu0 %v434
      %2739 = vmatprep.subr.mxu0 0.0
      %2740 = vmatpush1.msra.mxu0 %v435
      %2741 = vmatprep.subr.mxu0 0.0
      %2742 = vmatpush1.msra.mxu0 %v436
      %2743 = vmatprep.subr.mxu0 0.0
      %2744 = vmatpush1.msra.mxu0 0.0
      %2745 = vmatprep.subr.mxu0 0.0
      %2746 = vmatpush1.msra.mxu0 0.0
      %2747 = vmatprep.subr.mxu0 0.0
      %2748 = vmatpush1.msra.mxu0 0.0
      %2749 = vmatprep.subr.mxu0 0.0
      %2750 = vmatpush1.msra.mxu0 0.0
      %2751 = vmatprep.subr.mxu0 0.0
      %2752 = vmatpush1.msra.mxu0 0.0
      %2753 = vmatprep.subr.mxu0 0.0
      %2754 = vmatpush1.msra.mxu0 0.0
      %2755 = vmatprep.subr.mxu0 0.0
      %2756 = vmatpush1.msra.mxu0 0.0
      %2757 = vmatprep.subr.mxu0 0.0
      %2758 = vmatpush1.msra.mxu0 0.0
      %2759 = vmatprep.subr.mxu0 0.0
      %2760 = vmatpush1.msra.mxu0 0.0
      %2761 = vmatprep.subr.mxu0 0.0
      %2762 = vmatpush1.msra.mxu0 0.0
      %2763 = vmatprep.subr.mxu0 0.0
      %2764 = vmatpush1.msra.mxu0 0.0
      %2765 = vmatprep.subr.mxu0 0.0
      %2766 = vmatpush1.msra.mxu0 0.0
      %2767 = vmatprep.subr.mxu0 0.0
      %2768 = vmatpush1.msra.mxu0 0.0
      %2769 = vmatprep.subr.mxu0 0.0
      %2770 = vmatpush1.msra.mxu0 0.0
      %2771 = vmatprep.subr.mxu0 0.0
      %2772 = vmatpush1.msra.mxu0 0.0
      %2773 = vmatprep.subr.mxu0 0.0
      %2774 = vmatpush1.msra.mxu0 0.0
      %2775 = vmatprep.subr.mxu0 0.0
      %2776 = vmatpush1.msra.mxu0 0.0
      %2777 = vmatprep.subr.mxu0 0.0
      %2778 = vmatpush1.msra.mxu0 0.0
      %2779 = vmatprep.subr.mxu0 0.0
      %2780 = vmatpush1.msra.mxu0 0.0
      %2781 = vmatprep.subr.mxu0 0.0
      %2782 = vmatpush1.msra.mxu0 0.0
      %2783 = vmatprep.subr.mxu0 0.0
      %2784 = vmatpush1.msra.mxu0 0.0
      %2785 = vmatprep.subr.mxu0 0.0
      %2786 = vmatpush1.msra.mxu0 0.0
      %2787 = vmatprep.subr.mxu0 0.0
      %2788 = vmatpush1.msra.mxu0 0.0
      %2789 = vmatprep.subr.mxu0 0.0
      %2790 = vmatpush1.msra.mxu0 0.0
      %2791 = vmatprep.subr.mxu0 0.0
      %2792 = vmatpush1.msra.mxu0 0.0
      %2793 = vmatprep.subr.mxu0 0.0
      %2794 = vmatpush1.msra.mxu0 0.0
      %2795 = vmatprep.subr.mxu0 0.0
      %2796 = vmatpush1.msra.mxu0 0.0
      %2797 = vmatprep.subr.mxu0 0.0
      %2798 = vmatpush1.msra.mxu0 0.0
      %2799 = vmatprep.mubr.f32.mxu0 0.0
      %2800 = vmatmul.mubr.f32.gmra.mrb[0].mxu0 %v2688
      %v2801 = vpop.f32.mrb[0].mxu0
      %v2802 = vadd.f32 %v2609, %v2801
      %v2803 = vpop.f32.mrb[0].mxu0
      %2804 = vmatprep.mubr.f32.mxu0 0.0
      %2805 = vmatmul.mubr.f32.gmra.mrb[0].mxu0 %v2691
      %v2806 = vpop.f32.mrb[0].mxu0
      %v2807 = vadd.f32 %v2614, %v2806
      %v2808 = vpop.f32.mrb[0].mxu0
      %2809 = vmatprep.mubr.f32.mxu0 0.0
      %2810 = vmatmul.mubr.f32.gmra.mrb[0].mxu0 %v2694
      %v2811 = vpop.f32.mrb[0].mxu0
      %v2812 = vadd.f32 %v2619, %v2811
      %v2813 = vpop.f32.mrb[0].mxu0
      %2814 = vmatprep.mubr.f32.mxu0 0.0
      %2815 = vmatmul.mubr.f32.gmra.mrb[0].mxu0 %v2697
      %v2816 = vpop.f32.mrb[0].mxu0
      %v2817 = vadd.f32 %v2624, %v2816
      %v2818 = vpop.f32.mrb[0].mxu0
      %2819 = vmatprep.mubr.f32.mxu0 0.0
      %2820 = vmatmul.mubr.f32.gmra.mrb[0].mxu0 %v2700
      %v2821 = vpop.f32.mrb[0].mxu0
      %v2822 = vadd.f32 %v2629, %v2821
      %v2823 = vpop.f32.mrb[0].mxu0
      %2824 = vmatprep.mubr.f32.mxu0 0.0
      %2825 = vmatmul.mubr.f32.gmra.mrb[0].mxu0 %v2703
      %v2826 = vpop.f32.mrb[0].mxu0
      %v2827 = vadd.f32 %v2634, %v2826
      %v2828 = vpop.f32.mrb[0].mxu0
      %2829 = vmatprep.mubr.f32.mxu0 0.0
      %2830 = vmatmul.mubr.f32.gmra.mrb[0].mxu0 %v2706
      %v2831 = vpop.f32.mrb[0].mxu0
      %v2832 = vadd.f32 %v2639, %v2831
      %v2833 = vpop.f32.mrb[0].mxu0
      %2834 = vmatprep.mubr.f32.mxu0 0.0
      %2835 = vmatmul.mubr.f32.gmra.mrb[0].mxu0 %v2709
      %v2836 = vpop.f32.mrb[0].mxu0
      %v2837 = vadd.f32 %v2644, %v2836
      %v2838 = vpop.f32.mrb[0].mxu0
      %2839 = vmatprep.mubr.f32.mxu0 0.0
      %2840 = vmatmul.mubr.f32.gmra.mrb[0].mxu0 %v2712
      %v2841 = vpop.f32.mrb[0].mxu0
      %v2842 = vadd.f32 %v2649, %v2841
      %v2843 = vpop.f32.mrb[0].mxu0
      %2844 = vmatprep.mubr.f32.mxu0 0.0
      %2845 = vmatmul.mubr.f32.gmra.mrb[0].mxu0 %v2715
      %v2846 = vpop.f32.mrb[0].mxu0
      %v2847 = vadd.f32 %v2654, %v2846
      %v2848 = vpop.f32.mrb[0].mxu0
      %2849 = vmatprep.mubr.f32.mxu0 0.0
      %2850 = vmatmul.mubr.f32.gmra.mrb[0].mxu0 %v2718
      %v2851 = vpop.f32.mrb[0].mxu0
      %v2852 = vadd.f32 %v2659, %v2851
      %v2853 = vpop.f32.mrb[0].mxu0
      %2854 = vmatprep.mubr.f32.mxu0 0.0
      %2855 = vmatmul.mubr.f32.gmra.mrb[0].mxu0 %v2721
      %v2856 = vpop.f32.mrb[0].mxu0
      %v2857 = vadd.f32 %v2664, %v2856
      %v2858 = vpop.f32.mrb[0].mxu0
      %2859 = vmatprep.mubr.f32.mxu0 0.0
      %2860 = vmatmul.mubr.f32.gmra.mrb[0].mxu0 %v2724
      %v2861 = vpop.f32.mrb[0].mxu0
      %v2862 = vadd.f32 %v2669, %v2861
      %v2863 = vpop.f32.mrb[0].mxu0
      %2864 = vmatprep.mubr.f32.mxu0 0.0
      %2865 = vmatmul.mubr.f32.gmra.mrb[0].mxu0 %v2727
      %v2866 = vpop.f32.mrb[0].mxu0
      %v2867 = vadd.f32 %v2674, %v2866
      %v2868 = vpop.f32.mrb[0].mxu0
      %2869 = vmatprep.mubr.f32.mxu0 0.0
      %2870 = vmatmul.mubr.f32.gmra.mrb[0].mxu0 %v2730
      %v2871 = vpop.f32.mrb[0].mxu0
      %v2872 = vadd.f32 %v2679, %v2871
      %v2873 = vpop.f32.mrb[0].mxu0
      %2874 = vmatprep.mubr.f32.mxu0 0.0
      %2875 = vmatmul.mubr.f32.gmra.mrb[0].mxu0 %v2733
      %v2876 = vpop.f32.mrb[0].mxu0
      %v2877 = vadd.f32 %v2684, %v2876
      %v2878 = vpop.f32.mrb[0].mxu0
      %2879 = vdwg.mxu0
      %v2880 = vlaneseq
      %v2881 = vshrl.u32 %v2880, 7
      %v2882 = vsub.s32 0, %v2881
      %v2883 = vrot.slane %v441, %v2882
      %v2884 = vadd.f32 %v2802, %v2883
      %v2885 = vadd.f32 %v2807, %v2883
      %v2886 = vadd.f32 %v2812, %v2883
      %v2887 = vadd.f32 %v2817, %v2883
      %v2888 = vadd.f32 %v2822, %v2883
      %v2889 = vadd.f32 %v2827, %v2883
      %v2890 = vadd.f32 %v2832, %v2883
      %v2891 = vadd.f32 %v2837, %v2883
      %v2892 = vadd.f32 %v2842, %v2883
      %v2893 = vadd.f32 %v2847, %v2883
      %v2894 = vadd.f32 %v2852, %v2883
      %v2895 = vadd.f32 %v2857, %v2883
      %v2896 = vadd.f32 %v2862, %v2883
      %v2897 = vadd.f32 %v2867, %v2883
      %v2898 = vadd.f32 %v2872, %v2883
      %v2899 = vadd.f32 %v2877, %v2883
      %v2900 = vmax.f32 %v2884, 0.0
      %v2901 = vmax.f32 %v2885, 0.0
      %v2902 = vmax.f32 %v2886, 0.0
      %v2903 = vmax.f32 %v2887, 0.0
      %v2904 = vmax.f32 %v2888, 0.0
      %v2905 = vmax.f32 %v2889, 0.0
      %v2906 = vmax.f32 %v2890, 0.0
      %v2907 = vmax.f32 %v2891, 0.0
      %v2908 = vmax.f32 %v2892, 0.0
      %v2909 = vmax.f32 %v2893, 0.0
      %v2910 = vmax.f32 %v2894, 0.0
      %v2911 = vmax.f32 %v2895, 0.0
      %v2912 = vmax.f32 %v2896, 0.0
      %v2913 = vmax.f32 %v2897, 0.0
      %v2914 = vmax.f32 %v2898, 0.0
      %v2915 = vmax.f32 %v2899, 0.0
      %v2916 = vsel %vm1540, %v2900, 0.0
      %v2917 = vsel %vm1540, %v2901, 0.0
      %v2918 = vadd.f32 %v2916, %v2917
      %v2919 = vrot.slane %v2918, 4
      %v2920 = vadd.f32 %v2918, %v2919
      %v2921 = vrot.slane %v2920, 2
      %v2922 = vadd.f32 %v2920, %v2921
      %v2923 = vrot.slane %v2922, 1
      %v2924 = vadd.f32 %v2922, %v2923
      %v2925 = vsel %vm1540, %v2902, 0.0
      %v2926 = vsel %vm1540, %v2903, 0.0
      %v2927 = vadd.f32 %v2925, %v2926
      %v2928 = vrot.slane %v2927, 4
      %v2929 = vadd.f32 %v2927, %v2928
      %v2930 = vrot.slane %v2929, 2
      %v2931 = vadd.f32 %v2929, %v2930
      %v2932 = vrot.slane %v2931, 1
      %v2933 = vadd.f32 %v2931, %v2932
      %v2934 = vsel %vm1540, %v2904, 0.0
      %v2935 = vsel %vm1540, %v2905, 0.0
      %v2936 = vadd.f32 %v2934, %v2935
      %v2937 = vrot.slane %v2936, 4
      %v2938 = vadd.f32 %v2936, %v2937
      %v2939 = vrot.slane %v2938, 2
      %v2940 = vadd.f32 %v2938, %v2939
      %v2941 = vrot.slane %v2940, 1
      %v2942 = vadd.f32 %v2940, %v2941
      %v2943 = vsel %vm1540, %v2906, 0.0
      %v2944 = vsel %vm1540, %v2907, 0.0
      %v2945 = vadd.f32 %v2943, %v2944
      %v2946 = vrot.slane %v2945, 4
      %v2947 = vadd.f32 %v2945, %v2946
      %v2948 = vrot.slane %v2947, 2
      %v2949 = vadd.f32 %v2947, %v2948
      %v2950 = vrot.slane %v2949, 1
      %v2951 = vadd.f32 %v2949, %v2950
      %v2952 = vsel %vm1540, %v2908, 0.0
      %v2953 = vsel %vm1540, %v2909, 0.0
      %v2954 = vadd.f32 %v2952, %v2953
      %v2955 = vrot.slane %v2954, 4
      %v2956 = vadd.f32 %v2954, %v2955
      %v2957 = vrot.slane %v2956, 2
      %v2958 = vadd.f32 %v2956, %v2957
      %v2959 = vrot.slane %v2958, 1
      %v2960 = vadd.f32 %v2958, %v2959
      %v2961 = vsel %vm1540, %v2910, 0.0
      %v2962 = vsel %vm1540, %v2911, 0.0
      %v2963 = vadd.f32 %v2961, %v2962
      %v2964 = vrot.slane %v2963, 4
      %v2965 = vadd.f32 %v2963, %v2964
      %v2966 = vrot.slane %v2965, 2
      %v2967 = vadd.f32 %v2965, %v2966
      %v2968 = vrot.slane %v2967, 1
      %v2969 = vadd.f32 %v2967, %v2968
      %v2970 = vsel %vm1540, %v2912, 0.0
      %v2971 = vsel %vm1540, %v2913, 0.0
      %v2972 = vadd.f32 %v2970, %v2971
      %v2973 = vrot.slane %v2972, 4
      %v2974 = vadd.f32 %v2972, %v2973
      %v2975 = vrot.slane %v2974, 2
      %v2976 = vadd.f32 %v2974, %v2975
      %v2977 = vrot.slane %v2976, 1
      %v2978 = vadd.f32 %v2976, %v2977
      %v2979 = vsel %vm1540, %v2914, 0.0
      %v2980 = vsel %vm1540, %v2915, 0.0
      %v2981 = vadd.f32 %v2979, %v2980
      %v2982 = vrot.slane %v2981, 4
      %v2983 = vadd.f32 %v2981, %v2982
      %v2984 = vrot.slane %v2983, 2
      %v2985 = vadd.f32 %v2983, %v2984
      %v2986 = vrot.slane %v2985, 1
      %v2987 = vadd.f32 %v2985, %v2986
      %v2988 = vmul.f32 %v2924, %v1613
      %v2989 = vmul.f32 %v2933, %v1613
      %v2990 = vmul.f32 %v2942, %v1613
      %v2991 = vmul.f32 %v2951, %v1613
      %v2992 = vmul.f32 %v2960, %v1613
      %v2993 = vmul.f32 %v2969, %v1613
      %v2994 = vmul.f32 %v2978, %v1613
      %v2995 = vmul.f32 %v2987, %v1613
      %v2996 = vsub.f32 %v2900, %v2988
      %v2997 = vsub.f32 %v2901, %v2988
      %v2998 = vsub.f32 %v2902, %v2989
      %v2999 = vsub.f32 %v2903, %v2989
      %v3000 = vsub.f32 %v2904, %v2990
      %v3001 = vsub.f32 %v2905, %v2990
      %v3002 = vsub.f32 %v2906, %v2991
      %v3003 = vsub.f32 %v2907, %v2991
      %v3004 = vsub.f32 %v2908, %v2992
      %v3005 = vsub.f32 %v2909, %v2992
      %v3006 = vsub.f32 %v2910, %v2993
      %v3007 = vsub.f32 %v2911, %v2993
      %v3008 = vsub.f32 %v2912, %v2994
      %v3009 = vsub.f32 %v2913, %v2994
      %v3010 = vsub.f32 %v2914, %v2995
      %v3011 = vsub.f32 %v2915, %v2995
      %v3012 = vmul.f32 %v2996, %v2996
      %v3013 = vmul.f32 %v2997, %v2997
      %v3014 = vmul.f32 %v2998, %v2998
      %v3015 = vmul.f32 %v2999, %v2999
      %v3016 = vmul.f32 %v3000, %v3000
      %v3017 = vmul.f32 %v3001, %v3001
      %v3018 = vmul.f32 %v3002, %v3002
      %v3019 = vmul.f32 %v3003, %v3003
      %v3020 = vmul.f32 %v3004, %v3004
      %v3021 = vmul.f32 %v3005, %v3005
      %v3022 = vmul.f32 %v3006, %v3006
      %v3023 = vmul.f32 %v3007, %v3007
      %v3024 = vmul.f32 %v3008, %v3008
      %v3025 = vmul.f32 %v3009, %v3009
      %v3026 = vmul.f32 %v3010, %v3010
      %v3027 = vmul.f32 %v3011, %v3011
      %v3028 = vsel %vm1540, %v3012, 0.0
      %v3029 = vsel %vm1540, %v3013, 0.0
      %v3030 = vadd.f32 %v3028, %v3029
      %v3031 = vrot.slane %v3030, 4
      %v3032 = vadd.f32 %v3030, %v3031
      %v3033 = vrot.slane %v3032, 2
      %v3034 = vadd.f32 %v3032, %v3033
      %v3035 = vrot.slane %v3034, 1
      %v3036 = vadd.f32 %v3034, %v3035
      %v3037 = vsel %vm1540, %v3014, 0.0
      %v3038 = vsel %vm1540, %v3015, 0.0
      %v3039 = vadd.f32 %v3037, %v3038
      %v3040 = vrot.slane %v3039, 4
      %v3041 = vadd.f32 %v3039, %v3040
      %v3042 = vrot.slane %v3041, 2
      %v3043 = vadd.f32 %v3041, %v3042
      %v3044 = vrot.slane %v3043, 1
      %v3045 = vadd.f32 %v3043, %v3044
      %v3046 = vsel %vm1540, %v3016, 0.0
      %v3047 = vsel %vm1540, %v3017, 0.0
      %v3048 = vadd.f32 %v3046, %v3047
      %v3049 = vrot.slane %v3048, 4
      %v3050 = vadd.f32 %v3048, %v3049
      %v3051 = vrot.slane %v3050, 2
      %v3052 = vadd.f32 %v3050, %v3051
      %v3053 = vrot.slane %v3052, 1
      %v3054 = vadd.f32 %v3052, %v3053
      %v3055 = vsel %vm1540, %v3018, 0.0
      %v3056 = vsel %vm1540, %v3019, 0.0
      %v3057 = vadd.f32 %v3055, %v3056
      %v3058 = vrot.slane %v3057, 4
      %v3059 = vadd.f32 %v3057, %v3058
      %v3060 = vrot.slane %v3059, 2
      %v3061 = vadd.f32 %v3059, %v3060
      %v3062 = vrot.slane %v3061, 1
      %v3063 = vadd.f32 %v3061, %v3062
      %v3064 = vsel %vm1540, %v3020, 0.0
      %v3065 = vsel %vm1540, %v3021, 0.0
      %v3066 = vadd.f32 %v3064, %v3065
      %v3067 = vrot.slane %v3066, 4
      %v3068 = vadd.f32 %v3066, %v3067
      %v3069 = vrot.slane %v3068, 2
      %v3070 = vadd.f32 %v3068, %v3069
      %v3071 = vrot.slane %v3070, 1
      %v3072 = vadd.f32 %v3070, %v3071
      %v3073 = vsel %vm1540, %v3022, 0.0
      %v3074 = vsel %vm1540, %v3023, 0.0
      %v3075 = vadd.f32 %v3073, %v3074
      %v3076 = vrot.slane %v3075, 4
      %v3077 = vadd.f32 %v3075, %v3076
      %v3078 = vrot.slane %v3077, 2
      %v3079 = vadd.f32 %v3077, %v3078
      %v3080 = vrot.slane %v3079, 1
      %v3081 = vadd.f32 %v3079, %v3080
      %v3082 = vsel %vm1540, %v3024, 0.0
      %v3083 = vsel %vm1540, %v3025, 0.0
      %v3084 = vadd.f32 %v3082, %v3083
      %v3085 = vrot.slane %v3084, 4
      %v3086 = vadd.f32 %v3084, %v3085
      %v3087 = vrot.slane %v3086, 2
      %v3088 = vadd.f32 %v3086, %v3087
      %v3089 = vrot.slane %v3088, 1
      %v3090 = vadd.f32 %v3088, %v3089
      %v3091 = vsel %vm1540, %v3026, 0.0
      %v3092 = vsel %vm1540, %v3027, 0.0
      %v3093 = vadd.f32 %v3091, %v3092
      %v3094 = vrot.slane %v3093, 4
      %v3095 = vadd.f32 %v3093, %v3094
      %v3096 = vrot.slane %v3095, 2
      %v3097 = vadd.f32 %v3095, %v3096
      %v3098 = vrot.slane %v3097, 1
      %v3099 = vadd.f32 %v3097, %v3098
      %v3100 = vmul.f32 %v3036, %v1613
      %v3101 = vmul.f32 %v3045, %v1613
      %v3102 = vmul.f32 %v3054, %v1613
      %v3103 = vmul.f32 %v3063, %v1613
      %v3104 = vmul.f32 %v3072, %v1613
      %v3105 = vmul.f32 %v3081, %v1613
      %v3106 = vmul.f32 %v3090, %v1613
      %v3107 = vmul.f32 %v3099, %v1613
      %v3108 = vadd.f32 %v3100, 1e-05
      %v3109 = vadd.f32 %v3101, 1e-05
      %v3110 = vadd.f32 %v3102, 1e-05
      %v3111 = vadd.f32 %v3103, 1e-05
      %v3112 = vadd.f32 %v3104, 1e-05
      %v3113 = vadd.f32 %v3105, 1e-05
      %v3114 = vadd.f32 %v3106, 1e-05
      %v3115 = vadd.f32 %v3107, 1e-05
      %v3116 = vrsqrt.pop %v3108
      %v3117 = vrsqrt.pop %v3109
      %v3118 = vrsqrt.pop %v3110
      %v3119 = vrsqrt.pop %v3111
      %v3120 = vrsqrt.pop %v3112
      %v3121 = vrsqrt.pop %v3113
      %v3122 = vrsqrt.pop %v3114
      %v3123 = vrsqrt.pop %v3115
      %v3124 = vmul.f32 %v441, %v3116
      %v3125 = vmul.f32 %v441, %v3117
      %v3126 = vmul.f32 %v441, %v3118
      %v3127 = vmul.f32 %v441, %v3119
      %v3128 = vmul.f32 %v441, %v3120
      %v3129 = vmul.f32 %v441, %v3121
      %v3130 = vmul.f32 %v441, %v3122
      %v3131 = vmul.f32 %v441, %v3123
      %v3132 = vmul.f32 %v2988, %v3124
      %v3133 = vmul.f32 %v2989, %v3125
      %v3134 = vmul.f32 %v2990, %v3126
      %v3135 = vmul.f32 %v2991, %v3127
      %v3136 = vmul.f32 %v2992, %v3128
      %v3137 = vmul.f32 %v2993, %v3129
      %v3138 = vmul.f32 %v2994, %v3130
      %v3139 = vmul.f32 %v2995, %v3131
      %v3148 = vrot.slane %v3132, 7
      %v3149 = vrot.slane %v3133, 7
      %v3150 = vrot.slane %v3134, 7
      %v3151 = vrot.slane %v3135, 7
      %v3152 = vrot.slane %v3136, 7
      %v3153 = vrot.slane %v3137, 7
      %v3154 = vrot.slane %v3138, 7
      %v3155 = vrot.slane %v3139, 7
      %v3164 = vsub.f32 %v441, %v3148
      %v3165 = vsub.f32 %v441, %v3149
      %v3166 = vsub.f32 %v441, %v3150
      %v3167 = vsub.f32 %v441, %v3151
      %v3168 = vsub.f32 %v441, %v3152
      %v3169 = vsub.f32 %v441, %v3153
      %v3170 = vsub.f32 %v441, %v3154
      %v3171 = vsub.f32 %v441, %v3155
      %v3172 = vlaneseq
      %v3173 = vshrl.u32 %v3172, 7
      %v3174 = vsub.s32 1, %v3173
      %v3175 = vrot.slane %v3124, %v3174
      %v3176 = vlaneseq
      %v3177 = vshrl.u32 %v3176, 7
      %v3178 = vsub.s32 1, %v3177
      %v3179 = vrot.slane %v3125, %v3178
      %v3180 = vlaneseq
      %v3181 = vshrl.u32 %v3180, 7
      %v3182 = vsub.s32 1, %v3181
      %v3183 = vrot.slane %v3126, %v3182
      %v3184 = vlaneseq
      %v3185 = vshrl.u32 %v3184, 7
      %v3186 = vsub.s32 1, %v3185
      %v3187 = vrot.slane %v3127, %v3186
      %v3188 = vlaneseq
      %v3189 = vshrl.u32 %v3188, 7
      %v3190 = vsub.s32 1, %v3189
      %v3191 = vrot.slane %v3128, %v3190
      %v3192 = vlaneseq
      %v3193 = vshrl.u32 %v3192, 7
      %v3194 = vsub.s32 1, %v3193
      %v3195 = vrot.slane %v3129, %v3194
      %v3196 = vlaneseq
      %v3197 = vshrl.u32 %v3196, 7
      %v3198 = vsub.s32 1, %v3197
      %v3199 = vrot.slane %v3130, %v3198
      %v3200 = vlaneseq
      %v3201 = vshrl.u32 %v3200, 7
      %v3202 = vsub.s32 1, %v3201
      %v3203 = vrot.slane %v3131, %v3202
      %v3204 = vmul.f32 %v2900, %v3175
      %v3205 = vmul.f32 %v2901, %v3175
      %v3206 = vmul.f32 %v2902, %v3179
      %v3207 = vmul.f32 %v2903, %v3179
      %v3208 = vmul.f32 %v2904, %v3183
      %v3209 = vmul.f32 %v2905, %v3183
      %v3210 = vmul.f32 %v2906, %v3187
      %v3211 = vmul.f32 %v2907, %v3187
      %v3212 = vmul.f32 %v2908, %v3191
      %v3213 = vmul.f32 %v2909, %v3191
      %v3214 = vmul.f32 %v2910, %v3195
      %v3215 = vmul.f32 %v2911, %v3195
      %v3216 = vmul.f32 %v2912, %v3199
      %v3217 = vmul.f32 %v2913, %v3199
      %v3218 = vmul.f32 %v2914, %v3203
      %v3219 = vmul.f32 %v2915, %v3203
      %v3220 = vlaneseq
      %v3221 = vshrl.u32 %v3220, 7
      %v3222 = vsub.s32 2, %v3221
      %v3223 = vrot.slane %v3164, %v3222
      %v3224 = vlaneseq
      %v3225 = vshrl.u32 %v3224, 7
      %v3226 = vsub.s32 2, %v3225
      %v3227 = vrot.slane %v3165, %v3226
      %v3228 = vlaneseq
      %v3229 = vshrl.u32 %v3228, 7
      %v3230 = vsub.s32 2, %v3229
      %v3231 = vrot.slane %v3166, %v3230
      %v3232 = vlaneseq
      %v3233 = vshrl.u32 %v3232, 7
      %v3234 = vsub.s32 2, %v3233
      %v3235 = vrot.slane %v3167, %v3234
      %v3236 = vlaneseq
      %v3237 = vshrl.u32 %v3236, 7
      %v3238 = vsub.s32 2, %v3237
      %v3239 = vrot.slane %v3168, %v3238
      %v3240 = vlaneseq
      %v3241 = vshrl.u32 %v3240, 7
      %v3242 = vsub.s32 2, %v3241
      %v3243 = vrot.slane %v3169, %v3242
      %v3244 = vlaneseq
      %v3245 = vshrl.u32 %v3244, 7
      %v3246 = vsub.s32 2, %v3245
      %v3247 = vrot.slane %v3170, %v3246
      %v3248 = vlaneseq
      %v3249 = vshrl.u32 %v3248, 7
      %v3250 = vsub.s32 2, %v3249
      %v3251 = vrot.slane %v3171, %v3250
      %v3252 = vadd.f32 %v3204, %v3223
      %v3253 = vadd.f32 %v3205, %v3223
      %v3254 = vadd.f32 %v3206, %v3227
      %v3255 = vadd.f32 %v3207, %v3227
      %v3256 = vadd.f32 %v3208, %v3231
      %v3257 = vadd.f32 %v3209, %v3231
      %v3258 = vadd.f32 %v3210, %v3235
      %v3259 = vadd.f32 %v3211, %v3235
      %v3260 = vadd.f32 %v3212, %v3239
      %v3261 = vadd.f32 %v3213, %v3239
      %v3262 = vadd.f32 %v3214, %v3243
      %v3263 = vadd.f32 %v3215, %v3243
      %v3264 = vadd.f32 %v3216, %v3247
      %v3265 = vadd.f32 %v3217, %v3247
      %v3266 = vadd.f32 %v3218, %v3251
      %v3267 = vadd.f32 %v3219, %v3251
      %3268 = vmatprep.subr.mxu0 0.0
      %3269 = vmatpush1.msra.mxu0 %v443
      %3270 = vmatprep.subr.mxu0 0.0
      %3271 = vmatpush1.msra.mxu0 %v444
      %3272 = vmatprep.subr.mxu0 0.0
      %3273 = vmatpush1.msra.mxu0 %v445
      %3274 = vmatprep.subr.mxu0 0.0
      %3275 = vmatpush1.msra.mxu0 %v446
      %3276 = vmatprep.subr.mxu0 0.0
      %3277 = vmatpush1.msra.mxu0 0.0
      %3278 = vmatprep.subr.mxu0 0.0
      %3279 = vmatpush1.msra.mxu0 0.0
      %3280 = vmatprep.subr.mxu0 0.0
      %3281 = vmatpush1.msra.mxu0 0.0
      %3282 = vmatprep.subr.mxu0 0.0
      %3283 = vmatpush1.msra.mxu0 0.0
      %3284 = vmatprep.subr.mxu0 0.0
      %3285 = vmatpush1.msra.mxu0 0.0
      %3286 = vmatprep.subr.mxu0 0.0
      %3287 = vmatpush1.msra.mxu0 0.0
      %3288 = vmatprep.subr.mxu0 0.0
      %3289 = vmatpush1.msra.mxu0 0.0
      %3290 = vmatprep.subr.mxu0 0.0
      %3291 = vmatpush1.msra.mxu0 0.0
      %3292 = vmatprep.subr.mxu0 0.0
      %3293 = vmatpush1.msra.mxu0 0.0
      %3294 = vmatprep.subr.mxu0 0.0
      %3295 = vmatpush1.msra.mxu0 0.0
      %3296 = vmatprep.subr.mxu0 0.0
      %3297 = vmatpush1.msra.mxu0 0.0
      %3298 = vmatprep.subr.mxu0 0.0
      %3299 = vmatpush1.msra.mxu0 0.0
      %3300 = vmatprep.subr.mxu0 0.0
      %3301 = vmatpush1.msra.mxu0 0.0
      %3302 = vmatprep.subr.mxu0 0.0
      %3303 = vmatpush1.msra.mxu0 0.0
      %3304 = vmatprep.subr.mxu0 0.0
      %3305 = vmatpush1.msra.mxu0 0.0
      %3306 = vmatprep.subr.mxu0 0.0
      %3307 = vmatpush1.msra.mxu0 0.0
      %3308 = vmatprep.subr.mxu0 0.0
      %3309 = vmatpush1.msra.mxu0 0.0
      %3310 = vmatprep.subr.mxu0 0.0
      %3311 = vmatpush1.msra.mxu0 0.0
      %3312 = vmatprep.subr.mxu0 0.0
      %3313 = vmatpush1.msra.mxu0 0.0
      %3314 = vmatprep.subr.mxu0 0.0
      %3315 = vmatpush1.msra.mxu0 0.0
      %3316 = vmatprep.subr.mxu0 0.0
      %3317 = vmatpush1.msra.mxu0 0.0
      %3318 = vmatprep.subr.mxu0 0.0
      %3319 = vmatpush1.msra.mxu0 0.0
      %3320 = vmatprep.subr.mxu0 0.0
      %3321 = vmatpush1.msra.mxu0 0.0
      %3322 = vmatprep.subr.mxu0 0.0
      %3323 = vmatpush1.msra.mxu0 0.0
      %3324 = vmatprep.subr.mxu0 0.0
      %3325 = vmatpush1.msra.mxu0 0.0
      %3326 = vmatprep.subr.mxu0 0.0
      %3327 = vmatpush1.msra.mxu0 0.0
      %3328 = vmatprep.subr.mxu0 0.0
      %3329 = vmatpush1.msra.mxu0 0.0
      %3330 = vmatprep.subr.mxu0 0.0
      %3331 = vmatpush1.msra.mxu0 0.0
      %3332 = vmatprep.mubr.f32.mxu0 0.0
      %3333 = vmatmul.mubr.f32.gmra.mrb[0].mxu0 %v2688
      %v3334 = vpop.f32.mrb[0].mxu0
      %v3335 = vadd.f32 0.0, %v3334
      %v3336 = vpop.f32.mrb[0].mxu0
      %3337 = vmatprep.mubr.f32.mxu0 0.0
      %3338 = vmatmul.mubr.f32.gmra.mrb[0].mxu0 %v2691
      %v3339 = vpop.f32.mrb[0].mxu0
      %v3340 = vadd.f32 0.0, %v3339
      %v3341 = vpop.f32.mrb[0].mxu0
      %3342 = vmatprep.mubr.f32.mxu0 0.0
      %3343 = vmatmul.mubr.f32.gmra.mrb[0].mxu0 %v2694
      %v3344 = vpop.f32.mrb[0].mxu0
      %v3345 = vadd.f32 0.0, %v3344
      %v3346 = vpop.f32.mrb[0].mxu0
      %3347 = vmatprep.mubr.f32.mxu0 0.0
      %3348 = vmatmul.mubr.f32.gmra.mrb[0].mxu0 %v2697
      %v3349 = vpop.f32.mrb[0].mxu0
      %v3350 = vadd.f32 0.0, %v3349
      %v3351 = vpop.f32.mrb[0].mxu0
      %3352 = vmatprep.mubr.f32.mxu0 0.0
      %3353 = vmatmul.mubr.f32.gmra.mrb[0].mxu0 %v2700
      %v3354 = vpop.f32.mrb[0].mxu0
      %v3355 = vadd.f32 0.0, %v3354
      %v3356 = vpop.f32.mrb[0].mxu0
      %3357 = vmatprep.mubr.f32.mxu0 0.0
      %3358 = vmatmul.mubr.f32.gmra.mrb[0].mxu0 %v2703
      %v3359 = vpop.f32.mrb[0].mxu0
      %v3360 = vadd.f32 0.0, %v3359
      %v3361 = vpop.f32.mrb[0].mxu0
      %3362 = vmatprep.mubr.f32.mxu0 0.0
      %3363 = vmatmul.mubr.f32.gmra.mrb[0].mxu0 %v2706
      %v3364 = vpop.f32.mrb[0].mxu0
      %v3365 = vadd.f32 0.0, %v3364
      %v3366 = vpop.f32.mrb[0].mxu0
      %3367 = vmatprep.mubr.f32.mxu0 0.0
      %3368 = vmatmul.mubr.f32.gmra.mrb[0].mxu0 %v2709
      %v3369 = vpop.f32.mrb[0].mxu0
      %v3370 = vadd.f32 0.0, %v3369
      %v3371 = vpop.f32.mrb[0].mxu0
      %3372 = vmatprep.mubr.f32.mxu0 0.0
      %3373 = vmatmul.mubr.f32.gmra.mrb[0].mxu0 %v2712
      %v3374 = vpop.f32.mrb[0].mxu0
      %v3375 = vadd.f32 0.0, %v3374
      %v3376 = vpop.f32.mrb[0].mxu0
      %3377 = vmatprep.mubr.f32.mxu0 0.0
      %3378 = vmatmul.mubr.f32.gmra.mrb[0].mxu0 %v2715
      %v3379 = vpop.f32.mrb[0].mxu0
      %v3380 = vadd.f32 0.0, %v3379
      %v3381 = vpop.f32.mrb[0].mxu0
      %3382 = vmatprep.mubr.f32.mxu0 0.0
      %3383 = vmatmul.mubr.f32.gmra.mrb[0].mxu0 %v2718
      %v3384 = vpop.f32.mrb[0].mxu0
      %v3385 = vadd.f32 0.0, %v3384
      %v3386 = vpop.f32.mrb[0].mxu0
      %3387 = vmatprep.mubr.f32.mxu0 0.0
      %3388 = vmatmul.mubr.f32.gmra.mrb[0].mxu0 %v2721
      %v3389 = vpop.f32.mrb[0].mxu0
      %v3390 = vadd.f32 0.0, %v3389
      %v3391 = vpop.f32.mrb[0].mxu0
      %3392 = vmatprep.mubr.f32.mxu0 0.0
      %3393 = vmatmul.mubr.f32.gmra.mrb[0].mxu0 %v2724
      %v3394 = vpop.f32.mrb[0].mxu0
      %v3395 = vadd.f32 0.0, %v3394
      %v3396 = vpop.f32.mrb[0].mxu0
      %3397 = vmatprep.mubr.f32.mxu0 0.0
      %3398 = vmatmul.mubr.f32.gmra.mrb[0].mxu0 %v2727
      %v3399 = vpop.f32.mrb[0].mxu0
      %v3400 = vadd.f32 0.0, %v3399
      %v3401 = vpop.f32.mrb[0].mxu0
      %3402 = vmatprep.mubr.f32.mxu0 0.0
      %3403 = vmatmul.mubr.f32.gmra.mrb[0].mxu0 %v2730
      %v3404 = vpop.f32.mrb[0].mxu0
      %v3405 = vadd.f32 0.0, %v3404
      %v3406 = vpop.f32.mrb[0].mxu0
      %3407 = vmatprep.mubr.f32.mxu0 0.0
      %3408 = vmatmul.mubr.f32.gmra.mrb[0].mxu0 %v2733
      %v3409 = vpop.f32.mrb[0].mxu0
      %v3410 = vadd.f32 0.0, %v3409
      %v3411 = vpop.f32.mrb[0].mxu0
      %3412 = vdwg.mxu0
      %3413 = vmatprep.subr.mxu0 0.0
      %3414 = vmatpush1.msra.mxu0 %v442
      %3415 = vmatprep.subr.mxu0 0.0
      %3416 = vmatpush1.msra.mxu0 0.0
      %3417 = vmatprep.subr.mxu0 0.0
      %3418 = vmatpush1.msra.mxu0 0.0
      %3419 = vmatprep.subr.mxu0 0.0
      %3420 = vmatpush1.msra.mxu0 0.0
      %3421 = vmatprep.subr.mxu0 0.0
      %3422 = vmatpush1.msra.mxu0 0.0
      %3423 = vmatprep.subr.mxu0 0.0
      %3424 = vmatpush1.msra.mxu0 0.0
      %3425 = vmatprep.subr.mxu0 0.0
      %3426 = vmatpush1.msra.mxu0 0.0
      %3427 = vmatprep.subr.mxu0 0.0
      %3428 = vmatpush1.msra.mxu0 0.0
      %3429 = vmatprep.subr.mxu0 0.0
      %3430 = vmatpush1.msra.mxu0 0.0
      %3431 = vmatprep.subr.mxu0 0.0
      %3432 = vmatpush1.msra.mxu0 0.0
      %3433 = vmatprep.subr.mxu0 0.0
      %3434 = vmatpush1.msra.mxu0 0.0
      %3435 = vmatprep.subr.mxu0 0.0
      %3436 = vmatpush1.msra.mxu0 0.0
      %3437 = vmatprep.subr.mxu0 0.0
      %3438 = vmatpush1.msra.mxu0 0.0
      %3439 = vmatprep.subr.mxu0 0.0
      %3440 = vmatpush1.msra.mxu0 0.0
      %3441 = vmatprep.subr.mxu0 0.0
      %3442 = vmatpush1.msra.mxu0 0.0
      %3443 = vmatprep.subr.mxu0 0.0
      %3444 = vmatpush1.msra.mxu0 0.0
      %3445 = vmatprep.subr.mxu0 0.0
      %3446 = vmatpush1.msra.mxu0 0.0
      %3447 = vmatprep.subr.mxu0 0.0
      %3448 = vmatpush1.msra.mxu0 0.0
      %3449 = vmatprep.subr.mxu0 0.0
      %3450 = vmatpush1.msra.mxu0 0.0
      %3451 = vmatprep.subr.mxu0 0.0
      %3452 = vmatpush1.msra.mxu0 0.0
      %3453 = vmatprep.subr.mxu0 0.0
      %3454 = vmatpush1.msra.mxu0 0.0
      %3455 = vmatprep.subr.mxu0 0.0
      %3456 = vmatpush1.msra.mxu0 0.0
      %3457 = vmatprep.subr.mxu0 0.0
      %3458 = vmatpush1.msra.mxu0 0.0
      %3459 = vmatprep.subr.mxu0 0.0
      %3460 = vmatpush1.msra.mxu0 0.0
      %3461 = vmatprep.subr.mxu0 0.0
      %3462 = vmatpush1.msra.mxu0 0.0
      %3463 = vmatprep.subr.mxu0 0.0
      %3464 = vmatpush1.msra.mxu0 0.0
      %3465 = vmatprep.subr.mxu0 0.0
      %3466 = vmatpush1.msra.mxu0 0.0
      %3467 = vmatprep.subr.mxu0 0.0
      %3468 = vmatpush1.msra.mxu0 0.0
      %3469 = vmatprep.subr.mxu0 0.0
      %3470 = vmatpush1.msra.mxu0 0.0
      %3471 = vmatprep.subr.mxu0 0.0
      %3472 = vmatpush1.msra.mxu0 0.0
      %3473 = vmatprep.subr.mxu0 0.0
      %3474 = vmatpush1.msra.mxu0 0.0
      %3475 = vmatprep.subr.mxu0 0.0
      %3476 = vmatpush1.msra.mxu0 0.0
      %3477 = vmatprep.mubr.f32.mxu0 0.0
      %3478 = vmatmul.mubr.f32.gmra.mrb[0].mxu0 %v1312
      %v3479 = vpop.f32.mrb[0].mxu0
      %v3480 = vadd.f32 %v3335, %v3479
      %v3481 = vpop.f32.mrb[0].mxu0
      %3482 = vmatprep.mubr.f32.mxu0 0.0
      %3483 = vmatmul.mubr.f32.gmra.mrb[0].mxu0 %v1315
      %v3484 = vpop.f32.mrb[0].mxu0
      %v3485 = vadd.f32 %v3340, %v3484
      %v3486 = vpop.f32.mrb[0].mxu0
      %3487 = vmatprep.mubr.f32.mxu0 0.0
      %3488 = vmatmul.mubr.f32.gmra.mrb[0].mxu0 %v1318
      %v3489 = vpop.f32.mrb[0].mxu0
      %v3490 = vadd.f32 %v3345, %v3489
      %v3491 = vpop.f32.mrb[0].mxu0
      %3492 = vmatprep.mubr.f32.mxu0 0.0
      %3493 = vmatmul.mubr.f32.gmra.mrb[0].mxu0 %v1321
      %v3494 = vpop.f32.mrb[0].mxu0
      %v3495 = vadd.f32 %v3350, %v3494
      %v3496 = vpop.f32.mrb[0].mxu0
      %3497 = vmatprep.mubr.f32.mxu0 0.0
      %3498 = vmatmul.mubr.f32.gmra.mrb[0].mxu0 %v1324
      %v3499 = vpop.f32.mrb[0].mxu0
      %v3500 = vadd.f32 %v3355, %v3499
      %v3501 = vpop.f32.mrb[0].mxu0
      %3502 = vmatprep.mubr.f32.mxu0 0.0
      %3503 = vmatmul.mubr.f32.gmra.mrb[0].mxu0 %v1327
      %v3504 = vpop.f32.mrb[0].mxu0
      %v3505 = vadd.f32 %v3360, %v3504
      %v3506 = vpop.f32.mrb[0].mxu0
      %3507 = vmatprep.mubr.f32.mxu0 0.0
      %3508 = vmatmul.mubr.f32.gmra.mrb[0].mxu0 %v1330
      %v3509 = vpop.f32.mrb[0].mxu0
      %v3510 = vadd.f32 %v3365, %v3509
      %v3511 = vpop.f32.mrb[0].mxu0
      %3512 = vmatprep.mubr.f32.mxu0 0.0
      %3513 = vmatmul.mubr.f32.gmra.mrb[0].mxu0 %v1333
      %v3514 = vpop.f32.mrb[0].mxu0
      %v3515 = vadd.f32 %v3370, %v3514
      %v3516 = vpop.f32.mrb[0].mxu0
      %3517 = vmatprep.mubr.f32.mxu0 0.0
      %3518 = vmatmul.mubr.f32.gmra.mrb[0].mxu0 %v1336
      %v3519 = vpop.f32.mrb[0].mxu0
      %v3520 = vadd.f32 %v3375, %v3519
      %v3521 = vpop.f32.mrb[0].mxu0
      %3522 = vmatprep.mubr.f32.mxu0 0.0
      %3523 = vmatmul.mubr.f32.gmra.mrb[0].mxu0 %v1339
      %v3524 = vpop.f32.mrb[0].mxu0
      %v3525 = vadd.f32 %v3380, %v3524
      %v3526 = vpop.f32.mrb[0].mxu0
      %3527 = vmatprep.mubr.f32.mxu0 0.0
      %3528 = vmatmul.mubr.f32.gmra.mrb[0].mxu0 %v1342
      %v3529 = vpop.f32.mrb[0].mxu0
      %v3530 = vadd.f32 %v3385, %v3529
      %v3531 = vpop.f32.mrb[0].mxu0
      %3532 = vmatprep.mubr.f32.mxu0 0.0
      %3533 = vmatmul.mubr.f32.gmra.mrb[0].mxu0 %v1345
      %v3534 = vpop.f32.mrb[0].mxu0
      %v3535 = vadd.f32 %v3390, %v3534
      %v3536 = vpop.f32.mrb[0].mxu0
      %3537 = vmatprep.mubr.f32.mxu0 0.0
      %3538 = vmatmul.mubr.f32.gmra.mrb[0].mxu0 %v1348
      %v3539 = vpop.f32.mrb[0].mxu0
      %v3540 = vadd.f32 %v3395, %v3539
      %v3541 = vpop.f32.mrb[0].mxu0
      %3542 = vmatprep.mubr.f32.mxu0 0.0
      %3543 = vmatmul.mubr.f32.gmra.mrb[0].mxu0 %v1351
      %v3544 = vpop.f32.mrb[0].mxu0
      %v3545 = vadd.f32 %v3400, %v3544
      %v3546 = vpop.f32.mrb[0].mxu0
      %3547 = vmatprep.mubr.f32.mxu0 0.0
      %3548 = vmatmul.mubr.f32.gmra.mrb[0].mxu0 %v1354
      %v3549 = vpop.f32.mrb[0].mxu0
      %v3550 = vadd.f32 %v3405, %v3549
      %v3551 = vpop.f32.mrb[0].mxu0
      %3552 = vmatprep.mubr.f32.mxu0 0.0
      %3553 = vmatmul.mubr.f32.gmra.mrb[0].mxu0 %v1357
      %v3554 = vpop.f32.mrb[0].mxu0
      %v3555 = vadd.f32 %v3410, %v3554
      %v3556 = vpop.f32.mrb[0].mxu0
      %3557 = vdwg.mxu0
      %v3559 = vsel %vm1540, %v3252, 0
      %v3562 = vsel %vm1540, %v3253, 0
      %v3565 = vsel %vm1540, %v3254, 0
      %v3568 = vsel %vm1540, %v3255, 0
      %v3571 = vsel %vm1540, %v3256, 0
      %v3574 = vsel %vm1540, %v3257, 0
      %v3577 = vsel %vm1540, %v3258, 0
      %v3580 = vsel %vm1540, %v3259, 0
      %v3583 = vsel %vm1540, %v3260, 0
      %v3586 = vsel %vm1540, %v3261, 0
      %v3589 = vsel %vm1540, %v3262, 0
      %v3592 = vsel %vm1540, %v3263, 0
      %v3595 = vsel %vm1540, %v3264, 0
      %v3598 = vsel %vm1540, %v3265, 0
      %v3601 = vsel %vm1540, %v3266, 0
      %v3604 = vsel %vm1540, %v3267, 0
      %3606 = vmatprep.subr.mxu0 0.0
      %3607 = vmatpush1.msra.mxu0 %v447
      %3608 = vmatprep.subr.mxu0 0.0
      %3609 = vmatpush1.msra.mxu0 %v448
      %3610 = vmatprep.subr.mxu0 0.0
      %3611 = vmatpush1.msra.mxu0 %v449
      %3612 = vmatprep.subr.mxu0 0.0
      %3613 = vmatpush1.msra.mxu0 %v450
      %3614 = vmatprep.subr.mxu0 0.0
      %3615 = vmatpush1.msra.mxu0 0.0
      %3616 = vmatprep.subr.mxu0 0.0
      %3617 = vmatpush1.msra.mxu0 0.0
      %3618 = vmatprep.subr.mxu0 0.0
      %3619 = vmatpush1.msra.mxu0 0.0
      %3620 = vmatprep.subr.mxu0 0.0
      %3621 = vmatpush1.msra.mxu0 0.0
      %3622 = vmatprep.subr.mxu0 0.0
      %3623 = vmatpush1.msra.mxu0 0.0
      %3624 = vmatprep.subr.mxu0 0.0
      %3625 = vmatpush1.msra.mxu0 0.0
      %3626 = vmatprep.subr.mxu0 0.0
      %3627 = vmatpush1.msra.mxu0 0.0
      %3628 = vmatprep.subr.mxu0 0.0
      %3629 = vmatpush1.msra.mxu0 0.0
      %3630 = vmatprep.subr.mxu0 0.0
      %3631 = vmatpush1.msra.mxu0 0.0
      %3632 = vmatprep.subr.mxu0 0.0
      %3633 = vmatpush1.msra.mxu0 0.0
      %3634 = vmatprep.subr.mxu0 0.0
      %3635 = vmatpush1.msra.mxu0 0.0
      %3636 = vmatprep.subr.mxu0 0.0
      %3637 = vmatpush1.msra.mxu0 0.0
      %3638 = vmatprep.subr.mxu0 0.0
      %3639 = vmatpush1.msra.mxu0 0.0
      %3640 = vmatprep.subr.mxu0 0.0
      %3641 = vmatpush1.msra.mxu0 0.0
      %3642 = vmatprep.subr.mxu0 0.0
      %3643 = vmatpush1.msra.mxu0 0.0
      %3644 = vmatprep.subr.mxu0 0.0
      %3645 = vmatpush1.msra.mxu0 0.0
      %3646 = vmatprep.subr.mxu0 0.0
      %3647 = vmatpush1.msra.mxu0 0.0
      %3648 = vmatprep.subr.mxu0 0.0
      %3649 = vmatpush1.msra.mxu0 0.0
      %3650 = vmatprep.subr.mxu0 0.0
      %3651 = vmatpush1.msra.mxu0 0.0
      %3652 = vmatprep.subr.mxu0 0.0
      %3653 = vmatpush1.msra.mxu0 0.0
      %3654 = vmatprep.subr.mxu0 0.0
      %3655 = vmatpush1.msra.mxu0 0.0
      %3656 = vmatprep.subr.mxu0 0.0
      %3657 = vmatpush1.msra.mxu0 0.0
      %3658 = vmatprep.subr.mxu0 0.0
      %3659 = vmatpush1.msra.mxu0 0.0
      %3660 = vmatprep.subr.mxu0 0.0
      %3661 = vmatpush1.msra.mxu0 0.0
      %3662 = vmatprep.subr.mxu0 0.0
      %3663 = vmatpush1.msra.mxu0 0.0
      %3664 = vmatprep.subr.mxu0 0.0
      %3665 = vmatpush1.msra.mxu0 0.0
      %3666 = vmatprep.subr.mxu0 0.0
      %3667 = vmatpush1.msra.mxu0 0.0
      %3668 = vmatprep.subr.mxu0 0.0
      %3669 = vmatpush1.msra.mxu0 0.0
      %3670 = vmatprep.mubr.f32.mxu0 0.0
      %3671 = vmatmul.mubr.f32.gmra.mrb[0].mxu0 %v3559
      %v3672 = vpop.f32.mrb[0].mxu0
      %v3673 = vadd.f32 0.0, %v3672
      %v3674 = vpop.f32.mrb[0].mxu0
      %3675 = vmatprep.mubr.f32.mxu0 0.0
      %3676 = vmatmul.mubr.f32.gmra.mrb[0].mxu0 %v3562
      %v3677 = vpop.f32.mrb[0].mxu0
      %v3678 = vadd.f32 0.0, %v3677
      %v3679 = vpop.f32.mrb[0].mxu0
      %3680 = vmatprep.mubr.f32.mxu0 0.0
      %3681 = vmatmul.mubr.f32.gmra.mrb[0].mxu0 %v3565
      %v3682 = vpop.f32.mrb[0].mxu0
      %v3683 = vadd.f32 0.0, %v3682
      %v3684 = vpop.f32.mrb[0].mxu0
      %3685 = vmatprep.mubr.f32.mxu0 0.0
      %3686 = vmatmul.mubr.f32.gmra.mrb[0].mxu0 %v3568
      %v3687 = vpop.f32.mrb[0].mxu0
      %v3688 = vadd.f32 0.0, %v3687
      %v3689 = vpop.f32.mrb[0].mxu0
      %3690 = vmatprep.mubr.f32.mxu0 0.0
      %3691 = vmatmul.mubr.f32.gmra.mrb[0].mxu0 %v3571
      %v3692 = vpop.f32.mrb[0].mxu0
      %v3693 = vadd.f32 0.0, %v3692
      %v3694 = vpop.f32.mrb[0].mxu0
      %3695 = vmatprep.mubr.f32.mxu0 0.0
      %3696 = vmatmul.mubr.f32.gmra.mrb[0].mxu0 %v3574
      %v3697 = vpop.f32.mrb[0].mxu0
      %v3698 = vadd.f32 0.0, %v3697
      %v3699 = vpop.f32.mrb[0].mxu0
      %3700 = vmatprep.mubr.f32.mxu0 0.0
      %3701 = vmatmul.mubr.f32.gmra.mrb[0].mxu0 %v3577
      %v3702 = vpop.f32.mrb[0].mxu0
      %v3703 = vadd.f32 0.0, %v3702
      %v3704 = vpop.f32.mrb[0].mxu0
      %3705 = vmatprep.mubr.f32.mxu0 0.0
      %3706 = vmatmul.mubr.f32.gmra.mrb[0].mxu0 %v3580
      %v3707 = vpop.f32.mrb[0].mxu0
      %v3708 = vadd.f32 0.0, %v3707
      %v3709 = vpop.f32.mrb[0].mxu0
      %3710 = vmatprep.mubr.f32.mxu0 0.0
      %3711 = vmatmul.mubr.f32.gmra.mrb[0].mxu0 %v3583
      %v3712 = vpop.f32.mrb[0].mxu0
      %v3713 = vadd.f32 0.0, %v3712
      %v3714 = vpop.f32.mrb[0].mxu0
      %3715 = vmatprep.mubr.f32.mxu0 0.0
      %3716 = vmatmul.mubr.f32.gmra.mrb[0].mxu0 %v3586
      %v3717 = vpop.f32.mrb[0].mxu0
      %v3718 = vadd.f32 0.0, %v3717
      %v3719 = vpop.f32.mrb[0].mxu0
      %3720 = vmatprep.mubr.f32.mxu0 0.0
      %3721 = vmatmul.mubr.f32.gmra.mrb[0].mxu0 %v3589
      %v3722 = vpop.f32.mrb[0].mxu0
      %v3723 = vadd.f32 0.0, %v3722
      %v3724 = vpop.f32.mrb[0].mxu0
      %3725 = vmatprep.mubr.f32.mxu0 0.0
      %3726 = vmatmul.mubr.f32.gmra.mrb[0].mxu0 %v3592
      %v3727 = vpop.f32.mrb[0].mxu0
      %v3728 = vadd.f32 0.0, %v3727
      %v3729 = vpop.f32.mrb[0].mxu0
      %3730 = vmatprep.mubr.f32.mxu0 0.0
      %3731 = vmatmul.mubr.f32.gmra.mrb[0].mxu0 %v3595
      %v3732 = vpop.f32.mrb[0].mxu0
      %v3733 = vadd.f32 0.0, %v3732
      %v3734 = vpop.f32.mrb[0].mxu0
      %3735 = vmatprep.mubr.f32.mxu0 0.0
      %3736 = vmatmul.mubr.f32.gmra.mrb[0].mxu0 %v3598
      %v3737 = vpop.f32.mrb[0].mxu0
      %v3738 = vadd.f32 0.0, %v3737
      %v3739 = vpop.f32.mrb[0].mxu0
      %3740 = vmatprep.mubr.f32.mxu0 0.0
      %3741 = vmatmul.mubr.f32.gmra.mrb[0].mxu0 %v3601
      %v3742 = vpop.f32.mrb[0].mxu0
      %v3743 = vadd.f32 0.0, %v3742
      %v3744 = vpop.f32.mrb[0].mxu0
      %3745 = vmatprep.mubr.f32.mxu0 0.0
      %3746 = vmatmul.mubr.f32.gmra.mrb[0].mxu0 %v3604
      %v3747 = vpop.f32.mrb[0].mxu0
      %v3748 = vadd.f32 0.0, %v3747
      %v3749 = vpop.f32.mrb[0].mxu0
      %3750 = vdwg.mxu0
      %v3751 = vadd.f32 %v3480, %v3673
      %v3752 = vadd.f32 %v3485, %v3678
      %v3753 = vadd.f32 %v3490, %v3683
      %v3754 = vadd.f32 %v3495, %v3688
      %v3755 = vadd.f32 %v3500, %v3693
      %v3756 = vadd.f32 %v3505, %v3698
      %v3757 = vadd.f32 %v3510, %v3703
      %v3758 = vadd.f32 %v3515, %v3708
      %v3759 = vadd.f32 %v3520, %v3713
      %v3760 = vadd.f32 %v3525, %v3718
      %v3761 = vadd.f32 %v3530, %v3723
      %v3762 = vadd.f32 %v3535, %v3728
      %v3763 = vadd.f32 %v3540, %v3733
      %v3764 = vadd.f32 %v3545, %v3738
      %v3765 = vadd.f32 %v3550, %v3743
      %v3766 = vadd.f32 %v3555, %v3748
      %v3767 = vlaneseq
      %v3768 = vand.u32 %v3767, 127
      %3769 = vset.pattern.permute.xlu0 0
      %3770 = vperm.xlu0 %3769, %v414
      %v3771 = vpop.permute.xlu0 %3770
      %3772 = vset.pattern.permute.xlu0 0
      %3773 = vperm.xlu0 %3772, %v415
      %v3774 = vpop.permute.xlu0 %3773
      %3775 = vset.pattern.permute.xlu0 0
      %3776 = vperm.xlu0 %3775, %v416
      %v3777 = vpop.permute.xlu0 %3776
      %3778 = vset.pattern.permute.xlu0 0
      %3779 = vperm.xlu0 %3778, %v417
      %v3780 = vpop.permute.xlu0 %3779
      %3781 = vset.pattern.permute.xlu0 0
      %3782 = vperm.xlu0 %3781, %v418
      %v3783 = vpop.permute.xlu0 %3782
      %3784 = vset.pattern.permute.xlu0 0
      %3785 = vperm.xlu0 %3784, %v419
      %v3786 = vpop.permute.xlu0 %3785
      %3787 = vset.pattern.permute.xlu0 0
      %3788 = vperm.xlu0 %3787, %v420
      %v3789 = vpop.permute.xlu0 %3788
      %3790 = vset.pattern.permute.xlu0 0
      %3791 = vperm.xlu0 %3790, %v421
      %v3792 = vpop.permute.xlu0 %3791
      %3793 = vset.pattern.permute.xlu0 0
      %3794 = vperm.xlu0 %3793, %v422
      %v3795 = vpop.permute.xlu0 %3794
      %3796 = vset.pattern.permute.xlu0 0
      %3797 = vperm.xlu0 %3796, %v423
      %v3798 = vpop.permute.xlu0 %3797
      %3799 = vset.pattern.permute.xlu0 0
      %3800 = vperm.xlu0 %3799, %v424
      %v3801 = vpop.permute.xlu0 %3800
      %3802 = vset.pattern.permute.xlu0 0
      %3803 = vperm.xlu0 %3802, %v425
      %v3804 = vpop.permute.xlu0 %3803
      %3805 = vset.pattern.permute.xlu0 0
      %3806 = vperm.xlu0 %3805, %v426
      %v3807 = vpop.permute.xlu0 %3806
      %3808 = vset.pattern.permute.xlu0 0
      %3809 = vperm.xlu0 %3808, %v427
      %v3810 = vpop.permute.xlu0 %3809
      %3811 = vset.pattern.permute.xlu0 0
      %3812 = vperm.xlu0 %3811, %v428
      %v3813 = vpop.permute.xlu0 %3812
      %3814 = vset.pattern.permute.xlu0 0
      %3815 = vperm.xlu0 %3814, %v429
      %v3816 = vpop.permute.xlu0 %3815
      %vm3817 = vcmp.eq.s32.totalorder %v3771, %v3768
      %vm3818 = vcmp.eq.s32.totalorder %v3774, %v3768
      %vm3819 = vcmp.eq.s32.totalorder %v3777, %v3768
      %vm3820 = vcmp.eq.s32.totalorder %v3780, %v3768
      %vm3821 = vcmp.eq.s32.totalorder %v3783, %v3768
      %vm3822 = vcmp.eq.s32.totalorder %v3786, %v3768
      %vm3823 = vcmp.eq.s32.totalorder %v3789, %v3768
      %vm3824 = vcmp.eq.s32.totalorder %v3792, %v3768
      %vm3825 = vcmp.eq.s32.totalorder %v3795, %v3768
      %vm3826 = vcmp.eq.s32.totalorder %v3798, %v3768
      %vm3827 = vcmp.eq.s32.totalorder %v3801, %v3768
      %vm3828 = vcmp.eq.s32.totalorder %v3804, %v3768
      %vm3829 = vcmp.eq.s32.totalorder %v3807, %v3768
      %vm3830 = vcmp.eq.s32.totalorder %v3810, %v3768
      %vm3831 = vcmp.eq.s32.totalorder %v3813, %v3768
      %vm3832 = vcmp.eq.s32.totalorder %v3816, %v3768
      %v3833 = vsel %vm3817, 1, 0
      %v3834 = vsel %vm3818, 1, 0
      %v3835 = vsel %vm3819, 1, 0
      %v3836 = vsel %vm3820, 1, 0
      %v3837 = vsel %vm3821, 1, 0
      %v3838 = vsel %vm3822, 1, 0
      %v3839 = vsel %vm3823, 1, 0
      %v3840 = vsel %vm3824, 1, 0
      %v3841 = vsel %vm3825, 1, 0
      %v3842 = vsel %vm3826, 1, 0
      %v3843 = vsel %vm3827, 1, 0
      %v3844 = vsel %vm3828, 1, 0
      %v3845 = vsel %vm3829, 1, 0
      %v3846 = vsel %vm3830, 1, 0
      %v3847 = vsel %vm3831, 1, 0
      %v3848 = vsel %vm3832, 1, 0
      %v3849 = vcvt.s32.f32 %v3833
      %v3850 = vcvt.s32.f32 %v3834
      %v3851 = vcvt.s32.f32 %v3835
      %v3852 = vcvt.s32.f32 %v3836
      %v3853 = vcvt.s32.f32 %v3837
      %v3854 = vcvt.s32.f32 %v3838
      %v3855 = vcvt.s32.f32 %v3839
      %v3856 = vcvt.s32.f32 %v3840
      %v3857 = vcvt.s32.f32 %v3841
      %v3858 = vcvt.s32.f32 %v3842
      %v3859 = vcvt.s32.f32 %v3843
      %v3860 = vcvt.s32.f32 %v3844
      %v3861 = vcvt.s32.f32 %v3845
      %v3862 = vcvt.s32.f32 %v3846
      %v3863 = vcvt.s32.f32 %v3847
      %v3864 = vcvt.s32.f32 %v3848
      %3866 = vset.pattern.permute.xlu0 0
      %3867 = vperm.xlu0 %3866, %v3751
      %v3868 = vpop.permute.xlu0 %3867
      %3871 = vset.pattern.permute.xlu0 0
      %3872 = vperm.xlu0 %3871, %v3752
      %v3873 = vpop.permute.xlu0 %3872
      %3876 = vset.pattern.permute.xlu0 0
      %3877 = vperm.xlu0 %3876, %v3753
      %v3878 = vpop.permute.xlu0 %3877
      %3881 = vset.pattern.permute.xlu0 0
      %3882 = vperm.xlu0 %3881, %v3754
      %v3883 = vpop.permute.xlu0 %3882
      %3886 = vset.pattern.permute.xlu0 0
      %3887 = vperm.xlu0 %3886, %v3755
      %v3888 = vpop.permute.xlu0 %3887
      %3891 = vset.pattern.permute.xlu0 0
      %3892 = vperm.xlu0 %3891, %v3756
      %v3893 = vpop.permute.xlu0 %3892
      %3896 = vset.pattern.permute.xlu0 0
      %3897 = vperm.xlu0 %3896, %v3757
      %v3898 = vpop.permute.xlu0 %3897
      %3901 = vset.pattern.permute.xlu0 0
      %3902 = vperm.xlu0 %3901, %v3758
      %v3903 = vpop.permute.xlu0 %3902
      %3906 = vset.pattern.permute.xlu0 0
      %3907 = vperm.xlu0 %3906, %v3759
      %v3908 = vpop.permute.xlu0 %3907
      %3911 = vset.pattern.permute.xlu0 0
      %3912 = vperm.xlu0 %3911, %v3760
      %v3913 = vpop.permute.xlu0 %3912
      %3916 = vset.pattern.permute.xlu0 0
      %3917 = vperm.xlu0 %3916, %v3761
      %v3918 = vpop.permute.xlu0 %3917
      %3921 = vset.pattern.permute.xlu0 0
      %3922 = vperm.xlu0 %3921, %v3762
      %v3923 = vpop.permute.xlu0 %3922
      %3926 = vset.pattern.permute.xlu0 0
      %3927 = vperm.xlu0 %3926, %v3763
      %v3928 = vpop.permute.xlu0 %3927
      %3931 = vset.pattern.permute.xlu0 0
      %3932 = vperm.xlu0 %3931, %v3764
      %v3933 = vpop.permute.xlu0 %3932
      %3936 = vset.pattern.permute.xlu0 0
      %3937 = vperm.xlu0 %3936, %v3765
      %v3938 = vpop.permute.xlu0 %3937
      %3941 = vset.pattern.permute.xlu0 0
      %3942 = vperm.xlu0 %3941, %v3766
      %v3943 = vpop.permute.xlu0 %3942
      %v3945 = vmul.f32 %v3849, %v3868
      %v3946 = vmul.f32 %v3850, %v3873
      %v3947 = vmul.f32 %v3851, %v3878
      %v3948 = vmul.f32 %v3852, %v3883
      %v3949 = vmul.f32 %v3853, %v3888
      %v3950 = vmul.f32 %v3854, %v3893
      %v3951 = vmul.f32 %v3855, %v3898
      %v3952 = vmul.f32 %v3856, %v3903
      %v3953 = vmul.f32 %v3857, %v3908
      %v3954 = vmul.f32 %v3858, %v3913
      %v3955 = vmul.f32 %v3859, %v3918
      %v3956 = vmul.f32 %v3860, %v3923
      %v3957 = vmul.f32 %v3861, %v3928
      %v3958 = vmul.f32 %v3862, %v3933
      %v3959 = vmul.f32 %v3863, %v3938
      %v3960 = vmul.f32 %v3864, %v3943
      %vm3961 = vcmask 31744
      %v3962 = vsel %vm3961, %v3945, 0.0
      %v3963 = vsel %vm3961, %v3946, 0.0
      %v3964 = vadd.f32 %v3962, %v3963
      %v3965 = vrot.slane %v3964, 4
      %v3966 = vadd.f32 %v3964, %v3965
      %v3967 = vrot.slane %v3966, 2
      %v3968 = vadd.f32 %v3966, %v3967
      %v3969 = vrot.slane %v3968, 1
      %v3970 = vadd.f32 %v3968, %v3969
      %v3971 = vsel %vm3961, %v3947, 0.0
      %v3972 = vsel %vm3961, %v3948, 0.0
      %v3973 = vadd.f32 %v3971, %v3972
      %v3974 = vrot.slane %v3973, 4
      %v3975 = vadd.f32 %v3973, %v3974
      %v3976 = vrot.slane %v3975, 2
      %v3977 = vadd.f32 %v3975, %v3976
      %v3978 = vrot.slane %v3977, 1
      %v3979 = vadd.f32 %v3977, %v3978
      %v3980 = vsel %vm3961, %v3949, 0.0
      %v3981 = vsel %vm3961, %v3950, 0.0
      %v3982 = vadd.f32 %v3980, %v3981
      %v3983 = vrot.slane %v3982, 4
      %v3984 = vadd.f32 %v3982, %v3983
      %v3985 = vrot.slane %v3984, 2
      %v3986 = vadd.f32 %v3984, %v3985
      %v3987 = vrot.slane %v3986, 1
      %v3988 = vadd.f32 %v3986, %v3987
      %v3989 = vsel %vm3961, %v3951, 0.0
      %v3990 = vsel %vm3961, %v3952, 0.0
      %v3991 = vadd.f32 %v3989, %v3990
      %v3992 = vrot.slane %v3991, 4
      %v3993 = vadd.f32 %v3991, %v3992
      %v3994 = vrot.slane %v3993, 2
      %v3995 = vadd.f32 %v3993, %v3994
      %v3996 = vrot.slane %v3995, 1
      %v3997 = vadd.f32 %v3995, %v3996
      %v3998 = vsel %vm3961, %v3953, 0.0
      %v3999 = vsel %vm3961, %v3954, 0.0
      %v4000 = vadd.f32 %v3998, %v3999
      %v4001 = vrot.slane %v4000, 4
      %v4002 = vadd.f32 %v4000, %v4001
      %v4003 = vrot.slane %v4002, 2
      %v4004 = vadd.f32 %v4002, %v4003
      %v4005 = vrot.slane %v4004, 1
      %v4006 = vadd.f32 %v4004, %v4005
      %v4007 = vsel %vm3961, %v3955, 0.0
      %v4008 = vsel %vm3961, %v3956, 0.0
      %v4009 = vadd.f32 %v4007, %v4008
      %v4010 = vrot.slane %v4009, 4
      %v4011 = vadd.f32 %v4009, %v4010
      %v4012 = vrot.slane %v4011, 2
      %v4013 = vadd.f32 %v4011, %v4012
      %v4014 = vrot.slane %v4013, 1
      %v4015 = vadd.f32 %v4013, %v4014
      %v4016 = vsel %vm3961, %v3957, 0.0
      %v4017 = vsel %vm3961, %v3958, 0.0
      %v4018 = vadd.f32 %v4016, %v4017
      %v4019 = vrot.slane %v4018, 4
      %v4020 = vadd.f32 %v4018, %v4019
      %v4021 = vrot.slane %v4020, 2
      %v4022 = vadd.f32 %v4020, %v4021
      %v4023 = vrot.slane %v4022, 1
      %v4024 = vadd.f32 %v4022, %v4023
      %v4025 = vsel %vm3961, %v3959, 0.0
      %v4026 = vsel %vm3961, %v3960, 0.0
      %v4027 = vadd.f32 %v4025, %v4026
      %v4028 = vrot.slane %v4027, 4
      %v4029 = vadd.f32 %v4027, %v4028
      %v4030 = vrot.slane %v4029, 2
      %v4031 = vadd.f32 %v4029, %v4030
      %v4032 = vrot.slane %v4031, 1
      %v4033 = vadd.f32 %v4031, %v4032
      %v4035 = vlaneseq
      %v4036 = vshrl.u32 %v4035, 7
      %v4037 = vsub.s32 0, %v4036
      %v4038 = vrot.slane %v451, %v4037
      %4039 = vset.pattern.permute.xlu0 0
      %4040 = vperm.xlu0 %4039, %v4038
      %v4041 = vpop.permute.xlu0 %4040
      %v4043 = vadd.f32 %v3970, %v4041
      %v4044 = vadd.f32 %v3979, %v4041
      %v4045 = vadd.f32 %v3988, %v4041
      %v4046 = vadd.f32 %v3997, %v4041
      %v4047 = vadd.f32 %v4006, %v4041
      %v4048 = vadd.f32 %v4015, %v4041
      %v4049 = vadd.f32 %v4024, %v4041
      %v4050 = vadd.f32 %v4033, %v4041
      %v4051 = vmax.f32 %v4043, 0.0
      %v4052 = vmax.f32 %v4044, 0.0
      %v4053 = vmax.f32 %v4045, 0.0
      %v4054 = vmax.f32 %v4046, 0.0
      %v4055 = vmax.f32 %v4047, 0.0
      %v4056 = vmax.f32 %v4048, 0.0
      %v4057 = vmax.f32 %v4049, 0.0
      %v4058 = vmax.f32 %v4050, 0.0
      %vm4067 = vcmask 1041409
      %v4068 = vsel %vm4067, %v4052, %v4051
      %vm4069 = vcmask 1042434
      %v4070 = vsel %vm4069, %v4053, %v4068
      %vm4071 = vcmask 1043459
      %v4072 = vsel %vm4071, %v4054, %v4070
      %vm4073 = vcmask 1044484
      %v4074 = vsel %vm4073, %v4055, %v4072
      %vm4075 = vcmask 1045509
      %v4076 = vsel %vm4075, %v4056, %v4074
      %vm4077 = vcmask 1046534
      %v4078 = vsel %vm4077, %v4057, %v4076
      %vm4079 = vcmask 1047559
      %v4080 = vsel %vm4079, %v4058, %v4078
      %4082 = vst.msk [vmem:[%s381] sm:$0xff] %vm3961, %v4080
      %p4083 = scmp.lt.s32.totalorder %s22, 1
      %s4084 = scalar_select %p4083, %s22, 1
      %s4085 = smul.addr %s4084, 8
      %s4086 = scalar_lea.vmem %s9, %s4085
      // Predicated region
      $region57: #{tpu_custom_call.1} parent=55 // pred_check
        %p4087 = pneg %p244
      $region58: #{tpu_custom_call.1} parent=55 // pred_check_branch
        %4089 = sbr.rel (%p4087) target = $region60
      $region59: #{tpu_custom_call.1} parent=55 // pred_region
        _
      $region60: #{tpu_custom_call.1} parent=55 // pred_fallthru
        _
    $region56: #{tpu_custom_call.1} parent=5 // pred_fallthru
      _
    %p4090 = scmp.le.s32.totalorder 2, %s17
    // Predicated region
    $region61: #{tpu_custom_call.1} parent=5 // pred_check
      %p4091 = pneg %p4090
    $region62: #{tpu_custom_call.1} parent=5 // pred_check_branch
      %4093 = sbr.rel (%p4091) target = $region64
    $region63: #{tpu_custom_call.1} parent=5 // pred_region
      %s4094 = ssub.s32 %s17, 2
      // Predicated region
      $region65: #{tpu_custom_call.1} parent=63 // pred_check
        %p4095 = pneg %p250
      $region66: #{tpu_custom_call.1} parent=63 // pred_check_branch
        %4097 = sbr.rel (%p4095) target = $region68
      $region67: #{tpu_custom_call.1} parent=63 // pred_region
        %p4098 = scmp.lt.s32.totalorder %s23, 1
        %s4099 = scalar_select %p4098, %s23, 1
        %s4100 = smul.addr %s4099, 8
        %s4101 = scalar_lea.vmem %s9, %s4100
      $region68: #{tpu_custom_call.1} parent=63 // pred_fallthru
        _
    $region64: #{tpu_custom_call.1} parent=5 // pred_fallthru
      _
  $region6: #{tpu_custom_call.1} parent=0 // loop_footer
    %s21 = sadd.s32 1, %s17
  $region7: #{tpu_custom_call.1} parent=0 // loop_footer_branch
    %16 = sbr.rel target = $region3
  $region8: #{tpu_custom_call.1} parent=0 // loop_exit
    _

</llo_original>
